<compile_context>
chip_gen: v7x
topology: tpu7x:2x2x1
jax: 0.10.0
libtpu: 0.0.40
codegen_flags: <defaults>
</compile_context>

<pallas_src>
import functools

import jax
import jax.numpy as jnp
from jax.experimental import pallas as pl
from jax.experimental.pallas import tpu as pltpu

ACT_DTYPE = jnp.bfloat16      # activations / matmul operands
C_PAD = 128                   # lane-dense channel padding
WO_ALIGN = 16                 # output-width padding (tile-aligned collapse)
_VMEM_LIMIT = 32 * 1024 * 1024


def _round_up(x, m):
    return ((x + m - 1) // m) * m


def _compiler_params():
    return pltpu.CompilerParams(
        dimension_semantics=("parallel",),
        vmem_limit_bytes=_VMEM_LIMIT,
    )


# --------------------------------------------------------------------------
# Pallas kernels
# --------------------------------------------------------------------------
def _conv_taps(x_ref, w_ref, *, k, stride, ho, wo):
    """Direct conv: sum of k*k shifted matmuls on the phase slab (f32 acc)."""
    s = stride
    x = x_ref[...]                          # (s*s, hph, wph, cin)  bf16
    cin = x.shape[-1]
    cout = w_ref.shape[-1]
    acc = jnp.zeros((ho * wo, cout), jnp.float32)
    for i in range(k):
        for j in range(k):
            ph = (i % s) * s + (j % s)
            oi, oj = i // s, j // s
            tap = x[ph, oi:oi + ho, oj:oj + wo, :]          # (ho, wo, cin)
            lhs = tap.reshape(ho * wo, cin)                 # tile-aligned
            acc = acc + jnp.dot(lhs, w_ref[i * k + j],
                                preferred_element_type=jnp.float32)
    return acc


def _conv_bn_kernel(x_ref, w_ref, s_ref, b_ref, o_ref, *,
                    k, stride, ho, wo, relu):
    """o = [relu](conv(x) * scale + bias)   — conv + folded BN (+ ReLU)."""
    acc = _conv_taps(x_ref, w_ref, k=k, stride=stride, ho=ho, wo=wo)
    y = acc * s_ref[...] + b_ref[...]
    if relu:
        y = jnp.maximum(y, 0.0)
    o_ref[0] = y.astype(o_ref.dtype)


def _conv_bn_res_relu_kernel(x_ref, w_ref, s_ref, b_ref, r_ref, o_ref, *,
                             k, stride, ho, wo):
    """o = relu(conv(x) * scale + bias + residual) — BasicBlock second conv."""
    acc = _conv_taps(x_ref, w_ref, k=k, stride=stride, ho=ho, wo=wo)
    y = acc * s_ref[...] + b_ref[...] + r_ref[0].astype(jnp.float32)
    o_ref[0] = jnp.maximum(y, 0.0).astype(o_ref.dtype)


def _maxpool_kernel(x_ref, o_ref, *, k, stride, ho, wo):
    """3x3/s2 max-pool: 9-way max over in-VMEM shifted phase windows."""
    s = stride
    x = x_ref[...]                          # (s*s, hph, wph, C)
    m = None
    for i in range(k):
        for j in range(k):
            ph = (i % s) * s + (j % s)
            tap = x[ph, i // s:i // s + ho, j // s:j // s + wo, :]
            m = tap if m is None else jnp.maximum(m, tap)
    o_ref[0] = m


def _global_avg_kernel(x_ref, o_ref):
    """(1, H, W, C) -> (1, 1, C): AdaptiveAvgPool2d(1), f32 accumulation."""
    h, w = x_ref.shape[1], x_ref.shape[2]
    x = x_ref[0].astype(jnp.float32)        # (H, W, C)
    acc = jnp.sum(x, axis=0)                # (W, C)
    acc = jnp.sum(acc, axis=0, keepdims=True)   # (1, C)
    o_ref[0] = acc * (1.0 / float(h * w))


# --------------------------------------------------------------------------
# XLA-side glue: stride-phase decomposition (no data duplication)
# --------------------------------------------------------------------------
def _phase_decompose(x, k, stride, pad, wo_target):
    """Pad x (B,H,W,C) and space-to-batch it by `stride` so every conv/pool
    tap becomes a contiguous (ho, wo, C) window of one phase.

    Returns (B*stride*stride, hph, wph, C) with phase = (dy%s)*s + (dx%s)."""
    b, h, w, c = x.shape
    s = stride
    ho = (h + 2 * pad - k) // s + 1
    hph = (k - 1) // s + ho
    wph = (k - 1) // s + wo_target
    xp = jnp.pad(
        x,
        ((0, 0),
         (pad, s * hph - h - pad),
         (pad, s * wph - w - pad),
         (0, 0)),
    )
    xph = xp.reshape(b, hph, s, wph, s, c).transpose(0, 2, 4, 1, 3, 5)
    return xph.reshape(b * s * s, hph, wph, c), hph, wph


# --------------------------------------------------------------------------
# pallas_call wrappers
# --------------------------------------------------------------------------
def _conv_bn(x, p, relu=True, residual=None):
    """x: (B,H,W,Cin) bf16 -> (B,Ho,Wo,Cout_pad) bf16.  Fused conv+BN(+res)(+ReLU)."""
    k, s, pad = p["k"], p["stride"], p["pad"]
    b, h, w, c = x.shape
    cin, cout = p["w"].shape[-2], p["w"].shape[-1]
    assert c == cin, (c, cin)

    ho = (h + 2 * pad - k) // s + 1
    wo = (w + 2 * pad - k) // s + 1
    wo_pad = _round_up(wo, WO_ALIGN)

    xph, hph, wph = _phase_decompose(x, k, s, pad, wo_pad)

    kern_kwargs = dict(k=k, stride=s, ho=ho, wo=wo_pad)
    in_specs = [
        pl.BlockSpec((s * s, hph, wph, cin), lambda bi: (bi, 0, 0, 0)),
        pl.BlockSpec((k * k, cin, cout), lambda bi: (0, 0, 0)),
        pl.BlockSpec((1, cout), lambda bi: (0, 0)),
        pl.BlockSpec((1, cout), lambda bi: (0, 0)),
    ]
    args = [xph, p["w"], p["scale"], p["bias"]]
    if residual is None:
        kern = functools.partial(_conv_bn_kernel, relu=relu, **kern_kwargs)
    else:
        # residual (B,Ho,Wo,Cout_pad): zero-pad W to wo_pad and flatten spatial
        r = jnp.pad(residual, ((0, 0), (0, 0), (0, wo_pad - wo), (0, 0)))
        r = r.reshape(b, ho * wo_pad, cout)
        kern = functools.partial(_conv_bn_res_relu_kernel, **kern_kwargs)
        in_specs.append(pl.BlockSpec((1, ho * wo_pad, cout),
                                     lambda bi: (bi, 0, 0)))
        args.append(r)

    out = pl.pallas_call(
        kern,
        grid=(b,),
        in_specs=in_specs,
        out_specs=pl.BlockSpec((1, ho * wo_pad, cout), lambda bi: (bi, 0, 0)),
        out_shape=jax.ShapeDtypeStruct((b, ho * wo_pad, cout), ACT_DTYPE),
        compiler_params=_compiler_params(),
    )(*args)
    return out.reshape(b, ho, wo_pad, cout)[:, :, :wo, :]


def _maxpool_3x3_s2(x):
    """nn.MaxPool2d(3, stride=2, padding=1) in NHWC.  Zero padding is
    equivalent to -inf padding here because the input is post-ReLU (>= 0)."""
    k, s, pad = 3, 2, 1
    b, h, w, c = x.shape
    ho = (h + 2 * pad - k) // s + 1
    wo = (w + 2 * pad - k) // s + 1
    xph, hph, wph = _phase_decompose(x, k, s, pad, wo)
    return pl.pallas_call(
        functools.partial(_maxpool_kernel, k=k, stride=s, ho=ho, wo=wo),
        grid=(b,),
        in_specs=[pl.BlockSpec((s * s, hph, wph, c), lambda bi: (bi, 0, 0, 0))],
        out_specs=pl.BlockSpec((1, ho, wo, c), lambda bi: (bi, 0, 0, 0)),
        out_shape=jax.ShapeDtypeStruct((b, ho, wo, c), x.dtype),
        compiler_params=_compiler_params(),
    )(xph)


def _global_avg_pool(x):
    """(B,H,W,C) -> (B,C) f32: AdaptiveAvgPool2d(1)."""
    b, h, w, c = x.shape
    out = pl.pallas_call(
        _global_avg_kernel,
        grid=(b,),
        in_specs=[pl.BlockSpec((1, h, w, c), lambda bi: (bi, 0, 0, 0))],
        out_specs=pl.BlockSpec((1, 1, c), lambda bi: (bi, 0, 0)),
        out_shape=jax.ShapeDtypeStruct((b, 1, c), jnp.float32),
        compiler_params=_compiler_params(),
    )(x)
    return out[:, 0, :]


# --------------------------------------------------------------------------
# ResNet forward (== Resnet.forward with pool_type in {'avgpool','maxpool'})
# --------------------------------------------------------------------------
def _basic_block(x, p):
    identity = x
    out = _conv_bn(x, p["conv1"], relu=True)
    if p["down"] is not None:
        identity = _conv_bn(x, p["down"], relu=False)
    return _conv_bn(out, p["conv2"], relu=True, residual=identity)


def resnet_forward(x_nchw, params, pool=True, pool_type="maxpool"):
    # NCHW (PyTorch) -> NHWC (TPU layout), bf16 activations.
    x = jnp.transpose(x_nchw, (0, 2, 3, 1)).astype(ACT_DTYPE)

    # self.features: conv1/bn1/relu, maxpool, layer1..4, AdaptiveAvgPool2d(1)
    x = _conv_bn(x, params["stem"], relu=True)
    x = _maxpool_3x3_s2(x)
    for layer in params["layers"]:
        for blk in layer:
            x = _basic_block(x, blk)
    feat = _global_avg_pool(x)[:, :params["num_features"]]   # (B, C) f32

    if not pool:
        # features output is (B, C, 1, 1) in PyTorch (NCHW)
        return feat[:, :, None, None]

    # adaptive_{avg,max}_pool2d over a (B, C, 1, 1) map is the identity.
    del pool_type
    return feat


# --------------------------------------------------------------------------
# Deterministic parameter construction (small ResNet-18-style backbone)
# --------------------------------------------------------------------------
def _make_conv_params(key, cin, cout, k, stride, pad, cin_pad=None):
    cin_p = cin if cin_pad is None else cin_pad
    cout_p = _round_up(cout, C_PAD)
    kw, kg, kb, km, kv = jax.random.split(key, 5)
    w = jax.random.normal(kw, (k, k, cin, cout), jnp.float32) / jnp.sqrt(
        jnp.float32(k * k * cin))
    gamma = 1.0 + 0.1 * jax.random.normal(kg, (cout,), jnp.float32)
    beta = 0.1 * jax.random.normal(kb, (cout,), jnp.float32)
    mean = 0.1 * jax.random.normal(km, (cout,), jnp.float32)
    var = 1.0 + 0.1 * jnp.abs(jax.random.normal(kv, (cout,), jnp.float32))
    scale = gamma / jnp.sqrt(var + 1e-5)      # folded inference-mode BN
    bias = beta - mean * scale
    w_p = jnp.zeros((k * k, cin_p, cout_p), jnp.float32)
    w_p = w_p.at[:, :cin, :cout].set(w.reshape(k * k, cin, cout))
    scale_p = jnp.zeros((1, cout_p), jnp.float32).at[:, :cout].set(scale)
    bias_p = jnp.zeros((1, cout_p), jnp.float32).at[:, :cout].set(bias)
    return {
        "w": w_p.astype(ACT_DTYPE),   # (k*k, Cin_pad, Cout_pad) bf16
        "scale": scale_p,             # (1, Cout_pad) f32
        "bias": bias_p,               # (1, Cout_pad) f32
        "k": k,
        "stride": stride,
        "pad": pad,
    }


def _make_block_params(key, cin, cout, stride):
    k1, k2, k3 = jax.random.split(key, 3)
    p = {
        "conv1": _make_conv_params(k1, cin, cout, 3, stride, 1,
                                   cin_pad=_round_up(cin, C_PAD)),
        "conv2": _make_conv_params(k2, cout, cout, 3, 1, 1,
                                   cin_pad=_round_up(cout, C_PAD)),
        "down": None,
    }
    if stride != 1 or cin != cout:
        p["down"] = _make_conv_params(k3, cin, cout, 1, stride, 0,
                                      cin_pad=_round_up(cin, C_PAD))
    return p


def make_resnet_params(key, in_channels=3, widths=(8, 16, 32, 64),
                       blocks_per_layer=2):
    keys = jax.random.split(key, 1 + len(widths) * blocks_per_layer)
    stem = _make_conv_params(keys[0], in_channels, widths[0], 7, 2, 3,
                             cin_pad=in_channels)
    layers = []
    cin = widths[0]
    ki = 1
    for li, cout in enumerate(widths):
        layer = []
        for bi in range(blocks_per_layer):
            stride = 2 if (li > 0 and bi == 0) else 1
            layer.append(_make_block_params(keys[ki], cin, cout, stride))
            cin = cout
            ki += 1
        layers.append(layer)
    return {"stem": stem, "layers": layers, "num_features": widths[-1]}


if __name__ == "__main__":
    key = jax.random.PRNGKey(0)
    pkey, xkey = jax.random.split(key)
    params = make_resnet_params(pkey, in_channels=3)

    # NCHW input, like the PyTorch module (channel=3 path)
    x = jax.random.normal(xkey, (2, 3, 16, 16), jnp.float32)

    out = resnet_forward(x, params, pool=True, pool_type="maxpool")
    out = jax.block_until_ready(out)

    assert out.shape == (2, 64), out.shape
    assert bool(jnp.all(jnp.isfinite(out)))
    print("KERNEL_OK")
</pallas_src>

<mosaic_0001>
module attributes {stable_mosaic.version = 11 : i64} {
  func.func @_conv_bn_kernel(%arg0: i32, %arg1: memref<4x11x19x3xbf16, #tpu.memory_space<vmem>>, %arg2: memref<49x3x128xbf16, #tpu.memory_space<vmem>>, %arg3: memref<1x128xf32, #tpu.memory_space<vmem>>, %arg4: memref<1x128xf32, #tpu.memory_space<vmem>>, %arg5: memref<1x128x128xbf16, #tpu.memory_space<vmem>>) attributes {dimension_semantics = [#tpu.dimension_semantics<parallel>], iteration_bounds = array<i64: 2>, scalar_prefetch = 0 : i64, scratch_operands = 0 : i64, tpu.core_type = #tpu.core_type<tc>, window_params = [{transform_indices = @transform_0, window_bounds = array<i64: 4, 11, 19, 3>}, {pipeline_mode = #tpu.pipeline_mode<synchronous>, transform_indices = @transform_1, window_bounds = array<i64: 49, 3, 128>}, {pipeline_mode = #tpu.pipeline_mode<synchronous>, transform_indices = @transform_2, window_bounds = array<i64: 1, 128>}, {pipeline_mode = #tpu.pipeline_mode<synchronous>, transform_indices = @transform_3, window_bounds = array<i64: 1, 128>}, {transform_indices = @transform_4, window_bounds = array<i64: 1, 128, 128>}]} {
    %c0 = arith.constant 0 : index
    %c0_0 = arith.constant 0 : index
    %c0_1 = arith.constant 0 : index
    %c0_2 = arith.constant 0 : index
    %0 = vector.load %arg1[%c0, %c0_0, %c0_1, %c0_2] : memref<4x11x19x3xbf16, #tpu.memory_space<vmem>>, vector<4x11x19x3xbf16>
    %cst = arith.constant 0.000000e+00 : f32
    %1 = vector.broadcast %cst : f32 to vector<128x128xf32>
    %2 = vector.extract_strided_slice %0 {offsets = [0, 0, 0, 0], sizes = [1, 8, 16, 3], strides = [1, 1, 1, 1]} : vector<4x11x19x3xbf16> to vector<1x8x16x3xbf16>
    %3 = vector.shape_cast %2 : vector<1x8x16x3xbf16> to vector<8x16x3xbf16>
    %4 = vector.shape_cast %3 : vector<8x16x3xbf16> to vector<128x3xbf16>
    %c0_3 = arith.constant 0 : index
    %c0_4 = arith.constant 0 : index
    %c0_5 = arith.constant 0 : index
    %5 = vector.load %arg2[%c0_3, %c0_4, %c0_5] : memref<49x3x128xbf16, #tpu.memory_space<vmem>>, vector<1x3x128xbf16>
    %6 = vector.shape_cast %5 : vector<1x3x128xbf16> to vector<3x128xbf16>
    %cst_6 = arith.constant dense<0.000000e+00> : vector<128x128xf32>
    %7 = tpu.matmul %4, %6, %cst_6 {dimension_numbers = #tpu.dot_dimension_numbers<[1], [0], [0], [1], [0, 0, 1, 1], [], []>} : vector<128x3xbf16>, vector<3x128xbf16>, vector<128x128xf32> -> vector<128x128xf32>
    %8 = arith.addf %1, %7 : vector<128x128xf32>
    %9 = vector.extract_strided_slice %0 {offsets = [1, 0, 0, 0], sizes = [1, 8, 16, 3], strides = [1, 1, 1, 1]} : vector<4x11x19x3xbf16> to vector<1x8x16x3xbf16>
    %10 = vector.shape_cast %9 : vector<1x8x16x3xbf16> to vector<8x16x3xbf16>
    %11 = vector.shape_cast %10 : vector<8x16x3xbf16> to vector<128x3xbf16>
    %c1 = arith.constant 1 : index
    %c0_7 = arith.constant 0 : index
    %c0_8 = arith.constant 0 : index
    %12 = vector.load %arg2[%c1, %c0_7, %c0_8] : memref<49x3x128xbf16, #tpu.memory_space<vmem>>, vector<1x3x128xbf16>
    %13 = vector.shape_cast %12 : vector<1x3x128xbf16> to vector<3x128xbf16>
    %cst_9 = arith.constant dense<0.000000e+00> : vector<128x128xf32>
    %14 = tpu.matmul %11, %13, %cst_9 {dimension_numbers = #tpu.dot_dimension_numbers<[1], [0], [0], [1], [0, 0, 1, 1], [], []>} : vector<128x3xbf16>, vector<3x128xbf16>, vector<128x128xf32> -> vector<128x128xf32>
    %15 = arith.addf %8, %14 : vector<128x128xf32>
    %16 = vector.extract_strided_slice %0 {offsets = [0, 0, 1, 0], sizes = [1, 8, 16, 3], strides = [1, 1, 1, 1]} : vector<4x11x19x3xbf16> to vector<1x8x16x3xbf16>
    %17 = vector.shape_cast %16 : vector<1x8x16x3xbf16> to vector<8x16x3xbf16>
    %18 = vector.shape_cast %17 : vector<8x16x3xbf16> to vector<128x3xbf16>
    %c2 = arith.constant 2 : index
    %c0_10 = arith.constant 0 : index
    %c0_11 = arith.constant 0 : index
    %19 = vector.load %arg2[%c2, %c0_10, %c0_11] : memref<49x3x128xbf16, #tpu.memory_space<vmem>>, vector<1x3x128xbf16>
    %20 = vector.shape_cast %19 : vector<1x3x128xbf16> to vector<3x128xbf16>
    %cst_12 = arith.constant dense<0.000000e+00> : vector<128x128xf32>
    %21 = tpu.matmul %18, %20, %cst_12 {dimension_numbers = #tpu.dot_dimension_numbers<[1], [0], [0], [1], [0, 0, 1, 1], [], []>} : vector<128x3xbf16>, vector<3x128xbf16>, vector<128x128xf32> -> vector<128x128xf32>
    %22 = arith.addf %15, %21 : vector<128x128xf32>
    %23 = vector.extract_strided_slice %0 {offsets = [1, 0, 1, 0], sizes = [1, 8, 16, 3], strides = [1, 1, 1, 1]} : vector<4x11x19x3xbf16> to vector<1x8x16x3xbf16>
    %24 = vector.shape_cast %23 : vector<1x8x16x3xbf16> to vector<8x16x3xbf16>
    %25 = vector.shape_cast %24 : vector<8x16x3xbf16> to vector<128x3xbf16>
    %c3 = arith.constant 3 : index
    %c0_13 = arith.constant 0 : index
    %c0_14 = arith.constant 0 : index
    %26 = vector.load %arg2[%c3, %c0_13, %c0_14] : memref<49x3x128xbf16, #tpu.memory_space<vmem>>, vector<1x3x128xbf16>
    %27 = vector.shape_cast %26 : vector<1x3x128xbf16> to vector<3x128xbf16>
    %cst_15 = arith.constant dense<0.000000e+00> : vector<128x128xf32>
    %28 = tpu.matmul %25, %27, %cst_15 {dimension_numbers = #tpu.dot_dimension_numbers<[1], [0], [0], [1], [0, 0, 1, 1], [], []>} : vector<128x3xbf16>, vector<3x128xbf16>, vector<128x128xf32> -> vector<128x128xf32>
    %29 = arith.addf %22, %28 : vector<128x128xf32>
    %30 = vector.extract_strided_slice %0 {offsets = [0, 0, 2, 0], sizes = [1, 8, 16, 3], strides = [1, 1, 1, 1]} : vector<4x11x19x3xbf16> to vector<1x8x16x3xbf16>
    %31 = vector.shape_cast %30 : vector<1x8x16x3xbf16> to vector<8x16x3xbf16>
    %32 = vector.shape_cast %31 : vector<8x16x3xbf16> to vector<128x3xbf16>
    %c4 = arith.constant 4 : index
    %c0_16 = arith.constant 0 : index
    %c0_17 = arith.constant 0 : index
    %33 = vector.load %arg2[%c4, %c0_16, %c0_17] : memref<49x3x128xbf16, #tpu.memory_space<vmem>>, vector<1x3x128xbf16>
    %34 = vector.shape_cast %33 : vector<1x3x128xbf16> to vector<3x128xbf16>
    %cst_18 = arith.constant dense<0.000000e+00> : vector<128x128xf32>
    %35 = tpu.matmul %32, %34, %cst_18 {dimension_numbers = #tpu.dot_dimension_numbers<[1], [0], [0], [1], [0, 0, 1, 1], [], []>} : vector<128x3xbf16>, vector<3x128xbf16>, vector<128x128xf32> -> vector<128x128xf32>
    %36 = arith.addf %29, %35 : vector<128x128xf32>
    %37 = vector.extract_strided_slice %0 {offsets = [1, 0, 2, 0], sizes = [1, 8, 16, 3], strides = [1, 1, 1, 1]} : vector<4x11x19x3xbf16> to vector<1x8x16x3xbf16>
    %38 = vector.shape_cast %37 : vector<1x8x16x3xbf16> to vector<8x16x3xbf16>
    %39 = vector.shape_cast %38 : vector<8x16x3xbf16> to vector<128x3xbf16>
    %c5 = arith.constant 5 : index
    %c0_19 = arith.constant 0 : index
    %c0_20 = arith.constant 0 : index
    %40 = vector.load %arg2[%c5, %c0_19, %c0_20] : memref<49x3x128xbf16, #tpu.memory_space<vmem>>, vector<1x3x128xbf16>
    %41 = vector.shape_cast %40 : vector<1x3x128xbf16> to vector<3x128xbf16>
    %cst_21 = arith.constant dense<0.000000e+00> : vector<128x128xf32>
    %42 = tpu.matmul %39, %41, %cst_21 {dimension_numbers = #tpu.dot_dimension_numbers<[1], [0], [0], [1], [0, 0, 1, 1], [], []>} : vector<128x3xbf16>, vector<3x128xbf16>, vector<128x128xf32> -> vector<128x128xf32>
    %43 = arith.addf %36, %42 : vector<128x128xf32>
    %44 = vector.extract_strided_slice %0 {offsets = [0, 0, 3, 0], sizes = [1, 8, 16, 3], strides = [1, 1, 1, 1]} : vector<4x11x19x3xbf16> to vector<1x8x16x3xbf16>
    %45 = vector.shape_cast %44 : vector<1x8x16x3xbf16> to vector<8x16x3xbf16>
    %46 = vector.shape_cast %45 : vector<8x16x3xbf16> to vector<128x3xbf16>
    %c6 = arith.constant 6 : index
    %c0_22 = arith.constant 0 : index
    %c0_23 = arith.constant 0 : index
    %47 = vector.load %arg2[%c6, %c0_22, %c0_23] : memref<49x3x128xbf16, #tpu.memory_space<vmem>>, vector<1x3x128xbf16>
    %48 = vector.shape_cast %47 : vector<1x3x128xbf16> to vector<3x128xbf16>
    %cst_24 = arith.constant dense<0.000000e+00> : vector<128x128xf32>
    %49 = tpu.matmul %46, %48, %cst_24 {dimension_numbers = #tpu.dot_dimension_numbers<[1], [0], [0], [1], [0, 0, 1, 1], [], []>} : vector<128x3xbf16>, vector<3x128xbf16>, vector<128x128xf32> -> vector<128x128xf32>
    %50 = arith.addf %43, %49 : vector<128x128xf32>
    %51 = vector.extract_strided_slice %0 {offsets = [2, 0, 0, 0], sizes = [1, 8, 16, 3], strides = [1, 1, 1, 1]} : vector<4x11x19x3xbf16> to vector<1x8x16x3xbf16>
    %52 = vector.shape_cast %51 : vector<1x8x16x3xbf16> to vector<8x16x3xbf16>
    %53 = vector.shape_cast %52 : vector<8x16x3xbf16> to vector<128x3xbf16>
    %c7 = arith.constant 7 : index
    %c0_25 = arith.constant 0 : index
    %c0_26 = arith.constant 0 : index
    %54 = vector.load %arg2[%c7, %c0_25, %c0_26] : memref<49x3x128xbf16, #tpu.memory_space<vmem>>, vector<1x3x128xbf16>
    %55 = vector.shape_cast %54 : vector<1x3x128xbf16> to vector<3x128xbf16>
    %cst_27 = arith.constant dense<0.000000e+00> : vector<128x128xf32>
    %56 = tpu.matmul %53, %55, %cst_27 {dimension_numbers = #tpu.dot_dimension_numbers<[1], [0], [0], [1], [0, 0, 1, 1], [], []>} : vector<128x3xbf16>, vector<3x128xbf16>, vector<128x128xf32> -> vector<128x128xf32>
    %57 = arith.addf %50, %56 : vector<128x128xf32>
    %58 = vector.extract_strided_slice %0 {offsets = [3, 0, 0, 0], sizes = [1, 8, 16, 3], strides = [1, 1, 1, 1]} : vector<4x11x19x3xbf16> to vector<1x8x16x3xbf16>
    %59 = vector.shape_cast %58 : vector<1x8x16x3xbf16> to vector<8x16x3xbf16>
    %60 = vector.shape_cast %59 : vector<8x16x3xbf16> to vector<128x3xbf16>
    %c8 = arith.constant 8 : index
    %c0_28 = arith.constant 0 : index
    %c0_29 = arith.constant 0 : index
    %61 = vector.load %arg2[%c8, %c0_28, %c0_29] : memref<49x3x128xbf16, #tpu.memory_space<vmem>>, vector<1x3x128xbf16>
    %62 = vector.shape_cast %61 : vector<1x3x128xbf16> to vector<3x128xbf16>
    %cst_30 = arith.constant dense<0.000000e+00> : vector<128x128xf32>
    %63 = tpu.matmul %60, %62, %cst_30 {dimension_numbers = #tpu.dot_dimension_numbers<[1], [0], [0], [1], [0, 0, 1, 1], [], []>} : vector<128x3xbf16>, vector<3x128xbf16>, vector<128x128xf32> -> vector<128x128xf32>
    %64 = arith.addf %57, %63 : vector<128x128xf32>
    %65 = vector.extract_strided_slice %0 {offsets = [2, 0, 1, 0], sizes = [1, 8, 16, 3], strides = [1, 1, 1, 1]} : vector<4x11x19x3xbf16> to vector<1x8x16x3xbf16>
    %66 = vector.shape_cast %65 : vector<1x8x16x3xbf16> to vector<8x16x3xbf16>
    %67 = vector.shape_cast %66 : vector<8x16x3xbf16> to vector<128x3xbf16>
    %c9 = arith.constant 9 : index
    %c0_31 = arith.constant 0 : index
    %c0_32 = arith.constant 0 : index
    %68 = vector.load %arg2[%c9, %c0_31, %c0_32] : memref<49x3x128xbf16, #tpu.memory_space<vmem>>, vector<1x3x128xbf16>
    %69 = vector.shape_cast %68 : vector<1x3x128xbf16> to vector<3x128xbf16>
    %cst_33 = arith.constant dense<0.000000e+00> : vector<128x128xf32>
    %70 = tpu.matmul %67, %69, %cst_33 {dimension_numbers = #tpu.dot_dimension_numbers<[1], [0], [0], [1], [0, 0, 1, 1], [], []>} : vector<128x3xbf16>, vector<3x128xbf16>, vector<128x128xf32> -> vector<128x128xf32>
    %71 = arith.addf %64, %70 : vector<128x128xf32>
    %72 = vector.extract_strided_slice %0 {offsets = [3, 0, 1, 0], sizes = [1, 8, 16, 3], strides = [1, 1, 1, 1]} : vector<4x11x19x3xbf16> to vector<1x8x16x3xbf16>
    %73 = vector.shape_cast %72 : vector<1x8x16x3xbf16> to vector<8x16x3xbf16>
    %74 = vector.shape_cast %73 : vector<8x16x3xbf16> to vector<128x3xbf16>
    %c10 = arith.constant 10 : index
    %c0_34 = arith.constant 0 : index
    %c0_35 = arith.constant 0 : index
    %75 = vector.load %arg2[%c10, %c0_34, %c0_35] : memref<49x3x128xbf16, #tpu.memory_space<vmem>>, vector<1x3x128xbf16>
    %76 = vector.shape_cast %75 : vector<1x3x128xbf16> to vector<3x128xbf16>
    %cst_36 = arith.constant dense<0.000000e+00> : vector<128x128xf32>
    %77 = tpu.matmul %74, %76, %cst_36 {dimension_numbers = #tpu.dot_dimension_numbers<[1], [0], [0], [1], [0, 0, 1, 1], [], []>} : vector<128x3xbf16>, vector<3x128xbf16>, vector<128x128xf32> -> vector<128x128xf32>
    %78 = arith.addf %71, %77 : vector<128x128xf32>
    %79 = vector.extract_strided_slice %0 {offsets = [2, 0, 2, 0], sizes = [1, 8, 16, 3], strides = [1, 1, 1, 1]} : vector<4x11x19x3xbf16> to vector<1x8x16x3xbf16>
    %80 = vector.shape_cast %79 : vector<1x8x16x3xbf16> to vector<8x16x3xbf16>
    %81 = vector.shape_cast %80 : vector<8x16x3xbf16> to vector<128x3xbf16>
    %c11 = arith.constant 11 : index
    %c0_37 = arith.constant 0 : index
    %c0_38 = arith.constant 0 : index
    %82 = vector.load %arg2[%c11, %c0_37, %c0_38] : memref<49x3x128xbf16, #tpu.memory_space<vmem>>, vector<1x3x128xbf16>
    %83 = vector.shape_cast %82 : vector<1x3x128xbf16> to vector<3x128xbf16>
    %cst_39 = arith.constant dense<0.000000e+00> : vector<128x128xf32>
    %84 = tpu.matmul %81, %83, %cst_39 {dimension_numbers = #tpu.dot_dimension_numbers<[1], [0], [0], [1], [0, 0, 1, 1], [], []>} : vector<128x3xbf16>, vector<3x128xbf16>, vector<128x128xf32> -> vector<128x128xf32>
    %85 = arith.addf %78, %84 : vector<128x128xf32>
    %86 = vector.extract_strided_slice %0 {offsets = [3, 0, 2, 0], sizes = [1, 8, 16, 3], strides = [1, 1, 1, 1]} : vector<4x11x19x3xbf16> to vector<1x8x16x3xbf16>
    %87 = vector.shape_cast %86 : vector<1x8x16x3xbf16> to vector<8x16x3xbf16>
    %88 = vector.shape_cast %87 : vector<8x16x3xbf16> to vector<128x3xbf16>
    %c12 = arith.constant 12 : index
    %c0_40 = arith.constant 0 : index
    %c0_41 = arith.constant 0 : index
    %89 = vector.load %arg2[%c12, %c0_40, %c0_41] : memref<49x3x128xbf16, #tpu.memory_space<vmem>>, vector<1x3x128xbf16>
    %90 = vector.shape_cast %89 : vector<1x3x128xbf16> to vector<3x128xbf16>
    %cst_42 = arith.constant dense<0.000000e+00> : vector<128x128xf32>
    %91 = tpu.matmul %88, %90, %cst_42 {dimension_numbers = #tpu.dot_dimension_numbers<[1], [0], [0], [1], [0, 0, 1, 1], [], []>} : vector<128x3xbf16>, vector<3x128xbf16>, vector<128x128xf32> -> vector<128x128xf32>
    %92 = arith.addf %85, %91 : vector<128x128xf32>
    %93 = vector.extract_strided_slice %0 {offsets = [2, 0, 3, 0], sizes = [1, 8, 16, 3], strides = [1, 1, 1, 1]} : vector<4x11x19x3xbf16> to vector<1x8x16x3xbf16>
    %94 = vector.shape_cast %93 : vector<1x8x16x3xbf16> to vector<8x16x3xbf16>
    %95 = vector.shape_cast %94 : vector<8x16x3xbf16> to vector<128x3xbf16>
    %c13 = arith.constant 13 : index
    %c0_43 = arith.constant 0 : index
    %c0_44 = arith.constant 0 : index
    %96 = vector.load %arg2[%c13, %c0_43, %c0_44] : memref<49x3x128xbf16, #tpu.memory_space<vmem>>, vector<1x3x128xbf16>
    %97 = vector.shape_cast %96 : vector<1x3x128xbf16> to vector<3x128xbf16>
    %cst_45 = arith.constant dense<0.000000e+00> : vector<128x128xf32>
    %98 = tpu.matmul %95, %97, %cst_45 {dimension_numbers = #tpu.dot_dimension_numbers<[1], [0], [0], [1], [0, 0, 1, 1], [], []>} : vector<128x3xbf16>, vector<3x128xbf16>, vector<128x128xf32> -> vector<128x128xf32>
    %99 = arith.addf %92, %98 : vector<128x128xf32>
    %100 = vector.extract_strided_slice %0 {offsets = [0, 1, 0, 0], sizes = [1, 8, 16, 3], strides = [1, 1, 1, 1]} : vector<4x11x19x3xbf16> to vector<1x8x16x3xbf16>
    %101 = vector.shape_cast %100 : vector<1x8x16x3xbf16> to vector<8x16x3xbf16>
    %102 = vector.shape_cast %101 : vector<8x16x3xbf16> to vector<128x3xbf16>
    %c14 = arith.constant 14 : index
    %c0_46 = arith.constant 0 : index
    %c0_47 = arith.constant 0 : index
    %103 = vector.load %arg2[%c14, %c0_46, %c0_47] : memref<49x3x128xbf16, #tpu.memory_space<vmem>>, vector<1x3x128xbf16>
    %104 = vector.shape_cast %103 : vector<1x3x128xbf16> to vector<3x128xbf16>
    %cst_48 = arith.constant dense<0.000000e+00> : vector<128x128xf32>
    %105 = tpu.matmul %102, %104, %cst_48 {dimension_numbers = #tpu.dot_dimension_numbers<[1], [0], [0], [1], [0, 0, 1, 1], [], []>} : vector<128x3xbf16>, vector<3x128xbf16>, vector<128x128xf32> -> vector<128x128xf32>
    %106 = arith.addf %99, %105 : vector<128x128xf32>
    %107 = vector.extract_strided_slice %0 {offsets = [1, 1, 0, 0], sizes = [1, 8, 16, 3], strides = [1, 1, 1, 1]} : vector<4x11x19x3xbf16> to vector<1x8x16x3xbf16>
    %108 = vector.shape_cast %107 : vector<1x8x16x3xbf16> to vector<8x16x3xbf16>
    %109 = vector.shape_cast %108 : vector<8x16x3xbf16> to vector<128x3xbf16>
    %c15 = arith.constant 15 : index
    %c0_49 = arith.constant 0 : index
    %c0_50 = arith.constant 0 : index
    %110 = vector.load %arg2[%c15, %c0_49, %c0_50] : memref<49x3x128xbf16, #tpu.memory_space<vmem>>, vector<1x3x128xbf16>
    %111 = vector.shape_cast %110 : vector<1x3x128xbf16> to vector<3x128xbf16>
    %cst_51 = arith.constant dense<0.000000e+00> : vector<128x128xf32>
    %112 = tpu.matmul %109, %111, %cst_51 {dimension_numbers = #tpu.dot_dimension_numbers<[1], [0], [0], [1], [0, 0, 1, 1], [], []>} : vector<128x3xbf16>, vector<3x128xbf16>, vector<128x128xf32> -> vector<128x128xf32>
    %113 = arith.addf %106, %112 : vector<128x128xf32>
    %114 = vector.extract_strided_slice %0 {offsets = [0, 1, 1, 0], sizes = [1, 8, 16, 3], strides = [1, 1, 1, 1]} : vector<4x11x19x3xbf16> to vector<1x8x16x3xbf16>
    %115 = vector.shape_cast %114 : vector<1x8x16x3xbf16> to vector<8x16x3xbf16>
    %116 = vector.shape_cast %115 : vector<8x16x3xbf16> to vector<128x3xbf16>
    %c16 = arith.constant 16 : index
    %c0_52 = arith.constant 0 : index
    %c0_53 = arith.constant 0 : index
    %117 = vector.load %arg2[%c16, %c0_52, %c0_53] : memref<49x3x128xbf16, #tpu.memory_space<vmem>>, vector<1x3x128xbf16>
    %118 = vector.shape_cast %117 : vector<1x3x128xbf16> to vector<3x128xbf16>
    %cst_54 = arith.constant dense<0.000000e+00> : vector<128x128xf32>
    %119 = tpu.matmul %116, %118, %cst_54 {dimension_numbers = #tpu.dot_dimension_numbers<[1], [0], [0], [1], [0, 0, 1, 1], [], []>} : vector<128x3xbf16>, vector<3x128xbf16>, vector<128x128xf32> -> vector<128x128xf32>
    %120 = arith.addf %113, %119 : vector<128x128xf32>
    %121 = vector.extract_strided_slice %0 {offsets = [1, 1, 1, 0], sizes = [1, 8, 16, 3], strides = [1, 1, 1, 1]} : vector<4x11x19x3xbf16> to vector<1x8x16x3xbf16>
    %122 = vector.shape_cast %121 : vector<1x8x16x3xbf16> to vector<8x16x3xbf16>
    %123 = vector.shape_cast %122 : vector<8x16x3xbf16> to vector<128x3xbf16>
    %c17 = arith.constant 17 : index
    %c0_55 = arith.constant 0 : index
    %c0_56 = arith.constant 0 : index
    %124 = vector.load %arg2[%c17, %c0_55, %c0_56] : memref<49x3x128xbf16, #tpu.memory_space<vmem>>, vector<1x3x128xbf16>
    %125 = vector.shape_cast %124 : vector<1x3x128xbf16> to vector<3x128xbf16>
    %cst_57 = arith.constant dense<0.000000e+00> : vector<128x128xf32>
    %126 = tpu.matmul %123, %125, %cst_57 {dimension_numbers = #tpu.dot_dimension_numbers<[1], [0], [0], [1], [0, 0, 1, 1], [], []>} : vector<128x3xbf16>, vector<3x128xbf16>, vector<128x128xf32> -> vector<128x128xf32>
    %127 = arith.addf %120, %126 : vector<128x128xf32>
    %128 = vector.extract_strided_slice %0 {offsets = [0, 1, 2, 0], sizes = [1, 8, 16, 3], strides = [1, 1, 1, 1]} : vector<4x11x19x3xbf16> to vector<1x8x16x3xbf16>
    %129 = vector.shape_cast %128 : vector<1x8x16x3xbf16> to vector<8x16x3xbf16>
    %130 = vector.shape_cast %129 : vector<8x16x3xbf16> to vector<128x3xbf16>
    %c18 = arith.constant 18 : index
    %c0_58 = arith.constant 0 : index
    %c0_59 = arith.constant 0 : index
    %131 = vector.load %arg2[%c18, %c0_58, %c0_59] : memref<49x3x128xbf16, #tpu.memory_space<vmem>>, vector<1x3x128xbf16>
    %132 = vector.shape_cast %131 : vector<1x3x128xbf16> to vector<3x128xbf16>
    %cst_60 = arith.constant dense<0.000000e+00> : vector<128x128xf32>
    %133 = tpu.matmul %130, %132, %cst_60 {dimension_numbers = #tpu.dot_dimension_numbers<[1], [0], [0], [1], [0, 0, 1, 1], [], []>} : vector<128x3xbf16>, vector<3x128xbf16>, vector<128x128xf32> -> vector<128x128xf32>
    %134 = arith.addf %127, %133 : vector<128x128xf32>
    %135 = vector.extract_strided_slice %0 {offsets = [1, 1, 2, 0], sizes = [1, 8, 16, 3], strides = [1, 1, 1, 1]} : vector<4x11x19x3xbf16> to vector<1x8x16x3xbf16>
    %136 = vector.shape_cast %135 : vector<1x8x16x3xbf16> to vector<8x16x3xbf16>
    %137 = vector.shape_cast %136 : vector<8x16x3xbf16> to vector<128x3xbf16>
    %c19 = arith.constant 19 : index
    %c0_61 = arith.constant 0 : index
    %c0_62 = arith.constant 0 : index
    %138 = vector.load %arg2[%c19, %c0_61, %c0_62] : memref<49x3x128xbf16, #tpu.memory_space<vmem>>, vector<1x3x128xbf16>
    %139 = vector.shape_cast %138 : vector<1x3x128xbf16> to vector<3x128xbf16>
    %cst_63 = arith.constant dense<0.000000e+00> : vector<128x128xf32>
    %140 = tpu.matmul %137, %139, %cst_63 {dimension_numbers = #tpu.dot_dimension_numbers<[1], [0], [0], [1], [0, 0, 1, 1], [], []>} : vector<128x3xbf16>, vector<3x128xbf16>, vector<128x128xf32> -> vector<128x128xf32>
    %141 = arith.addf %134, %140 : vector<128x128xf32>
    %142 = vector.extract_strided_slice %0 {offsets = [0, 1, 3, 0], sizes = [1, 8, 16, 3], strides = [1, 1, 1, 1]} : vector<4x11x19x3xbf16> to vector<1x8x16x3xbf16>
    %143 = vector.shape_cast %142 : vector<1x8x16x3xbf16> to vector<8x16x3xbf16>
    %144 = vector.shape_cast %143 : vector<8x16x3xbf16> to vector<128x3xbf16>
    %c20 = arith.constant 20 : index
    %c0_64 = arith.constant 0 : index
    %c0_65 = arith.constant 0 : index
    %145 = vector.load %arg2[%c20, %c0_64, %c0_65] : memref<49x3x128xbf16, #tpu.memory_space<vmem>>, vector<1x3x128xbf16>
    %146 = vector.shape_cast %145 : vector<1x3x128xbf16> to vector<3x128xbf16>
    %cst_66 = arith.constant dense<0.000000e+00> : vector<128x128xf32>
    %147 = tpu.matmul %144, %146, %cst_66 {dimension_numbers = #tpu.dot_dimension_numbers<[1], [0], [0], [1], [0, 0, 1, 1], [], []>} : vector<128x3xbf16>, vector<3x128xbf16>, vector<128x128xf32> -> vector<128x128xf32>
    %148 = arith.addf %141, %147 : vector<128x128xf32>
    %149 = vector.extract_strided_slice %0 {offsets = [2, 1, 0, 0], sizes = [1, 8, 16, 3], strides = [1, 1, 1, 1]} : vector<4x11x19x3xbf16> to vector<1x8x16x3xbf16>
    %150 = vector.shape_cast %149 : vector<1x8x16x3xbf16> to vector<8x16x3xbf16>
    %151 = vector.shape_cast %150 : vector<8x16x3xbf16> to vector<128x3xbf16>
    %c21 = arith.constant 21 : index
    %c0_67 = arith.constant 0 : index
    %c0_68 = arith.constant 0 : index
    %152 = vector.load %arg2[%c21, %c0_67, %c0_68] : memref<49x3x128xbf16, #tpu.memory_space<vmem>>, vector<1x3x128xbf16>
    %153 = vector.shape_cast %152 : vector<1x3x128xbf16> to vector<3x128xbf16>
    %cst_69 = arith.constant dense<0.000000e+00> : vector<128x128xf32>
    %154 = tpu.matmul %151, %153, %cst_69 {dimension_numbers = #tpu.dot_dimension_numbers<[1], [0], [0], [1], [0, 0, 1, 1], [], []>} : vector<128x3xbf16>, vector<3x128xbf16>, vector<128x128xf32> -> vector<128x128xf32>
    %155 = arith.addf %148, %154 : vector<128x128xf32>
    %156 = vector.extract_strided_slice %0 {offsets = [3, 1, 0, 0], sizes = [1, 8, 16, 3], strides = [1, 1, 1, 1]} : vector<4x11x19x3xbf16> to vector<1x8x16x3xbf16>
    %157 = vector.shape_cast %156 : vector<1x8x16x3xbf16> to vector<8x16x3xbf16>
    %158 = vector.shape_cast %157 : vector<8x16x3xbf16> to vector<128x3xbf16>
    %c22 = arith.constant 22 : index
    %c0_70 = arith.constant 0 : index
    %c0_71 = arith.constant 0 : index
    %159 = vector.load %arg2[%c22, %c0_70, %c0_71] : memref<49x3x128xbf16, #tpu.memory_space<vmem>>, vector<1x3x128xbf16>
    %160 = vector.shape_cast %159 : vector<1x3x128xbf16> to vector<3x128xbf16>
    %cst_72 = arith.constant dense<0.000000e+00> : vector<128x128xf32>
    %161 = tpu.matmul %158, %160, %cst_72 {dimension_numbers = #tpu.dot_dimension_numbers<[1], [0], [0], [1], [0, 0, 1, 1], [], []>} : vector<128x3xbf16>, vector<3x128xbf16>, vector<128x128xf32> -> vector<128x128xf32>
    %162 = arith.addf %155, %161 : vector<128x128xf32>
    %163 = vector.extract_strided_slice %0 {offsets = [2, 1, 1, 0], sizes = [1, 8, 16, 3], strides = [1, 1, 1, 1]} : vector<4x11x19x3xbf16> to vector<1x8x16x3xbf16>
    %164 = vector.shape_cast %163 : vector<1x8x16x3xbf16> to vector<8x16x3xbf16>
    %165 = vector.shape_cast %164 : vector<8x16x3xbf16> to vector<128x3xbf16>
    %c23 = arith.constant 23 : index
    %c0_73 = arith.constant 0 : index
    %c0_74 = arith.constant 0 : index
    %166 = vector.load %arg2[%c23, %c0_73, %c0_74] : memref<49x3x128xbf16, #tpu.memory_space<vmem>>, vector<1x3x128xbf16>
    %167 = vector.shape_cast %166 : vector<1x3x128xbf16> to vector<3x128xbf16>
    %cst_75 = arith.constant dense<0.000000e+00> : vector<128x128xf32>
    %168 = tpu.matmul %165, %167, %cst_75 {dimension_numbers = #tpu.dot_dimension_numbers<[1], [0], [0], [1], [0, 0, 1, 1], [], []>} : vector<128x3xbf16>, vector<3x128xbf16>, vector<128x128xf32> -> vector<128x128xf32>
    %169 = arith.addf %162, %168 : vector<128x128xf32>
    %170 = vector.extract_strided_slice %0 {offsets = [3, 1, 1, 0], sizes = [1, 8, 16, 3], strides = [1, 1, 1, 1]} : vector<4x11x19x3xbf16> to vector<1x8x16x3xbf16>
    %171 = vector.shape_cast %170 : vector<1x8x16x3xbf16> to vector<8x16x3xbf16>
    %172 = vector.shape_cast %171 : vector<8x16x3xbf16> to vector<128x3xbf16>
    %c24 = arith.constant 24 : index
    %c0_76 = arith.constant 0 : index
    %c0_77 = arith.constant 0 : index
    %173 = vector.load %arg2[%c24, %c0_76, %c0_77] : memref<49x3x128xbf16, #tpu.memory_space<vmem>>, vector<1x3x128xbf16>
    %174 = vector.shape_cast %173 : vector<1x3x128xbf16> to vector<3x128xbf16>
    %cst_78 = arith.constant dense<0.000000e+00> : vector<128x128xf32>
    %175 = tpu.matmul %172, %174, %cst_78 {dimension_numbers = #tpu.dot_dimension_numbers<[1], [0], [0], [1], [0, 0, 1, 1], [], []>} : vector<128x3xbf16>, vector<3x128xbf16>, vector<128x128xf32> -> vector<128x128xf32>
    %176 = arith.addf %169, %175 : vector<128x128xf32>
    %177 = vector.extract_strided_slice %0 {offsets = [2, 1, 2, 0], sizes = [1, 8, 16, 3], strides = [1, 1, 1, 1]} : vector<4x11x19x3xbf16> to vector<1x8x16x3xbf16>
    %178 = vector.shape_cast %177 : vector<1x8x16x3xbf16> to vector<8x16x3xbf16>
    %179 = vector.shape_cast %178 : vector<8x16x3xbf16> to vector<128x3xbf16>
    %c25 = arith.constant 25 : index
    %c0_79 = arith.constant 0 : index
    %c0_80 = arith.constant 0 : index
    %180 = vector.load %arg2[%c25, %c0_79, %c0_80] : memref<49x3x128xbf16, #tpu.memory_space<vmem>>, vector<1x3x128xbf16>
    %181 = vector.shape_cast %180 : vector<1x3x128xbf16> to vector<3x128xbf16>
    %cst_81 = arith.constant dense<0.000000e+00> : vector<128x128xf32>
    %182 = tpu.matmul %179, %181, %cst_81 {dimension_numbers = #tpu.dot_dimension_numbers<[1], [0], [0], [1], [0, 0, 1, 1], [], []>} : vector<128x3xbf16>, vector<3x128xbf16>, vector<128x128xf32> -> vector<128x128xf32>
    %183 = arith.addf %176, %182 : vector<128x128xf32>
    %184 = vector.extract_strided_slice %0 {offsets = [3, 1, 2, 0], sizes = [1, 8, 16, 3], strides = [1, 1, 1, 1]} : vector<4x11x19x3xbf16> to vector<1x8x16x3xbf16>
    %185 = vector.shape_cast %184 : vector<1x8x16x3xbf16> to vector<8x16x3xbf16>
    %186 = vector.shape_cast %185 : vector<8x16x3xbf16> to vector<128x3xbf16>
    %c26 = arith.constant 26 : index
    %c0_82 = arith.constant 0 : index
    %c0_83 = arith.constant 0 : index
    %187 = vector.load %arg2[%c26, %c0_82, %c0_83] : memref<49x3x128xbf16, #tpu.memory_space<vmem>>, vector<1x3x128xbf16>
    %188 = vector.shape_cast %187 : vector<1x3x128xbf16> to vector<3x128xbf16>
    %cst_84 = arith.constant dense<0.000000e+00> : vector<128x128xf32>
    %189 = tpu.matmul %186, %188, %cst_84 {dimension_numbers = #tpu.dot_dimension_numbers<[1], [0], [0], [1], [0, 0, 1, 1], [], []>} : vector<128x3xbf16>, vector<3x128xbf16>, vector<128x128xf32> -> vector<128x128xf32>
    %190 = arith.addf %183, %189 : vector<128x128xf32>
    %191 = vector.extract_strided_slice %0 {offsets = [2, 1, 3, 0], sizes = [1, 8, 16, 3], strides = [1, 1, 1, 1]} : vector<4x11x19x3xbf16> to vector<1x8x16x3xbf16>
    %192 = vector.shape_cast %191 : vector<1x8x16x3xbf16> to vector<8x16x3xbf16>
    %193 = vector.shape_cast %192 : vector<8x16x3xbf16> to vector<128x3xbf16>
    %c27 = arith.constant 27 : index
    %c0_85 = arith.constant 0 : index
    %c0_86 = arith.constant 0 : index
    %194 = vector.load %arg2[%c27, %c0_85, %c0_86] : memref<49x3x128xbf16, #tpu.memory_space<vmem>>, vector<1x3x128xbf16>
    %195 = vector.shape_cast %194 : vector<1x3x128xbf16> to vector<3x128xbf16>
    %cst_87 = arith.constant dense<0.000000e+00> : vector<128x128xf32>
    %196 = tpu.matmul %193, %195, %cst_87 {dimension_numbers = #tpu.dot_dimension_numbers<[1], [0], [0], [1], [0, 0, 1, 1], [], []>} : vector<128x3xbf16>, vector<3x128xbf16>, vector<128x128xf32> -> vector<128x128xf32>
    %197 = arith.addf %190, %196 : vector<128x128xf32>
    %198 = vector.extract_strided_slice %0 {offsets = [0, 2, 0, 0], sizes = [1, 8, 16, 3], strides = [1, 1, 1, 1]} : vector<4x11x19x3xbf16> to vector<1x8x16x3xbf16>
    %199 = vector.shape_cast %198 : vector<1x8x16x3xbf16> to vector<8x16x3xbf16>
    %200 = vector.shape_cast %199 : vector<8x16x3xbf16> to vector<128x3xbf16>
    %c28 = arith.constant 28 : index
    %c0_88 = arith.constant 0 : index
    %c0_89 = arith.constant 0 : index
    %201 = vector.load %arg2[%c28, %c0_88, %c0_89] : memref<49x3x128xbf16, #tpu.memory_space<vmem>>, vector<1x3x128xbf16>
    %202 = vector.shape_cast %201 : vector<1x3x128xbf16> to vector<3x128xbf16>
    %cst_90 = arith.constant dense<0.000000e+00> : vector<128x128xf32>
    %203 = tpu.matmul %200, %202, %cst_90 {dimension_numbers = #tpu.dot_dimension_numbers<[1], [0], [0], [1], [0, 0, 1, 1], [], []>} : vector<128x3xbf16>, vector<3x128xbf16>, vector<128x128xf32> -> vector<128x128xf32>
    %204 = arith.addf %197, %203 : vector<128x128xf32>
    %205 = vector.extract_strided_slice %0 {offsets = [1, 2, 0, 0], sizes = [1, 8, 16, 3], strides = [1, 1, 1, 1]} : vector<4x11x19x3xbf16> to vector<1x8x16x3xbf16>
    %206 = vector.shape_cast %205 : vector<1x8x16x3xbf16> to vector<8x16x3xbf16>
    %207 = vector.shape_cast %206 : vector<8x16x3xbf16> to vector<128x3xbf16>
    %c29 = arith.constant 29 : index
    %c0_91 = arith.constant 0 : index
    %c0_92 = arith.constant 0 : index
    %208 = vector.load %arg2[%c29, %c0_91, %c0_92] : memref<49x3x128xbf16, #tpu.memory_space<vmem>>, vector<1x3x128xbf16>
    %209 = vector.shape_cast %208 : vector<1x3x128xbf16> to vector<3x128xbf16>
    %cst_93 = arith.constant dense<0.000000e+00> : vector<128x128xf32>
    %210 = tpu.matmul %207, %209, %cst_93 {dimension_numbers = #tpu.dot_dimension_numbers<[1], [0], [0], [1], [0, 0, 1, 1], [], []>} : vector<128x3xbf16>, vector<3x128xbf16>, vector<128x128xf32> -> vector<128x128xf32>
    %211 = arith.addf %204, %210 : vector<128x128xf32>
    %212 = vector.extract_strided_slice %0 {offsets = [0, 2, 1, 0], sizes = [1, 8, 16, 3], strides = [1, 1, 1, 1]} : vector<4x11x19x3xbf16> to vector<1x8x16x3xbf16>
    %213 = vector.shape_cast %212 : vector<1x8x16x3xbf16> to vector<8x16x3xbf16>
    %214 = vector.shape_cast %213 : vector<8x16x3xbf16> to vector<128x3xbf16>
    %c30 = arith.constant 30 : index
    %c0_94 = arith.constant 0 : index
    %c0_95 = arith.constant 0 : index
    %215 = vector.load %arg2[%c30, %c0_94, %c0_95] : memref<49x3x128xbf16, #tpu.memory_space<vmem>>, vector<1x3x128xbf16>
    %216 = vector.shape_cast %215 : vector<1x3x128xbf16> to vector<3x128xbf16>
    %cst_96 = arith.constant dense<0.000000e+00> : vector<128x128xf32>
    %217 = tpu.matmul %214, %216, %cst_96 {dimension_numbers = #tpu.dot_dimension_numbers<[1], [0], [0], [1], [0, 0, 1, 1], [], []>} : vector<128x3xbf16>, vector<3x128xbf16>, vector<128x128xf32> -> vector<128x128xf32>
    %218 = arith.addf %211, %217 : vector<128x128xf32>
    %219 = vector.extract_strided_slice %0 {offsets = [1, 2, 1, 0], sizes = [1, 8, 16, 3], strides = [1, 1, 1, 1]} : vector<4x11x19x3xbf16> to vector<1x8x16x3xbf16>
    %220 = vector.shape_cast %219 : vector<1x8x16x3xbf16> to vector<8x16x3xbf16>
    %221 = vector.shape_cast %220 : vector<8x16x3xbf16> to vector<128x3xbf16>
    %c31 = arith.constant 31 : index
    %c0_97 = arith.constant 0 : index
    %c0_98 = arith.constant 0 : index
    %222 = vector.load %arg2[%c31, %c0_97, %c0_98] : memref<49x3x128xbf16, #tpu.memory_space<vmem>>, vector<1x3x128xbf16>
    %223 = vector.shape_cast %222 : vector<1x3x128xbf16> to vector<3x128xbf16>
    %cst_99 = arith.constant dense<0.000000e+00> : vector<128x128xf32>
    %224 = tpu.matmul %221, %223, %cst_99 {dimension_numbers = #tpu.dot_dimension_numbers<[1], [0], [0], [1], [0, 0, 1, 1], [], []>} : vector<128x3xbf16>, vector<3x128xbf16>, vector<128x128xf32> -> vector<128x128xf32>
    %225 = arith.addf %218, %224 : vector<128x128xf32>
    %226 = vector.extract_strided_slice %0 {offsets = [0, 2, 2, 0], sizes = [1, 8, 16, 3], strides = [1, 1, 1, 1]} : vector<4x11x19x3xbf16> to vector<1x8x16x3xbf16>
    %227 = vector.shape_cast %226 : vector<1x8x16x3xbf16> to vector<8x16x3xbf16>
    %228 = vector.shape_cast %227 : vector<8x16x3xbf16> to vector<128x3xbf16>
    %c32 = arith.constant 32 : index
    %c0_100 = arith.constant 0 : index
    %c0_101 = arith.constant 0 : index
    %229 = vector.load %arg2[%c32, %c0_100, %c0_101] : memref<49x3x128xbf16, #tpu.memory_space<vmem>>, vector<1x3x128xbf16>
    %230 = vector.shape_cast %229 : vector<1x3x128xbf16> to vector<3x128xbf16>
    %cst_102 = arith.constant dense<0.000000e+00> : vector<128x128xf32>
    %231 = tpu.matmul %228, %230, %cst_102 {dimension_numbers = #tpu.dot_dimension_numbers<[1], [0], [0], [1], [0, 0, 1, 1], [], []>} : vector<128x3xbf16>, vector<3x128xbf16>, vector<128x128xf32> -> vector<128x128xf32>
    %232 = arith.addf %225, %231 : vector<128x128xf32>
    %233 = vector.extract_strided_slice %0 {offsets = [1, 2, 2, 0], sizes = [1, 8, 16, 3], strides = [1, 1, 1, 1]} : vector<4x11x19x3xbf16> to vector<1x8x16x3xbf16>
    %234 = vector.shape_cast %233 : vector<1x8x16x3xbf16> to vector<8x16x3xbf16>
    %235 = vector.shape_cast %234 : vector<8x16x3xbf16> to vector<128x3xbf16>
    %c33 = arith.constant 33 : index
    %c0_103 = arith.constant 0 : index
    %c0_104 = arith.constant 0 : index
    %236 = vector.load %arg2[%c33, %c0_103, %c0_104] : memref<49x3x128xbf16, #tpu.memory_space<vmem>>, vector<1x3x128xbf16>
    %237 = vector.shape_cast %236 : vector<1x3x128xbf16> to vector<3x128xbf16>
    %cst_105 = arith.constant dense<0.000000e+00> : vector<128x128xf32>
    %238 = tpu.matmul %235, %237, %cst_105 {dimension_numbers = #tpu.dot_dimension_numbers<[1], [0], [0], [1], [0, 0, 1, 1], [], []>} : vector<128x3xbf16>, vector<3x128xbf16>, vector<128x128xf32> -> vector<128x128xf32>
    %239 = arith.addf %232, %238 : vector<128x128xf32>
    %240 = vector.extract_strided_slice %0 {offsets = [0, 2, 3, 0], sizes = [1, 8, 16, 3], strides = [1, 1, 1, 1]} : vector<4x11x19x3xbf16> to vector<1x8x16x3xbf16>
    %241 = vector.shape_cast %240 : vector<1x8x16x3xbf16> to vector<8x16x3xbf16>
    %242 = vector.shape_cast %241 : vector<8x16x3xbf16> to vector<128x3xbf16>
    %c34 = arith.constant 34 : index
    %c0_106 = arith.constant 0 : index
    %c0_107 = arith.constant 0 : index
    %243 = vector.load %arg2[%c34, %c0_106, %c0_107] : memref<49x3x128xbf16, #tpu.memory_space<vmem>>, vector<1x3x128xbf16>
    %244 = vector.shape_cast %243 : vector<1x3x128xbf16> to vector<3x128xbf16>
    %cst_108 = arith.constant dense<0.000000e+00> : vector<128x128xf32>
    %245 = tpu.matmul %242, %244, %cst_108 {dimension_numbers = #tpu.dot_dimension_numbers<[1], [0], [0], [1], [0, 0, 1, 1], [], []>} : vector<128x3xbf16>, vector<3x128xbf16>, vector<128x128xf32> -> vector<128x128xf32>
    %246 = arith.addf %239, %245 : vector<128x128xf32>
    %247 = vector.extract_strided_slice %0 {offsets = [2, 2, 0, 0], sizes = [1, 8, 16, 3], strides = [1, 1, 1, 1]} : vector<4x11x19x3xbf16> to vector<1x8x16x3xbf16>
    %248 = vector.shape_cast %247 : vector<1x8x16x3xbf16> to vector<8x16x3xbf16>
    %249 = vector.shape_cast %248 : vector<8x16x3xbf16> to vector<128x3xbf16>
    %c35 = arith.constant 35 : index
    %c0_109 = arith.constant 0 : index
    %c0_110 = arith.constant 0 : index
    %250 = vector.load %arg2[%c35, %c0_109, %c0_110] : memref<49x3x128xbf16, #tpu.memory_space<vmem>>, vector<1x3x128xbf16>
    %251 = vector.shape_cast %250 : vector<1x3x128xbf16> to vector<3x128xbf16>
    %cst_111 = arith.constant dense<0.000000e+00> : vector<128x128xf32>
    %252 = tpu.matmul %249, %251, %cst_111 {dimension_numbers = #tpu.dot_dimension_numbers<[1], [0], [0], [1], [0, 0, 1, 1], [], []>} : vector<128x3xbf16>, vector<3x128xbf16>, vector<128x128xf32> -> vector<128x128xf32>
    %253 = arith.addf %246, %252 : vector<128x128xf32>
    %254 = vector.extract_strided_slice %0 {offsets = [3, 2, 0, 0], sizes = [1, 8, 16, 3], strides = [1, 1, 1, 1]} : vector<4x11x19x3xbf16> to vector<1x8x16x3xbf16>
    %255 = vector.shape_cast %254 : vector<1x8x16x3xbf16> to vector<8x16x3xbf16>
    %256 = vector.shape_cast %255 : vector<8x16x3xbf16> to vector<128x3xbf16>
    %c36 = arith.constant 36 : index
    %c0_112 = arith.constant 0 : index
    %c0_113 = arith.constant 0 : index
    %257 = vector.load %arg2[%c36, %c0_112, %c0_113] : memref<49x3x128xbf16, #tpu.memory_space<vmem>>, vector<1x3x128xbf16>
    %258 = vector.shape_cast %257 : vector<1x3x128xbf16> to vector<3x128xbf16>
    %cst_114 = arith.constant dense<0.000000e+00> : vector<128x128xf32>
    %259 = tpu.matmul %256, %258, %cst_114 {dimension_numbers = #tpu.dot_dimension_numbers<[1], [0], [0], [1], [0, 0, 1, 1], [], []>} : vector<128x3xbf16>, vector<3x128xbf16>, vector<128x128xf32> -> vector<128x128xf32>
    %260 = arith.addf %253, %259 : vector<128x128xf32>
    %261 = vector.extract_strided_slice %0 {offsets = [2, 2, 1, 0], sizes = [1, 8, 16, 3], strides = [1, 1, 1, 1]} : vector<4x11x19x3xbf16> to vector<1x8x16x3xbf16>
    %262 = vector.shape_cast %261 : vector<1x8x16x3xbf16> to vector<8x16x3xbf16>
    %263 = vector.shape_cast %262 : vector<8x16x3xbf16> to vector<128x3xbf16>
    %c37 = arith.constant 37 : index
    %c0_115 = arith.constant 0 : index
    %c0_116 = arith.constant 0 : index
    %264 = vector.load %arg2[%c37, %c0_115, %c0_116] : memref<49x3x128xbf16, #tpu.memory_space<vmem>>, vector<1x3x128xbf16>
    %265 = vector.shape_cast %264 : vector<1x3x128xbf16> to vector<3x128xbf16>
    %cst_117 = arith.constant dense<0.000000e+00> : vector<128x128xf32>
    %266 = tpu.matmul %263, %265, %cst_117 {dimension_numbers = #tpu.dot_dimension_numbers<[1], [0], [0], [1], [0, 0, 1, 1], [], []>} : vector<128x3xbf16>, vector<3x128xbf16>, vector<128x128xf32> -> vector<128x128xf32>
    %267 = arith.addf %260, %266 : vector<128x128xf32>
    %268 = vector.extract_strided_slice %0 {offsets = [3, 2, 1, 0], sizes = [1, 8, 16, 3], strides = [1, 1, 1, 1]} : vector<4x11x19x3xbf16> to vector<1x8x16x3xbf16>
    %269 = vector.shape_cast %268 : vector<1x8x16x3xbf16> to vector<8x16x3xbf16>
    %270 = vector.shape_cast %269 : vector<8x16x3xbf16> to vector<128x3xbf16>
    %c38 = arith.constant 38 : index
    %c0_118 = arith.constant 0 : index
    %c0_119 = arith.constant 0 : index
    %271 = vector.load %arg2[%c38, %c0_118, %c0_119] : memref<49x3x128xbf16, #tpu.memory_space<vmem>>, vector<1x3x128xbf16>
    %272 = vector.shape_cast %271 : vector<1x3x128xbf16> to vector<3x128xbf16>
    %cst_120 = arith.constant dense<0.000000e+00> : vector<128x128xf32>
    %273 = tpu.matmul %270, %272, %cst_120 {dimension_numbers = #tpu.dot_dimension_numbers<[1], [0], [0], [1], [0, 0, 1, 1], [], []>} : vector<128x3xbf16>, vector<3x128xbf16>, vector<128x128xf32> -> vector<128x128xf32>
    %274 = arith.addf %267, %273 : vector<128x128xf32>
    %275 = vector.extract_strided_slice %0 {offsets = [2, 2, 2, 0], sizes = [1, 8, 16, 3], strides = [1, 1, 1, 1]} : vector<4x11x19x3xbf16> to vector<1x8x16x3xbf16>
    %276 = vector.shape_cast %275 : vector<1x8x16x3xbf16> to vector<8x16x3xbf16>
    %277 = vector.shape_cast %276 : vector<8x16x3xbf16> to vector<128x3xbf16>
    %c39 = arith.constant 39 : index
    %c0_121 = arith.constant 0 : index
    %c0_122 = arith.constant 0 : index
    %278 = vector.load %arg2[%c39, %c0_121, %c0_122] : memref<49x3x128xbf16, #tpu.memory_space<vmem>>, vector<1x3x128xbf16>
    %279 = vector.shape_cast %278 : vector<1x3x128xbf16> to vector<3x128xbf16>
    %cst_123 = arith.constant dense<0.000000e+00> : vector<128x128xf32>
    %280 = tpu.matmul %277, %279, %cst_123 {dimension_numbers = #tpu.dot_dimension_numbers<[1], [0], [0], [1], [0, 0, 1, 1], [], []>} : vector<128x3xbf16>, vector<3x128xbf16>, vector<128x128xf32> -> vector<128x128xf32>
    %281 = arith.addf %274, %280 : vector<128x128xf32>
    %282 = vector.extract_strided_slice %0 {offsets = [3, 2, 2, 0], sizes = [1, 8, 16, 3], strides = [1, 1, 1, 1]} : vector<4x11x19x3xbf16> to vector<1x8x16x3xbf16>
    %283 = vector.shape_cast %282 : vector<1x8x16x3xbf16> to vector<8x16x3xbf16>
    %284 = vector.shape_cast %283 : vector<8x16x3xbf16> to vector<128x3xbf16>
    %c40 = arith.constant 40 : index
    %c0_124 = arith.constant 0 : index
    %c0_125 = arith.constant 0 : index
    %285 = vector.load %arg2[%c40, %c0_124, %c0_125] : memref<49x3x128xbf16, #tpu.memory_space<vmem>>, vector<1x3x128xbf16>
    %286 = vector.shape_cast %285 : vector<1x3x128xbf16> to vector<3x128xbf16>
    %cst_126 = arith.constant dense<0.000000e+00> : vector<128x128xf32>
    %287 = tpu.matmul %284, %286, %cst_126 {dimension_numbers = #tpu.dot_dimension_numbers<[1], [0], [0], [1], [0, 0, 1, 1], [], []>} : vector<128x3xbf16>, vector<3x128xbf16>, vector<128x128xf32> -> vector<128x128xf32>
    %288 = arith.addf %281, %287 : vector<128x128xf32>
    %289 = vector.extract_strided_slice %0 {offsets = [2, 2, 3, 0], sizes = [1, 8, 16, 3], strides = [1, 1, 1, 1]} : vector<4x11x19x3xbf16> to vector<1x8x16x3xbf16>
    %290 = vector.shape_cast %289 : vector<1x8x16x3xbf16> to vector<8x16x3xbf16>
    %291 = vector.shape_cast %290 : vector<8x16x3xbf16> to vector<128x3xbf16>
    %c41 = arith.constant 41 : index
    %c0_127 = arith.constant 0 : index
    %c0_128 = arith.constant 0 : index
    %292 = vector.load %arg2[%c41, %c0_127, %c0_128] : memref<49x3x128xbf16, #tpu.memory_space<vmem>>, vector<1x3x128xbf16>
    %293 = vector.shape_cast %292 : vector<1x3x128xbf16> to vector<3x128xbf16>
    %cst_129 = arith.constant dense<0.000000e+00> : vector<128x128xf32>
    %294 = tpu.matmul %291, %293, %cst_129 {dimension_numbers = #tpu.dot_dimension_numbers<[1], [0], [0], [1], [0, 0, 1, 1], [], []>} : vector<128x3xbf16>, vector<3x128xbf16>, vector<128x128xf32> -> vector<128x128xf32>
    %295 = arith.addf %288, %294 : vector<128x128xf32>
    %296 = vector.extract_strided_slice %0 {offsets = [0, 3, 0, 0], sizes = [1, 8, 16, 3], strides = [1, 1, 1, 1]} : vector<4x11x19x3xbf16> to vector<1x8x16x3xbf16>
    %297 = vector.shape_cast %296 : vector<1x8x16x3xbf16> to vector<8x16x3xbf16>
    %298 = vector.shape_cast %297 : vector<8x16x3xbf16> to vector<128x3xbf16>
    %c42 = arith.constant 42 : index
    %c0_130 = arith.constant 0 : index
    %c0_131 = arith.constant 0 : index
    %299 = vector.load %arg2[%c42, %c0_130, %c0_131] : memref<49x3x128xbf16, #tpu.memory_space<vmem>>, vector<1x3x128xbf16>
    %300 = vector.shape_cast %299 : vector<1x3x128xbf16> to vector<3x128xbf16>
    %cst_132 = arith.constant dense<0.000000e+00> : vector<128x128xf32>
    %301 = tpu.matmul %298, %300, %cst_132 {dimension_numbers = #tpu.dot_dimension_numbers<[1], [0], [0], [1], [0, 0, 1, 1], [], []>} : vector<128x3xbf16>, vector<3x128xbf16>, vector<128x128xf32> -> vector<128x128xf32>
    %302 = arith.addf %295, %301 : vector<128x128xf32>
    %303 = vector.extract_strided_slice %0 {offsets = [1, 3, 0, 0], sizes = [1, 8, 16, 3], strides = [1, 1, 1, 1]} : vector<4x11x19x3xbf16> to vector<1x8x16x3xbf16>
    %304 = vector.shape_cast %303 : vector<1x8x16x3xbf16> to vector<8x16x3xbf16>
    %305 = vector.shape_cast %304 : vector<8x16x3xbf16> to vector<128x3xbf16>
    %c43 = arith.constant 43 : index
    %c0_133 = arith.constant 0 : index
    %c0_134 = arith.constant 0 : index
    %306 = vector.load %arg2[%c43, %c0_133, %c0_134] : memref<49x3x128xbf16, #tpu.memory_space<vmem>>, vector<1x3x128xbf16>
    %307 = vector.shape_cast %306 : vector<1x3x128xbf16> to vector<3x128xbf16>
    %cst_135 = arith.constant dense<0.000000e+00> : vector<128x128xf32>
    %308 = tpu.matmul %305, %307, %cst_135 {dimension_numbers = #tpu.dot_dimension_numbers<[1], [0], [0], [1], [0, 0, 1, 1], [], []>} : vector<128x3xbf16>, vector<3x128xbf16>, vector<128x128xf32> -> vector<128x128xf32>
    %309 = arith.addf %302, %308 : vector<128x128xf32>
    %310 = vector.extract_strided_slice %0 {offsets = [0, 3, 1, 0], sizes = [1, 8, 16, 3], strides = [1, 1, 1, 1]} : vector<4x11x19x3xbf16> to vector<1x8x16x3xbf16>
    %311 = vector.shape_cast %310 : vector<1x8x16x3xbf16> to vector<8x16x3xbf16>
    %312 = vector.shape_cast %311 : vector<8x16x3xbf16> to vector<128x3xbf16>
    %c44 = arith.constant 44 : index
    %c0_136 = arith.constant 0 : index
    %c0_137 = arith.constant 0 : index
    %313 = vector.load %arg2[%c44, %c0_136, %c0_137] : memref<49x3x128xbf16, #tpu.memory_space<vmem>>, vector<1x3x128xbf16>
    %314 = vector.shape_cast %313 : vector<1x3x128xbf16> to vector<3x128xbf16>
    %cst_138 = arith.constant dense<0.000000e+00> : vector<128x128xf32>
    %315 = tpu.matmul %312, %314, %cst_138 {dimension_numbers = #tpu.dot_dimension_numbers<[1], [0], [0], [1], [0, 0, 1, 1], [], []>} : vector<128x3xbf16>, vector<3x128xbf16>, vector<128x128xf32> -> vector<128x128xf32>
    %316 = arith.addf %309, %315 : vector<128x128xf32>
    %317 = vector.extract_strided_slice %0 {offsets = [1, 3, 1, 0], sizes = [1, 8, 16, 3], strides = [1, 1, 1, 1]} : vector<4x11x19x3xbf16> to vector<1x8x16x3xbf16>
    %318 = vector.shape_cast %317 : vector<1x8x16x3xbf16> to vector<8x16x3xbf16>
    %319 = vector.shape_cast %318 : vector<8x16x3xbf16> to vector<128x3xbf16>
    %c45 = arith.constant 45 : index
    %c0_139 = arith.constant 0 : index
    %c0_140 = arith.constant 0 : index
    %320 = vector.load %arg2[%c45, %c0_139, %c0_140] : memref<49x3x128xbf16, #tpu.memory_space<vmem>>, vector<1x3x128xbf16>
    %321 = vector.shape_cast %320 : vector<1x3x128xbf16> to vector<3x128xbf16>
    %cst_141 = arith.constant dense<0.000000e+00> : vector<128x128xf32>
    %322 = tpu.matmul %319, %321, %cst_141 {dimension_numbers = #tpu.dot_dimension_numbers<[1], [0], [0], [1], [0, 0, 1, 1], [], []>} : vector<128x3xbf16>, vector<3x128xbf16>, vector<128x128xf32> -> vector<128x128xf32>
    %323 = arith.addf %316, %322 : vector<128x128xf32>
    %324 = vector.extract_strided_slice %0 {offsets = [0, 3, 2, 0], sizes = [1, 8, 16, 3], strides = [1, 1, 1, 1]} : vector<4x11x19x3xbf16> to vector<1x8x16x3xbf16>
    %325 = vector.shape_cast %324 : vector<1x8x16x3xbf16> to vector<8x16x3xbf16>
    %326 = vector.shape_cast %325 : vector<8x16x3xbf16> to vector<128x3xbf16>
    %c46 = arith.constant 46 : index
    %c0_142 = arith.constant 0 : index
    %c0_143 = arith.constant 0 : index
    %327 = vector.load %arg2[%c46, %c0_142, %c0_143] : memref<49x3x128xbf16, #tpu.memory_space<vmem>>, vector<1x3x128xbf16>
    %328 = vector.shape_cast %327 : vector<1x3x128xbf16> to vector<3x128xbf16>
    %cst_144 = arith.constant dense<0.000000e+00> : vector<128x128xf32>
    %329 = tpu.matmul %326, %328, %cst_144 {dimension_numbers = #tpu.dot_dimension_numbers<[1], [0], [0], [1], [0, 0, 1, 1], [], []>} : vector<128x3xbf16>, vector<3x128xbf16>, vector<128x128xf32> -> vector<128x128xf32>
    %330 = arith.addf %323, %329 : vector<128x128xf32>
    %331 = vector.extract_strided_slice %0 {offsets = [1, 3, 2, 0], sizes = [1, 8, 16, 3], strides = [1, 1, 1, 1]} : vector<4x11x19x3xbf16> to vector<1x8x16x3xbf16>
    %332 = vector.shape_cast %331 : vector<1x8x16x3xbf16> to vector<8x16x3xbf16>
    %333 = vector.shape_cast %332 : vector<8x16x3xbf16> to vector<128x3xbf16>
    %c47 = arith.constant 47 : index
    %c0_145 = arith.constant 0 : index
    %c0_146 = arith.constant 0 : index
    %334 = vector.load %arg2[%c47, %c0_145, %c0_146] : memref<49x3x128xbf16, #tpu.memory_space<vmem>>, vector<1x3x128xbf16>
    %335 = vector.shape_cast %334 : vector<1x3x128xbf16> to vector<3x128xbf16>
    %cst_147 = arith.constant dense<0.000000e+00> : vector<128x128xf32>
    %336 = tpu.matmul %333, %335, %cst_147 {dimension_numbers = #tpu.dot_dimension_numbers<[1], [0], [0], [1], [0, 0, 1, 1], [], []>} : vector<128x3xbf16>, vector<3x128xbf16>, vector<128x128xf32> -> vector<128x128xf32>
    %337 = arith.addf %330, %336 : vector<128x128xf32>
    %338 = vector.extract_strided_slice %0 {offsets = [0, 3, 3, 0], sizes = [1, 8, 16, 3], strides = [1, 1, 1, 1]} : vector<4x11x19x3xbf16> to vector<1x8x16x3xbf16>
    %339 = vector.shape_cast %338 : vector<1x8x16x3xbf16> to vector<8x16x3xbf16>
    %340 = vector.shape_cast %339 : vector<8x16x3xbf16> to vector<128x3xbf16>
    %c48 = arith.constant 48 : index
    %c0_148 = arith.constant 0 : index
    %c0_149 = arith.constant 0 : index
    %341 = vector.load %arg2[%c48, %c0_148, %c0_149] : memref<49x3x128xbf16, #tpu.memory_space<vmem>>, vector<1x3x128xbf16>
    %342 = vector.shape_cast %341 : vector<1x3x128xbf16> to vector<3x128xbf16>
    %cst_150 = arith.constant dense<0.000000e+00> : vector<128x128xf32>
    %343 = tpu.matmul %340, %342, %cst_150 {dimension_numbers = #tpu.dot_dimension_numbers<[1], [0], [0], [1], [0, 0, 1, 1], [], []>} : vector<128x3xbf16>, vector<3x128xbf16>, vector<128x128xf32> -> vector<128x128xf32>
    %344 = arith.addf %337, %343 : vector<128x128xf32>
    %c0_151 = arith.constant 0 : index
    %c0_152 = arith.constant 0 : index
    %345 = vector.load %arg3[%c0_151, %c0_152] : memref<1x128xf32, #tpu.memory_space<vmem>>, vector<1x128xf32>
    %346 = vector.broadcast %345 : vector<1x128xf32> to vector<128x128xf32>
    %347 = arith.mulf %344, %346 : vector<128x128xf32>
    %c0_153 = arith.constant 0 : index
    %c0_154 = arith.constant 0 : index
    %348 = vector.load %arg4[%c0_153, %c0_154] : memref<1x128xf32, #tpu.memory_space<vmem>>, vector<1x128xf32>
    %349 = vector.broadcast %348 : vector<1x128xf32> to vector<128x128xf32>
    %350 = arith.addf %347, %349 : vector<128x128xf32>
    %cst_155 = arith.constant 0.000000e+00 : f32
    %351 = vector.broadcast %cst_155 : f32 to vector<128x128xf32>
    %352 = arith.maximumf %350, %351 : vector<128x128xf32>
    %353 = arith.truncf %352 : vector<128x128xf32> to vector<128x128xbf16>
    %c0_156 = arith.constant 0 : index
    %c0_157 = arith.constant 0 : index
    %c0_158 = arith.constant 0 : index
    %354 = vector.load %arg5[%c0_156, %c0_157, %c0_158] : memref<1x128x128xbf16, #tpu.memory_space<vmem>>, vector<1x128x128xbf16>
    %355 = vector.shape_cast %354 : vector<1x128x128xbf16> to vector<128x128xbf16>
    %356 = vector.shape_cast %353 : vector<128x128xbf16> to vector<1x128x128xbf16>
    tpu.vector_store %arg5[%c0_156, %c0_157, %c0_158], %356 {strides = array<i32>} : memref<1x128x128xbf16, #tpu.memory_space<vmem>>, vector<1x128x128xbf16>,
    return
  }
  func.func @transform_0(%arg0: i32) -> (i32, i32, i32, i32) {
    %c0_i32 = arith.constant 0 : i32
    %c0_i32_0 = arith.constant 0 : i32
    %c0_i32_1 = arith.constant 0 : i32
    %c0_i32_2 = arith.constant 0 : i32
    return %arg0, %c0_i32, %c0_i32_0, %c0_i32_1 : i32, i32, i32, i32
  }
  func.func @transform_1(%arg0: i32) -> (i32, i32, i32) {
    %c0_i32 = arith.constant 0 : i32
    %c0_i32_0 = arith.constant 0 : i32
    %c0_i32_1 = arith.constant 0 : i32
    %c0_i32_2 = arith.constant 0 : i32
    return %c0_i32, %c0_i32_0, %c0_i32_1 : i32, i32, i32
  }
  func.func @transform_2(%arg0: i32) -> (i32, i32) {
    %c0_i32 = arith.constant 0 : i32
    %c0_i32_0 = arith.constant 0 : i32
    %c0_i32_1 = arith.constant 0 : i32
    return %c0_i32, %c0_i32_0 : i32, i32
  }
  func.func @transform_3(%arg0: i32) -> (i32, i32) {
    %c0_i32 = arith.constant 0 : i32
    %c0_i32_0 = arith.constant 0 : i32
    %c0_i32_1 = arith.constant 0 : i32
    return %c0_i32, %c0_i32_0 : i32, i32
  }
  func.func @transform_4(%arg0: i32) -> (i32, i32, i32) {
    %c0_i32 = arith.constant 0 : i32
    %c0_i32_0 = arith.constant 0 : i32
    %c0_i32_1 = arith.constant 0 : i32
    return %arg0, %c0_i32, %c0_i32_0 : i32, i32, i32
  }
}

</mosaic_0001>

<llo_original>
// kernel: tpu_custom_call.1
$region0: #{tpu_custom_call.1}
  #allocation0 [shape = 'u32[]', space=smem, size = 0x4, offset = 0x4, fixed_abs, tag = 'smem constant byte address 0x4 - core index']
  #allocation1 [shape = 'u32[144,128]{1,0:T(1,128)}', space=vmem, size = 0x12000, scoped, tag = 'internal scratch']
  %s0 = inlined_call_operand.vmem [shape: bf16[8,11,19,3], index: 0, kind: input, shape index: {}]
  %s1 = inlined_call_operand.vmem [shape: bf16[49,3,128], index: 1, kind: input, shape index: {}]
  %s2 = inlined_call_operand.vmem [shape: f32[1,128], index: 2, kind: input, shape index: {}]
  %s3 = inlined_call_operand.vmem [shape: f32[1,128], index: 3, kind: input, shape index: {}]
  %s4 = inlined_call_operand.hbm [shape: bf16[2,128,128], index: 4, kind: output, shape index: {}]
  %s5 = sld [smem:[#allocation0]]
  $region49: #{tpu_custom_call.1} parent=0
    _
  %s7 = ssub.s32 1, %s5
  %s8 = scalar_select 0, %s7, %s5
  $region1: #{tpu_custom_call.1} parent=0
    #allocation2 [shape = 'u8[65536]{0}', space=vmem, size = 0x10000, scoped, tag = 'output window, operand 0']
    #allocation3 [shape = 's32[2]{0}', space=sflag, size = 0x8, scoped, tag = 'scoped memory for tpu_custom_call.1']
    %9 = vsyncpa [#allocation3], 0
    %s10 = scalar_lea.sflag [#allocation3], 1
    %11 = vsyncpa %s10, 0
    loop: start=0, step=1, limit=4
    $region2: #{tpu_custom_call.1} parent=1 // loop_pre_header
      _
    $region3: #{tpu_custom_call.1} parent=1 // loop_header
      %s13 = sphi 0, %s17
      %p14 = scmp.ge.s32.totalorder %s13, 4
      %s23 = sphi 0, %s25
      %s26 = sphi 0, %s23
      %s27 = sphi 0, %s26
      %s43 = sphi 0, %s27
      %s47 = sphi 0, %s47
      %s49 = sphi 0, %s47
      %s50 = sphi 0, %s49
      %s64 = sphi 0, %s50
      %s68 = sphi 0, %s68
      %s70 = sphi 0, %s68
      %s71 = sphi 0, %s70
      %s85 = sphi 0, %s71
      %s89 = sphi 0, %s89
      %s91 = sphi 0, %s89
      %s92 = sphi 0, %s91
      %s106 = sphi 0, %s92
      %s112 = sphi 0, %s114
      %s115 = sphi 0, %s112
      %s116 = sphi 0, %s115
      %s132 = sphi 0, %s116
    $region4: #{tpu_custom_call.1} parent=1 // loop_header_branch
      %16 = sbr.rel (%p14) target = $region8
    $region5: #{tpu_custom_call.1} parent=1 // loop_body
      %s18 = ssub.s32 %s13, 1
      %s19 = ssub.s32 %s13, 2
      %s20 = sadd.s32 %s13, 1
      %s21 = ssub.s32 %s13, %s20
      %p22 = scmp.eq.s32.totalorder %s21, 0
      %s24 = sadd.s32 %s23, 1
      %s25 = scalar_select %p22, %s23, %s24
      %p28 = pneg %p22
      %p29 = scmp.eq.s32.totalorder %s13, 1
      %p30 = por %p28, %p29
      %p31 = scmp.ne.s32.totalorder %s23, %s26
      %p32 = scmp.eq.s32.totalorder %s13, 0
      %p33 = por %p31, %p32
      %p34 = scmp.ne.s32.totalorder %s23, %s26
      %p35 = scmp.eq.s32.totalorder %s18, 1
      %p36 = por %p34, %p35
      %p37 = scmp.ne.s32.totalorder %s26, %s27
      %p38 = scmp.eq.s32.totalorder %s18, 0
      %p39 = por %p37, %p38
      %p40 = scmp.ne.s32.totalorder %s26, %s27
      %p41 = scmp.eq.s32.totalorder %s19, 1
      %p42 = por %p40, %p41
      %p44 = scmp.ne.s32.totalorder %s27, %s43
      %p45 = scmp.eq.s32.totalorder %s19, 0
      %p46 = por %p44, %p45
      %s48 = sadd.s32 %s47, 1
      %p51 = scmp.eq.s32.totalorder %s13, 1
      %p52 = scmp.ne.s32.totalorder %s47, %s49
      %p53 = scmp.eq.s32.totalorder %s13, 0
      %p54 = por %p52, %p53
      %p55 = scmp.ne.s32.totalorder %s47, %s49
      %p56 = scmp.eq.s32.totalorder %s18, 1
      %p57 = por %p55, %p56
      %p58 = scmp.ne.s32.totalorder %s49, %s50
      %p59 = scmp.eq.s32.totalorder %s18, 0
      %p60 = por %p58, %p59
      %p61 = scmp.ne.s32.totalorder %s49, %s50
      %p62 = scmp.eq.s32.totalorder %s19, 1
      %p63 = por %p61, %p62
      %p65 = scmp.ne.s32.totalorder %s50, %s64
      %p66 = scmp.eq.s32.totalorder %s19, 0
      %p67 = por %p65, %p66
      %s69 = sadd.s32 %s68, 1
      %p72 = scmp.eq.s32.totalorder %s13, 1
      %p73 = scmp.ne.s32.totalorder %s68, %s70
      %p74 = scmp.eq.s32.totalorder %s13, 0
      %p75 = por %p73, %p74
      %p76 = scmp.ne.s32.totalorder %s68, %s70
      %p77 = scmp.eq.s32.totalorder %s18, 1
      %p78 = por %p76, %p77
      %p79 = scmp.ne.s32.totalorder %s70, %s71
      %p80 = scmp.eq.s32.totalorder %s18, 0
      %p81 = por %p79, %p80
      %p82 = scmp.ne.s32.totalorder %s70, %s71
      %p83 = scmp.eq.s32.totalorder %s19, 1
      %p84 = por %p82, %p83
      %p86 = scmp.ne.s32.totalorder %s71, %s85
      %p87 = scmp.eq.s32.totalorder %s19, 0
      %p88 = por %p86, %p87
      %s90 = sadd.s32 %s89, 1
      %p93 = scmp.eq.s32.totalorder %s13, 1
      %p94 = scmp.ne.s32.totalorder %s89, %s91
      %p95 = scmp.eq.s32.totalorder %s13, 0
      %p96 = por %p94, %p95
      %p97 = scmp.ne.s32.totalorder %s89, %s91
      %p98 = scmp.eq.s32.totalorder %s18, 1
      %p99 = por %p97, %p98
      %p100 = scmp.ne.s32.totalorder %s91, %s92
      %p101 = scmp.eq.s32.totalorder %s18, 0
      %p102 = por %p100, %p101
      %p103 = scmp.ne.s32.totalorder %s91, %s92
      %p104 = scmp.eq.s32.totalorder %s19, 1
      %p105 = por %p103, %p104
      %p107 = scmp.ne.s32.totalorder %s92, %s106
      %p108 = scmp.eq.s32.totalorder %s19, 0
      %p109 = por %p107, %p108
      %s110 = ssub.s32 %s13, %s20
      %p111 = scmp.eq.s32.totalorder %s110, 0
      %s113 = sadd.s32 %s112, 1
      %s114 = scalar_select %p111, %s112, %s113
      %p117 = pneg %p111
      %p118 = scmp.eq.s32.totalorder %s13, 1
      %p119 = por %p117, %p118
      %p120 = scmp.ne.s32.totalorder %s112, %s115
      %p121 = scmp.eq.s32.totalorder %s13, 0
      %p122 = por %p120, %p121
      %p123 = scmp.ne.s32.totalorder %s112, %s115
      %p124 = scmp.eq.s32.totalorder %s18, 1
      %p125 = por %p123, %p124
      %p126 = scmp.ne.s32.totalorder %s115, %s116
      %p127 = scmp.eq.s32.totalorder %s18, 0
      %p128 = por %p126, %p127
      %p129 = scmp.ne.s32.totalorder %s115, %s116
      %p130 = scmp.eq.s32.totalorder %s19, 1
      %p131 = por %p129, %p130
      %p133 = scmp.ne.s32.totalorder %s116, %s132
      %p134 = scmp.eq.s32.totalorder %s19, 0
      %p135 = por %p133, %p134
      %p136 = scmp.le.s32.totalorder 1, %s13
      %p137 = scmp.lt.s32.totalorder %s13, 3
      %p138 = pnand %p136, %p137
      %p139 = pneg %p138
      // Predicated region
      $region9: #{tpu_custom_call.1} parent=5 // pred_check
        _
      $region10: #{tpu_custom_call.1} parent=5 // pred_check_branch
        %141 = sbr.rel (%p138) target = $region12
      $region11: #{tpu_custom_call.1} parent=5 // pred_region
        %s142 = ssub.s32 %s13, 1
        // Predicated region
        $region13: #{tpu_custom_call.1} parent=11 // pred_check
          %p143 = pneg %p60
        $region14: #{tpu_custom_call.1} parent=11 // pred_check_branch
          %145 = sbr.rel (%p143) target = $region16
        $region15: #{tpu_custom_call.1} parent=11 // pred_region
          _
        $region16: #{tpu_custom_call.1} parent=11 // pred_fallthru
          _
        // Predicated region
        $region17: #{tpu_custom_call.1} parent=11 // pred_check
          %p146 = pneg %p81
        $region18: #{tpu_custom_call.1} parent=11 // pred_check_branch
          %148 = sbr.rel (%p146) target = $region20
        $region19: #{tpu_custom_call.1} parent=11 // pred_region
          _
        $region20: #{tpu_custom_call.1} parent=11 // pred_fallthru
          _
        // Predicated region
        $region21: #{tpu_custom_call.1} parent=11 // pred_check
          %p149 = pneg %p102
        $region22: #{tpu_custom_call.1} parent=11 // pred_check_branch
          %151 = sbr.rel (%p149) target = $region24
        $region23: #{tpu_custom_call.1} parent=11 // pred_region
          _
        $region24: #{tpu_custom_call.1} parent=11 // pred_fallthru
          _
      $region12: #{tpu_custom_call.1} parent=5 // pred_fallthru
        _
      %p152 = scmp.lt.s32.totalorder %s13, 2
      // Predicated region
      $region25: #{tpu_custom_call.1} parent=5 // pred_check
        %p153 = pneg %p152
      $region26: #{tpu_custom_call.1} parent=5 // pred_check_branch
        %155 = sbr.rel (%p153) target = $region28
      $region27: #{tpu_custom_call.1} parent=5 // pred_region
        // Predicated region
        $region29: #{tpu_custom_call.1} parent=27 // pred_check
          %p156 = pneg %p33
        $region30: #{tpu_custom_call.1} parent=27 // pred_check_branch
          %158 = sbr.rel (%p156) target = $region32
        $region31: #{tpu_custom_call.1} parent=27 // pred_region
          %s159 = smul.u32 4, %s13
          %p160 = scmp.lt.s32.totalorder %s159, 7
          %s161 = scalar_select %p160, %s159, 7
          %s162 = smul.addr %s161, 33
          %s163 = smul.addr %s162, 4
          %s164 = scalar_lea.vmem %s0, %s163
          %s165 = smul.u32 4, %s13
        $region32: #{tpu_custom_call.1} parent=27 // pred_fallthru
          _
      $region28: #{tpu_custom_call.1} parent=5 // pred_fallthru
        _
      %p166 = scmp.le.s32.totalorder 1, %s13
      %p167 = scmp.lt.s32.totalorder %s13, 3
      %p168 = pnand %p166, %p167
      %p169 = pneg %p168
      // Predicated region
      $region33: #{tpu_custom_call.1} parent=5 // pred_check
        _
      $region34: #{tpu_custom_call.1} parent=5 // pred_check_branch
        %171 = sbr.rel (%p168) target = $region36
      $region35: #{tpu_custom_call.1} parent=5 // pred_region
        %s172 = ssub.s32 %s13, 1
        %s173 = smul.u32 4, %s18
        %p174 = scmp.lt.s32.totalorder %s173, 7
        %s175 = scalar_select %p174, %s173, 7
        %s176 = smul.addr %s175, 33
        %s177 = smul.addr %s176, 4
        %s178 = scalar_lea.vmem %s0, %s177
        %p179 = pneg %p39
        %p180 = pneg %p36
        %p181 = pneg %p60
        %p182 = pneg %p57
        %p183 = pneg %p81
        %p184 = pneg %p78
        %p185 = pneg %p102
        %p186 = pneg %p99
        %p187 = pneg %p128
        %p188 = pneg %p125
        %s189 = sand.u32 %s115, 1
        %s190 = scalar_lea.sflag [#allocation3], %s189
        %s191 = sand.u32 %s115, 1
        %s192 = smul.addr %s191, 64
        %s193 = scalar_lea.vmem [#allocation2], %s192
        %s194 = smul.u32 4, %s18
        %p195 = scmp.lt.s32.totalorder %s194, 7
        %s196 = scalar_select %p195, %s194, 7
        %s197 = smul.addr %s196, 33
        %s198 = smul.addr %s197, 4
        %s199 = scalar_lea.vmem %s0, %s198
        %s200 = smul.u32 4, %s18
        %v202 = vld [vmem:[%s199] sm:$0xf]
        %v203 = vld [vmem:[%s199 + $0x4] sm:$0xf]
        %v204 = vld [vmem:[%s199 + $0x8] sm:$0x3]
        %v205 = vld [vmem:[%s199 + $0xc] sm:$0xf]
        %v206 = vld [vmem:[%s199 + $0x10] sm:$0xf]
        %v207 = vld [vmem:[%s199 + $0x14] sm:$0x3]
        %v208 = vld [vmem:[%s199 + $0x18] sm:$0xf]
        %v209 = vld [vmem:[%s199 + $0x1c] sm:$0xf]
        %v210 = vld [vmem:[%s199 + $0x20] sm:$0x3]
        %v211 = vld [vmem:[%s199 + $0x24] sm:$0xf]
        %v212 = vld [vmem:[%s199 + $0x28] sm:$0xf]
        %v213 = vld [vmem:[%s199 + $0x2c] sm:$0x3]
        %v214 = vld [vmem:[%s199 + $0x30] sm:$0xf]
        %v215 = vld [vmem:[%s199 + $0x34] sm:$0xf]
        %v216 = vld [vmem:[%s199 + $0x38] sm:$0x3]
        %v217 = vld [vmem:[%s199 + $0x3c] sm:$0xf]
        %v218 = vld [vmem:[%s199 + $0x40] sm:$0xf]
        %v219 = vld [vmem:[%s199 + $0x44] sm:$0x3]
        %v220 = vld [vmem:[%s199 + $0x48] sm:$0xf]
        %v221 = vld [vmem:[%s199 + $0x4c] sm:$0xf]
        %v222 = vld [vmem:[%s199 + $0x50] sm:$0x3]
        %v223 = vld [vmem:[%s199 + $0x54] sm:$0xf]
        %v224 = vld [vmem:[%s199 + $0x58] sm:$0xf]
        %v225 = vld [vmem:[%s199 + $0x5c] sm:$0x3]
        %v226 = vld [vmem:[%s199 + $0x60] sm:$0xf]
        %v227 = vld [vmem:[%s199 + $0x64] sm:$0xf]
        %v228 = vld [vmem:[%s199 + $0x68] sm:$0x3]
        %v229 = vld [vmem:[%s199 + $0x6c] sm:$0xf]
        %v230 = vld [vmem:[%s199 + $0x70] sm:$0xf]
        %v231 = vld [vmem:[%s199 + $0x74] sm:$0x3]
        %v232 = vld [vmem:[%s199 + $0x78] sm:$0xf]
        %v233 = vld [vmem:[%s199 + $0x7c] sm:$0xf]
        %v234 = vld [vmem:[%s199 + $0x80] sm:$0x3]
        %v235 = vld [vmem:[%s199 + $0x84] sm:$0xf]
        %v236 = vld [vmem:[%s199 + $0x88] sm:$0xf]
        %v237 = vld [vmem:[%s199 + $0x8c] sm:$0x3]
        %v238 = vld [vmem:[%s199 + $0x90] sm:$0xf]
        %v239 = vld [vmem:[%s199 + $0x94] sm:$0xf]
        %v240 = vld [vmem:[%s199 + $0x98] sm:$0x3]
        %v241 = vld [vmem:[%s199 + $0x9c] sm:$0xf]
        %v242 = vld [vmem:[%s199 + $0xa0] sm:$0xf]
        %v243 = vld [vmem:[%s199 + $0xa4] sm:$0x3]
        %v244 = vld [vmem:[%s199 + $0xa8] sm:$0xf]
        %v245 = vld [vmem:[%s199 + $0xac] sm:$0xf]
        %v246 = vld [vmem:[%s199 + $0xb0] sm:$0x3]
        %v247 = vld [vmem:[%s199 + $0xb4] sm:$0xf]
        %v248 = vld [vmem:[%s199 + $0xb8] sm:$0xf]
        %v249 = vld [vmem:[%s199 + $0xbc] sm:$0x3]
        %v250 = vld [vmem:[%s199 + $0xc0] sm:$0xf]
        %v251 = vld [vmem:[%s199 + $0xc4] sm:$0xf]
        %v252 = vld [vmem:[%s199 + $0xc8] sm:$0x3]
        %v253 = vld [vmem:[%s199 + $0xcc] sm:$0xf]
        %v254 = vld [vmem:[%s199 + $0xd0] sm:$0xf]
        %v255 = vld [vmem:[%s199 + $0xd4] sm:$0x3]
        %v256 = vld [vmem:[%s199 + $0xd8] sm:$0xf]
        %v257 = vld [vmem:[%s199 + $0xdc] sm:$0xf]
        %v258 = vld [vmem:[%s199 + $0xe0] sm:$0x3]
        %v259 = vld [vmem:[%s199 + $0xe4] sm:$0xf]
        %v260 = vld [vmem:[%s199 + $0xe8] sm:$0xf]
        %v261 = vld [vmem:[%s199 + $0xec] sm:$0x3]
        %v262 = vld [vmem:[%s199 + $0xf0] sm:$0xf]
        %v263 = vld [vmem:[%s199 + $0xf4] sm:$0xf]
        %v264 = vld [vmem:[%s199 + $0xf8] sm:$0x3]
        %v265 = vld [vmem:[%s199 + $0xfc] sm:$0xf]
        %v266 = vld [vmem:[%s199 + $0x100] sm:$0xf]
        %v267 = vld [vmem:[%s199 + $0x104] sm:$0x3]
        %v268 = vld [vmem:[%s199 + $0x108] sm:$0xf]
        %v269 = vld [vmem:[%s199 + $0x10c] sm:$0xf]
        %v270 = vld [vmem:[%s199 + $0x110] sm:$0x3]
        %v271 = vld [vmem:[%s199 + $0x114] sm:$0xf]
        %v272 = vld [vmem:[%s199 + $0x118] sm:$0xf]
        %v273 = vld [vmem:[%s199 + $0x11c] sm:$0x3]
        %v274 = vld [vmem:[%s199 + $0x120] sm:$0xf]
        %v275 = vld [vmem:[%s199 + $0x124] sm:$0xf]
        %v276 = vld [vmem:[%s199 + $0x128] sm:$0x3]
        %v277 = vld [vmem:[%s199 + $0x12c] sm:$0xf]
        %v278 = vld [vmem:[%s199 + $0x130] sm:$0xf]
        %v279 = vld [vmem:[%s199 + $0x134] sm:$0x3]
        %v280 = vld [vmem:[%s199 + $0x138] sm:$0xf]
        %v281 = vld [vmem:[%s199 + $0x13c] sm:$0xf]
        %v282 = vld [vmem:[%s199 + $0x140] sm:$0x3]
        %v283 = vld [vmem:[%s199 + $0x144] sm:$0xf]
        %v284 = vld [vmem:[%s199 + $0x148] sm:$0xf]
        %v285 = vld [vmem:[%s199 + $0x14c] sm:$0x3]
        %v286 = vld [vmem:[%s199 + $0x150] sm:$0xf]
        %v287 = vld [vmem:[%s199 + $0x154] sm:$0xf]
        %v288 = vld [vmem:[%s199 + $0x158] sm:$0x3]
        %v289 = vld [vmem:[%s199 + $0x15c] sm:$0xf]
        %v290 = vld [vmem:[%s199 + $0x160] sm:$0xf]
        %v291 = vld [vmem:[%s199 + $0x164] sm:$0x3]
        %v292 = vld [vmem:[%s199 + $0x168] sm:$0xf]
        %v293 = vld [vmem:[%s199 + $0x16c] sm:$0xf]
        %v294 = vld [vmem:[%s199 + $0x170] sm:$0x3]
        %v295 = vld [vmem:[%s199 + $0x174] sm:$0xf]
        %v296 = vld [vmem:[%s199 + $0x178] sm:$0xf]
        %v297 = vld [vmem:[%s199 + $0x17c] sm:$0x3]
        %v298 = vld [vmem:[%s199 + $0x18c] sm:$0xf]
        %v299 = vld [vmem:[%s199 + $0x190] sm:$0xf]
        %v300 = vld [vmem:[%s199 + $0x194] sm:$0x3]
        %v301 = vld [vmem:[%s199 + $0x198] sm:$0xf]
        %v302 = vld [vmem:[%s199 + $0x19c] sm:$0xf]
        %v303 = vld [vmem:[%s199 + $0x1a0] sm:$0x3]
        %v304 = vld [vmem:[%s199 + $0x1a4] sm:$0xf]
        %v305 = vld [vmem:[%s199 + $0x1a8] sm:$0xf]
        %v306 = vld [vmem:[%s199 + $0x1ac] sm:$0x3]
        %v307 = vld [vmem:[%s199 + $0x1b0] sm:$0xf]
        %v308 = vld [vmem:[%s199 + $0x1b4] sm:$0xf]
        %v309 = vld [vmem:[%s199 + $0x1b8] sm:$0x3]
        %v310 = vld [vmem:[%s199 + $0x1bc] sm:$0xf]
        %v311 = vld [vmem:[%s199 + $0x1c0] sm:$0xf]
        %v312 = vld [vmem:[%s199 + $0x1c4] sm:$0x3]
        %v313 = vld [vmem:[%s199 + $0x1c8] sm:$0xf]
        %v314 = vld [vmem:[%s199 + $0x1cc] sm:$0xf]
        %v315 = vld [vmem:[%s199 + $0x1d0] sm:$0x3]
        %v316 = vld [vmem:[%s199 + $0x1d4] sm:$0xf]
        %v317 = vld [vmem:[%s199 + $0x1d8] sm:$0xf]
        %v318 = vld [vmem:[%s199 + $0x1dc] sm:$0x3]
        %v319 = vld [vmem:[%s199 + $0x1e0] sm:$0xf]
        %v320 = vld [vmem:[%s199 + $0x1e4] sm:$0xf]
        %v321 = vld [vmem:[%s199 + $0x1e8] sm:$0x3]
        %v322 = vld [vmem:[%s199 + $0x1ec] sm:$0xf]
        %v323 = vld [vmem:[%s199 + $0x1f0] sm:$0xf]
        %v324 = vld [vmem:[%s199 + $0x1f4] sm:$0x3]
        %v325 = vld [vmem:[%s199 + $0x1f8] sm:$0xf]
        %v326 = vld [vmem:[%s199 + $0x1fc] sm:$0xf]
        %v327 = vld [vmem:[%s199 + $0x200] sm:$0x3]
        %v328 = vld [vmem:[%s1] sm:$0x3]
        %s329 = scalar_lea.vmem %s1, 2
        %v330 = vld [vmem:[%s329] sm:$0x3]
        %v347 = vunpack.c.l.b16 %v235
        %v348 = vunpack.c.l.b16 %v236
        %v349 = vunpack.c.l.b16 %v238
        %v350 = vunpack.c.l.b16 %v239
        %v351 = vunpack.c.l.b16 %v241
        %v352 = vunpack.c.l.b16 %v242
        %v353 = vunpack.c.l.b16 %v244
        %v354 = vunpack.c.l.b16 %v245
        %v355 = vunpack.c.l.b16 %v247
        %v356 = vunpack.c.l.b16 %v248
        %v357 = vunpack.c.l.b16 %v250
        %v358 = vunpack.c.l.b16 %v251
        %v359 = vunpack.c.l.b16 %v253
        %v360 = vunpack.c.l.b16 %v254
        %v361 = vunpack.c.l.b16 %v256
        %v362 = vunpack.c.l.b16 %v257
        %v363 = vpack.c.b16 %v348, %v347
        %v364 = vpack.c.b16 %v350, %v349
        %v365 = vpack.c.b16 %v352, %v351
        %v366 = vpack.c.b16 %v354, %v353
        %v367 = vpack.c.b16 %v356, %v355
        %v368 = vpack.c.b16 %v358, %v357
        %v369 = vpack.c.b16 %v360, %v359
        %v370 = vpack.c.b16 %v362, %v361
        %vm371 = vcmask 23552
        %v373 = vsel %vm371, %v363, 0
        %v376 = vsel %vm371, %v364, 0
        %v379 = vsel %vm371, %v365, 0
        %v382 = vsel %vm371, %v366, 0
        %v385 = vsel %vm371, %v367, 0
        %v388 = vsel %vm371, %v368, 0
        %v391 = vsel %vm371, %v369, 0
        %v394 = vsel %vm371, %v370, 0
        %vm396 = vcmask 1040384
        %vm397 = vcmask 1041408
        %v398 = vsel %vm396, 4294967295, 65535
        %v399 = vsel %vm397, %v398, 0
        %v401 = vand.u32 %v330, %v399
        %403 = vmatprep.subr.bf16.mxu0 0
        %404 = vmatpush1.bf16.msra.mxu0 %v401
        %405 = vmatprep.subr.bf16.mxu0 0
        %406 = vmatpush1.bf16.msra.mxu0 0
        %407 = vmatprep.subr.bf16.mxu0 0
        %408 = vmatpush1.bf16.msra.mxu0 0
        %409 = vmatprep.subr.bf16.mxu0 0
        %410 = vmatpush1.bf16.msra.mxu0 0
        %411 = vmatprep.subr.bf16.mxu0 0
        %412 = vmatpush1.bf16.msra.mxu0 0
        %413 = vmatprep.subr.bf16.mxu0 0
        %414 = vmatpush1.bf16.msra.mxu0 0
        %415 = vmatprep.subr.bf16.mxu0 0
        %416 = vmatpush1.bf16.msra.mxu0 0
        %417 = vmatprep.subr.bf16.mxu0 0
        %418 = vmatpush1.bf16.msra.mxu0 0
        %419 = vmatprep.subr.bf16.mxu0 0
        %420 = vmatpush1.bf16.msra.mxu0 0
        %421 = vmatprep.subr.bf16.mxu0 0
        %422 = vmatpush1.bf16.msra.mxu0 0
        %423 = vmatprep.subr.bf16.mxu0 0
        %424 = vmatpush1.bf16.msra.mxu0 0
        %425 = vmatprep.subr.bf16.mxu0 0
        %426 = vmatpush1.bf16.msra.mxu0 0
        %427 = vmatprep.subr.bf16.mxu0 0
        %428 = vmatpush1.bf16.msra.mxu0 0
        %429 = vmatprep.subr.bf16.mxu0 0
        %430 = vmatpush1.bf16.msra.mxu0 0
        %431 = vmatprep.subr.bf16.mxu0 0
        %432 = vmatpush1.bf16.msra.mxu0 0
        %433 = vmatprep.subr.bf16.mxu0 0
        %434 = vmatpush1.bf16.msra.mxu0 0
        %435 = vmatprep.mubr.bf16.mxu0 0
        %436 = vmatmul.mubr.bf16.gmra.mrb[0].mxu0 %v373
        %v437 = vpop.f32.mrb[0].mxu0
        %v438 = vadd.f32 0.0, %v437
        %v439 = vpop.f32.mrb[0].mxu0
        %v440 = vpop.f32.mrb[0].mxu0
        %v441 = vadd.f32 0.0, %v440
        %v442 = vpop.f32.mrb[0].mxu0
        %443 = vmatprep.mubr.bf16.mxu0 0
        %444 = vmatmul.mubr.bf16.gmra.mrb[0].mxu0 %v376
        %v445 = vpop.f32.mrb[0].mxu0
        %v446 = vadd.f32 0.0, %v445
        %v447 = vpop.f32.mrb[0].mxu0
        %v448 = vpop.f32.mrb[0].mxu0
        %v449 = vadd.f32 0.0, %v448
        %v450 = vpop.f32.mrb[0].mxu0
        %451 = vmatprep.mubr.bf16.mxu0 0
        %452 = vmatmul.mubr.bf16.gmra.mrb[0].mxu0 %v379
        %v453 = vpop.f32.mrb[0].mxu0
        %v454 = vadd.f32 0.0, %v453
        %v455 = vpop.f32.mrb[0].mxu0
        %v456 = vpop.f32.mrb[0].mxu0
        %v457 = vadd.f32 0.0, %v456
        %v458 = vpop.f32.mrb[0].mxu0
        %459 = vmatprep.mubr.bf16.mxu0 0
        %460 = vmatmul.mubr.bf16.gmra.mrb[0].mxu0 %v382
        %v461 = vpop.f32.mrb[0].mxu0
        %v462 = vadd.f32 0.0, %v461
        %v463 = vpop.f32.mrb[0].mxu0
        %v464 = vpop.f32.mrb[0].mxu0
        %v465 = vadd.f32 0.0, %v464
        %v466 = vpop.f32.mrb[0].mxu0
        %467 = vmatprep.mubr.bf16.mxu0 0
        %468 = vmatmul.mubr.bf16.gmra.mrb[0].mxu0 %v385
        %v469 = vpop.f32.mrb[0].mxu0
        %v470 = vadd.f32 0.0, %v469
        %v471 = vpop.f32.mrb[0].mxu0
        %v472 = vpop.f32.mrb[0].mxu0
        %v473 = vadd.f32 0.0, %v472
        %v474 = vpop.f32.mrb[0].mxu0
        %475 = vmatprep.mubr.bf16.mxu0 0
        %476 = vmatmul.mubr.bf16.gmra.mrb[0].mxu0 %v388
        %v477 = vpop.f32.mrb[0].mxu0
        %v478 = vadd.f32 0.0, %v477
        %v479 = vpop.f32.mrb[0].mxu0
        %v480 = vpop.f32.mrb[0].mxu0
        %v481 = vadd.f32 0.0, %v480
        %v482 = vpop.f32.mrb[0].mxu0
        %483 = vmatprep.mubr.bf16.mxu0 0
        %484 = vmatmul.mubr.bf16.gmra.mrb[0].mxu0 %v391
        %v485 = vpop.f32.mrb[0].mxu0
        %v486 = vadd.f32 0.0, %v485
        %v487 = vpop.f32.mrb[0].mxu0
        %v488 = vpop.f32.mrb[0].mxu0
        %v489 = vadd.f32 0.0, %v488
        %v490 = vpop.f32.mrb[0].mxu0
        %491 = vmatprep.mubr.bf16.mxu0 0
        %492 = vmatmul.mubr.bf16.gmra.mrb[0].mxu0 %v394
        %v493 = vpop.f32.mrb[0].mxu0
        %v494 = vadd.f32 0.0, %v493
        %v495 = vpop.f32.mrb[0].mxu0
        %v496 = vpop.f32.mrb[0].mxu0
        %v497 = vadd.f32 0.0, %v496
        %v498 = vpop.f32.mrb[0].mxu0
        %499 = vdwg.mxu0
        %v516 = vunpack.c.l.b16 %v202
        %v517 = vunpack.c.l.b16 %v203
        %v518 = vunpack.c.l.b16 %v205
        %v519 = vunpack.c.l.b16 %v206
        %v520 = vunpack.c.l.b16 %v208
        %v521 = vunpack.c.l.b16 %v209
        %v522 = vunpack.c.l.b16 %v211
        %v523 = vunpack.c.l.b16 %v212
        %v524 = vunpack.c.l.b16 %v214
        %v525 = vunpack.c.l.b16 %v215
        %v526 = vunpack.c.l.b16 %v217
        %v527 = vunpack.c.l.b16 %v218
        %v528 = vunpack.c.l.b16 %v220
        %v529 = vunpack.c.l.b16 %v221
        %v530 = vunpack.c.l.b16 %v223
        %v531 = vunpack.c.l.b16 %v224
        %v532 = vpack.c.b16 %v517, %v516
        %v533 = vpack.c.b16 %v519, %v518
        %v534 = vpack.c.b16 %v521, %v520
        %v535 = vpack.c.b16 %v523, %v522
        %v536 = vpack.c.b16 %v525, %v524
        %v537 = vpack.c.b16 %v527, %v526
        %v538 = vpack.c.b16 %v529, %v528
        %v539 = vpack.c.b16 %v531, %v530
        %v541 = vsel %vm371, %v532, 0
        %v544 = vsel %vm371, %v533, 0
        %v547 = vsel %vm371, %v534, 0
        %v550 = vsel %vm371, %v535, 0
        %v553 = vsel %vm371, %v536, 0
        %v556 = vsel %vm371, %v537, 0
        %v559 = vsel %vm371, %v538, 0
        %v562 = vsel %vm371, %v539, 0
        %v565 = vand.u32 %v328, %v399
        %567 = vmatprep.subr.bf16.mxu0 0
        %568 = vmatpush1.bf16.msra.mxu0 %v565
        %569 = vmatprep.subr.bf16.mxu0 0
        %570 = vmatpush1.bf16.msra.mxu0 0
        %571 = vmatprep.subr.bf16.mxu0 0
        %572 = vmatpush1.bf16.msra.mxu0 0
        %573 = vmatprep.subr.bf16.mxu0 0
        %574 = vmatpush1.bf16.msra.mxu0 0
        %575 = vmatprep.subr.bf16.mxu0 0
        %576 = vmatpush1.bf16.msra.mxu0 0
        %577 = vmatprep.subr.bf16.mxu0 0
        %578 = vmatpush1.bf16.msra.mxu0 0
        %579 = vmatprep.subr.bf16.mxu0 0
        %580 = vmatpush1.bf16.msra.mxu0 0
        %581 = vmatprep.subr.bf16.mxu0 0
        %582 = vmatpush1.bf16.msra.mxu0 0
        %583 = vmatprep.subr.bf16.mxu0 0
        %584 = vmatpush1.bf16.msra.mxu0 0
        %585 = vmatprep.subr.bf16.mxu0 0
        %586 = vmatpush1.bf16.msra.mxu0 0
        %587 = vmatprep.subr.bf16.mxu0 0
        %588 = vmatpush1.bf16.msra.mxu0 0
        %589 = vmatprep.subr.bf16.mxu0 0
        %590 = vmatpush1.bf16.msra.mxu0 0
        %591 = vmatprep.subr.bf16.mxu0 0
        %592 = vmatpush1.bf16.msra.mxu0 0
        %593 = vmatprep.subr.bf16.mxu0 0
        %594 = vmatpush1.bf16.msra.mxu0 0
        %595 = vmatprep.subr.bf16.mxu0 0
        %596 = vmatpush1.bf16.msra.mxu0 0
        %597 = vmatprep.subr.bf16.mxu0 0
        %598 = vmatpush1.bf16.msra.mxu0 0
        %599 = vmatprep.mubr.bf16.mxu0 0
        %600 = vmatmul.mubr.bf16.gmra.mrb[0].mxu0 %v541
        %v601 = vpop.f32.mrb[0].mxu0
        %v602 = vadd.f32 %v438, %v601
        %v603 = vpop.f32.mrb[0].mxu0
        %v604 = vpop.f32.mrb[0].mxu0
        %v605 = vadd.f32 %v441, %v604
        %v606 = vpop.f32.mrb[0].mxu0
        %607 = vmatprep.mubr.bf16.mxu0 0
        %608 = vmatmul.mubr.bf16.gmra.mrb[0].mxu0 %v544
        %v609 = vpop.f32.mrb[0].mxu0
        %v610 = vadd.f32 %v446, %v609
        %v611 = vpop.f32.mrb[0].mxu0
        %v612 = vpop.f32.mrb[0].mxu0
        %v613 = vadd.f32 %v449, %v612
        %v614 = vpop.f32.mrb[0].mxu0
        %615 = vmatprep.mubr.bf16.mxu0 0
        %616 = vmatmul.mubr.bf16.gmra.mrb[0].mxu0 %v547
        %v617 = vpop.f32.mrb[0].mxu0
        %v618 = vadd.f32 %v454, %v617
        %v619 = vpop.f32.mrb[0].mxu0
        %v620 = vpop.f32.mrb[0].mxu0
        %v621 = vadd.f32 %v457, %v620
        %v622 = vpop.f32.mrb[0].mxu0
        %623 = vmatprep.mubr.bf16.mxu0 0
        %624 = vmatmul.mubr.bf16.gmra.mrb[0].mxu0 %v550
        %v625 = vpop.f32.mrb[0].mxu0
        %v626 = vadd.f32 %v462, %v625
        %v627 = vpop.f32.mrb[0].mxu0
        %v628 = vpop.f32.mrb[0].mxu0
        %v629 = vadd.f32 %v465, %v628
        %v630 = vpop.f32.mrb[0].mxu0
        %631 = vmatprep.mubr.bf16.mxu0 0
        %632 = vmatmul.mubr.bf16.gmra.mrb[0].mxu0 %v553
        %v633 = vpop.f32.mrb[0].mxu0
        %v634 = vadd.f32 %v470, %v633
        %v635 = vpop.f32.mrb[0].mxu0
        %v636 = vpop.f32.mrb[0].mxu0
        %v637 = vadd.f32 %v473, %v636
        %v638 = vpop.f32.mrb[0].mxu0
        %639 = vmatprep.mubr.bf16.mxu0 0
        %640 = vmatmul.mubr.bf16.gmra.mrb[0].mxu0 %v556
        %v641 = vpop.f32.mrb[0].mxu0
        %v642 = vadd.f32 %v478, %v641
        %v643 = vpop.f32.mrb[0].mxu0
        %v644 = vpop.f32.mrb[0].mxu0
        %v645 = vadd.f32 %v481, %v644
        %v646 = vpop.f32.mrb[0].mxu0
        %647 = vmatprep.mubr.bf16.mxu0 0
        %648 = vmatmul.mubr.bf16.gmra.mrb[0].mxu0 %v559
        %v649 = vpop.f32.mrb[0].mxu0
        %v650 = vadd.f32 %v486, %v649
        %v651 = vpop.f32.mrb[0].mxu0
        %v652 = vpop.f32.mrb[0].mxu0
        %v653 = vadd.f32 %v489, %v652
        %v654 = vpop.f32.mrb[0].mxu0
        %655 = vmatprep.mubr.bf16.mxu0 0
        %656 = vmatmul.mubr.bf16.gmra.mrb[0].mxu0 %v562
        %v657 = vpop.f32.mrb[0].mxu0
        %v658 = vadd.f32 %v494, %v657
        %v659 = vpop.f32.mrb[0].mxu0
        %v660 = vpop.f32.mrb[0].mxu0
        %v661 = vadd.f32 %v497, %v660
        %v662 = vpop.f32.mrb[0].mxu0
        %663 = vdwg.mxu0
        %vm664 = vsmask.f32 3328
        %vm665 = vsmask.f32 7440
        %vm666 = vmor %vm664, %vm665
        %v668 = vshrl.u32 %v202, 16
        %v670 = vrot.slane %v668, 4
        %v671 = vshll.u32 %v202, 16
        %v673 = vrot.slane %v671, 5
        %v674 = vor.u32 %v670, %v673
        %v675 = vrot.slane %v674, 4
        %v677 = vshll.u32 %v203, 16
        %v679 = vrot.slane %v677, 5
        %v680 = vsel %vm666, %v675, %v679
        %v681 = vshrl.u32 %v203, 16
        %v683 = vrot.slane %v681, 4
        %v684 = vor.u32 %v683, %v679
        %v685 = vrot.slane %v684, 4
        %v687 = vshll.u32 %v204, 16
        %v689 = vrot.slane %v687, 5
        %v690 = vsel %vm666, %v685, %v689
        %v692 = vshrl.u32 %v205, 16
        %v694 = vrot.slane %v692, 4
        %v695 = vshll.u32 %v205, 16
        %v697 = vrot.slane %v695, 5
        %v698 = vor.u32 %v694, %v697
        %v699 = vrot.slane %v698, 4
        %v701 = vshll.u32 %v206, 16
        %v703 = vrot.slane %v701, 5
        %v704 = vsel %vm666, %v699, %v703
        %v705 = vshrl.u32 %v206, 16
        %v707 = vrot.slane %v705, 4
        %v708 = vor.u32 %v707, %v703
        %v709 = vrot.slane %v708, 4
        %v711 = vshll.u32 %v207, 16
        %v713 = vrot.slane %v711, 5
        %v714 = vsel %vm666, %v709, %v713
        %v716 = vshrl.u32 %v208, 16
        %v718 = vrot.slane %v716, 4
        %v719 = vshll.u32 %v208, 16
        %v721 = vrot.slane %v719, 5
        %v722 = vor.u32 %v718, %v721
        %v723 = vrot.slane %v722, 4
        %v725 = vshll.u32 %v209, 16
        %v727 = vrot.slane %v725, 5
        %v728 = vsel %vm666, %v723, %v727
        %v729 = vshrl.u32 %v209, 16
        %v731 = vrot.slane %v729, 4
        %v732 = vor.u32 %v731, %v727
        %v733 = vrot.slane %v732, 4
        %v735 = vshll.u32 %v210, 16
        %v737 = vrot.slane %v735, 5
        %v738 = vsel %vm666, %v733, %v737
        %v740 = vshrl.u32 %v211, 16
        %v742 = vrot.slane %v740, 4
        %v743 = vshll.u32 %v211, 16
        %v745 = vrot.slane %v743, 5
        %v746 = vor.u32 %v742, %v745
        %v747 = vrot.slane %v746, 4
        %v749 = vshll.u32 %v212, 16
        %v751 = vrot.slane %v749, 5
        %v752 = vsel %vm666, %v747, %v751
        %v753 = vshrl.u32 %v212, 16
        %v755 = vrot.slane %v753, 4
        %v756 = vor.u32 %v755, %v751
        %v757 = vrot.slane %v756, 4
        %v759 = vshll.u32 %v213, 16
        %v761 = vrot.slane %v759, 5
        %v762 = vsel %vm666, %v757, %v761
        %v764 = vshrl.u32 %v214, 16
        %v766 = vrot.slane %v764, 4
        %v767 = vshll.u32 %v214, 16
        %v769 = vrot.slane %v767, 5
        %v770 = vor.u32 %v766, %v769
        %v771 = vrot.slane %v770, 4
        %v773 = vshll.u32 %v215, 16
        %v775 = vrot.slane %v773, 5
        %v776 = vsel %vm666, %v771, %v775
        %v777 = vshrl.u32 %v215, 16
        %v779 = vrot.slane %v777, 4
        %v780 = vor.u32 %v779, %v775
        %v781 = vrot.slane %v780, 4
        %v783 = vshll.u32 %v216, 16
        %v785 = vrot.slane %v783, 5
        %v786 = vsel %vm666, %v781, %v785
        %v788 = vshrl.u32 %v217, 16
        %v790 = vrot.slane %v788, 4
        %v791 = vshll.u32 %v217, 16
        %v793 = vrot.slane %v791, 5
        %v794 = vor.u32 %v790, %v793
        %v795 = vrot.slane %v794, 4
        %v797 = vshll.u32 %v218, 16
        %v799 = vrot.slane %v797, 5
        %v800 = vsel %vm666, %v795, %v799
        %v801 = vshrl.u32 %v218, 16
        %v803 = vrot.slane %v801, 4
        %v804 = vor.u32 %v803, %v799
        %v805 = vrot.slane %v804, 4
        %v807 = vshll.u32 %v219, 16
        %v809 = vrot.slane %v807, 5
        %v810 = vsel %vm666, %v805, %v809
        %v812 = vshrl.u32 %v220, 16
        %v814 = vrot.slane %v812, 4
        %v815 = vshll.u32 %v220, 16
        %v817 = vrot.slane %v815, 5
        %v818 = vor.u32 %v814, %v817
        %v819 = vrot.slane %v818, 4
        %v821 = vshll.u32 %v221, 16
        %v823 = vrot.slane %v821, 5
        %v824 = vsel %vm666, %v819, %v823
        %v825 = vshrl.u32 %v221, 16
        %v827 = vrot.slane %v825, 4
        %v828 = vor.u32 %v827, %v823
        %v829 = vrot.slane %v828, 4
        %v831 = vshll.u32 %v222, 16
        %v833 = vrot.slane %v831, 5
        %v834 = vsel %vm666, %v829, %v833
        %v836 = vshrl.u32 %v223, 16
        %v838 = vrot.slane %v836, 4
        %v839 = vshll.u32 %v223, 16
        %v841 = vrot.slane %v839, 5
        %v842 = vor.u32 %v838, %v841
        %v843 = vrot.slane %v842, 4
        %v845 = vshll.u32 %v224, 16
        %v847 = vrot.slane %v845, 5
        %v848 = vsel %vm666, %v843, %v847
        %v849 = vshrl.u32 %v224, 16
        %v851 = vrot.slane %v849, 4
        %v852 = vor.u32 %v851, %v847
        %v853 = vrot.slane %v852, 4
        %v855 = vshll.u32 %v225, 16
        %v857 = vrot.slane %v855, 5
        %v858 = vsel %vm666, %v853, %v857
        %s859 = scalar_lea.vmem %s1, 4
        %v860 = vld [vmem:[%s859] sm:$0x3]
        %v861 = vunpack.c.l.b16 %v680
        %v862 = vunpack.c.l.b16 %v690
        %v863 = vunpack.c.l.b16 %v704
        %v864 = vunpack.c.l.b16 %v714
        %v865 = vunpack.c.l.b16 %v728
        %v866 = vunpack.c.l.b16 %v738
        %v867 = vunpack.c.l.b16 %v752
        %v868 = vunpack.c.l.b16 %v762
        %v869 = vunpack.c.l.b16 %v776
        %v870 = vunpack.c.l.b16 %v786
        %v871 = vunpack.c.l.b16 %v800
        %v872 = vunpack.c.l.b16 %v810
        %v873 = vunpack.c.l.b16 %v824
        %v874 = vunpack.c.l.b16 %v834
        %v875 = vunpack.c.l.b16 %v848
        %v876 = vunpack.c.l.b16 %v858
        %v877 = vpack.c.b16 %v862, %v861
        %v878 = vpack.c.b16 %v864, %v863
        %v879 = vpack.c.b16 %v866, %v865
        %v880 = vpack.c.b16 %v868, %v867
        %v881 = vpack.c.b16 %v870, %v869
        %v882 = vpack.c.b16 %v872, %v871
        %v883 = vpack.c.b16 %v874, %v873
        %v884 = vpack.c.b16 %v876, %v875
        %v886 = vsel %vm371, %v877, 0
        %v889 = vsel %vm371, %v878, 0
        %v892 = vsel %vm371, %v879, 0
        %v895 = vsel %vm371, %v880, 0
        %v898 = vsel %vm371, %v881, 0
        %v901 = vsel %vm371, %v882, 0
        %v904 = vsel %vm371, %v883, 0
        %v907 = vsel %vm371, %v884, 0
        %v910 = vand.u32 %v860, %v399
        %912 = vmatprep.subr.bf16.mxu0 0
        %913 = vmatpush1.bf16.msra.mxu0 %v910
        %914 = vmatprep.subr.bf16.mxu0 0
        %915 = vmatpush1.bf16.msra.mxu0 0
        %916 = vmatprep.subr.bf16.mxu0 0
        %917 = vmatpush1.bf16.msra.mxu0 0
        %918 = vmatprep.subr.bf16.mxu0 0
        %919 = vmatpush1.bf16.msra.mxu0 0
        %920 = vmatprep.subr.bf16.mxu0 0
        %921 = vmatpush1.bf16.msra.mxu0 0
        %922 = vmatprep.subr.bf16.mxu0 0
        %923 = vmatpush1.bf16.msra.mxu0 0
        %924 = vmatprep.subr.bf16.mxu0 0
        %925 = vmatpush1.bf16.msra.mxu0 0
        %926 = vmatprep.subr.bf16.mxu0 0
        %927 = vmatpush1.bf16.msra.mxu0 0
        %928 = vmatprep.subr.bf16.mxu0 0
        %929 = vmatpush1.bf16.msra.mxu0 0
        %930 = vmatprep.subr.bf16.mxu0 0
        %931 = vmatpush1.bf16.msra.mxu0 0
        %932 = vmatprep.subr.bf16.mxu0 0
        %933 = vmatpush1.bf16.msra.mxu0 0
        %934 = vmatprep.subr.bf16.mxu0 0
        %935 = vmatpush1.bf16.msra.mxu0 0
        %936 = vmatprep.subr.bf16.mxu0 0
        %937 = vmatpush1.bf16.msra.mxu0 0
        %938 = vmatprep.subr.bf16.mxu0 0
        %939 = vmatpush1.bf16.msra.mxu0 0
        %940 = vmatprep.subr.bf16.mxu0 0
        %941 = vmatpush1.bf16.msra.mxu0 0
        %942 = vmatprep.subr.bf16.mxu0 0
        %943 = vmatpush1.bf16.msra.mxu0 0
        %944 = vmatprep.mubr.bf16.mxu0 0
        %945 = vmatmul.mubr.bf16.gmra.mrb[0].mxu0 %v886
        %v946 = vpop.f32.mrb[0].mxu0
        %v947 = vadd.f32 0.0, %v946
        %v948 = vpop.f32.mrb[0].mxu0
        %v949 = vpop.f32.mrb[0].mxu0
        %v950 = vadd.f32 0.0, %v949
        %v951 = vpop.f32.mrb[0].mxu0
        %952 = vmatprep.mubr.bf16.mxu0 0
        %953 = vmatmul.mubr.bf16.gmra.mrb[0].mxu0 %v889
        %v954 = vpop.f32.mrb[0].mxu0
        %v955 = vadd.f32 0.0, %v954
        %v956 = vpop.f32.mrb[0].mxu0
        %v957 = vpop.f32.mrb[0].mxu0
        %v958 = vadd.f32 0.0, %v957
        %v959 = vpop.f32.mrb[0].mxu0
        %960 = vmatprep.mubr.bf16.mxu0 0
        %961 = vmatmul.mubr.bf16.gmra.mrb[0].mxu0 %v892
        %v962 = vpop.f32.mrb[0].mxu0
        %v963 = vadd.f32 0.0, %v962
        %v964 = vpop.f32.mrb[0].mxu0
        %v965 = vpop.f32.mrb[0].mxu0
        %v966 = vadd.f32 0.0, %v965
        %v967 = vpop.f32.mrb[0].mxu0
        %968 = vmatprep.mubr.bf16.mxu0 0
        %969 = vmatmul.mubr.bf16.gmra.mrb[0].mxu0 %v895
        %v970 = vpop.f32.mrb[0].mxu0
        %v971 = vadd.f32 0.0, %v970
        %v972 = vpop.f32.mrb[0].mxu0
        %v973 = vpop.f32.mrb[0].mxu0
        %v974 = vadd.f32 0.0, %v973
        %v975 = vpop.f32.mrb[0].mxu0
        %976 = vmatprep.mubr.bf16.mxu0 0
        %977 = vmatmul.mubr.bf16.gmra.mrb[0].mxu0 %v898
        %v978 = vpop.f32.mrb[0].mxu0
        %v979 = vadd.f32 0.0, %v978
        %v980 = vpop.f32.mrb[0].mxu0
        %v981 = vpop.f32.mrb[0].mxu0
        %v982 = vadd.f32 0.0, %v981
        %v983 = vpop.f32.mrb[0].mxu0
        %984 = vmatprep.mubr.bf16.mxu0 0
        %985 = vmatmul.mubr.bf16.gmra.mrb[0].mxu0 %v901
        %v986 = vpop.f32.mrb[0].mxu0
        %v987 = vadd.f32 0.0, %v986
        %v988 = vpop.f32.mrb[0].mxu0
        %v989 = vpop.f32.mrb[0].mxu0
        %v990 = vadd.f32 0.0, %v989
        %v991 = vpop.f32.mrb[0].mxu0
        %992 = vmatprep.mubr.bf16.mxu0 0
        %993 = vmatmul.mubr.bf16.gmra.mrb[0].mxu0 %v904
        %v994 = vpop.f32.mrb[0].mxu0
        %v995 = vadd.f32 0.0, %v994
        %v996 = vpop.f32.mrb[0].mxu0
        %v997 = vpop.f32.mrb[0].mxu0
        %v998 = vadd.f32 0.0, %v997
        %v999 = vpop.f32.mrb[0].mxu0
        %1000 = vmatprep.mubr.bf16.mxu0 0
        %1001 = vmatmul.mubr.bf16.gmra.mrb[0].mxu0 %v907
        %v1002 = vpop.f32.mrb[0].mxu0
        %v1003 = vadd.f32 0.0, %v1002
        %v1004 = vpop.f32.mrb[0].mxu0
        %v1005 = vpop.f32.mrb[0].mxu0
        %v1006 = vadd.f32 0.0, %v1005
        %v1007 = vpop.f32.mrb[0].mxu0
        %1008 = vdwg.mxu0
        %v1009 = vadd.f32 %v602, %v947
        %v1010 = vadd.f32 %v605, %v950
        %v1011 = vadd.f32 %v610, %v955
        %v1012 = vadd.f32 %v613, %v958
        %v1013 = vadd.f32 %v618, %v963
        %v1014 = vadd.f32 %v621, %v966
        %v1015 = vadd.f32 %v626, %v971
        %v1016 = vadd.f32 %v629, %v974
        %v1017 = vadd.f32 %v634, %v979
        %v1018 = vadd.f32 %v637, %v982
        %v1019 = vadd.f32 %v642, %v987
        %v1020 = vadd.f32 %v645, %v990
        %v1021 = vadd.f32 %v650, %v995
        %v1022 = vadd.f32 %v653, %v998
        %v1023 = vadd.f32 %v658, %v1003
        %v1024 = vadd.f32 %v661, %v1006
        %v1026 = vshrl.u32 %v235, 16
        %v1028 = vrot.slane %v1026, 4
        %v1029 = vshll.u32 %v235, 16
        %v1031 = vrot.slane %v1029, 5
        %v1032 = vor.u32 %v1028, %v1031
        %v1033 = vrot.slane %v1032, 4
        %v1035 = vshll.u32 %v236, 16
        %v1037 = vrot.slane %v1035, 5
        %v1038 = vsel %vm666, %v1033, %v1037
        %v1039 = vshrl.u32 %v236, 16
        %v1041 = vrot.slane %v1039, 4
        %v1042 = vor.u32 %v1041, %v1037
        %v1043 = vrot.slane %v1042, 4
        %v1045 = vshll.u32 %v237, 16
        %v1047 = vrot.slane %v1045, 5
        %v1048 = vsel %vm666, %v1043, %v1047
        %v1050 = vshrl.u32 %v238, 16
        %v1052 = vrot.slane %v1050, 4
        %v1053 = vshll.u32 %v238, 16
        %v1055 = vrot.slane %v1053, 5
        %v1056 = vor.u32 %v1052, %v1055
        %v1057 = vrot.slane %v1056, 4
        %v1059 = vshll.u32 %v239, 16
        %v1061 = vrot.slane %v1059, 5
        %v1062 = vsel %vm666, %v1057, %v1061
        %v1063 = vshrl.u32 %v239, 16
        %v1065 = vrot.slane %v1063, 4
        %v1066 = vor.u32 %v1065, %v1061
        %v1067 = vrot.slane %v1066, 4
        %v1069 = vshll.u32 %v240, 16
        %v1071 = vrot.slane %v1069, 5
        %v1072 = vsel %vm666, %v1067, %v1071
        %v1074 = vshrl.u32 %v241, 16
        %v1076 = vrot.slane %v1074, 4
        %v1077 = vshll.u32 %v241, 16
        %v1079 = vrot.slane %v1077, 5
        %v1080 = vor.u32 %v1076, %v1079
        %v1081 = vrot.slane %v1080, 4
        %v1083 = vshll.u32 %v242, 16
        %v1085 = vrot.slane %v1083, 5
        %v1086 = vsel %vm666, %v1081, %v1085
        %v1087 = vshrl.u32 %v242, 16
        %v1089 = vrot.slane %v1087, 4
        %v1090 = vor.u32 %v1089, %v1085
        %v1091 = vrot.slane %v1090, 4
        %v1093 = vshll.u32 %v243, 16
        %v1095 = vrot.slane %v1093, 5
        %v1096 = vsel %vm666, %v1091, %v1095
        %v1098 = vshrl.u32 %v244, 16
        %v1100 = vrot.slane %v1098, 4
        %v1101 = vshll.u32 %v244, 16
        %v1103 = vrot.slane %v1101, 5
        %v1104 = vor.u32 %v1100, %v1103
        %v1105 = vrot.slane %v1104, 4
        %v1107 = vshll.u32 %v245, 16
        %v1109 = vrot.slane %v1107, 5
        %v1110 = vsel %vm666, %v1105, %v1109
        %v1111 = vshrl.u32 %v245, 16
        %v1113 = vrot.slane %v1111, 4
        %v1114 = vor.u32 %v1113, %v1109
        %v1115 = vrot.slane %v1114, 4
        %v1117 = vshll.u32 %v246, 16
        %v1119 = vrot.slane %v1117, 5
        %v1120 = vsel %vm666, %v1115, %v1119
        %v1122 = vshrl.u32 %v247, 16
        %v1124 = vrot.slane %v1122, 4
        %v1125 = vshll.u32 %v247, 16
        %v1127 = vrot.slane %v1125, 5
        %v1128 = vor.u32 %v1124, %v1127
        %v1129 = vrot.slane %v1128, 4
        %v1131 = vshll.u32 %v248, 16
        %v1133 = vrot.slane %v1131, 5
        %v1134 = vsel %vm666, %v1129, %v1133
        %v1135 = vshrl.u32 %v248, 16
        %v1137 = vrot.slane %v1135, 4
        %v1138 = vor.u32 %v1137, %v1133
        %v1139 = vrot.slane %v1138, 4
        %v1141 = vshll.u32 %v249, 16
        %v1143 = vrot.slane %v1141, 5
        %v1144 = vsel %vm666, %v1139, %v1143
        %v1146 = vshrl.u32 %v250, 16
        %v1148 = vrot.slane %v1146, 4
        %v1149 = vshll.u32 %v250, 16
        %v1151 = vrot.slane %v1149, 5
        %v1152 = vor.u32 %v1148, %v1151
        %v1153 = vrot.slane %v1152, 4
        %v1155 = vshll.u32 %v251, 16
        %v1157 = vrot.slane %v1155, 5
        %v1158 = vsel %vm666, %v1153, %v1157
        %v1159 = vshrl.u32 %v251, 16
        %v1161 = vrot.slane %v1159, 4
        %v1162 = vor.u32 %v1161, %v1157
        %v1163 = vrot.slane %v1162, 4
        %v1165 = vshll.u32 %v252, 16
        %v1167 = vrot.slane %v1165, 5
        %v1168 = vsel %vm666, %v1163, %v1167
        %v1170 = vshrl.u32 %v253, 16
        %v1172 = vrot.slane %v1170, 4
        %v1173 = vshll.u32 %v253, 16
        %v1175 = vrot.slane %v1173, 5
        %v1176 = vor.u32 %v1172, %v1175
        %v1177 = vrot.slane %v1176, 4
        %v1179 = vshll.u32 %v254, 16
        %v1181 = vrot.slane %v1179, 5
        %v1182 = vsel %vm666, %v1177, %v1181
        %v1183 = vshrl.u32 %v254, 16
        %v1185 = vrot.slane %v1183, 4
        %v1186 = vor.u32 %v1185, %v1181
        %v1187 = vrot.slane %v1186, 4
        %v1189 = vshll.u32 %v255, 16
        %v1191 = vrot.slane %v1189, 5
        %v1192 = vsel %vm666, %v1187, %v1191
        %v1194 = vshrl.u32 %v256, 16
        %v1196 = vrot.slane %v1194, 4
        %v1197 = vshll.u32 %v256, 16
        %v1199 = vrot.slane %v1197, 5
        %v1200 = vor.u32 %v1196, %v1199
        %v1201 = vrot.slane %v1200, 4
        %v1203 = vshll.u32 %v257, 16
        %v1205 = vrot.slane %v1203, 5
        %v1206 = vsel %vm666, %v1201, %v1205
        %v1207 = vshrl.u32 %v257, 16
        %v1209 = vrot.slane %v1207, 4
        %v1210 = vor.u32 %v1209, %v1205
        %v1211 = vrot.slane %v1210, 4
        %v1213 = vshll.u32 %v258, 16
        %v1215 = vrot.slane %v1213, 5
        %v1216 = vsel %vm666, %v1211, %v1215
        %s1217 = scalar_lea.vmem %s1, 6
        %v1218 = vld [vmem:[%s1217] sm:$0x3]
        %v1219 = vunpack.c.l.b16 %v1038
        %v1220 = vunpack.c.l.b16 %v1048
        %v1221 = vunpack.c.l.b16 %v1062
        %v1222 = vunpack.c.l.b16 %v1072
        %v1223 = vunpack.c.l.b16 %v1086
        %v1224 = vunpack.c.l.b16 %v1096
        %v1225 = vunpack.c.l.b16 %v1110
        %v1226 = vunpack.c.l.b16 %v1120
        %v1227 = vunpack.c.l.b16 %v1134
        %v1228 = vunpack.c.l.b16 %v1144
        %v1229 = vunpack.c.l.b16 %v1158
        %v1230 = vunpack.c.l.b16 %v1168
        %v1231 = vunpack.c.l.b16 %v1182
        %v1232 = vunpack.c.l.b16 %v1192
        %v1233 = vunpack.c.l.b16 %v1206
        %v1234 = vunpack.c.l.b16 %v1216
        %v1235 = vpack.c.b16 %v1220, %v1219
        %v1236 = vpack.c.b16 %v1222, %v1221
        %v1237 = vpack.c.b16 %v1224, %v1223
        %v1238 = vpack.c.b16 %v1226, %v1225
        %v1239 = vpack.c.b16 %v1228, %v1227
        %v1240 = vpack.c.b16 %v1230, %v1229
        %v1241 = vpack.c.b16 %v1232, %v1231
        %v1242 = vpack.c.b16 %v1234, %v1233
        %v1244 = vsel %vm371, %v1235, 0
        %v1247 = vsel %vm371, %v1236, 0
        %v1250 = vsel %vm371, %v1237, 0
        %v1253 = vsel %vm371, %v1238, 0
        %v1256 = vsel %vm371, %v1239, 0
        %v1259 = vsel %vm371, %v1240, 0
        %v1262 = vsel %vm371, %v1241, 0
        %v1265 = vsel %vm371, %v1242, 0
        %v1268 = vand.u32 %v1218, %v399
        %1270 = vmatprep.subr.bf16.mxu0 0
        %1271 = vmatpush1.bf16.msra.mxu0 %v1268
        %1272 = vmatprep.subr.bf16.mxu0 0
        %1273 = vmatpush1.bf16.msra.mxu0 0
        %1274 = vmatprep.subr.bf16.mxu0 0
        %1275 = vmatpush1.bf16.msra.mxu0 0
        %1276 = vmatprep.subr.bf16.mxu0 0
        %1277 = vmatpush1.bf16.msra.mxu0 0
        %1278 = vmatprep.subr.bf16.mxu0 0
        %1279 = vmatpush1.bf16.msra.mxu0 0
        %1280 = vmatprep.subr.bf16.mxu0 0
        %1281 = vmatpush1.bf16.msra.mxu0 0
        %1282 = vmatprep.subr.bf16.mxu0 0
        %1283 = vmatpush1.bf16.msra.mxu0 0
        %1284 = vmatprep.subr.bf16.mxu0 0
        %1285 = vmatpush1.bf16.msra.mxu0 0
        %1286 = vmatprep.subr.bf16.mxu0 0
        %1287 = vmatpush1.bf16.msra.mxu0 0
        %1288 = vmatprep.subr.bf16.mxu0 0
        %1289 = vmatpush1.bf16.msra.mxu0 0
        %1290 = vmatprep.subr.bf16.mxu0 0
        %1291 = vmatpush1.bf16.msra.mxu0 0
        %1292 = vmatprep.subr.bf16.mxu0 0
        %1293 = vmatpush1.bf16.msra.mxu0 0
        %1294 = vmatprep.subr.bf16.mxu0 0
        %1295 = vmatpush1.bf16.msra.mxu0 0
        %1296 = vmatprep.subr.bf16.mxu0 0
        %1297 = vmatpush1.bf16.msra.mxu0 0
        %1298 = vmatprep.subr.bf16.mxu0 0
        %1299 = vmatpush1.bf16.msra.mxu0 0
        %1300 = vmatprep.subr.bf16.mxu0 0
        %1301 = vmatpush1.bf16.msra.mxu0 0
        %1302 = vmatprep.mubr.bf16.mxu0 0
        %1303 = vmatmul.mubr.bf16.gmra.mrb[0].mxu0 %v1244
        %v1304 = vpop.f32.mrb[0].mxu0
        %v1305 = vadd.f32 0.0, %v1304
        %v1306 = vpop.f32.mrb[0].mxu0
        %v1307 = vpop.f32.mrb[0].mxu0
        %v1308 = vadd.f32 0.0, %v1307
        %v1309 = vpop.f32.mrb[0].mxu0
        %1310 = vmatprep.mubr.bf16.mxu0 0
        %1311 = vmatmul.mubr.bf16.gmra.mrb[0].mxu0 %v1247
        %v1312 = vpop.f32.mrb[0].mxu0
        %v1313 = vadd.f32 0.0, %v1312
        %v1314 = vpop.f32.mrb[0].mxu0
        %v1315 = vpop.f32.mrb[0].mxu0
        %v1316 = vadd.f32 0.0, %v1315
        %v1317 = vpop.f32.mrb[0].mxu0
        %1318 = vmatprep.mubr.bf16.mxu0 0
        %1319 = vmatmul.mubr.bf16.gmra.mrb[0].mxu0 %v1250
        %v1320 = vpop.f32.mrb[0].mxu0
        %v1321 = vadd.f32 0.0, %v1320
        %v1322 = vpop.f32.mrb[0].mxu0
        %v1323 = vpop.f32.mrb[0].mxu0
        %v1324 = vadd.f32 0.0, %v1323
        %v1325 = vpop.f32.mrb[0].mxu0
        %1326 = vmatprep.mubr.bf16.mxu0 0
        %1327 = vmatmul.mubr.bf16.gmra.mrb[0].mxu0 %v1253
        %v1328 = vpop.f32.mrb[0].mxu0
        %v1329 = vadd.f32 0.0, %v1328
        %v1330 = vpop.f32.mrb[0].mxu0
        %v1331 = vpop.f32.mrb[0].mxu0
        %v1332 = vadd.f32 0.0, %v1331
        %v1333 = vpop.f32.mrb[0].mxu0
        %1334 = vmatprep.mubr.bf16.mxu0 0
        %1335 = vmatmul.mubr.bf16.gmra.mrb[0].mxu0 %v1256
        %v1336 = vpop.f32.mrb[0].mxu0
        %v1337 = vadd.f32 0.0, %v1336
        %v1338 = vpop.f32.mrb[0].mxu0
        %v1339 = vpop.f32.mrb[0].mxu0
        %v1340 = vadd.f32 0.0, %v1339
        %v1341 = vpop.f32.mrb[0].mxu0
        %1342 = vmatprep.mubr.bf16.mxu0 0
        %1343 = vmatmul.mubr.bf16.gmra.mrb[0].mxu0 %v1259
        %v1344 = vpop.f32.mrb[0].mxu0
        %v1345 = vadd.f32 0.0, %v1344
        %v1346 = vpop.f32.mrb[0].mxu0
        %v1347 = vpop.f32.mrb[0].mxu0
        %v1348 = vadd.f32 0.0, %v1347
        %v1349 = vpop.f32.mrb[0].mxu0
        %1350 = vmatprep.mubr.bf16.mxu0 0
        %1351 = vmatmul.mubr.bf16.gmra.mrb[0].mxu0 %v1262
        %v1352 = vpop.f32.mrb[0].mxu0
        %v1353 = vadd.f32 0.0, %v1352
        %v1354 = vpop.f32.mrb[0].mxu0
        %v1355 = vpop.f32.mrb[0].mxu0
        %v1356 = vadd.f32 0.0, %v1355
        %v1357 = vpop.f32.mrb[0].mxu0
        %1358 = vmatprep.mubr.bf16.mxu0 0
        %1359 = vmatmul.mubr.bf16.gmra.mrb[0].mxu0 %v1265
        %v1360 = vpop.f32.mrb[0].mxu0
        %v1361 = vadd.f32 0.0, %v1360
        %v1362 = vpop.f32.mrb[0].mxu0
        %v1363 = vpop.f32.mrb[0].mxu0
        %v1364 = vadd.f32 0.0, %v1363
        %v1365 = vpop.f32.mrb[0].mxu0
        %1366 = vdwg.mxu0
        %v1367 = vadd.f32 %v1009, %v1305
        %v1368 = vadd.f32 %v1010, %v1308
        %v1369 = vadd.f32 %v1011, %v1313
        %v1370 = vadd.f32 %v1012, %v1316
        %v1371 = vadd.f32 %v1013, %v1321
        %v1372 = vadd.f32 %v1014, %v1324
        %v1373 = vadd.f32 %v1015, %v1329
        %v1374 = vadd.f32 %v1016, %v1332
        %v1375 = vadd.f32 %v1017, %v1337
        %v1376 = vadd.f32 %v1018, %v1340
        %v1377 = vadd.f32 %v1019, %v1345
        %v1378 = vadd.f32 %v1020, %v1348
        %v1379 = vadd.f32 %v1021, %v1353
        %v1380 = vadd.f32 %v1022, %v1356
        %v1381 = vadd.f32 %v1023, %v1361
        %v1382 = vadd.f32 %v1024, %v1364
        %vm1391 = vcmask 1042432
        %vm1392 = vcmask 1046532
        %vm1393 = vmor %vm1391, %vm1392
        %v1394 = vrot.slane %v202, 5
        %v1395 = vrot.slane %v1394, 4
        %v1396 = vrot.slane %v203, 5
        %v1397 = vsel %vm1393, %v1395, %v1396
        %v1398 = vrot.slane %v1396, 4
        %v1399 = vrot.slane %v204, 5
        %v1400 = vsel %vm1393, %v1398, %v1399
        %v1401 = vrot.slane %v205, 5
        %v1402 = vrot.slane %v1401, 4
        %v1403 = vrot.slane %v206, 5
        %v1404 = vsel %vm1393, %v1402, %v1403
        %v1405 = vrot.slane %v1403, 4
        %v1406 = vrot.slane %v207, 5
        %v1407 = vsel %vm1393, %v1405, %v1406
        %v1408 = vrot.slane %v208, 5
        %v1409 = vrot.slane %v1408, 4
        %v1410 = vrot.slane %v209, 5
        %v1411 = vsel %vm1393, %v1409, %v1410
        %v1412 = vrot.slane %v1410, 4
        %v1413 = vrot.slane %v210, 5
        %v1414 = vsel %vm1393, %v1412, %v1413
        %v1415 = vrot.slane %v211, 5
        %v1416 = vrot.slane %v1415, 4
        %v1417 = vrot.slane %v212, 5
        %v1418 = vsel %vm1393, %v1416, %v1417
        %v1419 = vrot.slane %v1417, 4
        %v1420 = vrot.slane %v213, 5
        %v1421 = vsel %vm1393, %v1419, %v1420
        %v1422 = vrot.slane %v214, 5
        %v1423 = vrot.slane %v1422, 4
        %v1424 = vrot.slane %v215, 5
        %v1425 = vsel %vm1393, %v1423, %v1424
        %v1426 = vrot.slane %v1424, 4
        %v1427 = vrot.slane %v216, 5
        %v1428 = vsel %vm1393, %v1426, %v1427
        %v1429 = vrot.slane %v217, 5
        %v1430 = vrot.slane %v1429, 4
        %v1431 = vrot.slane %v218, 5
        %v1432 = vsel %vm1393, %v1430, %v1431
        %v1433 = vrot.slane %v1431, 4
        %v1434 = vrot.slane %v219, 5
        %v1435 = vsel %vm1393, %v1433, %v1434
        %v1436 = vrot.slane %v220, 5
        %v1437 = vrot.slane %v1436, 4
        %v1438 = vrot.slane %v221, 5
        %v1439 = vsel %vm1393, %v1437, %v1438
        %v1440 = vrot.slane %v1438, 4
        %v1441 = vrot.slane %v222, 5
        %v1442 = vsel %vm1393, %v1440, %v1441
        %v1443 = vrot.slane %v223, 5
        %v1444 = vrot.slane %v1443, 4
        %v1445 = vrot.slane %v224, 5
        %v1446 = vsel %vm1393, %v1444, %v1445
        %v1447 = vrot.slane %v1445, 4
        %v1448 = vrot.slane %v225, 5
        %v1449 = vsel %vm1393, %v1447, %v1448
        %s1450 = scalar_lea.vmem %s1, 8
        %v1451 = vld [vmem:[%s1450] sm:$0x3]
        %v1452 = vunpack.c.l.b16 %v1397
        %v1453 = vunpack.c.l.b16 %v1400
        %v1454 = vunpack.c.l.b16 %v1404
        %v1455 = vunpack.c.l.b16 %v1407
        %v1456 = vunpack.c.l.b16 %v1411
        %v1457 = vunpack.c.l.b16 %v1414
        %v1458 = vunpack.c.l.b16 %v1418
        %v1459 = vunpack.c.l.b16 %v1421
        %v1460 = vunpack.c.l.b16 %v1425
        %v1461 = vunpack.c.l.b16 %v1428
        %v1462 = vunpack.c.l.b16 %v1432
        %v1463 = vunpack.c.l.b16 %v1435
        %v1464 = vunpack.c.l.b16 %v1439
        %v1465 = vunpack.c.l.b16 %v1442
        %v1466 = vunpack.c.l.b16 %v1446
        %v1467 = vunpack.c.l.b16 %v1449
        %v1468 = vpack.c.b16 %v1453, %v1452
        %v1469 = vpack.c.b16 %v1455, %v1454
        %v1470 = vpack.c.b16 %v1457, %v1456
        %v1471 = vpack.c.b16 %v1459, %v1458
        %v1472 = vpack.c.b16 %v1461, %v1460
        %v1473 = vpack.c.b16 %v1463, %v1462
        %v1474 = vpack.c.b16 %v1465, %v1464
        %v1475 = vpack.c.b16 %v1467, %v1466
        %v1477 = vsel %vm371, %v1468, 0
        %v1480 = vsel %vm371, %v1469, 0
        %v1483 = vsel %vm371, %v1470, 0
        %v1486 = vsel %vm371, %v1471, 0
        %v1489 = vsel %vm371, %v1472, 0
        %v1492 = vsel %vm371, %v1473, 0
        %v1495 = vsel %vm371, %v1474, 0
        %v1498 = vsel %vm371, %v1475, 0
        %v1501 = vand.u32 %v1451, %v399
        %1503 = vmatprep.subr.bf16.mxu0 0
        %1504 = vmatpush1.bf16.msra.mxu0 %v1501
        %1505 = vmatprep.subr.bf16.mxu0 0
        %1506 = vmatpush1.bf16.msra.mxu0 0
        %1507 = vmatprep.subr.bf16.mxu0 0
        %1508 = vmatpush1.bf16.msra.mxu0 0
        %1509 = vmatprep.subr.bf16.mxu0 0
        %1510 = vmatpush1.bf16.msra.mxu0 0
        %1511 = vmatprep.subr.bf16.mxu0 0
        %1512 = vmatpush1.bf16.msra.mxu0 0
        %1513 = vmatprep.subr.bf16.mxu0 0
        %1514 = vmatpush1.bf16.msra.mxu0 0
        %1515 = vmatprep.subr.bf16.mxu0 0
        %1516 = vmatpush1.bf16.msra.mxu0 0
        %1517 = vmatprep.subr.bf16.mxu0 0
        %1518 = vmatpush1.bf16.msra.mxu0 0
        %1519 = vmatprep.subr.bf16.mxu0 0
        %1520 = vmatpush1.bf16.msra.mxu0 0
        %1521 = vmatprep.subr.bf16.mxu0 0
        %1522 = vmatpush1.bf16.msra.mxu0 0
        %1523 = vmatprep.subr.bf16.mxu0 0
        %1524 = vmatpush1.bf16.msra.mxu0 0
        %1525 = vmatprep.subr.bf16.mxu0 0
        %1526 = vmatpush1.bf16.msra.mxu0 0
        %1527 = vmatprep.subr.bf16.mxu0 0
        %1528 = vmatpush1.bf16.msra.mxu0 0
        %1529 = vmatprep.subr.bf16.mxu0 0
        %1530 = vmatpush1.bf16.msra.mxu0 0
        %1531 = vmatprep.subr.bf16.mxu0 0
        %1532 = vmatpush1.bf16.msra.mxu0 0
        %1533 = vmatprep.subr.bf16.mxu0 0
        %1534 = vmatpush1.bf16.msra.mxu0 0
        %1535 = vmatprep.mubr.bf16.mxu0 0
        %1536 = vmatmul.mubr.bf16.gmra.mrb[0].mxu0 %v1477
        %v1537 = vpop.f32.mrb[0].mxu0
        %v1538 = vadd.f32 0.0, %v1537
        %v1539 = vpop.f32.mrb[0].mxu0
        %v1540 = vpop.f32.mrb[0].mxu0
        %v1541 = vadd.f32 0.0, %v1540
        %v1542 = vpop.f32.mrb[0].mxu0
        %1543 = vmatprep.mubr.bf16.mxu0 0
        %1544 = vmatmul.mubr.bf16.gmra.mrb[0].mxu0 %v1480
        %v1545 = vpop.f32.mrb[0].mxu0
        %v1546 = vadd.f32 0.0, %v1545
        %v1547 = vpop.f32.mrb[0].mxu0
        %v1548 = vpop.f32.mrb[0].mxu0
        %v1549 = vadd.f32 0.0, %v1548
        %v1550 = vpop.f32.mrb[0].mxu0
        %1551 = vmatprep.mubr.bf16.mxu0 0
        %1552 = vmatmul.mubr.bf16.gmra.mrb[0].mxu0 %v1483
        %v1553 = vpop.f32.mrb[0].mxu0
        %v1554 = vadd.f32 0.0, %v1553
        %v1555 = vpop.f32.mrb[0].mxu0
        %v1556 = vpop.f32.mrb[0].mxu0
        %v1557 = vadd.f32 0.0, %v1556
        %v1558 = vpop.f32.mrb[0].mxu0
        %1559 = vmatprep.mubr.bf16.mxu0 0
        %1560 = vmatmul.mubr.bf16.gmra.mrb[0].mxu0 %v1486
        %v1561 = vpop.f32.mrb[0].mxu0
        %v1562 = vadd.f32 0.0, %v1561
        %v1563 = vpop.f32.mrb[0].mxu0
        %v1564 = vpop.f32.mrb[0].mxu0
        %v1565 = vadd.f32 0.0, %v1564
        %v1566 = vpop.f32.mrb[0].mxu0
        %1567 = vmatprep.mubr.bf16.mxu0 0
        %1568 = vmatmul.mubr.bf16.gmra.mrb[0].mxu0 %v1489
        %v1569 = vpop.f32.mrb[0].mxu0
        %v1570 = vadd.f32 0.0, %v1569
        %v1571 = vpop.f32.mrb[0].mxu0
        %v1572 = vpop.f32.mrb[0].mxu0
        %v1573 = vadd.f32 0.0, %v1572
        %v1574 = vpop.f32.mrb[0].mxu0
        %1575 = vmatprep.mubr.bf16.mxu0 0
        %1576 = vmatmul.mubr.bf16.gmra.mrb[0].mxu0 %v1492
        %v1577 = vpop.f32.mrb[0].mxu0
        %v1578 = vadd.f32 0.0, %v1577
        %v1579 = vpop.f32.mrb[0].mxu0
        %v1580 = vpop.f32.mrb[0].mxu0
        %v1581 = vadd.f32 0.0, %v1580
        %v1582 = vpop.f32.mrb[0].mxu0
        %1583 = vmatprep.mubr.bf16.mxu0 0
        %1584 = vmatmul.mubr.bf16.gmra.mrb[0].mxu0 %v1495
        %v1585 = vpop.f32.mrb[0].mxu0
        %v1586 = vadd.f32 0.0, %v1585
        %v1587 = vpop.f32.mrb[0].mxu0
        %v1588 = vpop.f32.mrb[0].mxu0
        %v1589 = vadd.f32 0.0, %v1588
        %v1590 = vpop.f32.mrb[0].mxu0
        %1591 = vmatprep.mubr.bf16.mxu0 0
        %1592 = vmatmul.mubr.bf16.gmra.mrb[0].mxu0 %v1498
        %v1593 = vpop.f32.mrb[0].mxu0
        %v1594 = vadd.f32 0.0, %v1593
        %v1595 = vpop.f32.mrb[0].mxu0
        %v1596 = vpop.f32.mrb[0].mxu0
        %v1597 = vadd.f32 0.0, %v1596
        %v1598 = vpop.f32.mrb[0].mxu0
        %1599 = vdwg.mxu0
        %v1600 = vadd.f32 %v1367, %v1538
        %v1601 = vadd.f32 %v1368, %v1541
        %v1602 = vadd.f32 %v1369, %v1546
        %v1603 = vadd.f32 %v1370, %v1549
        %v1604 = vadd.f32 %v1371, %v1554
        %v1605 = vadd.f32 %v1372, %v1557
        %v1606 = vadd.f32 %v1373, %v1562
        %v1607 = vadd.f32 %v1374, %v1565
        %v1608 = vadd.f32 %v1375, %v1570
        %v1609 = vadd.f32 %v1376, %v1573
        %v1610 = vadd.f32 %v1377, %v1578
        %v1611 = vadd.f32 %v1378, %v1581
        %v1612 = vadd.f32 %v1379, %v1586
        %v1613 = vadd.f32 %v1380, %v1589
        %v1614 = vadd.f32 %v1381, %v1594
        %v1615 = vadd.f32 %v1382, %v1597
        %v1624 = vrot.slane %v235, 5
        %v1625 = vrot.slane %v1624, 4
        %v1626 = vrot.slane %v236, 5
        %v1627 = vsel %vm1393, %v1625, %v1626
        %v1628 = vrot.slane %v1626, 4
        %v1629 = vrot.slane %v237, 5
        %v1630 = vsel %vm1393, %v1628, %v1629
        %v1631 = vrot.slane %v238, 5
        %v1632 = vrot.slane %v1631, 4
        %v1633 = vrot.slane %v239, 5
        %v1634 = vsel %vm1393, %v1632, %v1633
        %v1635 = vrot.slane %v1633, 4
        %v1636 = vrot.slane %v240, 5
        %v1637 = vsel %vm1393, %v1635, %v1636
        %v1638 = vrot.slane %v241, 5
        %v1639 = vrot.slane %v1638, 4
        %v1640 = vrot.slane %v242, 5
        %v1641 = vsel %vm1393, %v1639, %v1640
        %v1642 = vrot.slane %v1640, 4
        %v1643 = vrot.slane %v243, 5
        %v1644 = vsel %vm1393, %v1642, %v1643
        %v1645 = vrot.slane %v244, 5
        %v1646 = vrot.slane %v1645, 4
        %v1647 = vrot.slane %v245, 5
        %v1648 = vsel %vm1393, %v1646, %v1647
        %v1649 = vrot.slane %v1647, 4
        %v1650 = vrot.slane %v246, 5
        %v1651 = vsel %vm1393, %v1649, %v1650
        %v1652 = vrot.slane %v247, 5
        %v1653 = vrot.slane %v1652, 4
        %v1654 = vrot.slane %v248, 5
        %v1655 = vsel %vm1393, %v1653, %v1654
        %v1656 = vrot.slane %v1654, 4
        %v1657 = vrot.slane %v249, 5
        %v1658 = vsel %vm1393, %v1656, %v1657
        %v1659 = vrot.slane %v250, 5
        %v1660 = vrot.slane %v1659, 4
        %v1661 = vrot.slane %v251, 5
        %v1662 = vsel %vm1393, %v1660, %v1661
        %v1663 = vrot.slane %v1661, 4
        %v1664 = vrot.slane %v252, 5
        %v1665 = vsel %vm1393, %v1663, %v1664
        %v1666 = vrot.slane %v253, 5
        %v1667 = vrot.slane %v1666, 4
        %v1668 = vrot.slane %v254, 5
        %v1669 = vsel %vm1393, %v1667, %v1668
        %v1670 = vrot.slane %v1668, 4
        %v1671 = vrot.slane %v255, 5
        %v1672 = vsel %vm1393, %v1670, %v1671
        %v1673 = vrot.slane %v256, 5
        %v1674 = vrot.slane %v1673, 4
        %v1675 = vrot.slane %v257, 5
        %v1676 = vsel %vm1393, %v1674, %v1675
        %v1677 = vrot.slane %v1675, 4
        %v1678 = vrot.slane %v258, 5
        %v1679 = vsel %vm1393, %v1677, %v1678
        %s1680 = scalar_lea.vmem %s1, 10
        %v1681 = vld [vmem:[%s1680] sm:$0x3]
        %v1682 = vunpack.c.l.b16 %v1627
        %v1683 = vunpack.c.l.b16 %v1630
        %v1684 = vunpack.c.l.b16 %v1634
        %v1685 = vunpack.c.l.b16 %v1637
        %v1686 = vunpack.c.l.b16 %v1641
        %v1687 = vunpack.c.l.b16 %v1644
        %v1688 = vunpack.c.l.b16 %v1648
        %v1689 = vunpack.c.l.b16 %v1651
        %v1690 = vunpack.c.l.b16 %v1655
        %v1691 = vunpack.c.l.b16 %v1658
        %v1692 = vunpack.c.l.b16 %v1662
        %v1693 = vunpack.c.l.b16 %v1665
        %v1694 = vunpack.c.l.b16 %v1669
        %v1695 = vunpack.c.l.b16 %v1672
        %v1696 = vunpack.c.l.b16 %v1676
        %v1697 = vunpack.c.l.b16 %v1679
        %v1698 = vpack.c.b16 %v1683, %v1682
        %v1699 = vpack.c.b16 %v1685, %v1684
        %v1700 = vpack.c.b16 %v1687, %v1686
        %v1701 = vpack.c.b16 %v1689, %v1688
        %v1702 = vpack.c.b16 %v1691, %v1690
        %v1703 = vpack.c.b16 %v1693, %v1692
        %v1704 = vpack.c.b16 %v1695, %v1694
        %v1705 = vpack.c.b16 %v1697, %v1696
        %v1707 = vsel %vm371, %v1698, 0
        %v1710 = vsel %vm371, %v1699, 0
        %v1713 = vsel %vm371, %v1700, 0
        %v1716 = vsel %vm371, %v1701, 0
        %v1719 = vsel %vm371, %v1702, 0
        %v1722 = vsel %vm371, %v1703, 0
        %v1725 = vsel %vm371, %v1704, 0
        %v1728 = vsel %vm371, %v1705, 0
        %v1731 = vand.u32 %v1681, %v399
        %1733 = vmatprep.subr.bf16.mxu0 0
        %1734 = vmatpush1.bf16.msra.mxu0 %v1731
        %1735 = vmatprep.subr.bf16.mxu0 0
        %1736 = vmatpush1.bf16.msra.mxu0 0
        %1737 = vmatprep.subr.bf16.mxu0 0
        %1738 = vmatpush1.bf16.msra.mxu0 0
        %1739 = vmatprep.subr.bf16.mxu0 0
        %1740 = vmatpush1.bf16.msra.mxu0 0
        %1741 = vmatprep.subr.bf16.mxu0 0
        %1742 = vmatpush1.bf16.msra.mxu0 0
        %1743 = vmatprep.subr.bf16.mxu0 0
        %1744 = vmatpush1.bf16.msra.mxu0 0
        %1745 = vmatprep.subr.bf16.mxu0 0
        %1746 = vmatpush1.bf16.msra.mxu0 0
        %1747 = vmatprep.subr.bf16.mxu0 0
        %1748 = vmatpush1.bf16.msra.mxu0 0
        %1749 = vmatprep.subr.bf16.mxu0 0
        %1750 = vmatpush1.bf16.msra.mxu0 0
        %1751 = vmatprep.subr.bf16.mxu0 0
        %1752 = vmatpush1.bf16.msra.mxu0 0
        %1753 = vmatprep.subr.bf16.mxu0 0
        %1754 = vmatpush1.bf16.msra.mxu0 0
        %1755 = vmatprep.subr.bf16.mxu0 0
        %1756 = vmatpush1.bf16.msra.mxu0 0
        %1757 = vmatprep.subr.bf16.mxu0 0
        %1758 = vmatpush1.bf16.msra.mxu0 0
        %1759 = vmatprep.subr.bf16.mxu0 0
        %1760 = vmatpush1.bf16.msra.mxu0 0
        %1761 = vmatprep.subr.bf16.mxu0 0
        %1762 = vmatpush1.bf16.msra.mxu0 0
        %1763 = vmatprep.subr.bf16.mxu0 0
        %1764 = vmatpush1.bf16.msra.mxu0 0
        %1765 = vmatprep.mubr.bf16.mxu0 0
        %1766 = vmatmul.mubr.bf16.gmra.mrb[0].mxu0 %v1707
        %v1767 = vpop.f32.mrb[0].mxu0
        %v1768 = vadd.f32 0.0, %v1767
        %v1769 = vpop.f32.mrb[0].mxu0
        %v1770 = vpop.f32.mrb[0].mxu0
        %v1771 = vadd.f32 0.0, %v1770
        %v1772 = vpop.f32.mrb[0].mxu0
        %1773 = vmatprep.mubr.bf16.mxu0 0
        %1774 = vmatmul.mubr.bf16.gmra.mrb[0].mxu0 %v1710
        %v1775 = vpop.f32.mrb[0].mxu0
        %v1776 = vadd.f32 0.0, %v1775
        %v1777 = vpop.f32.mrb[0].mxu0
        %v1778 = vpop.f32.mrb[0].mxu0
        %v1779 = vadd.f32 0.0, %v1778
        %v1780 = vpop.f32.mrb[0].mxu0
        %1781 = vmatprep.mubr.bf16.mxu0 0
        %1782 = vmatmul.mubr.bf16.gmra.mrb[0].mxu0 %v1713
        %v1783 = vpop.f32.mrb[0].mxu0
        %v1784 = vadd.f32 0.0, %v1783
        %v1785 = vpop.f32.mrb[0].mxu0
        %v1786 = vpop.f32.mrb[0].mxu0
        %v1787 = vadd.f32 0.0, %v1786
        %v1788 = vpop.f32.mrb[0].mxu0
        %1789 = vmatprep.mubr.bf16.mxu0 0
        %1790 = vmatmul.mubr.bf16.gmra.mrb[0].mxu0 %v1716
        %v1791 = vpop.f32.mrb[0].mxu0
        %v1792 = vadd.f32 0.0, %v1791
        %v1793 = vpop.f32.mrb[0].mxu0
        %v1794 = vpop.f32.mrb[0].mxu0
        %v1795 = vadd.f32 0.0, %v1794
        %v1796 = vpop.f32.mrb[0].mxu0
        %1797 = vmatprep.mubr.bf16.mxu0 0
        %1798 = vmatmul.mubr.bf16.gmra.mrb[0].mxu0 %v1719
        %v1799 = vpop.f32.mrb[0].mxu0
        %v1800 = vadd.f32 0.0, %v1799
        %v1801 = vpop.f32.mrb[0].mxu0
        %v1802 = vpop.f32.mrb[0].mxu0
        %v1803 = vadd.f32 0.0, %v1802
        %v1804 = vpop.f32.mrb[0].mxu0
        %1805 = vmatprep.mubr.bf16.mxu0 0
        %1806 = vmatmul.mubr.bf16.gmra.mrb[0].mxu0 %v1722
        %v1807 = vpop.f32.mrb[0].mxu0
        %v1808 = vadd.f32 0.0, %v1807
        %v1809 = vpop.f32.mrb[0].mxu0
        %v1810 = vpop.f32.mrb[0].mxu0
        %v1811 = vadd.f32 0.0, %v1810
        %v1812 = vpop.f32.mrb[0].mxu0
        %1813 = vmatprep.mubr.bf16.mxu0 0
        %1814 = vmatmul.mubr.bf16.gmra.mrb[0].mxu0 %v1725
        %v1815 = vpop.f32.mrb[0].mxu0
        %v1816 = vadd.f32 0.0, %v1815
        %v1817 = vpop.f32.mrb[0].mxu0
        %v1818 = vpop.f32.mrb[0].mxu0
        %v1819 = vadd.f32 0.0, %v1818
        %v1820 = vpop.f32.mrb[0].mxu0
        %1821 = vmatprep.mubr.bf16.mxu0 0
        %1822 = vmatmul.mubr.bf16.gmra.mrb[0].mxu0 %v1728
        %v1823 = vpop.f32.mrb[0].mxu0
        %v1824 = vadd.f32 0.0, %v1823
        %v1825 = vpop.f32.mrb[0].mxu0
        %v1826 = vpop.f32.mrb[0].mxu0
        %v1827 = vadd.f32 0.0, %v1826
        %v1828 = vpop.f32.mrb[0].mxu0
        %1829 = vdwg.mxu0
        %v1830 = vadd.f32 %v1600, %v1768
        %v1831 = vadd.f32 %v1601, %v1771
        %v1832 = vadd.f32 %v1602, %v1776
        %v1833 = vadd.f32 %v1603, %v1779
        %v1834 = vadd.f32 %v1604, %v1784
        %v1835 = vadd.f32 %v1605, %v1787
        %v1836 = vadd.f32 %v1606, %v1792
        %v1837 = vadd.f32 %v1607, %v1795
        %v1838 = vadd.f32 %v1608, %v1800
        %v1839 = vadd.f32 %v1609, %v1803
        %v1840 = vadd.f32 %v1610, %v1808
        %v1841 = vadd.f32 %v1611, %v1811
        %v1842 = vadd.f32 %v1612, %v1816
        %v1843 = vadd.f32 %v1613, %v1819
        %v1844 = vadd.f32 %v1614, %v1824
        %v1845 = vadd.f32 %v1615, %v1827
        %vm1846 = vsmask.f32 2304
        %vm1847 = vsmask.f32 6416
        %vm1848 = vmor %vm1846, %vm1847
        %v1849 = vrot.slane %v668, 5
        %v1850 = vrot.slane %v671, 6
        %v1851 = vor.u32 %v1849, %v1850
        %v1852 = vrot.slane %v1851, 4
        %v1853 = vrot.slane %v681, 5
        %v1854 = vrot.slane %v677, 6
        %v1855 = vor.u32 %v1853, %v1854
        %v1856 = vsel %vm1848, %v1852, %v1855
        %v1857 = vrot.slane %v1855, 4
        %v1858 = vshrl.u32 %v204, 16
        %v1860 = vrot.slane %v1858, 5
        %v1861 = vrot.slane %v687, 6
        %v1862 = vor.u32 %v1860, %v1861
        %v1863 = vsel %vm1848, %v1857, %v1862
        %v1864 = vrot.slane %v692, 5
        %v1865 = vrot.slane %v695, 6
        %v1866 = vor.u32 %v1864, %v1865
        %v1867 = vrot.slane %v1866, 4
        %v1868 = vrot.slane %v705, 5
        %v1869 = vrot.slane %v701, 6
        %v1870 = vor.u32 %v1868, %v1869
        %v1871 = vsel %vm1848, %v1867, %v1870
        %v1872 = vrot.slane %v1870, 4
        %v1873 = vshrl.u32 %v207, 16
        %v1875 = vrot.slane %v1873, 5
        %v1876 = vrot.slane %v711, 6
        %v1877 = vor.u32 %v1875, %v1876
        %v1878 = vsel %vm1848, %v1872, %v1877
        %v1879 = vrot.slane %v716, 5
        %v1880 = vrot.slane %v719, 6
        %v1881 = vor.u32 %v1879, %v1880
        %v1882 = vrot.slane %v1881, 4
        %v1883 = vrot.slane %v729, 5
        %v1884 = vrot.slane %v725, 6
        %v1885 = vor.u32 %v1883, %v1884
        %v1886 = vsel %vm1848, %v1882, %v1885
        %v1887 = vrot.slane %v1885, 4
        %v1888 = vshrl.u32 %v210, 16
        %v1890 = vrot.slane %v1888, 5
        %v1891 = vrot.slane %v735, 6
        %v1892 = vor.u32 %v1890, %v1891
        %v1893 = vsel %vm1848, %v1887, %v1892
        %v1894 = vrot.slane %v740, 5
        %v1895 = vrot.slane %v743, 6
        %v1896 = vor.u32 %v1894, %v1895
        %v1897 = vrot.slane %v1896, 4
        %v1898 = vrot.slane %v753, 5
        %v1899 = vrot.slane %v749, 6
        %v1900 = vor.u32 %v1898, %v1899
        %v1901 = vsel %vm1848, %v1897, %v1900
        %v1902 = vrot.slane %v1900, 4
        %v1903 = vshrl.u32 %v213, 16
        %v1905 = vrot.slane %v1903, 5
        %v1906 = vrot.slane %v759, 6
        %v1907 = vor.u32 %v1905, %v1906
        %v1908 = vsel %vm1848, %v1902, %v1907
        %v1909 = vrot.slane %v764, 5
        %v1910 = vrot.slane %v767, 6
        %v1911 = vor.u32 %v1909, %v1910
        %v1912 = vrot.slane %v1911, 4
        %v1913 = vrot.slane %v777, 5
        %v1914 = vrot.slane %v773, 6
        %v1915 = vor.u32 %v1913, %v1914
        %v1916 = vsel %vm1848, %v1912, %v1915
        %v1917 = vrot.slane %v1915, 4
        %v1918 = vshrl.u32 %v216, 16
        %v1920 = vrot.slane %v1918, 5
        %v1921 = vrot.slane %v783, 6
        %v1922 = vor.u32 %v1920, %v1921
        %v1923 = vsel %vm1848, %v1917, %v1922
        %v1924 = vrot.slane %v788, 5
        %v1925 = vrot.slane %v791, 6
        %v1926 = vor.u32 %v1924, %v1925
        %v1927 = vrot.slane %v1926, 4
        %v1928 = vrot.slane %v801, 5
        %v1929 = vrot.slane %v797, 6
        %v1930 = vor.u32 %v1928, %v1929
        %v1931 = vsel %vm1848, %v1927, %v1930
        %v1932 = vrot.slane %v1930, 4
        %v1933 = vshrl.u32 %v219, 16
        %v1935 = vrot.slane %v1933, 5
        %v1936 = vrot.slane %v807, 6
        %v1937 = vor.u32 %v1935, %v1936
        %v1938 = vsel %vm1848, %v1932, %v1937
        %v1939 = vrot.slane %v812, 5
        %v1940 = vrot.slane %v815, 6
        %v1941 = vor.u32 %v1939, %v1940
        %v1942 = vrot.slane %v1941, 4
        %v1943 = vrot.slane %v825, 5
        %v1944 = vrot.slane %v821, 6
        %v1945 = vor.u32 %v1943, %v1944
        %v1946 = vsel %vm1848, %v1942, %v1945
        %v1947 = vrot.slane %v1945, 4
        %v1948 = vshrl.u32 %v222, 16
        %v1950 = vrot.slane %v1948, 5
        %v1951 = vrot.slane %v831, 6
        %v1952 = vor.u32 %v1950, %v1951
        %v1953 = vsel %vm1848, %v1947, %v1952
        %v1954 = vrot.slane %v836, 5
        %v1955 = vrot.slane %v839, 6
        %v1956 = vor.u32 %v1954, %v1955
        %v1957 = vrot.slane %v1956, 4
        %v1958 = vrot.slane %v849, 5
        %v1959 = vrot.slane %v845, 6
        %v1960 = vor.u32 %v1958, %v1959
        %v1961 = vsel %vm1848, %v1957, %v1960
        %v1962 = vrot.slane %v1960, 4
        %v1963 = vshrl.u32 %v225, 16
        %v1965 = vrot.slane %v1963, 5
        %v1966 = vrot.slane %v855, 6
        %v1967 = vor.u32 %v1965, %v1966
        %v1968 = vsel %vm1848, %v1962, %v1967
        %s1969 = scalar_lea.vmem %s1, 12
        %v1970 = vld [vmem:[%s1969] sm:$0x3]
        %v1971 = vunpack.c.l.b16 %v1856
        %v1972 = vunpack.c.l.b16 %v1863
        %v1973 = vunpack.c.l.b16 %v1871
        %v1974 = vunpack.c.l.b16 %v1878
        %v1975 = vunpack.c.l.b16 %v1886
        %v1976 = vunpack.c.l.b16 %v1893
        %v1977 = vunpack.c.l.b16 %v1901
        %v1978 = vunpack.c.l.b16 %v1908
        %v1979 = vunpack.c.l.b16 %v1916
        %v1980 = vunpack.c.l.b16 %v1923
        %v1981 = vunpack.c.l.b16 %v1931
        %v1982 = vunpack.c.l.b16 %v1938
        %v1983 = vunpack.c.l.b16 %v1946
        %v1984 = vunpack.c.l.b16 %v1953
        %v1985 = vunpack.c.l.b16 %v1961
        %v1986 = vunpack.c.l.b16 %v1968
        %v1987 = vpack.c.b16 %v1972, %v1971
        %v1988 = vpack.c.b16 %v1974, %v1973
        %v1989 = vpack.c.b16 %v1976, %v1975
        %v1990 = vpack.c.b16 %v1978, %v1977
        %v1991 = vpack.c.b16 %v1980, %v1979
        %v1992 = vpack.c.b16 %v1982, %v1981
        %v1993 = vpack.c.b16 %v1984, %v1983
        %v1994 = vpack.c.b16 %v1986, %v1985
        %v1996 = vsel %vm371, %v1987, 0
        %v1999 = vsel %vm371, %v1988, 0
        %v2002 = vsel %vm371, %v1989, 0
        %v2005 = vsel %vm371, %v1990, 0
        %v2008 = vsel %vm371, %v1991, 0
        %v2011 = vsel %vm371, %v1992, 0
        %v2014 = vsel %vm371, %v1993, 0
        %v2017 = vsel %vm371, %v1994, 0
        %v2020 = vand.u32 %v1970, %v399
        %2022 = vmatprep.subr.bf16.mxu0 0
        %2023 = vmatpush1.bf16.msra.mxu0 %v2020
        %2024 = vmatprep.subr.bf16.mxu0 0
        %2025 = vmatpush1.bf16.msra.mxu0 0
        %2026 = vmatprep.subr.bf16.mxu0 0
        %2027 = vmatpush1.bf16.msra.mxu0 0
        %2028 = vmatprep.subr.bf16.mxu0 0
        %2029 = vmatpush1.bf16.msra.mxu0 0
        %2030 = vmatprep.subr.bf16.mxu0 0
        %2031 = vmatpush1.bf16.msra.mxu0 0
        %2032 = vmatprep.subr.bf16.mxu0 0
        %2033 = vmatpush1.bf16.msra.mxu0 0
        %2034 = vmatprep.subr.bf16.mxu0 0
        %2035 = vmatpush1.bf16.msra.mxu0 0
        %2036 = vmatprep.subr.bf16.mxu0 0
        %2037 = vmatpush1.bf16.msra.mxu0 0
        %2038 = vmatprep.subr.bf16.mxu0 0
        %2039 = vmatpush1.bf16.msra.mxu0 0
        %2040 = vmatprep.subr.bf16.mxu0 0
        %2041 = vmatpush1.bf16.msra.mxu0 0
        %2042 = vmatprep.subr.bf16.mxu0 0
        %2043 = vmatpush1.bf16.msra.mxu0 0
        %2044 = vmatprep.subr.bf16.mxu0 0
        %2045 = vmatpush1.bf16.msra.mxu0 0
        %2046 = vmatprep.subr.bf16.mxu0 0
        %2047 = vmatpush1.bf16.msra.mxu0 0
        %2048 = vmatprep.subr.bf16.mxu0 0
        %2049 = vmatpush1.bf16.msra.mxu0 0
        %2050 = vmatprep.subr.bf16.mxu0 0
        %2051 = vmatpush1.bf16.msra.mxu0 0
        %2052 = vmatprep.subr.bf16.mxu0 0
        %2053 = vmatpush1.bf16.msra.mxu0 0
        %2054 = vmatprep.mubr.bf16.mxu0 0
        %2055 = vmatmul.mubr.bf16.gmra.mrb[0].mxu0 %v1996
        %v2056 = vpop.f32.mrb[0].mxu0
        %v2057 = vadd.f32 0.0, %v2056
        %v2058 = vpop.f32.mrb[0].mxu0
        %v2059 = vpop.f32.mrb[0].mxu0
        %v2060 = vadd.f32 0.0, %v2059
        %v2061 = vpop.f32.mrb[0].mxu0
        %2062 = vmatprep.mubr.bf16.mxu0 0
        %2063 = vmatmul.mubr.bf16.gmra.mrb[0].mxu0 %v1999
        %v2064 = vpop.f32.mrb[0].mxu0
        %v2065 = vadd.f32 0.0, %v2064
        %v2066 = vpop.f32.mrb[0].mxu0
        %v2067 = vpop.f32.mrb[0].mxu0
        %v2068 = vadd.f32 0.0, %v2067
        %v2069 = vpop.f32.mrb[0].mxu0
        %2070 = vmatprep.mubr.bf16.mxu0 0
        %2071 = vmatmul.mubr.bf16.gmra.mrb[0].mxu0 %v2002
        %v2072 = vpop.f32.mrb[0].mxu0
        %v2073 = vadd.f32 0.0, %v2072
        %v2074 = vpop.f32.mrb[0].mxu0
        %v2075 = vpop.f32.mrb[0].mxu0
        %v2076 = vadd.f32 0.0, %v2075
        %v2077 = vpop.f32.mrb[0].mxu0
        %2078 = vmatprep.mubr.bf16.mxu0 0
        %2079 = vmatmul.mubr.bf16.gmra.mrb[0].mxu0 %v2005
        %v2080 = vpop.f32.mrb[0].mxu0
        %v2081 = vadd.f32 0.0, %v2080
        %v2082 = vpop.f32.mrb[0].mxu0
        %v2083 = vpop.f32.mrb[0].mxu0
        %v2084 = vadd.f32 0.0, %v2083
        %v2085 = vpop.f32.mrb[0].mxu0
        %2086 = vmatprep.mubr.bf16.mxu0 0
        %2087 = vmatmul.mubr.bf16.gmra.mrb[0].mxu0 %v2008
        %v2088 = vpop.f32.mrb[0].mxu0
        %v2089 = vadd.f32 0.0, %v2088
        %v2090 = vpop.f32.mrb[0].mxu0
        %v2091 = vpop.f32.mrb[0].mxu0
        %v2092 = vadd.f32 0.0, %v2091
        %v2093 = vpop.f32.mrb[0].mxu0
        %2094 = vmatprep.mubr.bf16.mxu0 0
        %2095 = vmatmul.mubr.bf16.gmra.mrb[0].mxu0 %v2011
        %v2096 = vpop.f32.mrb[0].mxu0
        %v2097 = vadd.f32 0.0, %v2096
        %v2098 = vpop.f32.mrb[0].mxu0
        %v2099 = vpop.f32.mrb[0].mxu0
        %v2100 = vadd.f32 0.0, %v2099
        %v2101 = vpop.f32.mrb[0].mxu0
        %2102 = vmatprep.mubr.bf16.mxu0 0
        %2103 = vmatmul.mubr.bf16.gmra.mrb[0].mxu0 %v2014
        %v2104 = vpop.f32.mrb[0].mxu0
        %v2105 = vadd.f32 0.0, %v2104
        %v2106 = vpop.f32.mrb[0].mxu0
        %v2107 = vpop.f32.mrb[0].mxu0
        %v2108 = vadd.f32 0.0, %v2107
        %v2109 = vpop.f32.mrb[0].mxu0
        %2110 = vmatprep.mubr.bf16.mxu0 0
        %2111 = vmatmul.mubr.bf16.gmra.mrb[0].mxu0 %v2017
        %v2112 = vpop.f32.mrb[0].mxu0
        %v2113 = vadd.f32 0.0, %v2112
        %v2114 = vpop.f32.mrb[0].mxu0
        %v2115 = vpop.f32.mrb[0].mxu0
        %v2116 = vadd.f32 0.0, %v2115
        %v2117 = vpop.f32.mrb[0].mxu0
        %2118 = vdwg.mxu0
        %v2119 = vadd.f32 %v1830, %v2057
        %v2120 = vadd.f32 %v1831, %v2060
        %v2121 = vadd.f32 %v1832, %v2065
        %v2122 = vadd.f32 %v1833, %v2068
        %v2123 = vadd.f32 %v1834, %v2073
        %v2124 = vadd.f32 %v1835, %v2076
        %v2125 = vadd.f32 %v1836, %v2081
        %v2126 = vadd.f32 %v1837, %v2084
        %v2127 = vadd.f32 %v1838, %v2089
        %v2128 = vadd.f32 %v1839, %v2092
        %v2129 = vadd.f32 %v1840, %v2097
        %v2130 = vadd.f32 %v1841, %v2100
        %v2131 = vadd.f32 %v1842, %v2105
        %v2132 = vadd.f32 %v1843, %v2108
        %v2133 = vadd.f32 %v1844, %v2113
        %v2134 = vadd.f32 %v1845, %v2116
        %s2135 = scalar_lea.vmem %s1, 14
        %v2136 = vld [vmem:[%s2135] sm:$0x3]
        %v2153 = vunpack.c.l.b16 %v268
        %v2154 = vunpack.c.l.b16 %v269
        %v2155 = vunpack.c.l.b16 %v271
        %v2156 = vunpack.c.l.b16 %v272
        %v2157 = vunpack.c.l.b16 %v274
        %v2158 = vunpack.c.l.b16 %v275
        %v2159 = vunpack.c.l.b16 %v277
        %v2160 = vunpack.c.l.b16 %v278
        %v2161 = vunpack.c.l.b16 %v280
        %v2162 = vunpack.c.l.b16 %v281
        %v2163 = vunpack.c.l.b16 %v283
        %v2164 = vunpack.c.l.b16 %v284
        %v2165 = vunpack.c.l.b16 %v286
        %v2166 = vunpack.c.l.b16 %v287
        %v2167 = vunpack.c.l.b16 %v289
        %v2168 = vunpack.c.l.b16 %v290
        %v2169 = vpack.c.b16 %v2154, %v2153
        %v2170 = vpack.c.b16 %v2156, %v2155
        %v2171 = vpack.c.b16 %v2158, %v2157
        %v2172 = vpack.c.b16 %v2160, %v2159
        %v2173 = vpack.c.b16 %v2162, %v2161
        %v2174 = vpack.c.b16 %v2164, %v2163
        %v2175 = vpack.c.b16 %v2166, %v2165
        %v2176 = vpack.c.b16 %v2168, %v2167
        %v2178 = vsel %vm371, %v2169, 0
        %v2181 = vsel %vm371, %v2170, 0
        %v2184 = vsel %vm371, %v2171, 0
        %v2187 = vsel %vm371, %v2172, 0
        %v2190 = vsel %vm371, %v2173, 0
        %v2193 = vsel %vm371, %v2174, 0
        %v2196 = vsel %vm371, %v2175, 0
        %v2199 = vsel %vm371, %v2176, 0
        %v2202 = vand.u32 %v2136, %v399
        %2204 = vmatprep.subr.bf16.mxu0 0
        %2205 = vmatpush1.bf16.msra.mxu0 %v2202
        %2206 = vmatprep.subr.bf16.mxu0 0
        %2207 = vmatpush1.bf16.msra.mxu0 0
        %2208 = vmatprep.subr.bf16.mxu0 0
        %2209 = vmatpush1.bf16.msra.mxu0 0
        %2210 = vmatprep.subr.bf16.mxu0 0
        %2211 = vmatpush1.bf16.msra.mxu0 0
        %2212 = vmatprep.subr.bf16.mxu0 0
        %2213 = vmatpush1.bf16.msra.mxu0 0
        %2214 = vmatprep.subr.bf16.mxu0 0
        %2215 = vmatpush1.bf16.msra.mxu0 0
        %2216 = vmatprep.subr.bf16.mxu0 0
        %2217 = vmatpush1.bf16.msra.mxu0 0
        %2218 = vmatprep.subr.bf16.mxu0 0
        %2219 = vmatpush1.bf16.msra.mxu0 0
        %2220 = vmatprep.subr.bf16.mxu0 0
        %2221 = vmatpush1.bf16.msra.mxu0 0
        %2222 = vmatprep.subr.bf16.mxu0 0
        %2223 = vmatpush1.bf16.msra.mxu0 0
        %2224 = vmatprep.subr.bf16.mxu0 0
        %2225 = vmatpush1.bf16.msra.mxu0 0
        %2226 = vmatprep.subr.bf16.mxu0 0
        %2227 = vmatpush1.bf16.msra.mxu0 0
        %2228 = vmatprep.subr.bf16.mxu0 0
        %2229 = vmatpush1.bf16.msra.mxu0 0
        %2230 = vmatprep.subr.bf16.mxu0 0
        %2231 = vmatpush1.bf16.msra.mxu0 0
        %2232 = vmatprep.subr.bf16.mxu0 0
        %2233 = vmatpush1.bf16.msra.mxu0 0
        %2234 = vmatprep.subr.bf16.mxu0 0
        %2235 = vmatpush1.bf16.msra.mxu0 0
        %2236 = vmatprep.mubr.bf16.mxu0 0
        %2237 = vmatmul.mubr.bf16.gmra.mrb[0].mxu0 %v2178
        %v2238 = vpop.f32.mrb[0].mxu0
        %v2239 = vadd.f32 0.0, %v2238
        %v2240 = vpop.f32.mrb[0].mxu0
        %v2241 = vpop.f32.mrb[0].mxu0
        %v2242 = vadd.f32 0.0, %v2241
        %v2243 = vpop.f32.mrb[0].mxu0
        %2244 = vmatprep.mubr.bf16.mxu0 0
        %2245 = vmatmul.mubr.bf16.gmra.mrb[0].mxu0 %v2181
        %v2246 = vpop.f32.mrb[0].mxu0
        %v2247 = vadd.f32 0.0, %v2246
        %v2248 = vpop.f32.mrb[0].mxu0
        %v2249 = vpop.f32.mrb[0].mxu0
        %v2250 = vadd.f32 0.0, %v2249
        %v2251 = vpop.f32.mrb[0].mxu0
        %2252 = vmatprep.mubr.bf16.mxu0 0
        %2253 = vmatmul.mubr.bf16.gmra.mrb[0].mxu0 %v2184
        %v2254 = vpop.f32.mrb[0].mxu0
        %v2255 = vadd.f32 0.0, %v2254
        %v2256 = vpop.f32.mrb[0].mxu0
        %v2257 = vpop.f32.mrb[0].mxu0
        %v2258 = vadd.f32 0.0, %v2257
        %v2259 = vpop.f32.mrb[0].mxu0
        %2260 = vmatprep.mubr.bf16.mxu0 0
        %2261 = vmatmul.mubr.bf16.gmra.mrb[0].mxu0 %v2187
        %v2262 = vpop.f32.mrb[0].mxu0
        %v2263 = vadd.f32 0.0, %v2262
        %v2264 = vpop.f32.mrb[0].mxu0
        %v2265 = vpop.f32.mrb[0].mxu0
        %v2266 = vadd.f32 0.0, %v2265
        %v2267 = vpop.f32.mrb[0].mxu0
        %2268 = vmatprep.mubr.bf16.mxu0 0
        %2269 = vmatmul.mubr.bf16.gmra.mrb[0].mxu0 %v2190
        %v2270 = vpop.f32.mrb[0].mxu0
        %v2271 = vadd.f32 0.0, %v2270
        %v2272 = vpop.f32.mrb[0].mxu0
        %v2273 = vpop.f32.mrb[0].mxu0
        %v2274 = vadd.f32 0.0, %v2273
        %v2275 = vpop.f32.mrb[0].mxu0
        %2276 = vmatprep.mubr.bf16.mxu0 0
        %2277 = vmatmul.mubr.bf16.gmra.mrb[0].mxu0 %v2193
        %v2278 = vpop.f32.mrb[0].mxu0
        %v2279 = vadd.f32 0.0, %v2278
        %v2280 = vpop.f32.mrb[0].mxu0
        %v2281 = vpop.f32.mrb[0].mxu0
        %v2282 = vadd.f32 0.0, %v2281
        %v2283 = vpop.f32.mrb[0].mxu0
        %2284 = vmatprep.mubr.bf16.mxu0 0
        %2285 = vmatmul.mubr.bf16.gmra.mrb[0].mxu0 %v2196
        %v2286 = vpop.f32.mrb[0].mxu0
        %v2287 = vadd.f32 0.0, %v2286
        %v2288 = vpop.f32.mrb[0].mxu0
        %v2289 = vpop.f32.mrb[0].mxu0
        %v2290 = vadd.f32 0.0, %v2289
        %v2291 = vpop.f32.mrb[0].mxu0
        %2292 = vmatprep.mubr.bf16.mxu0 0
        %2293 = vmatmul.mubr.bf16.gmra.mrb[0].mxu0 %v2199
        %v2294 = vpop.f32.mrb[0].mxu0
        %v2295 = vadd.f32 0.0, %v2294
        %v2296 = vpop.f32.mrb[0].mxu0
        %v2297 = vpop.f32.mrb[0].mxu0
        %v2298 = vadd.f32 0.0, %v2297
        %v2299 = vpop.f32.mrb[0].mxu0
        %2300 = vdwg.mxu0
        %v2301 = vadd.f32 %v2119, %v2239
        %v2302 = vadd.f32 %v2120, %v2242
        %v2303 = vadd.f32 %v2121, %v2247
        %v2304 = vadd.f32 %v2122, %v2250
        %v2305 = vadd.f32 %v2123, %v2255
        %v2306 = vadd.f32 %v2124, %v2258
        %v2307 = vadd.f32 %v2125, %v2263
        %v2308 = vadd.f32 %v2126, %v2266
        %v2309 = vadd.f32 %v2127, %v2271
        %v2310 = vadd.f32 %v2128, %v2274
        %v2311 = vadd.f32 %v2129, %v2279
        %v2312 = vadd.f32 %v2130, %v2282
        %v2313 = vadd.f32 %v2131, %v2287
        %v2314 = vadd.f32 %v2132, %v2290
        %v2315 = vadd.f32 %v2133, %v2295
        %v2316 = vadd.f32 %v2134, %v2298
        %s2317 = scalar_lea.vmem %s1, 16
        %v2318 = vld [vmem:[%s2317] sm:$0x3]
        %v2335 = vunpack.c.l.b16 %v298
        %v2336 = vunpack.c.l.b16 %v299
        %v2337 = vunpack.c.l.b16 %v301
        %v2338 = vunpack.c.l.b16 %v302
        %v2339 = vunpack.c.l.b16 %v304
        %v2340 = vunpack.c.l.b16 %v305
        %v2341 = vunpack.c.l.b16 %v307
        %v2342 = vunpack.c.l.b16 %v308
        %v2343 = vunpack.c.l.b16 %v310
        %v2344 = vunpack.c.l.b16 %v311
        %v2345 = vunpack.c.l.b16 %v313
        %v2346 = vunpack.c.l.b16 %v314
        %v2347 = vunpack.c.l.b16 %v316
        %v2348 = vunpack.c.l.b16 %v317
        %v2349 = vunpack.c.l.b16 %v319
        %v2350 = vunpack.c.l.b16 %v320
        %v2351 = vpack.c.b16 %v2336, %v2335
        %v2352 = vpack.c.b16 %v2338, %v2337
        %v2353 = vpack.c.b16 %v2340, %v2339
        %v2354 = vpack.c.b16 %v2342, %v2341
        %v2355 = vpack.c.b16 %v2344, %v2343
        %v2356 = vpack.c.b16 %v2346, %v2345
        %v2357 = vpack.c.b16 %v2348, %v2347
        %v2358 = vpack.c.b16 %v2350, %v2349
        %v2360 = vsel %vm371, %v2351, 0
        %v2363 = vsel %vm371, %v2352, 0
        %v2366 = vsel %vm371, %v2353, 0
        %v2369 = vsel %vm371, %v2354, 0
        %v2372 = vsel %vm371, %v2355, 0
        %v2375 = vsel %vm371, %v2356, 0
        %v2378 = vsel %vm371, %v2357, 0
        %v2381 = vsel %vm371, %v2358, 0
        %v2384 = vand.u32 %v2318, %v399
        %2386 = vmatprep.subr.bf16.mxu0 0
        %2387 = vmatpush1.bf16.msra.mxu0 %v2384
        %2388 = vmatprep.subr.bf16.mxu0 0
        %2389 = vmatpush1.bf16.msra.mxu0 0
        %2390 = vmatprep.subr.bf16.mxu0 0
        %2391 = vmatpush1.bf16.msra.mxu0 0
        %2392 = vmatprep.subr.bf16.mxu0 0
        %2393 = vmatpush1.bf16.msra.mxu0 0
        %2394 = vmatprep.subr.bf16.mxu0 0
        %2395 = vmatpush1.bf16.msra.mxu0 0
        %2396 = vmatprep.subr.bf16.mxu0 0
        %2397 = vmatpush1.bf16.msra.mxu0 0
        %2398 = vmatprep.subr.bf16.mxu0 0
        %2399 = vmatpush1.bf16.msra.mxu0 0
        %2400 = vmatprep.subr.bf16.mxu0 0
        %2401 = vmatpush1.bf16.msra.mxu0 0
        %2402 = vmatprep.subr.bf16.mxu0 0
        %2403 = vmatpush1.bf16.msra.mxu0 0
        %2404 = vmatprep.subr.bf16.mxu0 0
        %2405 = vmatpush1.bf16.msra.mxu0 0
        %2406 = vmatprep.subr.bf16.mxu0 0
        %2407 = vmatpush1.bf16.msra.mxu0 0
        %2408 = vmatprep.subr.bf16.mxu0 0
        %2409 = vmatpush1.bf16.msra.mxu0 0
        %2410 = vmatprep.subr.bf16.mxu0 0
        %2411 = vmatpush1.bf16.msra.mxu0 0
        %2412 = vmatprep.subr.bf16.mxu0 0
        %2413 = vmatpush1.bf16.msra.mxu0 0
        %2414 = vmatprep.subr.bf16.mxu0 0
        %2415 = vmatpush1.bf16.msra.mxu0 0
        %2416 = vmatprep.subr.bf16.mxu0 0
        %2417 = vmatpush1.bf16.msra.mxu0 0
        %2418 = vmatprep.mubr.bf16.mxu0 0
        %2419 = vmatmul.mubr.bf16.gmra.mrb[0].mxu0 %v2360
        %v2420 = vpop.f32.mrb[0].mxu0
        %v2421 = vadd.f32 0.0, %v2420
        %v2422 = vpop.f32.mrb[0].mxu0
        %v2423 = vpop.f32.mrb[0].mxu0
        %v2424 = vadd.f32 0.0, %v2423
        %v2425 = vpop.f32.mrb[0].mxu0
        %2426 = vmatprep.mubr.bf16.mxu0 0
        %2427 = vmatmul.mubr.bf16.gmra.mrb[0].mxu0 %v2363
        %v2428 = vpop.f32.mrb[0].mxu0
        %v2429 = vadd.f32 0.0, %v2428
        %v2430 = vpop.f32.mrb[0].mxu0
        %v2431 = vpop.f32.mrb[0].mxu0
        %v2432 = vadd.f32 0.0, %v2431
        %v2433 = vpop.f32.mrb[0].mxu0
        %2434 = vmatprep.mubr.bf16.mxu0 0
        %2435 = vmatmul.mubr.bf16.gmra.mrb[0].mxu0 %v2366
        %v2436 = vpop.f32.mrb[0].mxu0
        %v2437 = vadd.f32 0.0, %v2436
        %v2438 = vpop.f32.mrb[0].mxu0
        %v2439 = vpop.f32.mrb[0].mxu0
        %v2440 = vadd.f32 0.0, %v2439
        %v2441 = vpop.f32.mrb[0].mxu0
        %2442 = vmatprep.mubr.bf16.mxu0 0
        %2443 = vmatmul.mubr.bf16.gmra.mrb[0].mxu0 %v2369
        %v2444 = vpop.f32.mrb[0].mxu0
        %v2445 = vadd.f32 0.0, %v2444
        %v2446 = vpop.f32.mrb[0].mxu0
        %v2447 = vpop.f32.mrb[0].mxu0
        %v2448 = vadd.f32 0.0, %v2447
        %v2449 = vpop.f32.mrb[0].mxu0
        %2450 = vmatprep.mubr.bf16.mxu0 0
        %2451 = vmatmul.mubr.bf16.gmra.mrb[0].mxu0 %v2372
        %v2452 = vpop.f32.mrb[0].mxu0
        %v2453 = vadd.f32 0.0, %v2452
        %v2454 = vpop.f32.mrb[0].mxu0
        %v2455 = vpop.f32.mrb[0].mxu0
        %v2456 = vadd.f32 0.0, %v2455
        %v2457 = vpop.f32.mrb[0].mxu0
        %2458 = vmatprep.mubr.bf16.mxu0 0
        %2459 = vmatmul.mubr.bf16.gmra.mrb[0].mxu0 %v2375
        %v2460 = vpop.f32.mrb[0].mxu0
        %v2461 = vadd.f32 0.0, %v2460
        %v2462 = vpop.f32.mrb[0].mxu0
        %v2463 = vpop.f32.mrb[0].mxu0
        %v2464 = vadd.f32 0.0, %v2463
        %v2465 = vpop.f32.mrb[0].mxu0
        %2466 = vmatprep.mubr.bf16.mxu0 0
        %2467 = vmatmul.mubr.bf16.gmra.mrb[0].mxu0 %v2378
        %v2468 = vpop.f32.mrb[0].mxu0
        %v2469 = vadd.f32 0.0, %v2468
        %v2470 = vpop.f32.mrb[0].mxu0
        %v2471 = vpop.f32.mrb[0].mxu0
        %v2472 = vadd.f32 0.0, %v2471
        %v2473 = vpop.f32.mrb[0].mxu0
        %2474 = vmatprep.mubr.bf16.mxu0 0
        %2475 = vmatmul.mubr.bf16.gmra.mrb[0].mxu0 %v2381
        %v2476 = vpop.f32.mrb[0].mxu0
        %v2477 = vadd.f32 0.0, %v2476
        %v2478 = vpop.f32.mrb[0].mxu0
        %v2479 = vpop.f32.mrb[0].mxu0
        %v2480 = vadd.f32 0.0, %v2479
        %v2481 = vpop.f32.mrb[0].mxu0
        %2482 = vdwg.mxu0
        %v2483 = vadd.f32 %v2301, %v2421
        %v2484 = vadd.f32 %v2302, %v2424
        %v2485 = vadd.f32 %v2303, %v2429
        %v2486 = vadd.f32 %v2304, %v2432
        %v2487 = vadd.f32 %v2305, %v2437
        %v2488 = vadd.f32 %v2306, %v2440
        %v2489 = vadd.f32 %v2307, %v2445
        %v2490 = vadd.f32 %v2308, %v2448
        %v2491 = vadd.f32 %v2309, %v2453
        %v2492 = vadd.f32 %v2310, %v2456
        %v2493 = vadd.f32 %v2311, %v2461
        %v2494 = vadd.f32 %v2312, %v2464
        %v2495 = vadd.f32 %v2313, %v2469
        %v2496 = vadd.f32 %v2314, %v2472
        %v2497 = vadd.f32 %v2315, %v2477
        %v2498 = vadd.f32 %v2316, %v2480
        %v2500 = vshrl.u32 %v268, 16
        %v2502 = vrot.slane %v2500, 4
        %v2503 = vshll.u32 %v268, 16
        %v2505 = vrot.slane %v2503, 5
        %v2506 = vor.u32 %v2502, %v2505
        %v2507 = vrot.slane %v2506, 4
        %v2509 = vshll.u32 %v269, 16
        %v2511 = vrot.slane %v2509, 5
        %v2512 = vsel %vm666, %v2507, %v2511
        %v2513 = vshrl.u32 %v269, 16
        %v2515 = vrot.slane %v2513, 4
        %v2516 = vor.u32 %v2515, %v2511
        %v2517 = vrot.slane %v2516, 4
        %v2519 = vshll.u32 %v270, 16
        %v2521 = vrot.slane %v2519, 5
        %v2522 = vsel %vm666, %v2517, %v2521
        %v2524 = vshrl.u32 %v271, 16
        %v2526 = vrot.slane %v2524, 4
        %v2527 = vshll.u32 %v271, 16
        %v2529 = vrot.slane %v2527, 5
        %v2530 = vor.u32 %v2526, %v2529
        %v2531 = vrot.slane %v2530, 4
        %v2533 = vshll.u32 %v272, 16
        %v2535 = vrot.slane %v2533, 5
        %v2536 = vsel %vm666, %v2531, %v2535
        %v2537 = vshrl.u32 %v272, 16
        %v2539 = vrot.slane %v2537, 4
        %v2540 = vor.u32 %v2539, %v2535
        %v2541 = vrot.slane %v2540, 4
        %v2543 = vshll.u32 %v273, 16
        %v2545 = vrot.slane %v2543, 5
        %v2546 = vsel %vm666, %v2541, %v2545
        %v2548 = vshrl.u32 %v274, 16
        %v2550 = vrot.slane %v2548, 4
        %v2551 = vshll.u32 %v274, 16
        %v2553 = vrot.slane %v2551, 5
        %v2554 = vor.u32 %v2550, %v2553
        %v2555 = vrot.slane %v2554, 4
        %v2557 = vshll.u32 %v275, 16
        %v2559 = vrot.slane %v2557, 5
        %v2560 = vsel %vm666, %v2555, %v2559
        %v2561 = vshrl.u32 %v275, 16
        %v2563 = vrot.slane %v2561, 4
        %v2564 = vor.u32 %v2563, %v2559
        %v2565 = vrot.slane %v2564, 4
        %v2567 = vshll.u32 %v276, 16
        %v2569 = vrot.slane %v2567, 5
        %v2570 = vsel %vm666, %v2565, %v2569
        %v2572 = vshrl.u32 %v277, 16
        %v2574 = vrot.slane %v2572, 4
        %v2575 = vshll.u32 %v277, 16
        %v2577 = vrot.slane %v2575, 5
        %v2578 = vor.u32 %v2574, %v2577
        %v2579 = vrot.slane %v2578, 4
        %v2581 = vshll.u32 %v278, 16
        %v2583 = vrot.slane %v2581, 5
        %v2584 = vsel %vm666, %v2579, %v2583
        %v2585 = vshrl.u32 %v278, 16
        %v2587 = vrot.slane %v2585, 4
        %v2588 = vor.u32 %v2587, %v2583
        %v2589 = vrot.slane %v2588, 4
        %v2591 = vshll.u32 %v279, 16
        %v2593 = vrot.slane %v2591, 5
        %v2594 = vsel %vm666, %v2589, %v2593
        %v2596 = vshrl.u32 %v280, 16
        %v2598 = vrot.slane %v2596, 4
        %v2599 = vshll.u32 %v280, 16
        %v2601 = vrot.slane %v2599, 5
        %v2602 = vor.u32 %v2598, %v2601
        %v2603 = vrot.slane %v2602, 4
        %v2605 = vshll.u32 %v281, 16
        %v2607 = vrot.slane %v2605, 5
        %v2608 = vsel %vm666, %v2603, %v2607
        %v2609 = vshrl.u32 %v281, 16
        %v2611 = vrot.slane %v2609, 4
        %v2612 = vor.u32 %v2611, %v2607
        %v2613 = vrot.slane %v2612, 4
        %v2615 = vshll.u32 %v282, 16
        %v2617 = vrot.slane %v2615, 5
        %v2618 = vsel %vm666, %v2613, %v2617
        %v2620 = vshrl.u32 %v283, 16
        %v2622 = vrot.slane %v2620, 4
        %v2623 = vshll.u32 %v283, 16
        %v2625 = vrot.slane %v2623, 5
        %v2626 = vor.u32 %v2622, %v2625
        %v2627 = vrot.slane %v2626, 4
        %v2629 = vshll.u32 %v284, 16
        %v2631 = vrot.slane %v2629, 5
        %v2632 = vsel %vm666, %v2627, %v2631
        %v2633 = vshrl.u32 %v284, 16
        %v2635 = vrot.slane %v2633, 4
        %v2636 = vor.u32 %v2635, %v2631
        %v2637 = vrot.slane %v2636, 4
        %v2639 = vshll.u32 %v285, 16
        %v2641 = vrot.slane %v2639, 5
        %v2642 = vsel %vm666, %v2637, %v2641
        %v2644 = vshrl.u32 %v286, 16
        %v2646 = vrot.slane %v2644, 4
        %v2647 = vshll.u32 %v286, 16
        %v2649 = vrot.slane %v2647, 5
        %v2650 = vor.u32 %v2646, %v2649
        %v2651 = vrot.slane %v2650, 4
        %v2653 = vshll.u32 %v287, 16
        %v2655 = vrot.slane %v2653, 5
        %v2656 = vsel %vm666, %v2651, %v2655
        %v2657 = vshrl.u32 %v287, 16
        %v2659 = vrot.slane %v2657, 4
        %v2660 = vor.u32 %v2659, %v2655
        %v2661 = vrot.slane %v2660, 4
        %v2663 = vshll.u32 %v288, 16
        %v2665 = vrot.slane %v2663, 5
        %v2666 = vsel %vm666, %v2661, %v2665
        %v2668 = vshrl.u32 %v289, 16
        %v2670 = vrot.slane %v2668, 4
        %v2671 = vshll.u32 %v289, 16
        %v2673 = vrot.slane %v2671, 5
        %v2674 = vor.u32 %v2670, %v2673
        %v2675 = vrot.slane %v2674, 4
        %v2677 = vshll.u32 %v290, 16
        %v2679 = vrot.slane %v2677, 5
        %v2680 = vsel %vm666, %v2675, %v2679
        %v2681 = vshrl.u32 %v290, 16
        %v2683 = vrot.slane %v2681, 4
        %v2684 = vor.u32 %v2683, %v2679
        %v2685 = vrot.slane %v2684, 4
        %v2687 = vshll.u32 %v291, 16
        %v2689 = vrot.slane %v2687, 5
        %v2690 = vsel %vm666, %v2685, %v2689
        %s2691 = scalar_lea.vmem %s1, 18
        %v2692 = vld [vmem:[%s2691] sm:$0x3]
        %v2693 = vunpack.c.l.b16 %v2512
        %v2694 = vunpack.c.l.b16 %v2522
        %v2695 = vunpack.c.l.b16 %v2536
        %v2696 = vunpack.c.l.b16 %v2546
        %v2697 = vunpack.c.l.b16 %v2560
        %v2698 = vunpack.c.l.b16 %v2570
        %v2699 = vunpack.c.l.b16 %v2584
        %v2700 = vunpack.c.l.b16 %v2594
        %v2701 = vunpack.c.l.b16 %v2608
        %v2702 = vunpack.c.l.b16 %v2618
        %v2703 = vunpack.c.l.b16 %v2632
        %v2704 = vunpack.c.l.b16 %v2642
        %v2705 = vunpack.c.l.b16 %v2656
        %v2706 = vunpack.c.l.b16 %v2666
        %v2707 = vunpack.c.l.b16 %v2680
        %v2708 = vunpack.c.l.b16 %v2690
        %v2709 = vpack.c.b16 %v2694, %v2693
        %v2710 = vpack.c.b16 %v2696, %v2695
        %v2711 = vpack.c.b16 %v2698, %v2697
        %v2712 = vpack.c.b16 %v2700, %v2699
        %v2713 = vpack.c.b16 %v2702, %v2701
        %v2714 = vpack.c.b16 %v2704, %v2703
        %v2715 = vpack.c.b16 %v2706, %v2705
        %v2716 = vpack.c.b16 %v2708, %v2707
        %v2718 = vsel %vm371, %v2709, 0
        %v2721 = vsel %vm371, %v2710, 0
        %v2724 = vsel %vm371, %v2711, 0
        %v2727 = vsel %vm371, %v2712, 0
        %v2730 = vsel %vm371, %v2713, 0
        %v2733 = vsel %vm371, %v2714, 0
        %v2736 = vsel %vm371, %v2715, 0
        %v2739 = vsel %vm371, %v2716, 0
        %v2742 = vand.u32 %v2692, %v399
        %2744 = vmatprep.subr.bf16.mxu0 0
        %2745 = vmatpush1.bf16.msra.mxu0 %v2742
        %2746 = vmatprep.subr.bf16.mxu0 0
        %2747 = vmatpush1.bf16.msra.mxu0 0
        %2748 = vmatprep.subr.bf16.mxu0 0
        %2749 = vmatpush1.bf16.msra.mxu0 0
        %2750 = vmatprep.subr.bf16.mxu0 0
        %2751 = vmatpush1.bf16.msra.mxu0 0
        %2752 = vmatprep.subr.bf16.mxu0 0
        %2753 = vmatpush1.bf16.msra.mxu0 0
        %2754 = vmatprep.subr.bf16.mxu0 0
        %2755 = vmatpush1.bf16.msra.mxu0 0
        %2756 = vmatprep.subr.bf16.mxu0 0
        %2757 = vmatpush1.bf16.msra.mxu0 0
        %2758 = vmatprep.subr.bf16.mxu0 0
        %2759 = vmatpush1.bf16.msra.mxu0 0
        %2760 = vmatprep.subr.bf16.mxu0 0
        %2761 = vmatpush1.bf16.msra.mxu0 0
        %2762 = vmatprep.subr.bf16.mxu0 0
        %2763 = vmatpush1.bf16.msra.mxu0 0
        %2764 = vmatprep.subr.bf16.mxu0 0
        %2765 = vmatpush1.bf16.msra.mxu0 0
        %2766 = vmatprep.subr.bf16.mxu0 0
        %2767 = vmatpush1.bf16.msra.mxu0 0
        %2768 = vmatprep.subr.bf16.mxu0 0
        %2769 = vmatpush1.bf16.msra.mxu0 0
        %2770 = vmatprep.subr.bf16.mxu0 0
        %2771 = vmatpush1.bf16.msra.mxu0 0
        %2772 = vmatprep.subr.bf16.mxu0 0
        %2773 = vmatpush1.bf16.msra.mxu0 0
        %2774 = vmatprep.subr.bf16.mxu0 0
        %2775 = vmatpush1.bf16.msra.mxu0 0
        %2776 = vmatprep.mubr.bf16.mxu0 0
        %2777 = vmatmul.mubr.bf16.gmra.mrb[0].mxu0 %v2718
        %v2778 = vpop.f32.mrb[0].mxu0
        %v2779 = vadd.f32 0.0, %v2778
        %v2780 = vpop.f32.mrb[0].mxu0
        %v2781 = vpop.f32.mrb[0].mxu0
        %v2782 = vadd.f32 0.0, %v2781
        %v2783 = vpop.f32.mrb[0].mxu0
        %2784 = vmatprep.mubr.bf16.mxu0 0
        %2785 = vmatmul.mubr.bf16.gmra.mrb[0].mxu0 %v2721
        %v2786 = vpop.f32.mrb[0].mxu0
        %v2787 = vadd.f32 0.0, %v2786
        %v2788 = vpop.f32.mrb[0].mxu0
        %v2789 = vpop.f32.mrb[0].mxu0
        %v2790 = vadd.f32 0.0, %v2789
        %v2791 = vpop.f32.mrb[0].mxu0
        %2792 = vmatprep.mubr.bf16.mxu0 0
        %2793 = vmatmul.mubr.bf16.gmra.mrb[0].mxu0 %v2724
        %v2794 = vpop.f32.mrb[0].mxu0
        %v2795 = vadd.f32 0.0, %v2794
        %v2796 = vpop.f32.mrb[0].mxu0
        %v2797 = vpop.f32.mrb[0].mxu0
        %v2798 = vadd.f32 0.0, %v2797
        %v2799 = vpop.f32.mrb[0].mxu0
        %2800 = vmatprep.mubr.bf16.mxu0 0
        %2801 = vmatmul.mubr.bf16.gmra.mrb[0].mxu0 %v2727
        %v2802 = vpop.f32.mrb[0].mxu0
        %v2803 = vadd.f32 0.0, %v2802
        %v2804 = vpop.f32.mrb[0].mxu0
        %v2805 = vpop.f32.mrb[0].mxu0
        %v2806 = vadd.f32 0.0, %v2805
        %v2807 = vpop.f32.mrb[0].mxu0
        %2808 = vmatprep.mubr.bf16.mxu0 0
        %2809 = vmatmul.mubr.bf16.gmra.mrb[0].mxu0 %v2730
        %v2810 = vpop.f32.mrb[0].mxu0
        %v2811 = vadd.f32 0.0, %v2810
        %v2812 = vpop.f32.mrb[0].mxu0
        %v2813 = vpop.f32.mrb[0].mxu0
        %v2814 = vadd.f32 0.0, %v2813
        %v2815 = vpop.f32.mrb[0].mxu0
        %2816 = vmatprep.mubr.bf16.mxu0 0
        %2817 = vmatmul.mubr.bf16.gmra.mrb[0].mxu0 %v2733
        %v2818 = vpop.f32.mrb[0].mxu0
        %v2819 = vadd.f32 0.0, %v2818
        %v2820 = vpop.f32.mrb[0].mxu0
        %v2821 = vpop.f32.mrb[0].mxu0
        %v2822 = vadd.f32 0.0, %v2821
        %v2823 = vpop.f32.mrb[0].mxu0
        %2824 = vmatprep.mubr.bf16.mxu0 0
        %2825 = vmatmul.mubr.bf16.gmra.mrb[0].mxu0 %v2736
        %v2826 = vpop.f32.mrb[0].mxu0
        %v2827 = vadd.f32 0.0, %v2826
        %v2828 = vpop.f32.mrb[0].mxu0
        %v2829 = vpop.f32.mrb[0].mxu0
        %v2830 = vadd.f32 0.0, %v2829
        %v2831 = vpop.f32.mrb[0].mxu0
        %2832 = vmatprep.mubr.bf16.mxu0 0
        %2833 = vmatmul.mubr.bf16.gmra.mrb[0].mxu0 %v2739
        %v2834 = vpop.f32.mrb[0].mxu0
        %v2835 = vadd.f32 0.0, %v2834
        %v2836 = vpop.f32.mrb[0].mxu0
        %v2837 = vpop.f32.mrb[0].mxu0
        %v2838 = vadd.f32 0.0, %v2837
        %v2839 = vpop.f32.mrb[0].mxu0
        %2840 = vdwg.mxu0
        %v2841 = vadd.f32 %v2483, %v2779
        %v2842 = vadd.f32 %v2484, %v2782
        %v2843 = vadd.f32 %v2485, %v2787
        %v2844 = vadd.f32 %v2486, %v2790
        %v2845 = vadd.f32 %v2487, %v2795
        %v2846 = vadd.f32 %v2488, %v2798
        %v2847 = vadd.f32 %v2489, %v2803
        %v2848 = vadd.f32 %v2490, %v2806
        %v2849 = vadd.f32 %v2491, %v2811
        %v2850 = vadd.f32 %v2492, %v2814
        %v2851 = vadd.f32 %v2493, %v2819
        %v2852 = vadd.f32 %v2494, %v2822
        %v2853 = vadd.f32 %v2495, %v2827
        %v2854 = vadd.f32 %v2496, %v2830
        %v2855 = vadd.f32 %v2497, %v2835
        %v2856 = vadd.f32 %v2498, %v2838
        %v2858 = vshrl.u32 %v298, 16
        %v2860 = vrot.slane %v2858, 4
        %v2861 = vshll.u32 %v298, 16
        %v2863 = vrot.slane %v2861, 5
        %v2864 = vor.u32 %v2860, %v2863
        %v2865 = vrot.slane %v2864, 4
        %v2867 = vshll.u32 %v299, 16
        %v2869 = vrot.slane %v2867, 5
        %v2870 = vsel %vm666, %v2865, %v2869
        %v2871 = vshrl.u32 %v299, 16
        %v2873 = vrot.slane %v2871, 4
        %v2874 = vor.u32 %v2873, %v2869
        %v2875 = vrot.slane %v2874, 4
        %v2877 = vshll.u32 %v300, 16
        %v2879 = vrot.slane %v2877, 5
        %v2880 = vsel %vm666, %v2875, %v2879
        %v2882 = vshrl.u32 %v301, 16
        %v2884 = vrot.slane %v2882, 4
        %v2885 = vshll.u32 %v301, 16
        %v2887 = vrot.slane %v2885, 5
        %v2888 = vor.u32 %v2884, %v2887
        %v2889 = vrot.slane %v2888, 4
        %v2891 = vshll.u32 %v302, 16
        %v2893 = vrot.slane %v2891, 5
        %v2894 = vsel %vm666, %v2889, %v2893
        %v2895 = vshrl.u32 %v302, 16
        %v2897 = vrot.slane %v2895, 4
        %v2898 = vor.u32 %v2897, %v2893
        %v2899 = vrot.slane %v2898, 4
        %v2901 = vshll.u32 %v303, 16
        %v2903 = vrot.slane %v2901, 5
        %v2904 = vsel %vm666, %v2899, %v2903
        %v2906 = vshrl.u32 %v304, 16
        %v2908 = vrot.slane %v2906, 4
        %v2909 = vshll.u32 %v304, 16
        %v2911 = vrot.slane %v2909, 5
        %v2912 = vor.u32 %v2908, %v2911
        %v2913 = vrot.slane %v2912, 4
        %v2915 = vshll.u32 %v305, 16
        %v2917 = vrot.slane %v2915, 5
        %v2918 = vsel %vm666, %v2913, %v2917
        %v2919 = vshrl.u32 %v305, 16
        %v2921 = vrot.slane %v2919, 4
        %v2922 = vor.u32 %v2921, %v2917
        %v2923 = vrot.slane %v2922, 4
        %v2925 = vshll.u32 %v306, 16
        %v2927 = vrot.slane %v2925, 5
        %v2928 = vsel %vm666, %v2923, %v2927
        %v2930 = vshrl.u32 %v307, 16
        %v2932 = vrot.slane %v2930, 4
        %v2933 = vshll.u32 %v307, 16
        %v2935 = vrot.slane %v2933, 5
        %v2936 = vor.u32 %v2932, %v2935
        %v2937 = vrot.slane %v2936, 4
        %v2939 = vshll.u32 %v308, 16
        %v2941 = vrot.slane %v2939, 5
        %v2942 = vsel %vm666, %v2937, %v2941
        %v2943 = vshrl.u32 %v308, 16
        %v2945 = vrot.slane %v2943, 4
        %v2946 = vor.u32 %v2945, %v2941
        %v2947 = vrot.slane %v2946, 4
        %v2949 = vshll.u32 %v309, 16
        %v2951 = vrot.slane %v2949, 5
        %v2952 = vsel %vm666, %v2947, %v2951
        %v2954 = vshrl.u32 %v310, 16
        %v2956 = vrot.slane %v2954, 4
        %v2957 = vshll.u32 %v310, 16
        %v2959 = vrot.slane %v2957, 5
        %v2960 = vor.u32 %v2956, %v2959
        %v2961 = vrot.slane %v2960, 4
        %v2963 = vshll.u32 %v311, 16
        %v2965 = vrot.slane %v2963, 5
        %v2966 = vsel %vm666, %v2961, %v2965
        %v2967 = vshrl.u32 %v311, 16
        %v2969 = vrot.slane %v2967, 4
        %v2970 = vor.u32 %v2969, %v2965
        %v2971 = vrot.slane %v2970, 4
        %v2973 = vshll.u32 %v312, 16
        %v2975 = vrot.slane %v2973, 5
        %v2976 = vsel %vm666, %v2971, %v2975
        %v2978 = vshrl.u32 %v313, 16
        %v2980 = vrot.slane %v2978, 4
        %v2981 = vshll.u32 %v313, 16
        %v2983 = vrot.slane %v2981, 5
        %v2984 = vor.u32 %v2980, %v2983
        %v2985 = vrot.slane %v2984, 4
        %v2987 = vshll.u32 %v314, 16
        %v2989 = vrot.slane %v2987, 5
        %v2990 = vsel %vm666, %v2985, %v2989
        %v2991 = vshrl.u32 %v314, 16
        %v2993 = vrot.slane %v2991, 4
        %v2994 = vor.u32 %v2993, %v2989
        %v2995 = vrot.slane %v2994, 4
        %v2997 = vshll.u32 %v315, 16
        %v2999 = vrot.slane %v2997, 5
        %v3000 = vsel %vm666, %v2995, %v2999
        %v3002 = vshrl.u32 %v316, 16
        %v3004 = vrot.slane %v3002, 4
        %v3005 = vshll.u32 %v316, 16
        %v3007 = vrot.slane %v3005, 5
        %v3008 = vor.u32 %v3004, %v3007
        %v3009 = vrot.slane %v3008, 4
        %v3011 = vshll.u32 %v317, 16
        %v3013 = vrot.slane %v3011, 5
        %v3014 = vsel %vm666, %v3009, %v3013
        %v3015 = vshrl.u32 %v317, 16
        %v3017 = vrot.slane %v3015, 4
        %v3018 = vor.u32 %v3017, %v3013
        %v3019 = vrot.slane %v3018, 4
        %v3021 = vshll.u32 %v318, 16
        %v3023 = vrot.slane %v3021, 5
        %v3024 = vsel %vm666, %v3019, %v3023
        %v3026 = vshrl.u32 %v319, 16
        %v3028 = vrot.slane %v3026, 4
        %v3029 = vshll.u32 %v319, 16
        %v3031 = vrot.slane %v3029, 5
        %v3032 = vor.u32 %v3028, %v3031
        %v3033 = vrot.slane %v3032, 4
        %v3035 = vshll.u32 %v320, 16
        %v3037 = vrot.slane %v3035, 5
        %v3038 = vsel %vm666, %v3033, %v3037
        %v3039 = vshrl.u32 %v320, 16
        %v3041 = vrot.slane %v3039, 4
        %v3042 = vor.u32 %v3041, %v3037
        %v3043 = vrot.slane %v3042, 4
        %v3045 = vshll.u32 %v321, 16
        %v3047 = vrot.slane %v3045, 5
        %v3048 = vsel %vm666, %v3043, %v3047
        %s3049 = scalar_lea.vmem %s1, 20
        %v3050 = vld [vmem:[%s3049] sm:$0x3]
        %v3051 = vunpack.c.l.b16 %v2870
        %v3052 = vunpack.c.l.b16 %v2880
        %v3053 = vunpack.c.l.b16 %v2894
        %v3054 = vunpack.c.l.b16 %v2904
        %v3055 = vunpack.c.l.b16 %v2918
        %v3056 = vunpack.c.l.b16 %v2928
        %v3057 = vunpack.c.l.b16 %v2942
        %v3058 = vunpack.c.l.b16 %v2952
        %v3059 = vunpack.c.l.b16 %v2966
        %v3060 = vunpack.c.l.b16 %v2976
        %v3061 = vunpack.c.l.b16 %v2990
        %v3062 = vunpack.c.l.b16 %v3000
        %v3063 = vunpack.c.l.b16 %v3014
        %v3064 = vunpack.c.l.b16 %v3024
        %v3065 = vunpack.c.l.b16 %v3038
        %v3066 = vunpack.c.l.b16 %v3048
        %v3067 = vpack.c.b16 %v3052, %v3051
        %v3068 = vpack.c.b16 %v3054, %v3053
        %v3069 = vpack.c.b16 %v3056, %v3055
        %v3070 = vpack.c.b16 %v3058, %v3057
        %v3071 = vpack.c.b16 %v3060, %v3059
        %v3072 = vpack.c.b16 %v3062, %v3061
        %v3073 = vpack.c.b16 %v3064, %v3063
        %v3074 = vpack.c.b16 %v3066, %v3065
        %v3076 = vsel %vm371, %v3067, 0
        %v3079 = vsel %vm371, %v3068, 0
        %v3082 = vsel %vm371, %v3069, 0
        %v3085 = vsel %vm371, %v3070, 0
        %v3088 = vsel %vm371, %v3071, 0
        %v3091 = vsel %vm371, %v3072, 0
        %v3094 = vsel %vm371, %v3073, 0
        %v3097 = vsel %vm371, %v3074, 0
        %v3100 = vand.u32 %v3050, %v399
        %3102 = vmatprep.subr.bf16.mxu0 0
        %3103 = vmatpush1.bf16.msra.mxu0 %v3100
        %3104 = vmatprep.subr.bf16.mxu0 0
        %3105 = vmatpush1.bf16.msra.mxu0 0
        %3106 = vmatprep.subr.bf16.mxu0 0
        %3107 = vmatpush1.bf16.msra.mxu0 0
        %3108 = vmatprep.subr.bf16.mxu0 0
        %3109 = vmatpush1.bf16.msra.mxu0 0
        %3110 = vmatprep.subr.bf16.mxu0 0
        %3111 = vmatpush1.bf16.msra.mxu0 0
        %3112 = vmatprep.subr.bf16.mxu0 0
        %3113 = vmatpush1.bf16.msra.mxu0 0
        %3114 = vmatprep.subr.bf16.mxu0 0
        %3115 = vmatpush1.bf16.msra.mxu0 0
        %3116 = vmatprep.subr.bf16.mxu0 0
        %3117 = vmatpush1.bf16.msra.mxu0 0
        %3118 = vmatprep.subr.bf16.mxu0 0
        %3119 = vmatpush1.bf16.msra.mxu0 0
        %3120 = vmatprep.subr.bf16.mxu0 0
        %3121 = vmatpush1.bf16.msra.mxu0 0
        %3122 = vmatprep.subr.bf16.mxu0 0
        %3123 = vmatpush1.bf16.msra.mxu0 0
        %3124 = vmatprep.subr.bf16.mxu0 0
        %3125 = vmatpush1.bf16.msra.mxu0 0
        %3126 = vmatprep.subr.bf16.mxu0 0
        %3127 = vmatpush1.bf16.msra.mxu0 0
        %3128 = vmatprep.subr.bf16.mxu0 0
        %3129 = vmatpush1.bf16.msra.mxu0 0
        %3130 = vmatprep.subr.bf16.mxu0 0
        %3131 = vmatpush1.bf16.msra.mxu0 0
        %3132 = vmatprep.subr.bf16.mxu0 0
        %3133 = vmatpush1.bf16.msra.mxu0 0
        %3134 = vmatprep.mubr.bf16.mxu0 0
        %3135 = vmatmul.mubr.bf16.gmra.mrb[0].mxu0 %v3076
        %v3136 = vpop.f32.mrb[0].mxu0
        %v3137 = vadd.f32 0.0, %v3136
        %v3138 = vpop.f32.mrb[0].mxu0
        %v3139 = vpop.f32.mrb[0].mxu0
        %v3140 = vadd.f32 0.0, %v3139
        %v3141 = vpop.f32.mrb[0].mxu0
        %3142 = vmatprep.mubr.bf16.mxu0 0
        %3143 = vmatmul.mubr.bf16.gmra.mrb[0].mxu0 %v3079
        %v3144 = vpop.f32.mrb[0].mxu0
        %v3145 = vadd.f32 0.0, %v3144
        %v3146 = vpop.f32.mrb[0].mxu0
        %v3147 = vpop.f32.mrb[0].mxu0
        %v3148 = vadd.f32 0.0, %v3147
        %v3149 = vpop.f32.mrb[0].mxu0
        %3150 = vmatprep.mubr.bf16.mxu0 0
        %3151 = vmatmul.mubr.bf16.gmra.mrb[0].mxu0 %v3082
        %v3152 = vpop.f32.mrb[0].mxu0
        %v3153 = vadd.f32 0.0, %v3152
        %v3154 = vpop.f32.mrb[0].mxu0
        %v3155 = vpop.f32.mrb[0].mxu0
        %v3156 = vadd.f32 0.0, %v3155
        %v3157 = vpop.f32.mrb[0].mxu0
        %3158 = vmatprep.mubr.bf16.mxu0 0
        %3159 = vmatmul.mubr.bf16.gmra.mrb[0].mxu0 %v3085
        %v3160 = vpop.f32.mrb[0].mxu0
        %v3161 = vadd.f32 0.0, %v3160
        %v3162 = vpop.f32.mrb[0].mxu0
        %v3163 = vpop.f32.mrb[0].mxu0
        %v3164 = vadd.f32 0.0, %v3163
        %v3165 = vpop.f32.mrb[0].mxu0
        %3166 = vmatprep.mubr.bf16.mxu0 0
        %3167 = vmatmul.mubr.bf16.gmra.mrb[0].mxu0 %v3088
        %v3168 = vpop.f32.mrb[0].mxu0
        %v3169 = vadd.f32 0.0, %v3168
        %v3170 = vpop.f32.mrb[0].mxu0
        %v3171 = vpop.f32.mrb[0].mxu0
        %v3172 = vadd.f32 0.0, %v3171
        %v3173 = vpop.f32.mrb[0].mxu0
        %3174 = vmatprep.mubr.bf16.mxu0 0
        %3175 = vmatmul.mubr.bf16.gmra.mrb[0].mxu0 %v3091
        %v3176 = vpop.f32.mrb[0].mxu0
        %v3177 = vadd.f32 0.0, %v3176
        %v3178 = vpop.f32.mrb[0].mxu0
        %v3179 = vpop.f32.mrb[0].mxu0
        %v3180 = vadd.f32 0.0, %v3179
        %v3181 = vpop.f32.mrb[0].mxu0
        %3182 = vmatprep.mubr.bf16.mxu0 0
        %3183 = vmatmul.mubr.bf16.gmra.mrb[0].mxu0 %v3094
        %v3184 = vpop.f32.mrb[0].mxu0
        %v3185 = vadd.f32 0.0, %v3184
        %v3186 = vpop.f32.mrb[0].mxu0
        %v3187 = vpop.f32.mrb[0].mxu0
        %v3188 = vadd.f32 0.0, %v3187
        %v3189 = vpop.f32.mrb[0].mxu0
        %3190 = vmatprep.mubr.bf16.mxu0 0
        %3191 = vmatmul.mubr.bf16.gmra.mrb[0].mxu0 %v3097
        %v3192 = vpop.f32.mrb[0].mxu0
        %v3193 = vadd.f32 0.0, %v3192
        %v3194 = vpop.f32.mrb[0].mxu0
        %v3195 = vpop.f32.mrb[0].mxu0
        %v3196 = vadd.f32 0.0, %v3195
        %v3197 = vpop.f32.mrb[0].mxu0
        %3198 = vdwg.mxu0
        %v3199 = vadd.f32 %v2841, %v3137
        %v3200 = vadd.f32 %v2842, %v3140
        %v3201 = vadd.f32 %v2843, %v3145
        %v3202 = vadd.f32 %v2844, %v3148
        %v3203 = vadd.f32 %v2845, %v3153
        %v3204 = vadd.f32 %v2846, %v3156
        %v3205 = vadd.f32 %v2847, %v3161
        %v3206 = vadd.f32 %v2848, %v3164
        %v3207 = vadd.f32 %v2849, %v3169
        %v3208 = vadd.f32 %v2850, %v3172
        %v3209 = vadd.f32 %v2851, %v3177
        %v3210 = vadd.f32 %v2852, %v3180
        %v3211 = vadd.f32 %v2853, %v3185
        %v3212 = vadd.f32 %v2854, %v3188
        %v3213 = vadd.f32 %v2855, %v3193
        %v3214 = vadd.f32 %v2856, %v3196
        %v3223 = vrot.slane %v268, 5
        %v3224 = vrot.slane %v3223, 4
        %v3225 = vrot.slane %v269, 5
        %v3226 = vsel %vm1393, %v3224, %v3225
        %v3227 = vrot.slane %v3225, 4
        %v3228 = vrot.slane %v270, 5
        %v3229 = vsel %vm1393, %v3227, %v3228
        %v3230 = vrot.slane %v271, 5
        %v3231 = vrot.slane %v3230, 4
        %v3232 = vrot.slane %v272, 5
        %v3233 = vsel %vm1393, %v3231, %v3232
        %v3234 = vrot.slane %v3232, 4
        %v3235 = vrot.slane %v273, 5
        %v3236 = vsel %vm1393, %v3234, %v3235
        %v3237 = vrot.slane %v274, 5
        %v3238 = vrot.slane %v3237, 4
        %v3239 = vrot.slane %v275, 5
        %v3240 = vsel %vm1393, %v3238, %v3239
        %v3241 = vrot.slane %v3239, 4
        %v3242 = vrot.slane %v276, 5
        %v3243 = vsel %vm1393, %v3241, %v3242
        %v3244 = vrot.slane %v277, 5
        %v3245 = vrot.slane %v3244, 4
        %v3246 = vrot.slane %v278, 5
        %v3247 = vsel %vm1393, %v3245, %v3246
        %v3248 = vrot.slane %v3246, 4
        %v3249 = vrot.slane %v279, 5
        %v3250 = vsel %vm1393, %v3248, %v3249
        %v3251 = vrot.slane %v280, 5
        %v3252 = vrot.slane %v3251, 4
        %v3253 = vrot.slane %v281, 5
        %v3254 = vsel %vm1393, %v3252, %v3253
        %v3255 = vrot.slane %v3253, 4
        %v3256 = vrot.slane %v282, 5
        %v3257 = vsel %vm1393, %v3255, %v3256
        %v3258 = vrot.slane %v283, 5
        %v3259 = vrot.slane %v3258, 4
        %v3260 = vrot.slane %v284, 5
        %v3261 = vsel %vm1393, %v3259, %v3260
        %v3262 = vrot.slane %v3260, 4
        %v3263 = vrot.slane %v285, 5
        %v3264 = vsel %vm1393, %v3262, %v3263
        %v3265 = vrot.slane %v286, 5
        %v3266 = vrot.slane %v3265, 4
        %v3267 = vrot.slane %v287, 5
        %v3268 = vsel %vm1393, %v3266, %v3267
        %v3269 = vrot.slane %v3267, 4
        %v3270 = vrot.slane %v288, 5
        %v3271 = vsel %vm1393, %v3269, %v3270
        %v3272 = vrot.slane %v289, 5
        %v3273 = vrot.slane %v3272, 4
        %v3274 = vrot.slane %v290, 5
        %v3275 = vsel %vm1393, %v3273, %v3274
        %v3276 = vrot.slane %v3274, 4
        %v3277 = vrot.slane %v291, 5
        %v3278 = vsel %vm1393, %v3276, %v3277
        %s3279 = scalar_lea.vmem %s1, 22
        %v3280 = vld [vmem:[%s3279] sm:$0x3]
        %v3281 = vunpack.c.l.b16 %v3226
        %v3282 = vunpack.c.l.b16 %v3229
        %v3283 = vunpack.c.l.b16 %v3233
        %v3284 = vunpack.c.l.b16 %v3236
        %v3285 = vunpack.c.l.b16 %v3240
        %v3286 = vunpack.c.l.b16 %v3243
        %v3287 = vunpack.c.l.b16 %v3247
        %v3288 = vunpack.c.l.b16 %v3250
        %v3289 = vunpack.c.l.b16 %v3254
        %v3290 = vunpack.c.l.b16 %v3257
        %v3291 = vunpack.c.l.b16 %v3261
        %v3292 = vunpack.c.l.b16 %v3264
        %v3293 = vunpack.c.l.b16 %v3268
        %v3294 = vunpack.c.l.b16 %v3271
        %v3295 = vunpack.c.l.b16 %v3275
        %v3296 = vunpack.c.l.b16 %v3278
        %v3297 = vpack.c.b16 %v3282, %v3281
        %v3298 = vpack.c.b16 %v3284, %v3283
        %v3299 = vpack.c.b16 %v3286, %v3285
        %v3300 = vpack.c.b16 %v3288, %v3287
        %v3301 = vpack.c.b16 %v3290, %v3289
        %v3302 = vpack.c.b16 %v3292, %v3291
        %v3303 = vpack.c.b16 %v3294, %v3293
        %v3304 = vpack.c.b16 %v3296, %v3295
        %v3306 = vsel %vm371, %v3297, 0
        %v3309 = vsel %vm371, %v3298, 0
        %v3312 = vsel %vm371, %v3299, 0
        %v3315 = vsel %vm371, %v3300, 0
        %v3318 = vsel %vm371, %v3301, 0
        %v3321 = vsel %vm371, %v3302, 0
        %v3324 = vsel %vm371, %v3303, 0
        %v3327 = vsel %vm371, %v3304, 0
        %v3330 = vand.u32 %v3280, %v399
        %3332 = vmatprep.subr.bf16.mxu0 0
        %3333 = vmatpush1.bf16.msra.mxu0 %v3330
        %3334 = vmatprep.subr.bf16.mxu0 0
        %3335 = vmatpush1.bf16.msra.mxu0 0
        %3336 = vmatprep.subr.bf16.mxu0 0
        %3337 = vmatpush1.bf16.msra.mxu0 0
        %3338 = vmatprep.subr.bf16.mxu0 0
        %3339 = vmatpush1.bf16.msra.mxu0 0
        %3340 = vmatprep.subr.bf16.mxu0 0
        %3341 = vmatpush1.bf16.msra.mxu0 0
        %3342 = vmatprep.subr.bf16.mxu0 0
        %3343 = vmatpush1.bf16.msra.mxu0 0
        %3344 = vmatprep.subr.bf16.mxu0 0
        %3345 = vmatpush1.bf16.msra.mxu0 0
        %3346 = vmatprep.subr.bf16.mxu0 0
        %3347 = vmatpush1.bf16.msra.mxu0 0
        %3348 = vmatprep.subr.bf16.mxu0 0
        %3349 = vmatpush1.bf16.msra.mxu0 0
        %3350 = vmatprep.subr.bf16.mxu0 0
        %3351 = vmatpush1.bf16.msra.mxu0 0
        %3352 = vmatprep.subr.bf16.mxu0 0
        %3353 = vmatpush1.bf16.msra.mxu0 0
        %3354 = vmatprep.subr.bf16.mxu0 0
        %3355 = vmatpush1.bf16.msra.mxu0 0
        %3356 = vmatprep.subr.bf16.mxu0 0
        %3357 = vmatpush1.bf16.msra.mxu0 0
        %3358 = vmatprep.subr.bf16.mxu0 0
        %3359 = vmatpush1.bf16.msra.mxu0 0
        %3360 = vmatprep.subr.bf16.mxu0 0
        %3361 = vmatpush1.bf16.msra.mxu0 0
        %3362 = vmatprep.subr.bf16.mxu0 0
        %3363 = vmatpush1.bf16.msra.mxu0 0
        %3364 = vmatprep.mubr.bf16.mxu0 0
        %3365 = vmatmul.mubr.bf16.gmra.mrb[0].mxu0 %v3306
        %v3366 = vpop.f32.mrb[0].mxu0
        %v3367 = vadd.f32 0.0, %v3366
        %v3368 = vpop.f32.mrb[0].mxu0
        %v3369 = vpop.f32.mrb[0].mxu0
        %v3370 = vadd.f32 0.0, %v3369
        %v3371 = vpop.f32.mrb[0].mxu0
        %3372 = vmatprep.mubr.bf16.mxu0 0
        %3373 = vmatmul.mubr.bf16.gmra.mrb[0].mxu0 %v3309
        %v3374 = vpop.f32.mrb[0].mxu0
        %v3375 = vadd.f32 0.0, %v3374
        %v3376 = vpop.f32.mrb[0].mxu0
        %v3377 = vpop.f32.mrb[0].mxu0
        %v3378 = vadd.f32 0.0, %v3377
        %v3379 = vpop.f32.mrb[0].mxu0
        %3380 = vmatprep.mubr.bf16.mxu0 0
        %3381 = vmatmul.mubr.bf16.gmra.mrb[0].mxu0 %v3312
        %v3382 = vpop.f32.mrb[0].mxu0
        %v3383 = vadd.f32 0.0, %v3382
        %v3384 = vpop.f32.mrb[0].mxu0
        %v3385 = vpop.f32.mrb[0].mxu0
        %v3386 = vadd.f32 0.0, %v3385
        %v3387 = vpop.f32.mrb[0].mxu0
        %3388 = vmatprep.mubr.bf16.mxu0 0
        %3389 = vmatmul.mubr.bf16.gmra.mrb[0].mxu0 %v3315
        %v3390 = vpop.f32.mrb[0].mxu0
        %v3391 = vadd.f32 0.0, %v3390
        %v3392 = vpop.f32.mrb[0].mxu0
        %v3393 = vpop.f32.mrb[0].mxu0
        %v3394 = vadd.f32 0.0, %v3393
        %v3395 = vpop.f32.mrb[0].mxu0
        %3396 = vmatprep.mubr.bf16.mxu0 0
        %3397 = vmatmul.mubr.bf16.gmra.mrb[0].mxu0 %v3318
        %v3398 = vpop.f32.mrb[0].mxu0
        %v3399 = vadd.f32 0.0, %v3398
        %v3400 = vpop.f32.mrb[0].mxu0
        %v3401 = vpop.f32.mrb[0].mxu0
        %v3402 = vadd.f32 0.0, %v3401
        %v3403 = vpop.f32.mrb[0].mxu0
        %3404 = vmatprep.mubr.bf16.mxu0 0
        %3405 = vmatmul.mubr.bf16.gmra.mrb[0].mxu0 %v3321
        %v3406 = vpop.f32.mrb[0].mxu0
        %v3407 = vadd.f32 0.0, %v3406
        %v3408 = vpop.f32.mrb[0].mxu0
        %v3409 = vpop.f32.mrb[0].mxu0
        %v3410 = vadd.f32 0.0, %v3409
        %v3411 = vpop.f32.mrb[0].mxu0
        %3412 = vmatprep.mubr.bf16.mxu0 0
        %3413 = vmatmul.mubr.bf16.gmra.mrb[0].mxu0 %v3324
        %v3414 = vpop.f32.mrb[0].mxu0
        %v3415 = vadd.f32 0.0, %v3414
        %v3416 = vpop.f32.mrb[0].mxu0
        %v3417 = vpop.f32.mrb[0].mxu0
        %v3418 = vadd.f32 0.0, %v3417
        %v3419 = vpop.f32.mrb[0].mxu0
        %3420 = vmatprep.mubr.bf16.mxu0 0
        %3421 = vmatmul.mubr.bf16.gmra.mrb[0].mxu0 %v3327
        %v3422 = vpop.f32.mrb[0].mxu0
        %v3423 = vadd.f32 0.0, %v3422
        %v3424 = vpop.f32.mrb[0].mxu0
        %v3425 = vpop.f32.mrb[0].mxu0
        %v3426 = vadd.f32 0.0, %v3425
        %v3427 = vpop.f32.mrb[0].mxu0
        %3428 = vdwg.mxu0
        %v3429 = vadd.f32 %v3199, %v3367
        %v3430 = vadd.f32 %v3200, %v3370
        %v3431 = vadd.f32 %v3201, %v3375
        %v3432 = vadd.f32 %v3202, %v3378
        %v3433 = vadd.f32 %v3203, %v3383
        %v3434 = vadd.f32 %v3204, %v3386
        %v3435 = vadd.f32 %v3205, %v3391
        %v3436 = vadd.f32 %v3206, %v3394
        %v3437 = vadd.f32 %v3207, %v3399
        %v3438 = vadd.f32 %v3208, %v3402
        %v3439 = vadd.f32 %v3209, %v3407
        %v3440 = vadd.f32 %v3210, %v3410
        %v3441 = vadd.f32 %v3211, %v3415
        %v3442 = vadd.f32 %v3212, %v3418
        %v3443 = vadd.f32 %v3213, %v3423
        %v3444 = vadd.f32 %v3214, %v3426
        %v3453 = vrot.slane %v298, 5
        %v3454 = vrot.slane %v3453, 4
        %v3455 = vrot.slane %v299, 5
        %v3456 = vsel %vm1393, %v3454, %v3455
        %v3457 = vrot.slane %v3455, 4
        %v3458 = vrot.slane %v300, 5
        %v3459 = vsel %vm1393, %v3457, %v3458
        %v3460 = vrot.slane %v301, 5
        %v3461 = vrot.slane %v3460, 4
        %v3462 = vrot.slane %v302, 5
        %v3463 = vsel %vm1393, %v3461, %v3462
        %v3464 = vrot.slane %v3462, 4
        %v3465 = vrot.slane %v303, 5
        %v3466 = vsel %vm1393, %v3464, %v3465
        %v3467 = vrot.slane %v304, 5
        %v3468 = vrot.slane %v3467, 4
        %v3469 = vrot.slane %v305, 5
        %v3470 = vsel %vm1393, %v3468, %v3469
        %v3471 = vrot.slane %v3469, 4
        %v3472 = vrot.slane %v306, 5
        %v3473 = vsel %vm1393, %v3471, %v3472
        %v3474 = vrot.slane %v307, 5
        %v3475 = vrot.slane %v3474, 4
        %v3476 = vrot.slane %v308, 5
        %v3477 = vsel %vm1393, %v3475, %v3476
        %v3478 = vrot.slane %v3476, 4
        %v3479 = vrot.slane %v309, 5
        %v3480 = vsel %vm1393, %v3478, %v3479
        %v3481 = vrot.slane %v310, 5
        %v3482 = vrot.slane %v3481, 4
        %v3483 = vrot.slane %v311, 5
        %v3484 = vsel %vm1393, %v3482, %v3483
        %v3485 = vrot.slane %v3483, 4
        %v3486 = vrot.slane %v312, 5
        %v3487 = vsel %vm1393, %v3485, %v3486
        %v3488 = vrot.slane %v313, 5
        %v3489 = vrot.slane %v3488, 4
        %v3490 = vrot.slane %v314, 5
        %v3491 = vsel %vm1393, %v3489, %v3490
        %v3492 = vrot.slane %v3490, 4
        %v3493 = vrot.slane %v315, 5
        %v3494 = vsel %vm1393, %v3492, %v3493
        %v3495 = vrot.slane %v316, 5
        %v3496 = vrot.slane %v3495, 4
        %v3497 = vrot.slane %v317, 5
        %v3498 = vsel %vm1393, %v3496, %v3497
        %v3499 = vrot.slane %v3497, 4
        %v3500 = vrot.slane %v318, 5
        %v3501 = vsel %vm1393, %v3499, %v3500
        %v3502 = vrot.slane %v319, 5
        %v3503 = vrot.slane %v3502, 4
        %v3504 = vrot.slane %v320, 5
        %v3505 = vsel %vm1393, %v3503, %v3504
        %v3506 = vrot.slane %v3504, 4
        %v3507 = vrot.slane %v321, 5
        %v3508 = vsel %vm1393, %v3506, %v3507
        %s3509 = scalar_lea.vmem %s1, 24
        %v3510 = vld [vmem:[%s3509] sm:$0x3]
        %v3511 = vunpack.c.l.b16 %v3456
        %v3512 = vunpack.c.l.b16 %v3459
        %v3513 = vunpack.c.l.b16 %v3463
        %v3514 = vunpack.c.l.b16 %v3466
        %v3515 = vunpack.c.l.b16 %v3470
        %v3516 = vunpack.c.l.b16 %v3473
        %v3517 = vunpack.c.l.b16 %v3477
        %v3518 = vunpack.c.l.b16 %v3480
        %v3519 = vunpack.c.l.b16 %v3484
        %v3520 = vunpack.c.l.b16 %v3487
        %v3521 = vunpack.c.l.b16 %v3491
        %v3522 = vunpack.c.l.b16 %v3494
        %v3523 = vunpack.c.l.b16 %v3498
        %v3524 = vunpack.c.l.b16 %v3501
        %v3525 = vunpack.c.l.b16 %v3505
        %v3526 = vunpack.c.l.b16 %v3508
        %v3527 = vpack.c.b16 %v3512, %v3511
        %v3528 = vpack.c.b16 %v3514, %v3513
        %v3529 = vpack.c.b16 %v3516, %v3515
        %v3530 = vpack.c.b16 %v3518, %v3517
        %v3531 = vpack.c.b16 %v3520, %v3519
        %v3532 = vpack.c.b16 %v3522, %v3521
        %v3533 = vpack.c.b16 %v3524, %v3523
        %v3534 = vpack.c.b16 %v3526, %v3525
        %v3536 = vsel %vm371, %v3527, 0
        %v3539 = vsel %vm371, %v3528, 0
        %v3542 = vsel %vm371, %v3529, 0
        %v3545 = vsel %vm371, %v3530, 0
        %v3548 = vsel %vm371, %v3531, 0
        %v3551 = vsel %vm371, %v3532, 0
        %v3554 = vsel %vm371, %v3533, 0
        %v3557 = vsel %vm371, %v3534, 0
        %v3560 = vand.u32 %v3510, %v399
        %3562 = vmatprep.subr.bf16.mxu0 0
        %3563 = vmatpush1.bf16.msra.mxu0 %v3560
        %3564 = vmatprep.subr.bf16.mxu0 0
        %3565 = vmatpush1.bf16.msra.mxu0 0
        %3566 = vmatprep.subr.bf16.mxu0 0
        %3567 = vmatpush1.bf16.msra.mxu0 0
        %3568 = vmatprep.subr.bf16.mxu0 0
        %3569 = vmatpush1.bf16.msra.mxu0 0
        %3570 = vmatprep.subr.bf16.mxu0 0
        %3571 = vmatpush1.bf16.msra.mxu0 0
        %3572 = vmatprep.subr.bf16.mxu0 0
        %3573 = vmatpush1.bf16.msra.mxu0 0
        %3574 = vmatprep.subr.bf16.mxu0 0
        %3575 = vmatpush1.bf16.msra.mxu0 0
        %3576 = vmatprep.subr.bf16.mxu0 0
        %3577 = vmatpush1.bf16.msra.mxu0 0
        %3578 = vmatprep.subr.bf16.mxu0 0
        %3579 = vmatpush1.bf16.msra.mxu0 0
        %3580 = vmatprep.subr.bf16.mxu0 0
        %3581 = vmatpush1.bf16.msra.mxu0 0
        %3582 = vmatprep.subr.bf16.mxu0 0
        %3583 = vmatpush1.bf16.msra.mxu0 0
        %3584 = vmatprep.subr.bf16.mxu0 0
        %3585 = vmatpush1.bf16.msra.mxu0 0
        %3586 = vmatprep.subr.bf16.mxu0 0
        %3587 = vmatpush1.bf16.msra.mxu0 0
        %3588 = vmatprep.subr.bf16.mxu0 0
        %3589 = vmatpush1.bf16.msra.mxu0 0
        %3590 = vmatprep.subr.bf16.mxu0 0
        %3591 = vmatpush1.bf16.msra.mxu0 0
        %3592 = vmatprep.subr.bf16.mxu0 0
        %3593 = vmatpush1.bf16.msra.mxu0 0
        %3594 = vmatprep.mubr.bf16.mxu0 0
        %3595 = vmatmul.mubr.bf16.gmra.mrb[0].mxu0 %v3536
        %v3596 = vpop.f32.mrb[0].mxu0
        %v3597 = vadd.f32 0.0, %v3596
        %v3598 = vpop.f32.mrb[0].mxu0
        %v3599 = vpop.f32.mrb[0].mxu0
        %v3600 = vadd.f32 0.0, %v3599
        %v3601 = vpop.f32.mrb[0].mxu0
        %3602 = vmatprep.mubr.bf16.mxu0 0
        %3603 = vmatmul.mubr.bf16.gmra.mrb[0].mxu0 %v3539
        %v3604 = vpop.f32.mrb[0].mxu0
        %v3605 = vadd.f32 0.0, %v3604
        %v3606 = vpop.f32.mrb[0].mxu0
        %v3607 = vpop.f32.mrb[0].mxu0
        %v3608 = vadd.f32 0.0, %v3607
        %v3609 = vpop.f32.mrb[0].mxu0
        %3610 = vmatprep.mubr.bf16.mxu0 0
        %3611 = vmatmul.mubr.bf16.gmra.mrb[0].mxu0 %v3542
        %v3612 = vpop.f32.mrb[0].mxu0
        %v3613 = vadd.f32 0.0, %v3612
        %v3614 = vpop.f32.mrb[0].mxu0
        %v3615 = vpop.f32.mrb[0].mxu0
        %v3616 = vadd.f32 0.0, %v3615
        %v3617 = vpop.f32.mrb[0].mxu0
        %3618 = vmatprep.mubr.bf16.mxu0 0
        %3619 = vmatmul.mubr.bf16.gmra.mrb[0].mxu0 %v3545
        %v3620 = vpop.f32.mrb[0].mxu0
        %v3621 = vadd.f32 0.0, %v3620
        %v3622 = vpop.f32.mrb[0].mxu0
        %v3623 = vpop.f32.mrb[0].mxu0
        %v3624 = vadd.f32 0.0, %v3623
        %v3625 = vpop.f32.mrb[0].mxu0
        %3626 = vmatprep.mubr.bf16.mxu0 0
        %3627 = vmatmul.mubr.bf16.gmra.mrb[0].mxu0 %v3548
        %v3628 = vpop.f32.mrb[0].mxu0
        %v3629 = vadd.f32 0.0, %v3628
        %v3630 = vpop.f32.mrb[0].mxu0
        %v3631 = vpop.f32.mrb[0].mxu0
        %v3632 = vadd.f32 0.0, %v3631
        %v3633 = vpop.f32.mrb[0].mxu0
        %3634 = vmatprep.mubr.bf16.mxu0 0
        %3635 = vmatmul.mubr.bf16.gmra.mrb[0].mxu0 %v3551
        %v3636 = vpop.f32.mrb[0].mxu0
        %v3637 = vadd.f32 0.0, %v3636
        %v3638 = vpop.f32.mrb[0].mxu0
        %v3639 = vpop.f32.mrb[0].mxu0
        %v3640 = vadd.f32 0.0, %v3639
        %v3641 = vpop.f32.mrb[0].mxu0
        %3642 = vmatprep.mubr.bf16.mxu0 0
        %3643 = vmatmul.mubr.bf16.gmra.mrb[0].mxu0 %v3554
        %v3644 = vpop.f32.mrb[0].mxu0
        %v3645 = vadd.f32 0.0, %v3644
        %v3646 = vpop.f32.mrb[0].mxu0
        %v3647 = vpop.f32.mrb[0].mxu0
        %v3648 = vadd.f32 0.0, %v3647
        %v3649 = vpop.f32.mrb[0].mxu0
        %3650 = vmatprep.mubr.bf16.mxu0 0
        %3651 = vmatmul.mubr.bf16.gmra.mrb[0].mxu0 %v3557
        %v3652 = vpop.f32.mrb[0].mxu0
        %v3653 = vadd.f32 0.0, %v3652
        %v3654 = vpop.f32.mrb[0].mxu0
        %v3655 = vpop.f32.mrb[0].mxu0
        %v3656 = vadd.f32 0.0, %v3655
        %v3657 = vpop.f32.mrb[0].mxu0
        %3658 = vdwg.mxu0
        %v3659 = vadd.f32 %v3429, %v3597
        %v3660 = vadd.f32 %v3430, %v3600
        %v3661 = vadd.f32 %v3431, %v3605
        %v3662 = vadd.f32 %v3432, %v3608
        %v3663 = vadd.f32 %v3433, %v3613
        %v3664 = vadd.f32 %v3434, %v3616
        %v3665 = vadd.f32 %v3435, %v3621
        %v3666 = vadd.f32 %v3436, %v3624
        %v3667 = vadd.f32 %v3437, %v3629
        %v3668 = vadd.f32 %v3438, %v3632
        %v3669 = vadd.f32 %v3439, %v3637
        %v3670 = vadd.f32 %v3440, %v3640
        %v3671 = vadd.f32 %v3441, %v3645
        %v3672 = vadd.f32 %v3442, %v3648
        %v3673 = vadd.f32 %v3443, %v3653
        %v3674 = vadd.f32 %v3444, %v3656
        %v3675 = vrot.slane %v2500, 5
        %v3676 = vrot.slane %v2503, 6
        %v3677 = vor.u32 %v3675, %v3676
        %v3678 = vrot.slane %v3677, 4
        %v3679 = vrot.slane %v2513, 5
        %v3680 = vrot.slane %v2509, 6
        %v3681 = vor.u32 %v3679, %v3680
        %v3682 = vsel %vm1848, %v3678, %v3681
        %v3683 = vrot.slane %v3681, 4
        %v3684 = vshrl.u32 %v270, 16
        %v3686 = vrot.slane %v3684, 5
        %v3687 = vrot.slane %v2519, 6
        %v3688 = vor.u32 %v3686, %v3687
        %v3689 = vsel %vm1848, %v3683, %v3688
        %v3690 = vrot.slane %v2524, 5
        %v3691 = vrot.slane %v2527, 6
        %v3692 = vor.u32 %v3690, %v3691
        %v3693 = vrot.slane %v3692, 4
        %v3694 = vrot.slane %v2537, 5
        %v3695 = vrot.slane %v2533, 6
        %v3696 = vor.u32 %v3694, %v3695
        %v3697 = vsel %vm1848, %v3693, %v3696
        %v3698 = vrot.slane %v3696, 4
        %v3699 = vshrl.u32 %v273, 16
        %v3701 = vrot.slane %v3699, 5
        %v3702 = vrot.slane %v2543, 6
        %v3703 = vor.u32 %v3701, %v3702
        %v3704 = vsel %vm1848, %v3698, %v3703
        %v3705 = vrot.slane %v2548, 5
        %v3706 = vrot.slane %v2551, 6
        %v3707 = vor.u32 %v3705, %v3706
        %v3708 = vrot.slane %v3707, 4
        %v3709 = vrot.slane %v2561, 5
        %v3710 = vrot.slane %v2557, 6
        %v3711 = vor.u32 %v3709, %v3710
        %v3712 = vsel %vm1848, %v3708, %v3711
        %v3713 = vrot.slane %v3711, 4
        %v3714 = vshrl.u32 %v276, 16
        %v3716 = vrot.slane %v3714, 5
        %v3717 = vrot.slane %v2567, 6
        %v3718 = vor.u32 %v3716, %v3717
        %v3719 = vsel %vm1848, %v3713, %v3718
        %v3720 = vrot.slane %v2572, 5
        %v3721 = vrot.slane %v2575, 6
        %v3722 = vor.u32 %v3720, %v3721
        %v3723 = vrot.slane %v3722, 4
        %v3724 = vrot.slane %v2585, 5
        %v3725 = vrot.slane %v2581, 6
        %v3726 = vor.u32 %v3724, %v3725
        %v3727 = vsel %vm1848, %v3723, %v3726
        %v3728 = vrot.slane %v3726, 4
        %v3729 = vshrl.u32 %v279, 16
        %v3731 = vrot.slane %v3729, 5
        %v3732 = vrot.slane %v2591, 6
        %v3733 = vor.u32 %v3731, %v3732
        %v3734 = vsel %vm1848, %v3728, %v3733
        %v3735 = vrot.slane %v2596, 5
        %v3736 = vrot.slane %v2599, 6
        %v3737 = vor.u32 %v3735, %v3736
        %v3738 = vrot.slane %v3737, 4
        %v3739 = vrot.slane %v2609, 5
        %v3740 = vrot.slane %v2605, 6
        %v3741 = vor.u32 %v3739, %v3740
        %v3742 = vsel %vm1848, %v3738, %v3741
        %v3743 = vrot.slane %v3741, 4
        %v3744 = vshrl.u32 %v282, 16
        %v3746 = vrot.slane %v3744, 5
        %v3747 = vrot.slane %v2615, 6
        %v3748 = vor.u32 %v3746, %v3747
        %v3749 = vsel %vm1848, %v3743, %v3748
        %v3750 = vrot.slane %v2620, 5
        %v3751 = vrot.slane %v2623, 6
        %v3752 = vor.u32 %v3750, %v3751
        %v3753 = vrot.slane %v3752, 4
        %v3754 = vrot.slane %v2633, 5
        %v3755 = vrot.slane %v2629, 6
        %v3756 = vor.u32 %v3754, %v3755
        %v3757 = vsel %vm1848, %v3753, %v3756
        %v3758 = vrot.slane %v3756, 4
        %v3759 = vshrl.u32 %v285, 16
        %v3761 = vrot.slane %v3759, 5
        %v3762 = vrot.slane %v2639, 6
        %v3763 = vor.u32 %v3761, %v3762
        %v3764 = vsel %vm1848, %v3758, %v3763
        %v3765 = vrot.slane %v2644, 5
        %v3766 = vrot.slane %v2647, 6
        %v3767 = vor.u32 %v3765, %v3766
        %v3768 = vrot.slane %v3767, 4
        %v3769 = vrot.slane %v2657, 5
        %v3770 = vrot.slane %v2653, 6
        %v3771 = vor.u32 %v3769, %v3770
        %v3772 = vsel %vm1848, %v3768, %v3771
        %v3773 = vrot.slane %v3771, 4
        %v3774 = vshrl.u32 %v288, 16
        %v3776 = vrot.slane %v3774, 5
        %v3777 = vrot.slane %v2663, 6
        %v3778 = vor.u32 %v3776, %v3777
        %v3779 = vsel %vm1848, %v3773, %v3778
        %v3780 = vrot.slane %v2668, 5
        %v3781 = vrot.slane %v2671, 6
        %v3782 = vor.u32 %v3780, %v3781
        %v3783 = vrot.slane %v3782, 4
        %v3784 = vrot.slane %v2681, 5
        %v3785 = vrot.slane %v2677, 6
        %v3786 = vor.u32 %v3784, %v3785
        %v3787 = vsel %vm1848, %v3783, %v3786
        %v3788 = vrot.slane %v3786, 4
        %v3789 = vshrl.u32 %v291, 16
        %v3791 = vrot.slane %v3789, 5
        %v3792 = vrot.slane %v2687, 6
        %v3793 = vor.u32 %v3791, %v3792
        %v3794 = vsel %vm1848, %v3788, %v3793
        %s3795 = scalar_lea.vmem %s1, 26
        %v3796 = vld [vmem:[%s3795] sm:$0x3]
        %v3797 = vunpack.c.l.b16 %v3682
        %v3798 = vunpack.c.l.b16 %v3689
        %v3799 = vunpack.c.l.b16 %v3697
        %v3800 = vunpack.c.l.b16 %v3704
        %v3801 = vunpack.c.l.b16 %v3712
        %v3802 = vunpack.c.l.b16 %v3719
        %v3803 = vunpack.c.l.b16 %v3727
        %v3804 = vunpack.c.l.b16 %v3734
        %v3805 = vunpack.c.l.b16 %v3742
        %v3806 = vunpack.c.l.b16 %v3749
        %v3807 = vunpack.c.l.b16 %v3757
        %v3808 = vunpack.c.l.b16 %v3764
        %v3809 = vunpack.c.l.b16 %v3772
        %v3810 = vunpack.c.l.b16 %v3779
        %v3811 = vunpack.c.l.b16 %v3787
        %v3812 = vunpack.c.l.b16 %v3794
        %v3813 = vpack.c.b16 %v3798, %v3797
        %v3814 = vpack.c.b16 %v3800, %v3799
        %v3815 = vpack.c.b16 %v3802, %v3801
        %v3816 = vpack.c.b16 %v3804, %v3803
        %v3817 = vpack.c.b16 %v3806, %v3805
        %v3818 = vpack.c.b16 %v3808, %v3807
        %v3819 = vpack.c.b16 %v3810, %v3809
        %v3820 = vpack.c.b16 %v3812, %v3811
        %v3822 = vsel %vm371, %v3813, 0
        %v3825 = vsel %vm371, %v3814, 0
        %v3828 = vsel %vm371, %v3815, 0
        %v3831 = vsel %vm371, %v3816, 0
        %v3834 = vsel %vm371, %v3817, 0
        %v3837 = vsel %vm371, %v3818, 0
        %v3840 = vsel %vm371, %v3819, 0
        %v3843 = vsel %vm371, %v3820, 0
        %v3846 = vand.u32 %v3796, %v399
        %3848 = vmatprep.subr.bf16.mxu0 0
        %3849 = vmatpush1.bf16.msra.mxu0 %v3846
        %3850 = vmatprep.subr.bf16.mxu0 0
        %3851 = vmatpush1.bf16.msra.mxu0 0
        %3852 = vmatprep.subr.bf16.mxu0 0
        %3853 = vmatpush1.bf16.msra.mxu0 0
        %3854 = vmatprep.subr.bf16.mxu0 0
        %3855 = vmatpush1.bf16.msra.mxu0 0
        %3856 = vmatprep.subr.bf16.mxu0 0
        %3857 = vmatpush1.bf16.msra.mxu0 0
        %3858 = vmatprep.subr.bf16.mxu0 0
        %3859 = vmatpush1.bf16.msra.mxu0 0
        %3860 = vmatprep.subr.bf16.mxu0 0
        %3861 = vmatpush1.bf16.msra.mxu0 0
        %3862 = vmatprep.subr.bf16.mxu0 0
        %3863 = vmatpush1.bf16.msra.mxu0 0
        %3864 = vmatprep.subr.bf16.mxu0 0
        %3865 = vmatpush1.bf16.msra.mxu0 0
        %3866 = vmatprep.subr.bf16.mxu0 0
        %3867 = vmatpush1.bf16.msra.mxu0 0
        %3868 = vmatprep.subr.bf16.mxu0 0
        %3869 = vmatpush1.bf16.msra.mxu0 0
        %3870 = vmatprep.subr.bf16.mxu0 0
        %3871 = vmatpush1.bf16.msra.mxu0 0
        %3872 = vmatprep.subr.bf16.mxu0 0
        %3873 = vmatpush1.bf16.msra.mxu0 0
        %3874 = vmatprep.subr.bf16.mxu0 0
        %3875 = vmatpush1.bf16.msra.mxu0 0
        %3876 = vmatprep.subr.bf16.mxu0 0
        %3877 = vmatpush1.bf16.msra.mxu0 0
        %3878 = vmatprep.subr.bf16.mxu0 0
        %3879 = vmatpush1.bf16.msra.mxu0 0
        %3880 = vmatprep.mubr.bf16.mxu0 0
        %3881 = vmatmul.mubr.bf16.gmra.mrb[0].mxu0 %v3822
        %v3882 = vpop.f32.mrb[0].mxu0
        %v3883 = vadd.f32 0.0, %v3882
        %v3884 = vpop.f32.mrb[0].mxu0
        %v3885 = vpop.f32.mrb[0].mxu0
        %v3886 = vadd.f32 0.0, %v3885
        %v3887 = vpop.f32.mrb[0].mxu0
        %3888 = vmatprep.mubr.bf16.mxu0 0
        %3889 = vmatmul.mubr.bf16.gmra.mrb[0].mxu0 %v3825
        %v3890 = vpop.f32.mrb[0].mxu0
        %v3891 = vadd.f32 0.0, %v3890
        %v3892 = vpop.f32.mrb[0].mxu0
        %v3893 = vpop.f32.mrb[0].mxu0
        %v3894 = vadd.f32 0.0, %v3893
        %v3895 = vpop.f32.mrb[0].mxu0
        %3896 = vmatprep.mubr.bf16.mxu0 0
        %3897 = vmatmul.mubr.bf16.gmra.mrb[0].mxu0 %v3828
        %v3898 = vpop.f32.mrb[0].mxu0
        %v3899 = vadd.f32 0.0, %v3898
        %v3900 = vpop.f32.mrb[0].mxu0
        %v3901 = vpop.f32.mrb[0].mxu0
        %v3902 = vadd.f32 0.0, %v3901
        %v3903 = vpop.f32.mrb[0].mxu0
        %3904 = vmatprep.mubr.bf16.mxu0 0
        %3905 = vmatmul.mubr.bf16.gmra.mrb[0].mxu0 %v3831
        %v3906 = vpop.f32.mrb[0].mxu0
        %v3907 = vadd.f32 0.0, %v3906
        %v3908 = vpop.f32.mrb[0].mxu0
        %v3909 = vpop.f32.mrb[0].mxu0
        %v3910 = vadd.f32 0.0, %v3909
        %v3911 = vpop.f32.mrb[0].mxu0
        %3912 = vmatprep.mubr.bf16.mxu0 0
        %3913 = vmatmul.mubr.bf16.gmra.mrb[0].mxu0 %v3834
        %v3914 = vpop.f32.mrb[0].mxu0
        %v3915 = vadd.f32 0.0, %v3914
        %v3916 = vpop.f32.mrb[0].mxu0
        %v3917 = vpop.f32.mrb[0].mxu0
        %v3918 = vadd.f32 0.0, %v3917
        %v3919 = vpop.f32.mrb[0].mxu0
        %3920 = vmatprep.mubr.bf16.mxu0 0
        %3921 = vmatmul.mubr.bf16.gmra.mrb[0].mxu0 %v3837
        %v3922 = vpop.f32.mrb[0].mxu0
        %v3923 = vadd.f32 0.0, %v3922
        %v3924 = vpop.f32.mrb[0].mxu0
        %v3925 = vpop.f32.mrb[0].mxu0
        %v3926 = vadd.f32 0.0, %v3925
        %v3927 = vpop.f32.mrb[0].mxu0
        %3928 = vmatprep.mubr.bf16.mxu0 0
        %3929 = vmatmul.mubr.bf16.gmra.mrb[0].mxu0 %v3840
        %v3930 = vpop.f32.mrb[0].mxu0
        %v3931 = vadd.f32 0.0, %v3930
        %v3932 = vpop.f32.mrb[0].mxu0
        %v3933 = vpop.f32.mrb[0].mxu0
        %v3934 = vadd.f32 0.0, %v3933
        %v3935 = vpop.f32.mrb[0].mxu0
        %3936 = vmatprep.mubr.bf16.mxu0 0
        %3937 = vmatmul.mubr.bf16.gmra.mrb[0].mxu0 %v3843
        %v3938 = vpop.f32.mrb[0].mxu0
        %v3939 = vadd.f32 0.0, %v3938
        %v3940 = vpop.f32.mrb[0].mxu0
        %v3941 = vpop.f32.mrb[0].mxu0
        %v3942 = vadd.f32 0.0, %v3941
        %v3943 = vpop.f32.mrb[0].mxu0
        %3944 = vdwg.mxu0
        %v3945 = vadd.f32 %v3659, %v3883
        %v3946 = vadd.f32 %v3660, %v3886
        %v3947 = vadd.f32 %v3661, %v3891
        %v3948 = vadd.f32 %v3662, %v3894
        %v3949 = vadd.f32 %v3663, %v3899
        %v3950 = vadd.f32 %v3664, %v3902
        %v3951 = vadd.f32 %v3665, %v3907
        %v3952 = vadd.f32 %v3666, %v3910
        %v3953 = vadd.f32 %v3667, %v3915
        %v3954 = vadd.f32 %v3668, %v3918
        %v3955 = vadd.f32 %v3669, %v3923
        %v3956 = vadd.f32 %v3670, %v3926
        %v3957 = vadd.f32 %v3671, %v3931
        %v3958 = vadd.f32 %v3672, %v3934
        %v3959 = vadd.f32 %v3673, %v3939
        %v3960 = vadd.f32 %v3674, %v3942
        %s3961 = scalar_lea.vmem %s1, 28
        %v3962 = vld [vmem:[%s3961] sm:$0x3]
        %v3965 = vunpack.c.l.b16 %v226
        %v3966 = vunpack.c.l.b16 %v227
        %v3967 = vpack.c.b16 %v3966, %v3965
        %v3969 = vsel %vm371, %v3967, 0
        %v3972 = vand.u32 %v3962, %v399
        %3974 = vmatprep.subr.bf16.mxu0 0
        %3975 = vmatpush1.bf16.msra.mxu0 %v3972
        %3976 = vmatprep.subr.bf16.mxu0 0
        %3977 = vmatpush1.bf16.msra.mxu0 0
        %3978 = vmatprep.subr.bf16.mxu0 0
        %3979 = vmatpush1.bf16.msra.mxu0 0
        %3980 = vmatprep.subr.bf16.mxu0 0
        %3981 = vmatpush1.bf16.msra.mxu0 0
        %3982 = vmatprep.subr.bf16.mxu0 0
        %3983 = vmatpush1.bf16.msra.mxu0 0
        %3984 = vmatprep.subr.bf16.mxu0 0
        %3985 = vmatpush1.bf16.msra.mxu0 0
        %3986 = vmatprep.subr.bf16.mxu0 0
        %3987 = vmatpush1.bf16.msra.mxu0 0
        %3988 = vmatprep.subr.bf16.mxu0 0
        %3989 = vmatpush1.bf16.msra.mxu0 0
        %3990 = vmatprep.subr.bf16.mxu0 0
        %3991 = vmatpush1.bf16.msra.mxu0 0
        %3992 = vmatprep.subr.bf16.mxu0 0
        %3993 = vmatpush1.bf16.msra.mxu0 0
        %3994 = vmatprep.subr.bf16.mxu0 0
        %3995 = vmatpush1.bf16.msra.mxu0 0
        %3996 = vmatprep.subr.bf16.mxu0 0
        %3997 = vmatpush1.bf16.msra.mxu0 0
        %3998 = vmatprep.subr.bf16.mxu0 0
        %3999 = vmatpush1.bf16.msra.mxu0 0
        %4000 = vmatprep.subr.bf16.mxu0 0
        %4001 = vmatpush1.bf16.msra.mxu0 0
        %4002 = vmatprep.subr.bf16.mxu0 0
        %4003 = vmatpush1.bf16.msra.mxu0 0
        %4004 = vmatprep.subr.bf16.mxu0 0
        %4005 = vmatpush1.bf16.msra.mxu0 0
        %4006 = vmatprep.mubr.bf16.mxu0 0
        %4007 = vmatmul.mubr.bf16.gmra.mrb[0].mxu0 %v544
        %v4008 = vpop.f32.mrb[0].mxu0
        %v4009 = vadd.f32 0.0, %v4008
        %v4010 = vpop.f32.mrb[0].mxu0
        %v4011 = vpop.f32.mrb[0].mxu0
        %v4012 = vadd.f32 0.0, %v4011
        %v4013 = vpop.f32.mrb[0].mxu0
        %4014 = vmatprep.mubr.bf16.mxu0 0
        %4015 = vmatmul.mubr.bf16.gmra.mrb[0].mxu0 %v547
        %v4016 = vpop.f32.mrb[0].mxu0
        %v4017 = vadd.f32 0.0, %v4016
        %v4018 = vpop.f32.mrb[0].mxu0
        %v4019 = vpop.f32.mrb[0].mxu0
        %v4020 = vadd.f32 0.0, %v4019
        %v4021 = vpop.f32.mrb[0].mxu0
        %4022 = vmatprep.mubr.bf16.mxu0 0
        %4023 = vmatmul.mubr.bf16.gmra.mrb[0].mxu0 %v550
        %v4024 = vpop.f32.mrb[0].mxu0
        %v4025 = vadd.f32 0.0, %v4024
        %v4026 = vpop.f32.mrb[0].mxu0
        %v4027 = vpop.f32.mrb[0].mxu0
        %v4028 = vadd.f32 0.0, %v4027
        %v4029 = vpop.f32.mrb[0].mxu0
        %4030 = vmatprep.mubr.bf16.mxu0 0
        %4031 = vmatmul.mubr.bf16.gmra.mrb[0].mxu0 %v553
        %v4032 = vpop.f32.mrb[0].mxu0
        %v4033 = vadd.f32 0.0, %v4032
        %v4034 = vpop.f32.mrb[0].mxu0
        %v4035 = vpop.f32.mrb[0].mxu0
        %v4036 = vadd.f32 0.0, %v4035
        %v4037 = vpop.f32.mrb[0].mxu0
        %4038 = vmatprep.mubr.bf16.mxu0 0
        %4039 = vmatmul.mubr.bf16.gmra.mrb[0].mxu0 %v556
        %v4040 = vpop.f32.mrb[0].mxu0
        %v4041 = vadd.f32 0.0, %v4040
        %v4042 = vpop.f32.mrb[0].mxu0
        %v4043 = vpop.f32.mrb[0].mxu0
        %v4044 = vadd.f32 0.0, %v4043
        %v4045 = vpop.f32.mrb[0].mxu0
        %4046 = vmatprep.mubr.bf16.mxu0 0
        %4047 = vmatmul.mubr.bf16.gmra.mrb[0].mxu0 %v559
        %v4048 = vpop.f32.mrb[0].mxu0
        %v4049 = vadd.f32 0.0, %v4048
        %v4050 = vpop.f32.mrb[0].mxu0
        %v4051 = vpop.f32.mrb[0].mxu0
        %v4052 = vadd.f32 0.0, %v4051
        %v4053 = vpop.f32.mrb[0].mxu0
        %4054 = vmatprep.mubr.bf16.mxu0 0
        %4055 = vmatmul.mubr.bf16.gmra.mrb[0].mxu0 %v562
        %v4056 = vpop.f32.mrb[0].mxu0
        %v4057 = vadd.f32 0.0, %v4056
        %v4058 = vpop.f32.mrb[0].mxu0
        %v4059 = vpop.f32.mrb[0].mxu0
        %v4060 = vadd.f32 0.0, %v4059
        %v4061 = vpop.f32.mrb[0].mxu0
        %4062 = vmatprep.mubr.bf16.mxu0 0
        %4063 = vmatmul.mubr.bf16.gmra.mrb[0].mxu0 %v3969
        %v4064 = vpop.f32.mrb[0].mxu0
        %v4065 = vadd.f32 0.0, %v4064
        %v4066 = vpop.f32.mrb[0].mxu0
        %v4067 = vpop.f32.mrb[0].mxu0
        %v4068 = vadd.f32 0.0, %v4067
        %v4069 = vpop.f32.mrb[0].mxu0
        %4070 = vdwg.mxu0
        %v4071 = vadd.f32 %v3945, %v4009
        %v4072 = vadd.f32 %v3946, %v4012
        %v4073 = vadd.f32 %v3947, %v4017
        %v4074 = vadd.f32 %v3948, %v4020
        %v4075 = vadd.f32 %v3949, %v4025
        %v4076 = vadd.f32 %v3950, %v4028
        %v4077 = vadd.f32 %v3951, %v4033
        %v4078 = vadd.f32 %v3952, %v4036
        %v4079 = vadd.f32 %v3953, %v4041
        %v4080 = vadd.f32 %v3954, %v4044
        %v4081 = vadd.f32 %v3955, %v4049
        %v4082 = vadd.f32 %v3956, %v4052
        %v4083 = vadd.f32 %v3957, %v4057
        %v4084 = vadd.f32 %v3958, %v4060
        %v4085 = vadd.f32 %v3959, %v4065
        %v4086 = vadd.f32 %v3960, %v4068
        %s4087 = scalar_lea.vmem %s1, 30
        %v4088 = vld [vmem:[%s4087] sm:$0x3]
        %v4091 = vunpack.c.l.b16 %v259
        %v4092 = vunpack.c.l.b16 %v260
        %v4093 = vpack.c.b16 %v4092, %v4091
        %v4095 = vsel %vm371, %v4093, 0
        %v4098 = vand.u32 %v4088, %v399
        %4100 = vmatprep.subr.bf16.mxu0 0
        %4101 = vmatpush1.bf16.msra.mxu0 %v4098
        %4102 = vmatprep.subr.bf16.mxu0 0
        %4103 = vmatpush1.bf16.msra.mxu0 0
        %4104 = vmatprep.subr.bf16.mxu0 0
        %4105 = vmatpush1.bf16.msra.mxu0 0
        %4106 = vmatprep.subr.bf16.mxu0 0
        %4107 = vmatpush1.bf16.msra.mxu0 0
        %4108 = vmatprep.subr.bf16.mxu0 0
        %4109 = vmatpush1.bf16.msra.mxu0 0
        %4110 = vmatprep.subr.bf16.mxu0 0
        %4111 = vmatpush1.bf16.msra.mxu0 0
        %4112 = vmatprep.subr.bf16.mxu0 0
        %4113 = vmatpush1.bf16.msra.mxu0 0
        %4114 = vmatprep.subr.bf16.mxu0 0
        %4115 = vmatpush1.bf16.msra.mxu0 0
        %4116 = vmatprep.subr.bf16.mxu0 0
        %4117 = vmatpush1.bf16.msra.mxu0 0
        %4118 = vmatprep.subr.bf16.mxu0 0
        %4119 = vmatpush1.bf16.msra.mxu0 0
        %4120 = vmatprep.subr.bf16.mxu0 0
        %4121 = vmatpush1.bf16.msra.mxu0 0
        %4122 = vmatprep.subr.bf16.mxu0 0
        %4123 = vmatpush1.bf16.msra.mxu0 0
        %4124 = vmatprep.subr.bf16.mxu0 0
        %4125 = vmatpush1.bf16.msra.mxu0 0
        %4126 = vmatprep.subr.bf16.mxu0 0
        %4127 = vmatpush1.bf16.msra.mxu0 0
        %4128 = vmatprep.subr.bf16.mxu0 0
        %4129 = vmatpush1.bf16.msra.mxu0 0
        %4130 = vmatprep.subr.bf16.mxu0 0
        %4131 = vmatpush1.bf16.msra.mxu0 0
        %4132 = vmatprep.mubr.bf16.mxu0 0
        %4133 = vmatmul.mubr.bf16.gmra.mrb[0].mxu0 %v376
        %v4134 = vpop.f32.mrb[0].mxu0
        %v4135 = vadd.f32 0.0, %v4134
        %v4136 = vpop.f32.mrb[0].mxu0
        %v4137 = vpop.f32.mrb[0].mxu0
        %v4138 = vadd.f32 0.0, %v4137
        %v4139 = vpop.f32.mrb[0].mxu0
        %4140 = vmatprep.mubr.bf16.mxu0 0
        %4141 = vmatmul.mubr.bf16.gmra.mrb[0].mxu0 %v379
        %v4142 = vpop.f32.mrb[0].mxu0
        %v4143 = vadd.f32 0.0, %v4142
        %v4144 = vpop.f32.mrb[0].mxu0
        %v4145 = vpop.f32.mrb[0].mxu0
        %v4146 = vadd.f32 0.0, %v4145
        %v4147 = vpop.f32.mrb[0].mxu0
        %4148 = vmatprep.mubr.bf16.mxu0 0
        %4149 = vmatmul.mubr.bf16.gmra.mrb[0].mxu0 %v382
        %v4150 = vpop.f32.mrb[0].mxu0
        %v4151 = vadd.f32 0.0, %v4150
        %v4152 = vpop.f32.mrb[0].mxu0
        %v4153 = vpop.f32.mrb[0].mxu0
        %v4154 = vadd.f32 0.0, %v4153
        %v4155 = vpop.f32.mrb[0].mxu0
        %4156 = vmatprep.mubr.bf16.mxu0 0
        %4157 = vmatmul.mubr.bf16.gmra.mrb[0].mxu0 %v385
        %v4158 = vpop.f32.mrb[0].mxu0
        %v4159 = vadd.f32 0.0, %v4158
        %v4160 = vpop.f32.mrb[0].mxu0
        %v4161 = vpop.f32.mrb[0].mxu0
        %v4162 = vadd.f32 0.0, %v4161
        %v4163 = vpop.f32.mrb[0].mxu0
        %4164 = vmatprep.mubr.bf16.mxu0 0
        %4165 = vmatmul.mubr.bf16.gmra.mrb[0].mxu0 %v388
        %v4166 = vpop.f32.mrb[0].mxu0
        %v4167 = vadd.f32 0.0, %v4166
        %v4168 = vpop.f32.mrb[0].mxu0
        %v4169 = vpop.f32.mrb[0].mxu0
        %v4170 = vadd.f32 0.0, %v4169
        %v4171 = vpop.f32.mrb[0].mxu0
        %4172 = vmatprep.mubr.bf16.mxu0 0
        %4173 = vmatmul.mubr.bf16.gmra.mrb[0].mxu0 %v391
        %v4174 = vpop.f32.mrb[0].mxu0
        %v4175 = vadd.f32 0.0, %v4174
        %v4176 = vpop.f32.mrb[0].mxu0
        %v4177 = vpop.f32.mrb[0].mxu0
        %v4178 = vadd.f32 0.0, %v4177
        %v4179 = vpop.f32.mrb[0].mxu0
        %4180 = vmatprep.mubr.bf16.mxu0 0
        %4181 = vmatmul.mubr.bf16.gmra.mrb[0].mxu0 %v394
        %v4182 = vpop.f32.mrb[0].mxu0
        %v4183 = vadd.f32 0.0, %v4182
        %v4184 = vpop.f32.mrb[0].mxu0
        %v4185 = vpop.f32.mrb[0].mxu0
        %v4186 = vadd.f32 0.0, %v4185
        %v4187 = vpop.f32.mrb[0].mxu0
        %4188 = vmatprep.mubr.bf16.mxu0 0
        %4189 = vmatmul.mubr.bf16.gmra.mrb[0].mxu0 %v4095
        %v4190 = vpop.f32.mrb[0].mxu0
        %v4191 = vadd.f32 0.0, %v4190
        %v4192 = vpop.f32.mrb[0].mxu0
        %v4193 = vpop.f32.mrb[0].mxu0
        %v4194 = vadd.f32 0.0, %v4193
        %v4195 = vpop.f32.mrb[0].mxu0
        %4196 = vdwg.mxu0
        %v4197 = vadd.f32 %v4071, %v4135
        %v4198 = vadd.f32 %v4072, %v4138
        %v4199 = vadd.f32 %v4073, %v4143
        %v4200 = vadd.f32 %v4074, %v4146
        %v4201 = vadd.f32 %v4075, %v4151
        %v4202 = vadd.f32 %v4076, %v4154
        %v4203 = vadd.f32 %v4077, %v4159
        %v4204 = vadd.f32 %v4078, %v4162
        %v4205 = vadd.f32 %v4079, %v4167
        %v4206 = vadd.f32 %v4080, %v4170
        %v4207 = vadd.f32 %v4081, %v4175
        %v4208 = vadd.f32 %v4082, %v4178
        %v4209 = vadd.f32 %v4083, %v4183
        %v4210 = vadd.f32 %v4084, %v4186
        %v4211 = vadd.f32 %v4085, %v4191
        %v4212 = vadd.f32 %v4086, %v4194
        %v4214 = vshrl.u32 %v226, 16
        %v4216 = vrot.slane %v4214, 4
        %v4217 = vshll.u32 %v226, 16
        %v4219 = vrot.slane %v4217, 5
        %v4220 = vor.u32 %v4216, %v4219
        %v4221 = vrot.slane %v4220, 4
        %v4223 = vshll.u32 %v227, 16
        %v4225 = vrot.slane %v4223, 5
        %v4226 = vsel %vm666, %v4221, %v4225
        %v4227 = vshrl.u32 %v227, 16
        %v4229 = vrot.slane %v4227, 4
        %v4230 = vor.u32 %v4229, %v4225
        %v4231 = vrot.slane %v4230, 4
        %v4233 = vshll.u32 %v228, 16
        %v4235 = vrot.slane %v4233, 5
        %v4236 = vsel %vm666, %v4231, %v4235
        %s4237 = scalar_lea.vmem %s1, 32
        %v4238 = vld [vmem:[%s4237] sm:$0x3]
        %v4239 = vunpack.c.l.b16 %v4226
        %v4240 = vunpack.c.l.b16 %v4236
        %v4241 = vpack.c.b16 %v4240, %v4239
        %v4243 = vsel %vm371, %v4241, 0
        %v4246 = vand.u32 %v4238, %v399
        %4248 = vmatprep.subr.bf16.mxu0 0
        %4249 = vmatpush1.bf16.msra.mxu0 %v4246
        %4250 = vmatprep.subr.bf16.mxu0 0
        %4251 = vmatpush1.bf16.msra.mxu0 0
        %4252 = vmatprep.subr.bf16.mxu0 0
        %4253 = vmatpush1.bf16.msra.mxu0 0
        %4254 = vmatprep.subr.bf16.mxu0 0
        %4255 = vmatpush1.bf16.msra.mxu0 0
        %4256 = vmatprep.subr.bf16.mxu0 0
        %4257 = vmatpush1.bf16.msra.mxu0 0
        %4258 = vmatprep.subr.bf16.mxu0 0
        %4259 = vmatpush1.bf16.msra.mxu0 0
        %4260 = vmatprep.subr.bf16.mxu0 0
        %4261 = vmatpush1.bf16.msra.mxu0 0
        %4262 = vmatprep.subr.bf16.mxu0 0
        %4263 = vmatpush1.bf16.msra.mxu0 0
        %4264 = vmatprep.subr.bf16.mxu0 0
        %4265 = vmatpush1.bf16.msra.mxu0 0
        %4266 = vmatprep.subr.bf16.mxu0 0
        %4267 = vmatpush1.bf16.msra.mxu0 0
        %4268 = vmatprep.subr.bf16.mxu0 0
        %4269 = vmatpush1.bf16.msra.mxu0 0
        %4270 = vmatprep.subr.bf16.mxu0 0
        %4271 = vmatpush1.bf16.msra.mxu0 0
        %4272 = vmatprep.subr.bf16.mxu0 0
        %4273 = vmatpush1.bf16.msra.mxu0 0
        %4274 = vmatprep.subr.bf16.mxu0 0
        %4275 = vmatpush1.bf16.msra.mxu0 0
        %4276 = vmatprep.subr.bf16.mxu0 0
        %4277 = vmatpush1.bf16.msra.mxu0 0
        %4278 = vmatprep.subr.bf16.mxu0 0
        %4279 = vmatpush1.bf16.msra.mxu0 0
        %4280 = vmatprep.mubr.bf16.mxu0 0
        %4281 = vmatmul.mubr.bf16.gmra.mrb[0].mxu0 %v889
        %v4282 = vpop.f32.mrb[0].mxu0
        %v4283 = vadd.f32 0.0, %v4282
        %v4284 = vpop.f32.mrb[0].mxu0
        %v4285 = vpop.f32.mrb[0].mxu0
        %v4286 = vadd.f32 0.0, %v4285
        %v4287 = vpop.f32.mrb[0].mxu0
        %4288 = vmatprep.mubr.bf16.mxu0 0
        %4289 = vmatmul.mubr.bf16.gmra.mrb[0].mxu0 %v892
        %v4290 = vpop.f32.mrb[0].mxu0
        %v4291 = vadd.f32 0.0, %v4290
        %v4292 = vpop.f32.mrb[0].mxu0
        %v4293 = vpop.f32.mrb[0].mxu0
        %v4294 = vadd.f32 0.0, %v4293
        %v4295 = vpop.f32.mrb[0].mxu0
        %4296 = vmatprep.mubr.bf16.mxu0 0
        %4297 = vmatmul.mubr.bf16.gmra.mrb[0].mxu0 %v895
        %v4298 = vpop.f32.mrb[0].mxu0
        %v4299 = vadd.f32 0.0, %v4298
        %v4300 = vpop.f32.mrb[0].mxu0
        %v4301 = vpop.f32.mrb[0].mxu0
        %v4302 = vadd.f32 0.0, %v4301
        %v4303 = vpop.f32.mrb[0].mxu0
        %4304 = vmatprep.mubr.bf16.mxu0 0
        %4305 = vmatmul.mubr.bf16.gmra.mrb[0].mxu0 %v898
        %v4306 = vpop.f32.mrb[0].mxu0
        %v4307 = vadd.f32 0.0, %v4306
        %v4308 = vpop.f32.mrb[0].mxu0
        %v4309 = vpop.f32.mrb[0].mxu0
        %v4310 = vadd.f32 0.0, %v4309
        %v4311 = vpop.f32.mrb[0].mxu0
        %4312 = vmatprep.mubr.bf16.mxu0 0
        %4313 = vmatmul.mubr.bf16.gmra.mrb[0].mxu0 %v901
        %v4314 = vpop.f32.mrb[0].mxu0
        %v4315 = vadd.f32 0.0, %v4314
        %v4316 = vpop.f32.mrb[0].mxu0
        %v4317 = vpop.f32.mrb[0].mxu0
        %v4318 = vadd.f32 0.0, %v4317
        %v4319 = vpop.f32.mrb[0].mxu0
        %4320 = vmatprep.mubr.bf16.mxu0 0
        %4321 = vmatmul.mubr.bf16.gmra.mrb[0].mxu0 %v904
        %v4322 = vpop.f32.mrb[0].mxu0
        %v4323 = vadd.f32 0.0, %v4322
        %v4324 = vpop.f32.mrb[0].mxu0
        %v4325 = vpop.f32.mrb[0].mxu0
        %v4326 = vadd.f32 0.0, %v4325
        %v4327 = vpop.f32.mrb[0].mxu0
        %4328 = vmatprep.mubr.bf16.mxu0 0
        %4329 = vmatmul.mubr.bf16.gmra.mrb[0].mxu0 %v907
        %v4330 = vpop.f32.mrb[0].mxu0
        %v4331 = vadd.f32 0.0, %v4330
        %v4332 = vpop.f32.mrb[0].mxu0
        %v4333 = vpop.f32.mrb[0].mxu0
        %v4334 = vadd.f32 0.0, %v4333
        %v4335 = vpop.f32.mrb[0].mxu0
        %4336 = vmatprep.mubr.bf16.mxu0 0
        %4337 = vmatmul.mubr.bf16.gmra.mrb[0].mxu0 %v4243
        %v4338 = vpop.f32.mrb[0].mxu0
        %v4339 = vadd.f32 0.0, %v4338
        %v4340 = vpop.f32.mrb[0].mxu0
        %v4341 = vpop.f32.mrb[0].mxu0
        %v4342 = vadd.f32 0.0, %v4341
        %v4343 = vpop.f32.mrb[0].mxu0
        %4344 = vdwg.mxu0
        %v4345 = vadd.f32 %v4197, %v4283
        %v4346 = vadd.f32 %v4198, %v4286
        %v4347 = vadd.f32 %v4199, %v4291
        %v4348 = vadd.f32 %v4200, %v4294
        %v4349 = vadd.f32 %v4201, %v4299
        %v4350 = vadd.f32 %v4202, %v4302
        %v4351 = vadd.f32 %v4203, %v4307
        %v4352 = vadd.f32 %v4204, %v4310
        %v4353 = vadd.f32 %v4205, %v4315
        %v4354 = vadd.f32 %v4206, %v4318
        %v4355 = vadd.f32 %v4207, %v4323
        %v4356 = vadd.f32 %v4208, %v4326
        %v4357 = vadd.f32 %v4209, %v4331
        %v4358 = vadd.f32 %v4210, %v4334
        %v4359 = vadd.f32 %v4211, %v4339
        %v4360 = vadd.f32 %v4212, %v4342
        %v4362 = vshrl.u32 %v259, 16
        %v4364 = vrot.slane %v4362, 4
        %v4365 = vshll.u32 %v259, 16
        %v4367 = vrot.slane %v4365, 5
        %v4368 = vor.u32 %v4364, %v4367
        %v4369 = vrot.slane %v4368, 4
        %v4371 = vshll.u32 %v260, 16
        %v4373 = vrot.slane %v4371, 5
        %v4374 = vsel %vm666, %v4369, %v4373
        %v4375 = vshrl.u32 %v260, 16
        %v4377 = vrot.slane %v4375, 4
        %v4378 = vor.u32 %v4377, %v4373
        %v4379 = vrot.slane %v4378, 4
        %v4381 = vshll.u32 %v261, 16
        %v4383 = vrot.slane %v4381, 5
        %v4384 = vsel %vm666, %v4379, %v4383
        %s4385 = scalar_lea.vmem %s1, 34
        %v4386 = vld [vmem:[%s4385] sm:$0x3]
        %v4387 = vunpack.c.l.b16 %v4374
        %v4388 = vunpack.c.l.b16 %v4384
        %v4389 = vpack.c.b16 %v4388, %v4387
        %v4391 = vsel %vm371, %v4389, 0
        %v4394 = vand.u32 %v4386, %v399
        %4396 = vmatprep.subr.bf16.mxu0 0
        %4397 = vmatpush1.bf16.msra.mxu0 %v4394
        %4398 = vmatprep.subr.bf16.mxu0 0
        %4399 = vmatpush1.bf16.msra.mxu0 0
        %4400 = vmatprep.subr.bf16.mxu0 0
        %4401 = vmatpush1.bf16.msra.mxu0 0
        %4402 = vmatprep.subr.bf16.mxu0 0
        %4403 = vmatpush1.bf16.msra.mxu0 0
        %4404 = vmatprep.subr.bf16.mxu0 0
        %4405 = vmatpush1.bf16.msra.mxu0 0
        %4406 = vmatprep.subr.bf16.mxu0 0
        %4407 = vmatpush1.bf16.msra.mxu0 0
        %4408 = vmatprep.subr.bf16.mxu0 0
        %4409 = vmatpush1.bf16.msra.mxu0 0
        %4410 = vmatprep.subr.bf16.mxu0 0
        %4411 = vmatpush1.bf16.msra.mxu0 0
        %4412 = vmatprep.subr.bf16.mxu0 0
        %4413 = vmatpush1.bf16.msra.mxu0 0
        %4414 = vmatprep.subr.bf16.mxu0 0
        %4415 = vmatpush1.bf16.msra.mxu0 0
        %4416 = vmatprep.subr.bf16.mxu0 0
        %4417 = vmatpush1.bf16.msra.mxu0 0
        %4418 = vmatprep.subr.bf16.mxu0 0
        %4419 = vmatpush1.bf16.msra.mxu0 0
        %4420 = vmatprep.subr.bf16.mxu0 0
        %4421 = vmatpush1.bf16.msra.mxu0 0
        %4422 = vmatprep.subr.bf16.mxu0 0
        %4423 = vmatpush1.bf16.msra.mxu0 0
        %4424 = vmatprep.subr.bf16.mxu0 0
        %4425 = vmatpush1.bf16.msra.mxu0 0
        %4426 = vmatprep.subr.bf16.mxu0 0
        %4427 = vmatpush1.bf16.msra.mxu0 0
        %4428 = vmatprep.mubr.bf16.mxu0 0
        %4429 = vmatmul.mubr.bf16.gmra.mrb[0].mxu0 %v1247
        %v4430 = vpop.f32.mrb[0].mxu0
        %v4431 = vadd.f32 0.0, %v4430
        %v4432 = vpop.f32.mrb[0].mxu0
        %v4433 = vpop.f32.mrb[0].mxu0
        %v4434 = vadd.f32 0.0, %v4433
        %v4435 = vpop.f32.mrb[0].mxu0
        %4436 = vmatprep.mubr.bf16.mxu0 0
        %4437 = vmatmul.mubr.bf16.gmra.mrb[0].mxu0 %v1250
        %v4438 = vpop.f32.mrb[0].mxu0
        %v4439 = vadd.f32 0.0, %v4438
        %v4440 = vpop.f32.mrb[0].mxu0
        %v4441 = vpop.f32.mrb[0].mxu0
        %v4442 = vadd.f32 0.0, %v4441
        %v4443 = vpop.f32.mrb[0].mxu0
        %4444 = vmatprep.mubr.bf16.mxu0 0
        %4445 = vmatmul.mubr.bf16.gmra.mrb[0].mxu0 %v1253
        %v4446 = vpop.f32.mrb[0].mxu0
        %v4447 = vadd.f32 0.0, %v4446
        %v4448 = vpop.f32.mrb[0].mxu0
        %v4449 = vpop.f32.mrb[0].mxu0
        %v4450 = vadd.f32 0.0, %v4449
        %v4451 = vpop.f32.mrb[0].mxu0
        %4452 = vmatprep.mubr.bf16.mxu0 0
        %4453 = vmatmul.mubr.bf16.gmra.mrb[0].mxu0 %v1256
        %v4454 = vpop.f32.mrb[0].mxu0
        %v4455 = vadd.f32 0.0, %v4454
        %v4456 = vpop.f32.mrb[0].mxu0
        %v4457 = vpop.f32.mrb[0].mxu0
        %v4458 = vadd.f32 0.0, %v4457
        %v4459 = vpop.f32.mrb[0].mxu0
        %4460 = vmatprep.mubr.bf16.mxu0 0
        %4461 = vmatmul.mubr.bf16.gmra.mrb[0].mxu0 %v1259
        %v4462 = vpop.f32.mrb[0].mxu0
        %v4463 = vadd.f32 0.0, %v4462
        %v4464 = vpop.f32.mrb[0].mxu0
        %v4465 = vpop.f32.mrb[0].mxu0
        %v4466 = vadd.f32 0.0, %v4465
        %v4467 = vpop.f32.mrb[0].mxu0
        %4468 = vmatprep.mubr.bf16.mxu0 0
        %4469 = vmatmul.mubr.bf16.gmra.mrb[0].mxu0 %v1262
        %v4470 = vpop.f32.mrb[0].mxu0
        %v4471 = vadd.f32 0.0, %v4470
        %v4472 = vpop.f32.mrb[0].mxu0
        %v4473 = vpop.f32.mrb[0].mxu0
        %v4474 = vadd.f32 0.0, %v4473
        %v4475 = vpop.f32.mrb[0].mxu0
        %4476 = vmatprep.mubr.bf16.mxu0 0
        %4477 = vmatmul.mubr.bf16.gmra.mrb[0].mxu0 %v1265
        %v4478 = vpop.f32.mrb[0].mxu0
        %v4479 = vadd.f32 0.0, %v4478
        %v4480 = vpop.f32.mrb[0].mxu0
        %v4481 = vpop.f32.mrb[0].mxu0
        %v4482 = vadd.f32 0.0, %v4481
        %v4483 = vpop.f32.mrb[0].mxu0
        %4484 = vmatprep.mubr.bf16.mxu0 0
        %4485 = vmatmul.mubr.bf16.gmra.mrb[0].mxu0 %v4391
        %v4486 = vpop.f32.mrb[0].mxu0
        %v4487 = vadd.f32 0.0, %v4486
        %v4488 = vpop.f32.mrb[0].mxu0
        %v4489 = vpop.f32.mrb[0].mxu0
        %v4490 = vadd.f32 0.0, %v4489
        %v4491 = vpop.f32.mrb[0].mxu0
        %4492 = vdwg.mxu0
        %v4493 = vadd.f32 %v4345, %v4431
        %v4494 = vadd.f32 %v4346, %v4434
        %v4495 = vadd.f32 %v4347, %v4439
        %v4496 = vadd.f32 %v4348, %v4442
        %v4497 = vadd.f32 %v4349, %v4447
        %v4498 = vadd.f32 %v4350, %v4450
        %v4499 = vadd.f32 %v4351, %v4455
        %v4500 = vadd.f32 %v4352, %v4458
        %v4501 = vadd.f32 %v4353, %v4463
        %v4502 = vadd.f32 %v4354, %v4466
        %v4503 = vadd.f32 %v4355, %v4471
        %v4504 = vadd.f32 %v4356, %v4474
        %v4505 = vadd.f32 %v4357, %v4479
        %v4506 = vadd.f32 %v4358, %v4482
        %v4507 = vadd.f32 %v4359, %v4487
        %v4508 = vadd.f32 %v4360, %v4490
        %v4510 = vrot.slane %v226, 5
        %v4511 = vrot.slane %v4510, 4
        %v4512 = vrot.slane %v227, 5
        %v4513 = vsel %vm1393, %v4511, %v4512
        %v4514 = vrot.slane %v4512, 4
        %v4515 = vrot.slane %v228, 5
        %v4516 = vsel %vm1393, %v4514, %v4515
        %s4517 = scalar_lea.vmem %s1, 36
        %v4518 = vld [vmem:[%s4517] sm:$0x3]
        %v4519 = vunpack.c.l.b16 %v4513
        %v4520 = vunpack.c.l.b16 %v4516
        %v4521 = vpack.c.b16 %v4520, %v4519
        %v4523 = vsel %vm371, %v4521, 0
        %v4526 = vand.u32 %v4518, %v399
        %4528 = vmatprep.subr.bf16.mxu0 0
        %4529 = vmatpush1.bf16.msra.mxu0 %v4526
        %4530 = vmatprep.subr.bf16.mxu0 0
        %4531 = vmatpush1.bf16.msra.mxu0 0
        %4532 = vmatprep.subr.bf16.mxu0 0
        %4533 = vmatpush1.bf16.msra.mxu0 0
        %4534 = vmatprep.subr.bf16.mxu0 0
        %4535 = vmatpush1.bf16.msra.mxu0 0
        %4536 = vmatprep.subr.bf16.mxu0 0
        %4537 = vmatpush1.bf16.msra.mxu0 0
        %4538 = vmatprep.subr.bf16.mxu0 0
        %4539 = vmatpush1.bf16.msra.mxu0 0
        %4540 = vmatprep.subr.bf16.mxu0 0
        %4541 = vmatpush1.bf16.msra.mxu0 0
        %4542 = vmatprep.subr.bf16.mxu0 0
        %4543 = vmatpush1.bf16.msra.mxu0 0
        %4544 = vmatprep.subr.bf16.mxu0 0
        %4545 = vmatpush1.bf16.msra.mxu0 0
        %4546 = vmatprep.subr.bf16.mxu0 0
        %4547 = vmatpush1.bf16.msra.mxu0 0
        %4548 = vmatprep.subr.bf16.mxu0 0
        %4549 = vmatpush1.bf16.msra.mxu0 0
        %4550 = vmatprep.subr.bf16.mxu0 0
        %4551 = vmatpush1.bf16.msra.mxu0 0
        %4552 = vmatprep.subr.bf16.mxu0 0
        %4553 = vmatpush1.bf16.msra.mxu0 0
        %4554 = vmatprep.subr.bf16.mxu0 0
        %4555 = vmatpush1.bf16.msra.mxu0 0
        %4556 = vmatprep.subr.bf16.mxu0 0
        %4557 = vmatpush1.bf16.msra.mxu0 0
        %4558 = vmatprep.subr.bf16.mxu0 0
        %4559 = vmatpush1.bf16.msra.mxu0 0
        %4560 = vmatprep.mubr.bf16.mxu0 0
        %4561 = vmatmul.mubr.bf16.gmra.mrb[0].mxu0 %v1480
        %v4562 = vpop.f32.mrb[0].mxu0
        %v4563 = vadd.f32 0.0, %v4562
        %v4564 = vpop.f32.mrb[0].mxu0
        %v4565 = vpop.f32.mrb[0].mxu0
        %v4566 = vadd.f32 0.0, %v4565
        %v4567 = vpop.f32.mrb[0].mxu0
        %4568 = vmatprep.mubr.bf16.mxu0 0
        %4569 = vmatmul.mubr.bf16.gmra.mrb[0].mxu0 %v1483
        %v4570 = vpop.f32.mrb[0].mxu0
        %v4571 = vadd.f32 0.0, %v4570
        %v4572 = vpop.f32.mrb[0].mxu0
        %v4573 = vpop.f32.mrb[0].mxu0
        %v4574 = vadd.f32 0.0, %v4573
        %v4575 = vpop.f32.mrb[0].mxu0
        %4576 = vmatprep.mubr.bf16.mxu0 0
        %4577 = vmatmul.mubr.bf16.gmra.mrb[0].mxu0 %v1486
        %v4578 = vpop.f32.mrb[0].mxu0
        %v4579 = vadd.f32 0.0, %v4578
        %v4580 = vpop.f32.mrb[0].mxu0
        %v4581 = vpop.f32.mrb[0].mxu0
        %v4582 = vadd.f32 0.0, %v4581
        %v4583 = vpop.f32.mrb[0].mxu0
        %4584 = vmatprep.mubr.bf16.mxu0 0
        %4585 = vmatmul.mubr.bf16.gmra.mrb[0].mxu0 %v1489
        %v4586 = vpop.f32.mrb[0].mxu0
        %v4587 = vadd.f32 0.0, %v4586
        %v4588 = vpop.f32.mrb[0].mxu0
        %v4589 = vpop.f32.mrb[0].mxu0
        %v4590 = vadd.f32 0.0, %v4589
        %v4591 = vpop.f32.mrb[0].mxu0
        %4592 = vmatprep.mubr.bf16.mxu0 0
        %4593 = vmatmul.mubr.bf16.gmra.mrb[0].mxu0 %v1492
        %v4594 = vpop.f32.mrb[0].mxu0
        %v4595 = vadd.f32 0.0, %v4594
        %v4596 = vpop.f32.mrb[0].mxu0
        %v4597 = vpop.f32.mrb[0].mxu0
        %v4598 = vadd.f32 0.0, %v4597
        %v4599 = vpop.f32.mrb[0].mxu0
        %4600 = vmatprep.mubr.bf16.mxu0 0
        %4601 = vmatmul.mubr.bf16.gmra.mrb[0].mxu0 %v1495
        %v4602 = vpop.f32.mrb[0].mxu0
        %v4603 = vadd.f32 0.0, %v4602
        %v4604 = vpop.f32.mrb[0].mxu0
        %v4605 = vpop.f32.mrb[0].mxu0
        %v4606 = vadd.f32 0.0, %v4605
        %v4607 = vpop.f32.mrb[0].mxu0
        %4608 = vmatprep.mubr.bf16.mxu0 0
        %4609 = vmatmul.mubr.bf16.gmra.mrb[0].mxu0 %v1498
        %v4610 = vpop.f32.mrb[0].mxu0
        %v4611 = vadd.f32 0.0, %v4610
        %v4612 = vpop.f32.mrb[0].mxu0
        %v4613 = vpop.f32.mrb[0].mxu0
        %v4614 = vadd.f32 0.0, %v4613
        %v4615 = vpop.f32.mrb[0].mxu0
        %4616 = vmatprep.mubr.bf16.mxu0 0
        %4617 = vmatmul.mubr.bf16.gmra.mrb[0].mxu0 %v4523
        %v4618 = vpop.f32.mrb[0].mxu0
        %v4619 = vadd.f32 0.0, %v4618
        %v4620 = vpop.f32.mrb[0].mxu0
        %v4621 = vpop.f32.mrb[0].mxu0
        %v4622 = vadd.f32 0.0, %v4621
        %v4623 = vpop.f32.mrb[0].mxu0
        %4624 = vdwg.mxu0
        %v4625 = vadd.f32 %v4493, %v4563
        %v4626 = vadd.f32 %v4494, %v4566
        %v4627 = vadd.f32 %v4495, %v4571
        %v4628 = vadd.f32 %v4496, %v4574
        %v4629 = vadd.f32 %v4497, %v4579
        %v4630 = vadd.f32 %v4498, %v4582
        %v4631 = vadd.f32 %v4499, %v4587
        %v4632 = vadd.f32 %v4500, %v4590
        %v4633 = vadd.f32 %v4501, %v4595
        %v4634 = vadd.f32 %v4502, %v4598
        %v4635 = vadd.f32 %v4503, %v4603
        %v4636 = vadd.f32 %v4504, %v4606
        %v4637 = vadd.f32 %v4505, %v4611
        %v4638 = vadd.f32 %v4506, %v4614
        %v4639 = vadd.f32 %v4507, %v4619
        %v4640 = vadd.f32 %v4508, %v4622
        %v4642 = vrot.slane %v259, 5
        %v4643 = vrot.slane %v4642, 4
        %v4644 = vrot.slane %v260, 5
        %v4645 = vsel %vm1393, %v4643, %v4644
        %v4646 = vrot.slane %v4644, 4
        %v4647 = vrot.slane %v261, 5
        %v4648 = vsel %vm1393, %v4646, %v4647
        %s4649 = scalar_lea.vmem %s1, 38
        %v4650 = vld [vmem:[%s4649] sm:$0x3]
        %v4651 = vunpack.c.l.b16 %v4645
        %v4652 = vunpack.c.l.b16 %v4648
        %v4653 = vpack.c.b16 %v4652, %v4651
        %v4655 = vsel %vm371, %v4653, 0
        %v4658 = vand.u32 %v4650, %v399
        %4660 = vmatprep.subr.bf16.mxu0 0
        %4661 = vmatpush1.bf16.msra.mxu0 %v4658
        %4662 = vmatprep.subr.bf16.mxu0 0
        %4663 = vmatpush1.bf16.msra.mxu0 0
        %4664 = vmatprep.subr.bf16.mxu0 0
        %4665 = vmatpush1.bf16.msra.mxu0 0
        %4666 = vmatprep.subr.bf16.mxu0 0
        %4667 = vmatpush1.bf16.msra.mxu0 0
        %4668 = vmatprep.subr.bf16.mxu0 0
        %4669 = vmatpush1.bf16.msra.mxu0 0
        %4670 = vmatprep.subr.bf16.mxu0 0
        %4671 = vmatpush1.bf16.msra.mxu0 0
        %4672 = vmatprep.subr.bf16.mxu0 0
        %4673 = vmatpush1.bf16.msra.mxu0 0
        %4674 = vmatprep.subr.bf16.mxu0 0
        %4675 = vmatpush1.bf16.msra.mxu0 0
        %4676 = vmatprep.subr.bf16.mxu0 0
        %4677 = vmatpush1.bf16.msra.mxu0 0
        %4678 = vmatprep.subr.bf16.mxu0 0
        %4679 = vmatpush1.bf16.msra.mxu0 0
        %4680 = vmatprep.subr.bf16.mxu0 0
        %4681 = vmatpush1.bf16.msra.mxu0 0
        %4682 = vmatprep.subr.bf16.mxu0 0
        %4683 = vmatpush1.bf16.msra.mxu0 0
        %4684 = vmatprep.subr.bf16.mxu0 0
        %4685 = vmatpush1.bf16.msra.mxu0 0
        %4686 = vmatprep.subr.bf16.mxu0 0
        %4687 = vmatpush1.bf16.msra.mxu0 0
        %4688 = vmatprep.subr.bf16.mxu0 0
        %4689 = vmatpush1.bf16.msra.mxu0 0
        %4690 = vmatprep.subr.bf16.mxu0 0
        %4691 = vmatpush1.bf16.msra.mxu0 0
        %4692 = vmatprep.mubr.bf16.mxu0 0
        %4693 = vmatmul.mubr.bf16.gmra.mrb[0].mxu0 %v1710
        %v4694 = vpop.f32.mrb[0].mxu0
        %v4695 = vadd.f32 0.0, %v4694
        %v4696 = vpop.f32.mrb[0].mxu0
        %v4697 = vpop.f32.mrb[0].mxu0
        %v4698 = vadd.f32 0.0, %v4697
        %v4699 = vpop.f32.mrb[0].mxu0
        %4700 = vmatprep.mubr.bf16.mxu0 0
        %4701 = vmatmul.mubr.bf16.gmra.mrb[0].mxu0 %v1713
        %v4702 = vpop.f32.mrb[0].mxu0
        %v4703 = vadd.f32 0.0, %v4702
        %v4704 = vpop.f32.mrb[0].mxu0
        %v4705 = vpop.f32.mrb[0].mxu0
        %v4706 = vadd.f32 0.0, %v4705
        %v4707 = vpop.f32.mrb[0].mxu0
        %4708 = vmatprep.mubr.bf16.mxu0 0
        %4709 = vmatmul.mubr.bf16.gmra.mrb[0].mxu0 %v1716
        %v4710 = vpop.f32.mrb[0].mxu0
        %v4711 = vadd.f32 0.0, %v4710
        %v4712 = vpop.f32.mrb[0].mxu0
        %v4713 = vpop.f32.mrb[0].mxu0
        %v4714 = vadd.f32 0.0, %v4713
        %v4715 = vpop.f32.mrb[0].mxu0
        %4716 = vmatprep.mubr.bf16.mxu0 0
        %4717 = vmatmul.mubr.bf16.gmra.mrb[0].mxu0 %v1719
        %v4718 = vpop.f32.mrb[0].mxu0
        %v4719 = vadd.f32 0.0, %v4718
        %v4720 = vpop.f32.mrb[0].mxu0
        %v4721 = vpop.f32.mrb[0].mxu0
        %v4722 = vadd.f32 0.0, %v4721
        %v4723 = vpop.f32.mrb[0].mxu0
        %4724 = vmatprep.mubr.bf16.mxu0 0
        %4725 = vmatmul.mubr.bf16.gmra.mrb[0].mxu0 %v1722
        %v4726 = vpop.f32.mrb[0].mxu0
        %v4727 = vadd.f32 0.0, %v4726
        %v4728 = vpop.f32.mrb[0].mxu0
        %v4729 = vpop.f32.mrb[0].mxu0
        %v4730 = vadd.f32 0.0, %v4729
        %v4731 = vpop.f32.mrb[0].mxu0
        %4732 = vmatprep.mubr.bf16.mxu0 0
        %4733 = vmatmul.mubr.bf16.gmra.mrb[0].mxu0 %v1725
        %v4734 = vpop.f32.mrb[0].mxu0
        %v4735 = vadd.f32 0.0, %v4734
        %v4736 = vpop.f32.mrb[0].mxu0
        %v4737 = vpop.f32.mrb[0].mxu0
        %v4738 = vadd.f32 0.0, %v4737
        %v4739 = vpop.f32.mrb[0].mxu0
        %4740 = vmatprep.mubr.bf16.mxu0 0
        %4741 = vmatmul.mubr.bf16.gmra.mrb[0].mxu0 %v1728
        %v4742 = vpop.f32.mrb[0].mxu0
        %v4743 = vadd.f32 0.0, %v4742
        %v4744 = vpop.f32.mrb[0].mxu0
        %v4745 = vpop.f32.mrb[0].mxu0
        %v4746 = vadd.f32 0.0, %v4745
        %v4747 = vpop.f32.mrb[0].mxu0
        %4748 = vmatprep.mubr.bf16.mxu0 0
        %4749 = vmatmul.mubr.bf16.gmra.mrb[0].mxu0 %v4655
        %v4750 = vpop.f32.mrb[0].mxu0
        %v4751 = vadd.f32 0.0, %v4750
        %v4752 = vpop.f32.mrb[0].mxu0
        %v4753 = vpop.f32.mrb[0].mxu0
        %v4754 = vadd.f32 0.0, %v4753
        %v4755 = vpop.f32.mrb[0].mxu0
        %4756 = vdwg.mxu0
        %v4757 = vadd.f32 %v4625, %v4695
        %v4758 = vadd.f32 %v4626, %v4698
        %v4759 = vadd.f32 %v4627, %v4703
        %v4760 = vadd.f32 %v4628, %v4706
        %v4761 = vadd.f32 %v4629, %v4711
        %v4762 = vadd.f32 %v4630, %v4714
        %v4763 = vadd.f32 %v4631, %v4719
        %v4764 = vadd.f32 %v4632, %v4722
        %v4765 = vadd.f32 %v4633, %v4727
        %v4766 = vadd.f32 %v4634, %v4730
        %v4767 = vadd.f32 %v4635, %v4735
        %v4768 = vadd.f32 %v4636, %v4738
        %v4769 = vadd.f32 %v4637, %v4743
        %v4770 = vadd.f32 %v4638, %v4746
        %v4771 = vadd.f32 %v4639, %v4751
        %v4772 = vadd.f32 %v4640, %v4754
        %v4773 = vrot.slane %v4214, 5
        %v4774 = vrot.slane %v4217, 6
        %v4775 = vor.u32 %v4773, %v4774
        %v4776 = vrot.slane %v4775, 4
        %v4777 = vrot.slane %v4227, 5
        %v4778 = vrot.slane %v4223, 6
        %v4779 = vor.u32 %v4777, %v4778
        %v4780 = vsel %vm1848, %v4776, %v4779
        %v4781 = vrot.slane %v4779, 4
        %v4782 = vshrl.u32 %v228, 16
        %v4784 = vrot.slane %v4782, 5
        %v4785 = vrot.slane %v4233, 6
        %v4786 = vor.u32 %v4784, %v4785
        %v4787 = vsel %vm1848, %v4781, %v4786
        %s4788 = scalar_lea.vmem %s1, 40
        %v4789 = vld [vmem:[%s4788] sm:$0x3]
        %v4790 = vunpack.c.l.b16 %v4780
        %v4791 = vunpack.c.l.b16 %v4787
        %v4792 = vpack.c.b16 %v4791, %v4790
        %v4794 = vsel %vm371, %v4792, 0
        %v4797 = vand.u32 %v4789, %v399
        %4799 = vmatprep.subr.bf16.mxu0 0
        %4800 = vmatpush1.bf16.msra.mxu0 %v4797
        %4801 = vmatprep.subr.bf16.mxu0 0
        %4802 = vmatpush1.bf16.msra.mxu0 0
        %4803 = vmatprep.subr.bf16.mxu0 0
        %4804 = vmatpush1.bf16.msra.mxu0 0
        %4805 = vmatprep.subr.bf16.mxu0 0
        %4806 = vmatpush1.bf16.msra.mxu0 0
        %4807 = vmatprep.subr.bf16.mxu0 0
        %4808 = vmatpush1.bf16.msra.mxu0 0
        %4809 = vmatprep.subr.bf16.mxu0 0
        %4810 = vmatpush1.bf16.msra.mxu0 0
        %4811 = vmatprep.subr.bf16.mxu0 0
        %4812 = vmatpush1.bf16.msra.mxu0 0
        %4813 = vmatprep.subr.bf16.mxu0 0
        %4814 = vmatpush1.bf16.msra.mxu0 0
        %4815 = vmatprep.subr.bf16.mxu0 0
        %4816 = vmatpush1.bf16.msra.mxu0 0
        %4817 = vmatprep.subr.bf16.mxu0 0
        %4818 = vmatpush1.bf16.msra.mxu0 0
        %4819 = vmatprep.subr.bf16.mxu0 0
        %4820 = vmatpush1.bf16.msra.mxu0 0
        %4821 = vmatprep.subr.bf16.mxu0 0
        %4822 = vmatpush1.bf16.msra.mxu0 0
        %4823 = vmatprep.subr.bf16.mxu0 0
        %4824 = vmatpush1.bf16.msra.mxu0 0
        %4825 = vmatprep.subr.bf16.mxu0 0
        %4826 = vmatpush1.bf16.msra.mxu0 0
        %4827 = vmatprep.subr.bf16.mxu0 0
        %4828 = vmatpush1.bf16.msra.mxu0 0
        %4829 = vmatprep.subr.bf16.mxu0 0
        %4830 = vmatpush1.bf16.msra.mxu0 0
        %4831 = vmatprep.mubr.bf16.mxu0 0
        %4832 = vmatmul.mubr.bf16.gmra.mrb[0].mxu0 %v1999
        %v4833 = vpop.f32.mrb[0].mxu0
        %v4834 = vadd.f32 0.0, %v4833
        %v4835 = vpop.f32.mrb[0].mxu0
        %v4836 = vpop.f32.mrb[0].mxu0
        %v4837 = vadd.f32 0.0, %v4836
        %v4838 = vpop.f32.mrb[0].mxu0
        %4839 = vmatprep.mubr.bf16.mxu0 0
        %4840 = vmatmul.mubr.bf16.gmra.mrb[0].mxu0 %v2002
        %v4841 = vpop.f32.mrb[0].mxu0
        %v4842 = vadd.f32 0.0, %v4841
        %v4843 = vpop.f32.mrb[0].mxu0
        %v4844 = vpop.f32.mrb[0].mxu0
        %v4845 = vadd.f32 0.0, %v4844
        %v4846 = vpop.f32.mrb[0].mxu0
        %4847 = vmatprep.mubr.bf16.mxu0 0
        %4848 = vmatmul.mubr.bf16.gmra.mrb[0].mxu0 %v2005
        %v4849 = vpop.f32.mrb[0].mxu0
        %v4850 = vadd.f32 0.0, %v4849
        %v4851 = vpop.f32.mrb[0].mxu0
        %v4852 = vpop.f32.mrb[0].mxu0
        %v4853 = vadd.f32 0.0, %v4852
        %v4854 = vpop.f32.mrb[0].mxu0
        %4855 = vmatprep.mubr.bf16.mxu0 0
        %4856 = vmatmul.mubr.bf16.gmra.mrb[0].mxu0 %v2008
        %v4857 = vpop.f32.mrb[0].mxu0
        %v4858 = vadd.f32 0.0, %v4857
        %v4859 = vpop.f32.mrb[0].mxu0
        %v4860 = vpop.f32.mrb[0].mxu0
        %v4861 = vadd.f32 0.0, %v4860
        %v4862 = vpop.f32.mrb[0].mxu0
        %4863 = vmatprep.mubr.bf16.mxu0 0
        %4864 = vmatmul.mubr.bf16.gmra.mrb[0].mxu0 %v2011
        %v4865 = vpop.f32.mrb[0].mxu0
        %v4866 = vadd.f32 0.0, %v4865
        %v4867 = vpop.f32.mrb[0].mxu0
        %v4868 = vpop.f32.mrb[0].mxu0
        %v4869 = vadd.f32 0.0, %v4868
        %v4870 = vpop.f32.mrb[0].mxu0
        %4871 = vmatprep.mubr.bf16.mxu0 0
        %4872 = vmatmul.mubr.bf16.gmra.mrb[0].mxu0 %v2014
        %v4873 = vpop.f32.mrb[0].mxu0
        %v4874 = vadd.f32 0.0, %v4873
        %v4875 = vpop.f32.mrb[0].mxu0
        %v4876 = vpop.f32.mrb[0].mxu0
        %v4877 = vadd.f32 0.0, %v4876
        %v4878 = vpop.f32.mrb[0].mxu0
        %4879 = vmatprep.mubr.bf16.mxu0 0
        %4880 = vmatmul.mubr.bf16.gmra.mrb[0].mxu0 %v2017
        %v4881 = vpop.f32.mrb[0].mxu0
        %v4882 = vadd.f32 0.0, %v4881
        %v4883 = vpop.f32.mrb[0].mxu0
        %v4884 = vpop.f32.mrb[0].mxu0
        %v4885 = vadd.f32 0.0, %v4884
        %v4886 = vpop.f32.mrb[0].mxu0
        %4887 = vmatprep.mubr.bf16.mxu0 0
        %4888 = vmatmul.mubr.bf16.gmra.mrb[0].mxu0 %v4794
        %v4889 = vpop.f32.mrb[0].mxu0
        %v4890 = vadd.f32 0.0, %v4889
        %v4891 = vpop.f32.mrb[0].mxu0
        %v4892 = vpop.f32.mrb[0].mxu0
        %v4893 = vadd.f32 0.0, %v4892
        %v4894 = vpop.f32.mrb[0].mxu0
        %4895 = vdwg.mxu0
        %v4896 = vadd.f32 %v4757, %v4834
        %v4897 = vadd.f32 %v4758, %v4837
        %v4898 = vadd.f32 %v4759, %v4842
        %v4899 = vadd.f32 %v4760, %v4845
        %v4900 = vadd.f32 %v4761, %v4850
        %v4901 = vadd.f32 %v4762, %v4853
        %v4902 = vadd.f32 %v4763, %v4858
        %v4903 = vadd.f32 %v4764, %v4861
        %v4904 = vadd.f32 %v4765, %v4866
        %v4905 = vadd.f32 %v4766, %v4869
        %v4906 = vadd.f32 %v4767, %v4874
        %v4907 = vadd.f32 %v4768, %v4877
        %v4908 = vadd.f32 %v4769, %v4882
        %v4909 = vadd.f32 %v4770, %v4885
        %v4910 = vadd.f32 %v4771, %v4890
        %v4911 = vadd.f32 %v4772, %v4893
        %s4912 = scalar_lea.vmem %s1, 42
        %v4913 = vld [vmem:[%s4912] sm:$0x3]
        %v4916 = vunpack.c.l.b16 %v292
        %v4917 = vunpack.c.l.b16 %v293
        %v4918 = vpack.c.b16 %v4917, %v4916
        %v4920 = vsel %vm371, %v4918, 0
        %v4923 = vand.u32 %v4913, %v399
        %4925 = vmatprep.subr.bf16.mxu0 0
        %4926 = vmatpush1.bf16.msra.mxu0 %v4923
        %4927 = vmatprep.subr.bf16.mxu0 0
        %4928 = vmatpush1.bf16.msra.mxu0 0
        %4929 = vmatprep.subr.bf16.mxu0 0
        %4930 = vmatpush1.bf16.msra.mxu0 0
        %4931 = vmatprep.subr.bf16.mxu0 0
        %4932 = vmatpush1.bf16.msra.mxu0 0
        %4933 = vmatprep.subr.bf16.mxu0 0
        %4934 = vmatpush1.bf16.msra.mxu0 0
        %4935 = vmatprep.subr.bf16.mxu0 0
        %4936 = vmatpush1.bf16.msra.mxu0 0
        %4937 = vmatprep.subr.bf16.mxu0 0
        %4938 = vmatpush1.bf16.msra.mxu0 0
        %4939 = vmatprep.subr.bf16.mxu0 0
        %4940 = vmatpush1.bf16.msra.mxu0 0
        %4941 = vmatprep.subr.bf16.mxu0 0
        %4942 = vmatpush1.bf16.msra.mxu0 0
        %4943 = vmatprep.subr.bf16.mxu0 0
        %4944 = vmatpush1.bf16.msra.mxu0 0
        %4945 = vmatprep.subr.bf16.mxu0 0
        %4946 = vmatpush1.bf16.msra.mxu0 0
        %4947 = vmatprep.subr.bf16.mxu0 0
        %4948 = vmatpush1.bf16.msra.mxu0 0
        %4949 = vmatprep.subr.bf16.mxu0 0
        %4950 = vmatpush1.bf16.msra.mxu0 0
        %4951 = vmatprep.subr.bf16.mxu0 0
        %4952 = vmatpush1.bf16.msra.mxu0 0
        %4953 = vmatprep.subr.bf16.mxu0 0
        %4954 = vmatpush1.bf16.msra.mxu0 0
        %4955 = vmatprep.subr.bf16.mxu0 0
        %4956 = vmatpush1.bf16.msra.mxu0 0
        %4957 = vmatprep.mubr.bf16.mxu0 0
        %4958 = vmatmul.mubr.bf16.gmra.mrb[0].mxu0 %v2181
        %v4959 = vpop.f32.mrb[0].mxu0
        %v4960 = vadd.f32 0.0, %v4959
        %v4961 = vpop.f32.mrb[0].mxu0
        %v4962 = vpop.f32.mrb[0].mxu0
        %v4963 = vadd.f32 0.0, %v4962
        %v4964 = vpop.f32.mrb[0].mxu0
        %4965 = vmatprep.mubr.bf16.mxu0 0
        %4966 = vmatmul.mubr.bf16.gmra.mrb[0].mxu0 %v2184
        %v4967 = vpop.f32.mrb[0].mxu0
        %v4968 = vadd.f32 0.0, %v4967
        %v4969 = vpop.f32.mrb[0].mxu0
        %v4970 = vpop.f32.mrb[0].mxu0
        %v4971 = vadd.f32 0.0, %v4970
        %v4972 = vpop.f32.mrb[0].mxu0
        %4973 = vmatprep.mubr.bf16.mxu0 0
        %4974 = vmatmul.mubr.bf16.gmra.mrb[0].mxu0 %v2187
        %v4975 = vpop.f32.mrb[0].mxu0
        %v4976 = vadd.f32 0.0, %v4975
        %v4977 = vpop.f32.mrb[0].mxu0
        %v4978 = vpop.f32.mrb[0].mxu0
        %v4979 = vadd.f32 0.0, %v4978
        %v4980 = vpop.f32.mrb[0].mxu0
        %4981 = vmatprep.mubr.bf16.mxu0 0
        %4982 = vmatmul.mubr.bf16.gmra.mrb[0].mxu0 %v2190
        %v4983 = vpop.f32.mrb[0].mxu0
        %v4984 = vadd.f32 0.0, %v4983
        %v4985 = vpop.f32.mrb[0].mxu0
        %v4986 = vpop.f32.mrb[0].mxu0
        %v4987 = vadd.f32 0.0, %v4986
        %v4988 = vpop.f32.mrb[0].mxu0
        %4989 = vmatprep.mubr.bf16.mxu0 0
        %4990 = vmatmul.mubr.bf16.gmra.mrb[0].mxu0 %v2193
        %v4991 = vpop.f32.mrb[0].mxu0
        %v4992 = vadd.f32 0.0, %v4991
        %v4993 = vpop.f32.mrb[0].mxu0
        %v4994 = vpop.f32.mrb[0].mxu0
        %v4995 = vadd.f32 0.0, %v4994
        %v4996 = vpop.f32.mrb[0].mxu0
        %4997 = vmatprep.mubr.bf16.mxu0 0
        %4998 = vmatmul.mubr.bf16.gmra.mrb[0].mxu0 %v2196
        %v4999 = vpop.f32.mrb[0].mxu0
        %v5000 = vadd.f32 0.0, %v4999
        %v5001 = vpop.f32.mrb[0].mxu0
        %v5002 = vpop.f32.mrb[0].mxu0
        %v5003 = vadd.f32 0.0, %v5002
        %v5004 = vpop.f32.mrb[0].mxu0
        %5005 = vmatprep.mubr.bf16.mxu0 0
        %5006 = vmatmul.mubr.bf16.gmra.mrb[0].mxu0 %v2199
        %v5007 = vpop.f32.mrb[0].mxu0
        %v5008 = vadd.f32 0.0, %v5007
        %v5009 = vpop.f32.mrb[0].mxu0
        %v5010 = vpop.f32.mrb[0].mxu0
        %v5011 = vadd.f32 0.0, %v5010
        %v5012 = vpop.f32.mrb[0].mxu0
        %5013 = vmatprep.mubr.bf16.mxu0 0
        %5014 = vmatmul.mubr.bf16.gmra.mrb[0].mxu0 %v4920
        %v5015 = vpop.f32.mrb[0].mxu0
        %v5016 = vadd.f32 0.0, %v5015
        %v5017 = vpop.f32.mrb[0].mxu0
        %v5018 = vpop.f32.mrb[0].mxu0
        %v5019 = vadd.f32 0.0, %v5018
        %v5020 = vpop.f32.mrb[0].mxu0
        %5021 = vdwg.mxu0
        %v5022 = vadd.f32 %v4896, %v4960
        %v5023 = vadd.f32 %v4897, %v4963
        %v5024 = vadd.f32 %v4898, %v4968
        %v5025 = vadd.f32 %v4899, %v4971
        %v5026 = vadd.f32 %v4900, %v4976
        %v5027 = vadd.f32 %v4901, %v4979
        %v5028 = vadd.f32 %v4902, %v4984
        %v5029 = vadd.f32 %v4903, %v4987
        %v5030 = vadd.f32 %v4904, %v4992
        %v5031 = vadd.f32 %v4905, %v4995
        %v5032 = vadd.f32 %v4906, %v5000
        %v5033 = vadd.f32 %v4907, %v5003
        %v5034 = vadd.f32 %v4908, %v5008
        %v5035 = vadd.f32 %v4909, %v5011
        %v5036 = vadd.f32 %v4910, %v5016
        %v5037 = vadd.f32 %v4911, %v5019
        %s5038 = scalar_lea.vmem %s1, 44
        %v5039 = vld [vmem:[%s5038] sm:$0x3]
        %v5042 = vunpack.c.l.b16 %v322
        %v5043 = vunpack.c.l.b16 %v323
        %v5044 = vpack.c.b16 %v5043, %v5042
        %v5046 = vsel %vm371, %v5044, 0
        %v5049 = vand.u32 %v5039, %v399
        %5051 = vmatprep.subr.bf16.mxu0 0
        %5052 = vmatpush1.bf16.msra.mxu0 %v5049
        %5053 = vmatprep.subr.bf16.mxu0 0
        %5054 = vmatpush1.bf16.msra.mxu0 0
        %5055 = vmatprep.subr.bf16.mxu0 0
        %5056 = vmatpush1.bf16.msra.mxu0 0
        %5057 = vmatprep.subr.bf16.mxu0 0
        %5058 = vmatpush1.bf16.msra.mxu0 0
        %5059 = vmatprep.subr.bf16.mxu0 0
        %5060 = vmatpush1.bf16.msra.mxu0 0
        %5061 = vmatprep.subr.bf16.mxu0 0
        %5062 = vmatpush1.bf16.msra.mxu0 0
        %5063 = vmatprep.subr.bf16.mxu0 0
        %5064 = vmatpush1.bf16.msra.mxu0 0
        %5065 = vmatprep.subr.bf16.mxu0 0
        %5066 = vmatpush1.bf16.msra.mxu0 0
        %5067 = vmatprep.subr.bf16.mxu0 0
        %5068 = vmatpush1.bf16.msra.mxu0 0
        %5069 = vmatprep.subr.bf16.mxu0 0
        %5070 = vmatpush1.bf16.msra.mxu0 0
        %5071 = vmatprep.subr.bf16.mxu0 0
        %5072 = vmatpush1.bf16.msra.mxu0 0
        %5073 = vmatprep.subr.bf16.mxu0 0
        %5074 = vmatpush1.bf16.msra.mxu0 0
        %5075 = vmatprep.subr.bf16.mxu0 0
        %5076 = vmatpush1.bf16.msra.mxu0 0
        %5077 = vmatprep.subr.bf16.mxu0 0
        %5078 = vmatpush1.bf16.msra.mxu0 0
        %5079 = vmatprep.subr.bf16.mxu0 0
        %5080 = vmatpush1.bf16.msra.mxu0 0
        %5081 = vmatprep.subr.bf16.mxu0 0
        %5082 = vmatpush1.bf16.msra.mxu0 0
        %5083 = vmatprep.mubr.bf16.mxu0 0
        %5084 = vmatmul.mubr.bf16.gmra.mrb[0].mxu0 %v2363
        %v5085 = vpop.f32.mrb[0].mxu0
        %v5086 = vadd.f32 0.0, %v5085
        %v5087 = vpop.f32.mrb[0].mxu0
        %v5088 = vpop.f32.mrb[0].mxu0
        %v5089 = vadd.f32 0.0, %v5088
        %v5090 = vpop.f32.mrb[0].mxu0
        %5091 = vmatprep.mubr.bf16.mxu0 0
        %5092 = vmatmul.mubr.bf16.gmra.mrb[0].mxu0 %v2366
        %v5093 = vpop.f32.mrb[0].mxu0
        %v5094 = vadd.f32 0.0, %v5093
        %v5095 = vpop.f32.mrb[0].mxu0
        %v5096 = vpop.f32.mrb[0].mxu0
        %v5097 = vadd.f32 0.0, %v5096
        %v5098 = vpop.f32.mrb[0].mxu0
        %5099 = vmatprep.mubr.bf16.mxu0 0
        %5100 = vmatmul.mubr.bf16.gmra.mrb[0].mxu0 %v2369
        %v5101 = vpop.f32.mrb[0].mxu0
        %v5102 = vadd.f32 0.0, %v5101
        %v5103 = vpop.f32.mrb[0].mxu0
        %v5104 = vpop.f32.mrb[0].mxu0
        %v5105 = vadd.f32 0.0, %v5104
        %v5106 = vpop.f32.mrb[0].mxu0
        %5107 = vmatprep.mubr.bf16.mxu0 0
        %5108 = vmatmul.mubr.bf16.gmra.mrb[0].mxu0 %v2372
        %v5109 = vpop.f32.mrb[0].mxu0
        %v5110 = vadd.f32 0.0, %v5109
        %v5111 = vpop.f32.mrb[0].mxu0
        %v5112 = vpop.f32.mrb[0].mxu0
        %v5113 = vadd.f32 0.0, %v5112
        %v5114 = vpop.f32.mrb[0].mxu0
        %5115 = vmatprep.mubr.bf16.mxu0 0
        %5116 = vmatmul.mubr.bf16.gmra.mrb[0].mxu0 %v2375
        %v5117 = vpop.f32.mrb[0].mxu0
        %v5118 = vadd.f32 0.0, %v5117
        %v5119 = vpop.f32.mrb[0].mxu0
        %v5120 = vpop.f32.mrb[0].mxu0
        %v5121 = vadd.f32 0.0, %v5120
        %v5122 = vpop.f32.mrb[0].mxu0
        %5123 = vmatprep.mubr.bf16.mxu0 0
        %5124 = vmatmul.mubr.bf16.gmra.mrb[0].mxu0 %v2378
        %v5125 = vpop.f32.mrb[0].mxu0
        %v5126 = vadd.f32 0.0, %v5125
        %v5127 = vpop.f32.mrb[0].mxu0
        %v5128 = vpop.f32.mrb[0].mxu0
        %v5129 = vadd.f32 0.0, %v5128
        %v5130 = vpop.f32.mrb[0].mxu0
        %5131 = vmatprep.mubr.bf16.mxu0 0
        %5132 = vmatmul.mubr.bf16.gmra.mrb[0].mxu0 %v2381
        %v5133 = vpop.f32.mrb[0].mxu0
        %v5134 = vadd.f32 0.0, %v5133
        %v5135 = vpop.f32.mrb[0].mxu0
        %v5136 = vpop.f32.mrb[0].mxu0
        %v5137 = vadd.f32 0.0, %v5136
        %v5138 = vpop.f32.mrb[0].mxu0
        %5139 = vmatprep.mubr.bf16.mxu0 0
        %5140 = vmatmul.mubr.bf16.gmra.mrb[0].mxu0 %v5046
        %v5141 = vpop.f32.mrb[0].mxu0
        %v5142 = vadd.f32 0.0, %v5141
        %v5143 = vpop.f32.mrb[0].mxu0
        %v5144 = vpop.f32.mrb[0].mxu0
        %v5145 = vadd.f32 0.0, %v5144
        %v5146 = vpop.f32.mrb[0].mxu0
        %5147 = vdwg.mxu0
        %v5148 = vadd.f32 %v5022, %v5086
        %v5149 = vadd.f32 %v5023, %v5089
        %v5150 = vadd.f32 %v5024, %v5094
        %v5151 = vadd.f32 %v5025, %v5097
        %v5152 = vadd.f32 %v5026, %v5102
        %v5153 = vadd.f32 %v5027, %v5105
        %v5154 = vadd.f32 %v5028, %v5110
        %v5155 = vadd.f32 %v5029, %v5113
        %v5156 = vadd.f32 %v5030, %v5118
        %v5157 = vadd.f32 %v5031, %v5121
        %v5158 = vadd.f32 %v5032, %v5126
        %v5159 = vadd.f32 %v5033, %v5129
        %v5160 = vadd.f32 %v5034, %v5134
        %v5161 = vadd.f32 %v5035, %v5137
        %v5162 = vadd.f32 %v5036, %v5142
        %v5163 = vadd.f32 %v5037, %v5145
        %v5165 = vshrl.u32 %v292, 16
        %v5167 = vrot.slane %v5165, 4
        %v5168 = vshll.u32 %v292, 16
        %v5170 = vrot.slane %v5168, 5
        %v5171 = vor.u32 %v5167, %v5170
        %v5172 = vrot.slane %v5171, 4
        %v5174 = vshll.u32 %v293, 16
        %v5176 = vrot.slane %v5174, 5
        %v5177 = vsel %vm666, %v5172, %v5176
        %v5178 = vshrl.u32 %v293, 16
        %v5180 = vrot.slane %v5178, 4
        %v5181 = vor.u32 %v5180, %v5176
        %v5182 = vrot.slane %v5181, 4
        %v5184 = vshll.u32 %v294, 16
        %v5186 = vrot.slane %v5184, 5
        %v5187 = vsel %vm666, %v5182, %v5186
        %s5188 = scalar_lea.vmem %s1, 46
        %v5189 = vld [vmem:[%s5188] sm:$0x3]
        %v5190 = vunpack.c.l.b16 %v5177
        %v5191 = vunpack.c.l.b16 %v5187
        %v5192 = vpack.c.b16 %v5191, %v5190
        %v5194 = vsel %vm371, %v5192, 0
        %v5197 = vand.u32 %v5189, %v399
        %5199 = vmatprep.subr.bf16.mxu0 0
        %5200 = vmatpush1.bf16.msra.mxu0 %v5197
        %5201 = vmatprep.subr.bf16.mxu0 0
        %5202 = vmatpush1.bf16.msra.mxu0 0
        %5203 = vmatprep.subr.bf16.mxu0 0
        %5204 = vmatpush1.bf16.msra.mxu0 0
        %5205 = vmatprep.subr.bf16.mxu0 0
        %5206 = vmatpush1.bf16.msra.mxu0 0
        %5207 = vmatprep.subr.bf16.mxu0 0
        %5208 = vmatpush1.bf16.msra.mxu0 0
        %5209 = vmatprep.subr.bf16.mxu0 0
        %5210 = vmatpush1.bf16.msra.mxu0 0
        %5211 = vmatprep.subr.bf16.mxu0 0
        %5212 = vmatpush1.bf16.msra.mxu0 0
        %5213 = vmatprep.subr.bf16.mxu0 0
        %5214 = vmatpush1.bf16.msra.mxu0 0
        %5215 = vmatprep.subr.bf16.mxu0 0
        %5216 = vmatpush1.bf16.msra.mxu0 0
        %5217 = vmatprep.subr.bf16.mxu0 0
        %5218 = vmatpush1.bf16.msra.mxu0 0
        %5219 = vmatprep.subr.bf16.mxu0 0
        %5220 = vmatpush1.bf16.msra.mxu0 0
        %5221 = vmatprep.subr.bf16.mxu0 0
        %5222 = vmatpush1.bf16.msra.mxu0 0
        %5223 = vmatprep.subr.bf16.mxu0 0
        %5224 = vmatpush1.bf16.msra.mxu0 0
        %5225 = vmatprep.subr.bf16.mxu0 0
        %5226 = vmatpush1.bf16.msra.mxu0 0
        %5227 = vmatprep.subr.bf16.mxu0 0
        %5228 = vmatpush1.bf16.msra.mxu0 0
        %5229 = vmatprep.subr.bf16.mxu0 0
        %5230 = vmatpush1.bf16.msra.mxu0 0
        %5231 = vmatprep.mubr.bf16.mxu0 0
        %5232 = vmatmul.mubr.bf16.gmra.mrb[0].mxu0 %v2721
        %v5233 = vpop.f32.mrb[0].mxu0
        %v5234 = vadd.f32 0.0, %v5233
        %v5235 = vpop.f32.mrb[0].mxu0
        %v5236 = vpop.f32.mrb[0].mxu0
        %v5237 = vadd.f32 0.0, %v5236
        %v5238 = vpop.f32.mrb[0].mxu0
        %5239 = vmatprep.mubr.bf16.mxu0 0
        %5240 = vmatmul.mubr.bf16.gmra.mrb[0].mxu0 %v2724
        %v5241 = vpop.f32.mrb[0].mxu0
        %v5242 = vadd.f32 0.0, %v5241
        %v5243 = vpop.f32.mrb[0].mxu0
        %v5244 = vpop.f32.mrb[0].mxu0
        %v5245 = vadd.f32 0.0, %v5244
        %v5246 = vpop.f32.mrb[0].mxu0
        %5247 = vmatprep.mubr.bf16.mxu0 0
        %5248 = vmatmul.mubr.bf16.gmra.mrb[0].mxu0 %v2727
        %v5249 = vpop.f32.mrb[0].mxu0
        %v5250 = vadd.f32 0.0, %v5249
        %v5251 = vpop.f32.mrb[0].mxu0
        %v5252 = vpop.f32.mrb[0].mxu0
        %v5253 = vadd.f32 0.0, %v5252
        %v5254 = vpop.f32.mrb[0].mxu0
        %5255 = vmatprep.mubr.bf16.mxu0 0
        %5256 = vmatmul.mubr.bf16.gmra.mrb[0].mxu0 %v2730
        %v5257 = vpop.f32.mrb[0].mxu0
        %v5258 = vadd.f32 0.0, %v5257
        %v5259 = vpop.f32.mrb[0].mxu0
        %v5260 = vpop.f32.mrb[0].mxu0
        %v5261 = vadd.f32 0.0, %v5260
        %v5262 = vpop.f32.mrb[0].mxu0
        %5263 = vmatprep.mubr.bf16.mxu0 0
        %5264 = vmatmul.mubr.bf16.gmra.mrb[0].mxu0 %v2733
        %v5265 = vpop.f32.mrb[0].mxu0
        %v5266 = vadd.f32 0.0, %v5265
        %v5267 = vpop.f32.mrb[0].mxu0
        %v5268 = vpop.f32.mrb[0].mxu0
        %v5269 = vadd.f32 0.0, %v5268
        %v5270 = vpop.f32.mrb[0].mxu0
        %5271 = vmatprep.mubr.bf16.mxu0 0
        %5272 = vmatmul.mubr.bf16.gmra.mrb[0].mxu0 %v2736
        %v5273 = vpop.f32.mrb[0].mxu0
        %v5274 = vadd.f32 0.0, %v5273
        %v5275 = vpop.f32.mrb[0].mxu0
        %v5276 = vpop.f32.mrb[0].mxu0
        %v5277 = vadd.f32 0.0, %v5276
        %v5278 = vpop.f32.mrb[0].mxu0
        %5279 = vmatprep.mubr.bf16.mxu0 0
        %5280 = vmatmul.mubr.bf16.gmra.mrb[0].mxu0 %v2739
        %v5281 = vpop.f32.mrb[0].mxu0
        %v5282 = vadd.f32 0.0, %v5281
        %v5283 = vpop.f32.mrb[0].mxu0
        %v5284 = vpop.f32.mrb[0].mxu0
        %v5285 = vadd.f32 0.0, %v5284
        %v5286 = vpop.f32.mrb[0].mxu0
        %5287 = vmatprep.mubr.bf16.mxu0 0
        %5288 = vmatmul.mubr.bf16.gmra.mrb[0].mxu0 %v5194
        %v5289 = vpop.f32.mrb[0].mxu0
        %v5290 = vadd.f32 0.0, %v5289
        %v5291 = vpop.f32.mrb[0].mxu0
        %v5292 = vpop.f32.mrb[0].mxu0
        %v5293 = vadd.f32 0.0, %v5292
        %v5294 = vpop.f32.mrb[0].mxu0
        %5295 = vdwg.mxu0
        %v5296 = vadd.f32 %v5148, %v5234
        %v5297 = vadd.f32 %v5149, %v5237
        %v5298 = vadd.f32 %v5150, %v5242
        %v5299 = vadd.f32 %v5151, %v5245
        %v5300 = vadd.f32 %v5152, %v5250
        %v5301 = vadd.f32 %v5153, %v5253
        %v5302 = vadd.f32 %v5154, %v5258
        %v5303 = vadd.f32 %v5155, %v5261
        %v5304 = vadd.f32 %v5156, %v5266
        %v5305 = vadd.f32 %v5157, %v5269
        %v5306 = vadd.f32 %v5158, %v5274
        %v5307 = vadd.f32 %v5159, %v5277
        %v5308 = vadd.f32 %v5160, %v5282
        %v5309 = vadd.f32 %v5161, %v5285
        %v5310 = vadd.f32 %v5162, %v5290
        %v5311 = vadd.f32 %v5163, %v5293
        %v5313 = vshrl.u32 %v322, 16
        %v5315 = vrot.slane %v5313, 4
        %v5316 = vshll.u32 %v322, 16
        %v5318 = vrot.slane %v5316, 5
        %v5319 = vor.u32 %v5315, %v5318
        %v5320 = vrot.slane %v5319, 4
        %v5322 = vshll.u32 %v323, 16
        %v5324 = vrot.slane %v5322, 5
        %v5325 = vsel %vm666, %v5320, %v5324
        %v5326 = vshrl.u32 %v323, 16
        %v5328 = vrot.slane %v5326, 4
        %v5329 = vor.u32 %v5328, %v5324
        %v5330 = vrot.slane %v5329, 4
        %v5332 = vshll.u32 %v324, 16
        %v5334 = vrot.slane %v5332, 5
        %v5335 = vsel %vm666, %v5330, %v5334
        %s5336 = scalar_lea.vmem %s1, 48
        %v5337 = vld [vmem:[%s5336] sm:$0x3]
        %v5338 = vunpack.c.l.b16 %v5325
        %v5339 = vunpack.c.l.b16 %v5335
        %v5340 = vpack.c.b16 %v5339, %v5338
        %v5342 = vsel %vm371, %v5340, 0
        %v5345 = vand.u32 %v5337, %v399
        %5347 = vmatprep.subr.bf16.mxu0 0
        %5348 = vmatpush1.bf16.msra.mxu0 %v5345
        %5349 = vmatprep.subr.bf16.mxu0 0
        %5350 = vmatpush1.bf16.msra.mxu0 0
        %5351 = vmatprep.subr.bf16.mxu0 0
        %5352 = vmatpush1.bf16.msra.mxu0 0
        %5353 = vmatprep.subr.bf16.mxu0 0
        %5354 = vmatpush1.bf16.msra.mxu0 0
        %5355 = vmatprep.subr.bf16.mxu0 0
        %5356 = vmatpush1.bf16.msra.mxu0 0
        %5357 = vmatprep.subr.bf16.mxu0 0
        %5358 = vmatpush1.bf16.msra.mxu0 0
        %5359 = vmatprep.subr.bf16.mxu0 0
        %5360 = vmatpush1.bf16.msra.mxu0 0
        %5361 = vmatprep.subr.bf16.mxu0 0
        %5362 = vmatpush1.bf16.msra.mxu0 0
        %5363 = vmatprep.subr.bf16.mxu0 0
        %5364 = vmatpush1.bf16.msra.mxu0 0
        %5365 = vmatprep.subr.bf16.mxu0 0
        %5366 = vmatpush1.bf16.msra.mxu0 0
        %5367 = vmatprep.subr.bf16.mxu0 0
        %5368 = vmatpush1.bf16.msra.mxu0 0
        %5369 = vmatprep.subr.bf16.mxu0 0
        %5370 = vmatpush1.bf16.msra.mxu0 0
        %5371 = vmatprep.subr.bf16.mxu0 0
        %5372 = vmatpush1.bf16.msra.mxu0 0
        %5373 = vmatprep.subr.bf16.mxu0 0
        %5374 = vmatpush1.bf16.msra.mxu0 0
        %5375 = vmatprep.subr.bf16.mxu0 0
        %5376 = vmatpush1.bf16.msra.mxu0 0
        %5377 = vmatprep.subr.bf16.mxu0 0
        %5378 = vmatpush1.bf16.msra.mxu0 0
        %5379 = vmatprep.mubr.bf16.mxu0 0
        %5380 = vmatmul.mubr.bf16.gmra.mrb[0].mxu0 %v3079
        %v5381 = vpop.f32.mrb[0].mxu0
        %v5382 = vadd.f32 0.0, %v5381
        %v5383 = vpop.f32.mrb[0].mxu0
        %v5384 = vpop.f32.mrb[0].mxu0
        %v5385 = vadd.f32 0.0, %v5384
        %v5386 = vpop.f32.mrb[0].mxu0
        %5387 = vmatprep.mubr.bf16.mxu0 0
        %5388 = vmatmul.mubr.bf16.gmra.mrb[0].mxu0 %v3082
        %v5389 = vpop.f32.mrb[0].mxu0
        %v5390 = vadd.f32 0.0, %v5389
        %v5391 = vpop.f32.mrb[0].mxu0
        %v5392 = vpop.f32.mrb[0].mxu0
        %v5393 = vadd.f32 0.0, %v5392
        %v5394 = vpop.f32.mrb[0].mxu0
        %5395 = vmatprep.mubr.bf16.mxu0 0
        %5396 = vmatmul.mubr.bf16.gmra.mrb[0].mxu0 %v3085
        %v5397 = vpop.f32.mrb[0].mxu0
        %v5398 = vadd.f32 0.0, %v5397
        %v5399 = vpop.f32.mrb[0].mxu0
        %v5400 = vpop.f32.mrb[0].mxu0
        %v5401 = vadd.f32 0.0, %v5400
        %v5402 = vpop.f32.mrb[0].mxu0
        %5403 = vmatprep.mubr.bf16.mxu0 0
        %5404 = vmatmul.mubr.bf16.gmra.mrb[0].mxu0 %v3088
        %v5405 = vpop.f32.mrb[0].mxu0
        %v5406 = vadd.f32 0.0, %v5405
        %v5407 = vpop.f32.mrb[0].mxu0
        %v5408 = vpop.f32.mrb[0].mxu0
        %v5409 = vadd.f32 0.0, %v5408
        %v5410 = vpop.f32.mrb[0].mxu0
        %5411 = vmatprep.mubr.bf16.mxu0 0
        %5412 = vmatmul.mubr.bf16.gmra.mrb[0].mxu0 %v3091
        %v5413 = vpop.f32.mrb[0].mxu0
        %v5414 = vadd.f32 0.0, %v5413
        %v5415 = vpop.f32.mrb[0].mxu0
        %v5416 = vpop.f32.mrb[0].mxu0
        %v5417 = vadd.f32 0.0, %v5416
        %v5418 = vpop.f32.mrb[0].mxu0
        %5419 = vmatprep.mubr.bf16.mxu0 0
        %5420 = vmatmul.mubr.bf16.gmra.mrb[0].mxu0 %v3094
        %v5421 = vpop.f32.mrb[0].mxu0
        %v5422 = vadd.f32 0.0, %v5421
        %v5423 = vpop.f32.mrb[0].mxu0
        %v5424 = vpop.f32.mrb[0].mxu0
        %v5425 = vadd.f32 0.0, %v5424
        %v5426 = vpop.f32.mrb[0].mxu0
        %5427 = vmatprep.mubr.bf16.mxu0 0
        %5428 = vmatmul.mubr.bf16.gmra.mrb[0].mxu0 %v3097
        %v5429 = vpop.f32.mrb[0].mxu0
        %v5430 = vadd.f32 0.0, %v5429
        %v5431 = vpop.f32.mrb[0].mxu0
        %v5432 = vpop.f32.mrb[0].mxu0
        %v5433 = vadd.f32 0.0, %v5432
        %v5434 = vpop.f32.mrb[0].mxu0
        %5435 = vmatprep.mubr.bf16.mxu0 0
        %5436 = vmatmul.mubr.bf16.gmra.mrb[0].mxu0 %v5342
        %v5437 = vpop.f32.mrb[0].mxu0
        %v5438 = vadd.f32 0.0, %v5437
        %v5439 = vpop.f32.mrb[0].mxu0
        %v5440 = vpop.f32.mrb[0].mxu0
        %v5441 = vadd.f32 0.0, %v5440
        %v5442 = vpop.f32.mrb[0].mxu0
        %5443 = vdwg.mxu0
        %v5444 = vadd.f32 %v5296, %v5382
        %v5445 = vadd.f32 %v5297, %v5385
        %v5446 = vadd.f32 %v5298, %v5390
        %v5447 = vadd.f32 %v5299, %v5393
        %v5448 = vadd.f32 %v5300, %v5398
        %v5449 = vadd.f32 %v5301, %v5401
        %v5450 = vadd.f32 %v5302, %v5406
        %v5451 = vadd.f32 %v5303, %v5409
        %v5452 = vadd.f32 %v5304, %v5414
        %v5453 = vadd.f32 %v5305, %v5417
        %v5454 = vadd.f32 %v5306, %v5422
        %v5455 = vadd.f32 %v5307, %v5425
        %v5456 = vadd.f32 %v5308, %v5430
        %v5457 = vadd.f32 %v5309, %v5433
        %v5458 = vadd.f32 %v5310, %v5438
        %v5459 = vadd.f32 %v5311, %v5441
        %v5461 = vrot.slane %v292, 5
        %v5462 = vrot.slane %v5461, 4
        %v5463 = vrot.slane %v293, 5
        %v5464 = vsel %vm1393, %v5462, %v5463
        %v5465 = vrot.slane %v5463, 4
        %v5466 = vrot.slane %v294, 5
        %v5467 = vsel %vm1393, %v5465, %v5466
        %s5468 = scalar_lea.vmem %s1, 50
        %v5469 = vld [vmem:[%s5468] sm:$0x3]
        %v5470 = vunpack.c.l.b16 %v5464
        %v5471 = vunpack.c.l.b16 %v5467
        %v5472 = vpack.c.b16 %v5471, %v5470
        %v5474 = vsel %vm371, %v5472, 0
        %v5477 = vand.u32 %v5469, %v399
        %5479 = vmatprep.subr.bf16.mxu0 0
        %5480 = vmatpush1.bf16.msra.mxu0 %v5477
        %5481 = vmatprep.subr.bf16.mxu0 0
        %5482 = vmatpush1.bf16.msra.mxu0 0
        %5483 = vmatprep.subr.bf16.mxu0 0
        %5484 = vmatpush1.bf16.msra.mxu0 0
        %5485 = vmatprep.subr.bf16.mxu0 0
        %5486 = vmatpush1.bf16.msra.mxu0 0
        %5487 = vmatprep.subr.bf16.mxu0 0
        %5488 = vmatpush1.bf16.msra.mxu0 0
        %5489 = vmatprep.subr.bf16.mxu0 0
        %5490 = vmatpush1.bf16.msra.mxu0 0
        %5491 = vmatprep.subr.bf16.mxu0 0
        %5492 = vmatpush1.bf16.msra.mxu0 0
        %5493 = vmatprep.subr.bf16.mxu0 0
        %5494 = vmatpush1.bf16.msra.mxu0 0
        %5495 = vmatprep.subr.bf16.mxu0 0
        %5496 = vmatpush1.bf16.msra.mxu0 0
        %5497 = vmatprep.subr.bf16.mxu0 0
        %5498 = vmatpush1.bf16.msra.mxu0 0
        %5499 = vmatprep.subr.bf16.mxu0 0
        %5500 = vmatpush1.bf16.msra.mxu0 0
        %5501 = vmatprep.subr.bf16.mxu0 0
        %5502 = vmatpush1.bf16.msra.mxu0 0
        %5503 = vmatprep.subr.bf16.mxu0 0
        %5504 = vmatpush1.bf16.msra.mxu0 0
        %5505 = vmatprep.subr.bf16.mxu0 0
        %5506 = vmatpush1.bf16.msra.mxu0 0
        %5507 = vmatprep.subr.bf16.mxu0 0
        %5508 = vmatpush1.bf16.msra.mxu0 0
        %5509 = vmatprep.subr.bf16.mxu0 0
        %5510 = vmatpush1.bf16.msra.mxu0 0
        %5511 = vmatprep.mubr.bf16.mxu0 0
        %5512 = vmatmul.mubr.bf16.gmra.mrb[0].mxu0 %v3309
        %v5513 = vpop.f32.mrb[0].mxu0
        %v5514 = vadd.f32 0.0, %v5513
        %v5515 = vpop.f32.mrb[0].mxu0
        %v5516 = vpop.f32.mrb[0].mxu0
        %v5517 = vadd.f32 0.0, %v5516
        %v5518 = vpop.f32.mrb[0].mxu0
        %5519 = vmatprep.mubr.bf16.mxu0 0
        %5520 = vmatmul.mubr.bf16.gmra.mrb[0].mxu0 %v3312
        %v5521 = vpop.f32.mrb[0].mxu0
        %v5522 = vadd.f32 0.0, %v5521
        %v5523 = vpop.f32.mrb[0].mxu0
        %v5524 = vpop.f32.mrb[0].mxu0
        %v5525 = vadd.f32 0.0, %v5524
        %v5526 = vpop.f32.mrb[0].mxu0
        %5527 = vmatprep.mubr.bf16.mxu0 0
        %5528 = vmatmul.mubr.bf16.gmra.mrb[0].mxu0 %v3315
        %v5529 = vpop.f32.mrb[0].mxu0
        %v5530 = vadd.f32 0.0, %v5529
        %v5531 = vpop.f32.mrb[0].mxu0
        %v5532 = vpop.f32.mrb[0].mxu0
        %v5533 = vadd.f32 0.0, %v5532
        %v5534 = vpop.f32.mrb[0].mxu0
        %5535 = vmatprep.mubr.bf16.mxu0 0
        %5536 = vmatmul.mubr.bf16.gmra.mrb[0].mxu0 %v3318
        %v5537 = vpop.f32.mrb[0].mxu0
        %v5538 = vadd.f32 0.0, %v5537
        %v5539 = vpop.f32.mrb[0].mxu0
        %v5540 = vpop.f32.mrb[0].mxu0
        %v5541 = vadd.f32 0.0, %v5540
        %v5542 = vpop.f32.mrb[0].mxu0
        %5543 = vmatprep.mubr.bf16.mxu0 0
        %5544 = vmatmul.mubr.bf16.gmra.mrb[0].mxu0 %v3321
        %v5545 = vpop.f32.mrb[0].mxu0
        %v5546 = vadd.f32 0.0, %v5545
        %v5547 = vpop.f32.mrb[0].mxu0
        %v5548 = vpop.f32.mrb[0].mxu0
        %v5549 = vadd.f32 0.0, %v5548
        %v5550 = vpop.f32.mrb[0].mxu0
        %5551 = vmatprep.mubr.bf16.mxu0 0
        %5552 = vmatmul.mubr.bf16.gmra.mrb[0].mxu0 %v3324
        %v5553 = vpop.f32.mrb[0].mxu0
        %v5554 = vadd.f32 0.0, %v5553
        %v5555 = vpop.f32.mrb[0].mxu0
        %v5556 = vpop.f32.mrb[0].mxu0
        %v5557 = vadd.f32 0.0, %v5556
        %v5558 = vpop.f32.mrb[0].mxu0
        %5559 = vmatprep.mubr.bf16.mxu0 0
        %5560 = vmatmul.mubr.bf16.gmra.mrb[0].mxu0 %v3327
        %v5561 = vpop.f32.mrb[0].mxu0
        %v5562 = vadd.f32 0.0, %v5561
        %v5563 = vpop.f32.mrb[0].mxu0
        %v5564 = vpop.f32.mrb[0].mxu0
        %v5565 = vadd.f32 0.0, %v5564
        %v5566 = vpop.f32.mrb[0].mxu0
        %5567 = vmatprep.mubr.bf16.mxu0 0
        %5568 = vmatmul.mubr.bf16.gmra.mrb[0].mxu0 %v5474
        %v5569 = vpop.f32.mrb[0].mxu0
        %v5570 = vadd.f32 0.0, %v5569
        %v5571 = vpop.f32.mrb[0].mxu0
        %v5572 = vpop.f32.mrb[0].mxu0
        %v5573 = vadd.f32 0.0, %v5572
        %v5574 = vpop.f32.mrb[0].mxu0
        %5575 = vdwg.mxu0
        %v5576 = vadd.f32 %v5444, %v5514
        %v5577 = vadd.f32 %v5445, %v5517
        %v5578 = vadd.f32 %v5446, %v5522
        %v5579 = vadd.f32 %v5447, %v5525
        %v5580 = vadd.f32 %v5448, %v5530
        %v5581 = vadd.f32 %v5449, %v5533
        %v5582 = vadd.f32 %v5450, %v5538
        %v5583 = vadd.f32 %v5451, %v5541
        %v5584 = vadd.f32 %v5452, %v5546
        %v5585 = vadd.f32 %v5453, %v5549
        %v5586 = vadd.f32 %v5454, %v5554
        %v5587 = vadd.f32 %v5455, %v5557
        %v5588 = vadd.f32 %v5456, %v5562
        %v5589 = vadd.f32 %v5457, %v5565
        %v5590 = vadd.f32 %v5458, %v5570
        %v5591 = vadd.f32 %v5459, %v5573
        %v5593 = vrot.slane %v322, 5
        %v5594 = vrot.slane %v5593, 4
        %v5595 = vrot.slane %v323, 5
        %v5596 = vsel %vm1393, %v5594, %v5595
        %v5597 = vrot.slane %v5595, 4
        %v5598 = vrot.slane %v324, 5
        %v5599 = vsel %vm1393, %v5597, %v5598
        %s5600 = scalar_lea.vmem %s1, 52
        %v5601 = vld [vmem:[%s5600] sm:$0x3]
        %v5602 = vunpack.c.l.b16 %v5596
        %v5603 = vunpack.c.l.b16 %v5599
        %v5604 = vpack.c.b16 %v5603, %v5602
        %v5606 = vsel %vm371, %v5604, 0
        %v5609 = vand.u32 %v5601, %v399
        %5611 = vmatprep.subr.bf16.mxu0 0
        %5612 = vmatpush1.bf16.msra.mxu0 %v5609
        %5613 = vmatprep.subr.bf16.mxu0 0
        %5614 = vmatpush1.bf16.msra.mxu0 0
        %5615 = vmatprep.subr.bf16.mxu0 0
        %5616 = vmatpush1.bf16.msra.mxu0 0
        %5617 = vmatprep.subr.bf16.mxu0 0
        %5618 = vmatpush1.bf16.msra.mxu0 0
        %5619 = vmatprep.subr.bf16.mxu0 0
        %5620 = vmatpush1.bf16.msra.mxu0 0
        %5621 = vmatprep.subr.bf16.mxu0 0
        %5622 = vmatpush1.bf16.msra.mxu0 0
        %5623 = vmatprep.subr.bf16.mxu0 0
        %5624 = vmatpush1.bf16.msra.mxu0 0
        %5625 = vmatprep.subr.bf16.mxu0 0
        %5626 = vmatpush1.bf16.msra.mxu0 0
        %5627 = vmatprep.subr.bf16.mxu0 0
        %5628 = vmatpush1.bf16.msra.mxu0 0
        %5629 = vmatprep.subr.bf16.mxu0 0
        %5630 = vmatpush1.bf16.msra.mxu0 0
        %5631 = vmatprep.subr.bf16.mxu0 0
        %5632 = vmatpush1.bf16.msra.mxu0 0
        %5633 = vmatprep.subr.bf16.mxu0 0
        %5634 = vmatpush1.bf16.msra.mxu0 0
        %5635 = vmatprep.subr.bf16.mxu0 0
        %5636 = vmatpush1.bf16.msra.mxu0 0
        %5637 = vmatprep.subr.bf16.mxu0 0
        %5638 = vmatpush1.bf16.msra.mxu0 0
        %5639 = vmatprep.subr.bf16.mxu0 0
        %5640 = vmatpush1.bf16.msra.mxu0 0
        %5641 = vmatprep.subr.bf16.mxu0 0
        %5642 = vmatpush1.bf16.msra.mxu0 0
        %5643 = vmatprep.mubr.bf16.mxu0 0
        %5644 = vmatmul.mubr.bf16.gmra.mrb[0].mxu0 %v3539
        %v5645 = vpop.f32.mrb[0].mxu0
        %v5646 = vadd.f32 0.0, %v5645
        %v5647 = vpop.f32.mrb[0].mxu0
        %v5648 = vpop.f32.mrb[0].mxu0
        %v5649 = vadd.f32 0.0, %v5648
        %v5650 = vpop.f32.mrb[0].mxu0
        %5651 = vmatprep.mubr.bf16.mxu0 0
        %5652 = vmatmul.mubr.bf16.gmra.mrb[0].mxu0 %v3542
        %v5653 = vpop.f32.mrb[0].mxu0
        %v5654 = vadd.f32 0.0, %v5653
        %v5655 = vpop.f32.mrb[0].mxu0
        %v5656 = vpop.f32.mrb[0].mxu0
        %v5657 = vadd.f32 0.0, %v5656
        %v5658 = vpop.f32.mrb[0].mxu0
        %5659 = vmatprep.mubr.bf16.mxu0 0
        %5660 = vmatmul.mubr.bf16.gmra.mrb[0].mxu0 %v3545
        %v5661 = vpop.f32.mrb[0].mxu0
        %v5662 = vadd.f32 0.0, %v5661
        %v5663 = vpop.f32.mrb[0].mxu0
        %v5664 = vpop.f32.mrb[0].mxu0
        %v5665 = vadd.f32 0.0, %v5664
        %v5666 = vpop.f32.mrb[0].mxu0
        %5667 = vmatprep.mubr.bf16.mxu0 0
        %5668 = vmatmul.mubr.bf16.gmra.mrb[0].mxu0 %v3548
        %v5669 = vpop.f32.mrb[0].mxu0
        %v5670 = vadd.f32 0.0, %v5669
        %v5671 = vpop.f32.mrb[0].mxu0
        %v5672 = vpop.f32.mrb[0].mxu0
        %v5673 = vadd.f32 0.0, %v5672
        %v5674 = vpop.f32.mrb[0].mxu0
        %5675 = vmatprep.mubr.bf16.mxu0 0
        %5676 = vmatmul.mubr.bf16.gmra.mrb[0].mxu0 %v3551
        %v5677 = vpop.f32.mrb[0].mxu0
        %v5678 = vadd.f32 0.0, %v5677
        %v5679 = vpop.f32.mrb[0].mxu0
        %v5680 = vpop.f32.mrb[0].mxu0
        %v5681 = vadd.f32 0.0, %v5680
        %v5682 = vpop.f32.mrb[0].mxu0
        %5683 = vmatprep.mubr.bf16.mxu0 0
        %5684 = vmatmul.mubr.bf16.gmra.mrb[0].mxu0 %v3554
        %v5685 = vpop.f32.mrb[0].mxu0
        %v5686 = vadd.f32 0.0, %v5685
        %v5687 = vpop.f32.mrb[0].mxu0
        %v5688 = vpop.f32.mrb[0].mxu0
        %v5689 = vadd.f32 0.0, %v5688
        %v5690 = vpop.f32.mrb[0].mxu0
        %5691 = vmatprep.mubr.bf16.mxu0 0
        %5692 = vmatmul.mubr.bf16.gmra.mrb[0].mxu0 %v3557
        %v5693 = vpop.f32.mrb[0].mxu0
        %v5694 = vadd.f32 0.0, %v5693
        %v5695 = vpop.f32.mrb[0].mxu0
        %v5696 = vpop.f32.mrb[0].mxu0
        %v5697 = vadd.f32 0.0, %v5696
        %v5698 = vpop.f32.mrb[0].mxu0
        %5699 = vmatprep.mubr.bf16.mxu0 0
        %5700 = vmatmul.mubr.bf16.gmra.mrb[0].mxu0 %v5606
        %v5701 = vpop.f32.mrb[0].mxu0
        %v5702 = vadd.f32 0.0, %v5701
        %v5703 = vpop.f32.mrb[0].mxu0
        %v5704 = vpop.f32.mrb[0].mxu0
        %v5705 = vadd.f32 0.0, %v5704
        %v5706 = vpop.f32.mrb[0].mxu0
        %5707 = vdwg.mxu0
        %v5708 = vadd.f32 %v5576, %v5646
        %v5709 = vadd.f32 %v5577, %v5649
        %v5710 = vadd.f32 %v5578, %v5654
        %v5711 = vadd.f32 %v5579, %v5657
        %v5712 = vadd.f32 %v5580, %v5662
        %v5713 = vadd.f32 %v5581, %v5665
        %v5714 = vadd.f32 %v5582, %v5670
        %v5715 = vadd.f32 %v5583, %v5673
        %v5716 = vadd.f32 %v5584, %v5678
        %v5717 = vadd.f32 %v5585, %v5681
        %v5718 = vadd.f32 %v5586, %v5686
        %v5719 = vadd.f32 %v5587, %v5689
        %v5720 = vadd.f32 %v5588, %v5694
        %v5721 = vadd.f32 %v5589, %v5697
        %v5722 = vadd.f32 %v5590, %v5702
        %v5723 = vadd.f32 %v5591, %v5705
        %v5724 = vrot.slane %v5165, 5
        %v5725 = vrot.slane %v5168, 6
        %v5726 = vor.u32 %v5724, %v5725
        %v5727 = vrot.slane %v5726, 4
        %v5728 = vrot.slane %v5178, 5
        %v5729 = vrot.slane %v5174, 6
        %v5730 = vor.u32 %v5728, %v5729
        %v5731 = vsel %vm1848, %v5727, %v5730
        %v5732 = vrot.slane %v5730, 4
        %v5733 = vshrl.u32 %v294, 16
        %v5735 = vrot.slane %v5733, 5
        %v5736 = vrot.slane %v5184, 6
        %v5737 = vor.u32 %v5735, %v5736
        %v5738 = vsel %vm1848, %v5732, %v5737
        %s5739 = scalar_lea.vmem %s1, 54
        %v5740 = vld [vmem:[%s5739] sm:$0x3]
        %v5741 = vunpack.c.l.b16 %v5731
        %v5742 = vunpack.c.l.b16 %v5738
        %v5743 = vpack.c.b16 %v5742, %v5741
        %v5745 = vsel %vm371, %v5743, 0
        %v5748 = vand.u32 %v5740, %v399
        %5750 = vmatprep.subr.bf16.mxu0 0
        %5751 = vmatpush1.bf16.msra.mxu0 %v5748
        %5752 = vmatprep.subr.bf16.mxu0 0
        %5753 = vmatpush1.bf16.msra.mxu0 0
        %5754 = vmatprep.subr.bf16.mxu0 0
        %5755 = vmatpush1.bf16.msra.mxu0 0
        %5756 = vmatprep.subr.bf16.mxu0 0
        %5757 = vmatpush1.bf16.msra.mxu0 0
        %5758 = vmatprep.subr.bf16.mxu0 0
        %5759 = vmatpush1.bf16.msra.mxu0 0
        %5760 = vmatprep.subr.bf16.mxu0 0
        %5761 = vmatpush1.bf16.msra.mxu0 0
        %5762 = vmatprep.subr.bf16.mxu0 0
        %5763 = vmatpush1.bf16.msra.mxu0 0
        %5764 = vmatprep.subr.bf16.mxu0 0
        %5765 = vmatpush1.bf16.msra.mxu0 0
        %5766 = vmatprep.subr.bf16.mxu0 0
        %5767 = vmatpush1.bf16.msra.mxu0 0
        %5768 = vmatprep.subr.bf16.mxu0 0
        %5769 = vmatpush1.bf16.msra.mxu0 0
        %5770 = vmatprep.subr.bf16.mxu0 0
        %5771 = vmatpush1.bf16.msra.mxu0 0
        %5772 = vmatprep.subr.bf16.mxu0 0
        %5773 = vmatpush1.bf16.msra.mxu0 0
        %5774 = vmatprep.subr.bf16.mxu0 0
        %5775 = vmatpush1.bf16.msra.mxu0 0
        %5776 = vmatprep.subr.bf16.mxu0 0
        %5777 = vmatpush1.bf16.msra.mxu0 0
        %5778 = vmatprep.subr.bf16.mxu0 0
        %5779 = vmatpush1.bf16.msra.mxu0 0
        %5780 = vmatprep.subr.bf16.mxu0 0
        %5781 = vmatpush1.bf16.msra.mxu0 0
        %5782 = vmatprep.mubr.bf16.mxu0 0
        %5783 = vmatmul.mubr.bf16.gmra.mrb[0].mxu0 %v3825
        %v5784 = vpop.f32.mrb[0].mxu0
        %v5785 = vadd.f32 0.0, %v5784
        %v5786 = vpop.f32.mrb[0].mxu0
        %v5787 = vpop.f32.mrb[0].mxu0
        %v5788 = vadd.f32 0.0, %v5787
        %v5789 = vpop.f32.mrb[0].mxu0
        %5790 = vmatprep.mubr.bf16.mxu0 0
        %5791 = vmatmul.mubr.bf16.gmra.mrb[0].mxu0 %v3828
        %v5792 = vpop.f32.mrb[0].mxu0
        %v5793 = vadd.f32 0.0, %v5792
        %v5794 = vpop.f32.mrb[0].mxu0
        %v5795 = vpop.f32.mrb[0].mxu0
        %v5796 = vadd.f32 0.0, %v5795
        %v5797 = vpop.f32.mrb[0].mxu0
        %5798 = vmatprep.mubr.bf16.mxu0 0
        %5799 = vmatmul.mubr.bf16.gmra.mrb[0].mxu0 %v3831
        %v5800 = vpop.f32.mrb[0].mxu0
        %v5801 = vadd.f32 0.0, %v5800
        %v5802 = vpop.f32.mrb[0].mxu0
        %v5803 = vpop.f32.mrb[0].mxu0
        %v5804 = vadd.f32 0.0, %v5803
        %v5805 = vpop.f32.mrb[0].mxu0
        %5806 = vmatprep.mubr.bf16.mxu0 0
        %5807 = vmatmul.mubr.bf16.gmra.mrb[0].mxu0 %v3834
        %v5808 = vpop.f32.mrb[0].mxu0
        %v5809 = vadd.f32 0.0, %v5808
        %v5810 = vpop.f32.mrb[0].mxu0
        %v5811 = vpop.f32.mrb[0].mxu0
        %v5812 = vadd.f32 0.0, %v5811
        %v5813 = vpop.f32.mrb[0].mxu0
        %5814 = vmatprep.mubr.bf16.mxu0 0
        %5815 = vmatmul.mubr.bf16.gmra.mrb[0].mxu0 %v3837
        %v5816 = vpop.f32.mrb[0].mxu0
        %v5817 = vadd.f32 0.0, %v5816
        %v5818 = vpop.f32.mrb[0].mxu0
        %v5819 = vpop.f32.mrb[0].mxu0
        %v5820 = vadd.f32 0.0, %v5819
        %v5821 = vpop.f32.mrb[0].mxu0
        %5822 = vmatprep.mubr.bf16.mxu0 0
        %5823 = vmatmul.mubr.bf16.gmra.mrb[0].mxu0 %v3840
        %v5824 = vpop.f32.mrb[0].mxu0
        %v5825 = vadd.f32 0.0, %v5824
        %v5826 = vpop.f32.mrb[0].mxu0
        %v5827 = vpop.f32.mrb[0].mxu0
        %v5828 = vadd.f32 0.0, %v5827
        %v5829 = vpop.f32.mrb[0].mxu0
        %5830 = vmatprep.mubr.bf16.mxu0 0
        %5831 = vmatmul.mubr.bf16.gmra.mrb[0].mxu0 %v3843
        %v5832 = vpop.f32.mrb[0].mxu0
        %v5833 = vadd.f32 0.0, %v5832
        %v5834 = vpop.f32.mrb[0].mxu0
        %v5835 = vpop.f32.mrb[0].mxu0
        %v5836 = vadd.f32 0.0, %v5835
        %v5837 = vpop.f32.mrb[0].mxu0
        %5838 = vmatprep.mubr.bf16.mxu0 0
        %5839 = vmatmul.mubr.bf16.gmra.mrb[0].mxu0 %v5745
        %v5840 = vpop.f32.mrb[0].mxu0
        %v5841 = vadd.f32 0.0, %v5840
        %v5842 = vpop.f32.mrb[0].mxu0
        %v5843 = vpop.f32.mrb[0].mxu0
        %v5844 = vadd.f32 0.0, %v5843
        %v5845 = vpop.f32.mrb[0].mxu0
        %5846 = vdwg.mxu0
        %v5847 = vadd.f32 %v5708, %v5785
        %v5848 = vadd.f32 %v5709, %v5788
        %v5849 = vadd.f32 %v5710, %v5793
        %v5850 = vadd.f32 %v5711, %v5796
        %v5851 = vadd.f32 %v5712, %v5801
        %v5852 = vadd.f32 %v5713, %v5804
        %v5853 = vadd.f32 %v5714, %v5809
        %v5854 = vadd.f32 %v5715, %v5812
        %v5855 = vadd.f32 %v5716, %v5817
        %v5856 = vadd.f32 %v5717, %v5820
        %v5857 = vadd.f32 %v5718, %v5825
        %v5858 = vadd.f32 %v5719, %v5828
        %v5859 = vadd.f32 %v5720, %v5833
        %v5860 = vadd.f32 %v5721, %v5836
        %v5861 = vadd.f32 %v5722, %v5841
        %v5862 = vadd.f32 %v5723, %v5844
        %s5863 = scalar_lea.vmem %s1, 56
        %v5864 = vld [vmem:[%s5863] sm:$0x3]
        %v5867 = vunpack.c.l.b16 %v229
        %v5868 = vunpack.c.l.b16 %v230
        %v5869 = vpack.c.b16 %v5868, %v5867
        %v5871 = vsel %vm371, %v5869, 0
        %v5874 = vand.u32 %v5864, %v399
        %5876 = vmatprep.subr.bf16.mxu0 0
        %5877 = vmatpush1.bf16.msra.mxu0 %v5874
        %5878 = vmatprep.subr.bf16.mxu0 0
        %5879 = vmatpush1.bf16.msra.mxu0 0
        %5880 = vmatprep.subr.bf16.mxu0 0
        %5881 = vmatpush1.bf16.msra.mxu0 0
        %5882 = vmatprep.subr.bf16.mxu0 0
        %5883 = vmatpush1.bf16.msra.mxu0 0
        %5884 = vmatprep.subr.bf16.mxu0 0
        %5885 = vmatpush1.bf16.msra.mxu0 0
        %5886 = vmatprep.subr.bf16.mxu0 0
        %5887 = vmatpush1.bf16.msra.mxu0 0
        %5888 = vmatprep.subr.bf16.mxu0 0
        %5889 = vmatpush1.bf16.msra.mxu0 0
        %5890 = vmatprep.subr.bf16.mxu0 0
        %5891 = vmatpush1.bf16.msra.mxu0 0
        %5892 = vmatprep.subr.bf16.mxu0 0
        %5893 = vmatpush1.bf16.msra.mxu0 0
        %5894 = vmatprep.subr.bf16.mxu0 0
        %5895 = vmatpush1.bf16.msra.mxu0 0
        %5896 = vmatprep.subr.bf16.mxu0 0
        %5897 = vmatpush1.bf16.msra.mxu0 0
        %5898 = vmatprep.subr.bf16.mxu0 0
        %5899 = vmatpush1.bf16.msra.mxu0 0
        %5900 = vmatprep.subr.bf16.mxu0 0
        %5901 = vmatpush1.bf16.msra.mxu0 0
        %5902 = vmatprep.subr.bf16.mxu0 0
        %5903 = vmatpush1.bf16.msra.mxu0 0
        %5904 = vmatprep.subr.bf16.mxu0 0
        %5905 = vmatpush1.bf16.msra.mxu0 0
        %5906 = vmatprep.subr.bf16.mxu0 0
        %5907 = vmatpush1.bf16.msra.mxu0 0
        %5908 = vmatprep.mubr.bf16.mxu0 0
        %5909 = vmatmul.mubr.bf16.gmra.mrb[0].mxu0 %v547
        %v5910 = vpop.f32.mrb[0].mxu0
        %v5911 = vadd.f32 0.0, %v5910
        %v5912 = vpop.f32.mrb[0].mxu0
        %v5913 = vpop.f32.mrb[0].mxu0
        %v5914 = vadd.f32 0.0, %v5913
        %v5915 = vpop.f32.mrb[0].mxu0
        %5916 = vmatprep.mubr.bf16.mxu0 0
        %5917 = vmatmul.mubr.bf16.gmra.mrb[0].mxu0 %v550
        %v5918 = vpop.f32.mrb[0].mxu0
        %v5919 = vadd.f32 0.0, %v5918
        %v5920 = vpop.f32.mrb[0].mxu0
        %v5921 = vpop.f32.mrb[0].mxu0
        %v5922 = vadd.f32 0.0, %v5921
        %v5923 = vpop.f32.mrb[0].mxu0
        %5924 = vmatprep.mubr.bf16.mxu0 0
        %5925 = vmatmul.mubr.bf16.gmra.mrb[0].mxu0 %v553
        %v5926 = vpop.f32.mrb[0].mxu0
        %v5927 = vadd.f32 0.0, %v5926
        %v5928 = vpop.f32.mrb[0].mxu0
        %v5929 = vpop.f32.mrb[0].mxu0
        %v5930 = vadd.f32 0.0, %v5929
        %v5931 = vpop.f32.mrb[0].mxu0
        %5932 = vmatprep.mubr.bf16.mxu0 0
        %5933 = vmatmul.mubr.bf16.gmra.mrb[0].mxu0 %v556
        %v5934 = vpop.f32.mrb[0].mxu0
        %v5935 = vadd.f32 0.0, %v5934
        %v5936 = vpop.f32.mrb[0].mxu0
        %v5937 = vpop.f32.mrb[0].mxu0
        %v5938 = vadd.f32 0.0, %v5937
        %v5939 = vpop.f32.mrb[0].mxu0
        %5940 = vmatprep.mubr.bf16.mxu0 0
        %5941 = vmatmul.mubr.bf16.gmra.mrb[0].mxu0 %v559
        %v5942 = vpop.f32.mrb[0].mxu0
        %v5943 = vadd.f32 0.0, %v5942
        %v5944 = vpop.f32.mrb[0].mxu0
        %v5945 = vpop.f32.mrb[0].mxu0
        %v5946 = vadd.f32 0.0, %v5945
        %v5947 = vpop.f32.mrb[0].mxu0
        %5948 = vmatprep.mubr.bf16.mxu0 0
        %5949 = vmatmul.mubr.bf16.gmra.mrb[0].mxu0 %v562
        %v5950 = vpop.f32.mrb[0].mxu0
        %v5951 = vadd.f32 0.0, %v5950
        %v5952 = vpop.f32.mrb[0].mxu0
        %v5953 = vpop.f32.mrb[0].mxu0
        %v5954 = vadd.f32 0.0, %v5953
        %v5955 = vpop.f32.mrb[0].mxu0
        %5956 = vmatprep.mubr.bf16.mxu0 0
        %5957 = vmatmul.mubr.bf16.gmra.mrb[0].mxu0 %v3969
        %v5958 = vpop.f32.mrb[0].mxu0
        %v5959 = vadd.f32 0.0, %v5958
        %v5960 = vpop.f32.mrb[0].mxu0
        %v5961 = vpop.f32.mrb[0].mxu0
        %v5962 = vadd.f32 0.0, %v5961
        %v5963 = vpop.f32.mrb[0].mxu0
        %5964 = vmatprep.mubr.bf16.mxu0 0
        %5965 = vmatmul.mubr.bf16.gmra.mrb[0].mxu0 %v5871
        %v5966 = vpop.f32.mrb[0].mxu0
        %v5967 = vadd.f32 0.0, %v5966
        %v5968 = vpop.f32.mrb[0].mxu0
        %v5969 = vpop.f32.mrb[0].mxu0
        %v5970 = vadd.f32 0.0, %v5969
        %v5971 = vpop.f32.mrb[0].mxu0
        %5972 = vdwg.mxu0
        %v5973 = vadd.f32 %v5847, %v5911
        %v5974 = vadd.f32 %v5848, %v5914
        %v5975 = vadd.f32 %v5849, %v5919
        %v5976 = vadd.f32 %v5850, %v5922
        %v5977 = vadd.f32 %v5851, %v5927
        %v5978 = vadd.f32 %v5852, %v5930
        %v5979 = vadd.f32 %v5853, %v5935
        %v5980 = vadd.f32 %v5854, %v5938
        %v5981 = vadd.f32 %v5855, %v5943
        %v5982 = vadd.f32 %v5856, %v5946
        %v5983 = vadd.f32 %v5857, %v5951
        %v5984 = vadd.f32 %v5858, %v5954
        %v5985 = vadd.f32 %v5859, %v5959
        %v5986 = vadd.f32 %v5860, %v5962
        %v5987 = vadd.f32 %v5861, %v5967
        %v5988 = vadd.f32 %v5862, %v5970
        %s5989 = scalar_lea.vmem %s1, 58
        %v5990 = vld [vmem:[%s5989] sm:$0x3]
        %v5993 = vunpack.c.l.b16 %v262
        %v5994 = vunpack.c.l.b16 %v263
        %v5995 = vpack.c.b16 %v5994, %v5993
        %v5997 = vsel %vm371, %v5995, 0
        %v6000 = vand.u32 %v5990, %v399
        %6002 = vmatprep.subr.bf16.mxu0 0
        %6003 = vmatpush1.bf16.msra.mxu0 %v6000
        %6004 = vmatprep.subr.bf16.mxu0 0
        %6005 = vmatpush1.bf16.msra.mxu0 0
        %6006 = vmatprep.subr.bf16.mxu0 0
        %6007 = vmatpush1.bf16.msra.mxu0 0
        %6008 = vmatprep.subr.bf16.mxu0 0
        %6009 = vmatpush1.bf16.msra.mxu0 0
        %6010 = vmatprep.subr.bf16.mxu0 0
        %6011 = vmatpush1.bf16.msra.mxu0 0
        %6012 = vmatprep.subr.bf16.mxu0 0
        %6013 = vmatpush1.bf16.msra.mxu0 0
        %6014 = vmatprep.subr.bf16.mxu0 0
        %6015 = vmatpush1.bf16.msra.mxu0 0
        %6016 = vmatprep.subr.bf16.mxu0 0
        %6017 = vmatpush1.bf16.msra.mxu0 0
        %6018 = vmatprep.subr.bf16.mxu0 0
        %6019 = vmatpush1.bf16.msra.mxu0 0
        %6020 = vmatprep.subr.bf16.mxu0 0
        %6021 = vmatpush1.bf16.msra.mxu0 0
        %6022 = vmatprep.subr.bf16.mxu0 0
        %6023 = vmatpush1.bf16.msra.mxu0 0
        %6024 = vmatprep.subr.bf16.mxu0 0
        %6025 = vmatpush1.bf16.msra.mxu0 0
        %6026 = vmatprep.subr.bf16.mxu0 0
        %6027 = vmatpush1.bf16.msra.mxu0 0
        %6028 = vmatprep.subr.bf16.mxu0 0
        %6029 = vmatpush1.bf16.msra.mxu0 0
        %6030 = vmatprep.subr.bf16.mxu0 0
        %6031 = vmatpush1.bf16.msra.mxu0 0
        %6032 = vmatprep.subr.bf16.mxu0 0
        %6033 = vmatpush1.bf16.msra.mxu0 0
        %6034 = vmatprep.mubr.bf16.mxu0 0
        %6035 = vmatmul.mubr.bf16.gmra.mrb[0].mxu0 %v379
        %v6036 = vpop.f32.mrb[0].mxu0
        %v6037 = vadd.f32 0.0, %v6036
        %v6038 = vpop.f32.mrb[0].mxu0
        %v6039 = vpop.f32.mrb[0].mxu0
        %v6040 = vadd.f32 0.0, %v6039
        %v6041 = vpop.f32.mrb[0].mxu0
        %6042 = vmatprep.mubr.bf16.mxu0 0
        %6043 = vmatmul.mubr.bf16.gmra.mrb[0].mxu0 %v382
        %v6044 = vpop.f32.mrb[0].mxu0
        %v6045 = vadd.f32 0.0, %v6044
        %v6046 = vpop.f32.mrb[0].mxu0
        %v6047 = vpop.f32.mrb[0].mxu0
        %v6048 = vadd.f32 0.0, %v6047
        %v6049 = vpop.f32.mrb[0].mxu0
        %6050 = vmatprep.mubr.bf16.mxu0 0
        %6051 = vmatmul.mubr.bf16.gmra.mrb[0].mxu0 %v385
        %v6052 = vpop.f32.mrb[0].mxu0
        %v6053 = vadd.f32 0.0, %v6052
        %v6054 = vpop.f32.mrb[0].mxu0
        %v6055 = vpop.f32.mrb[0].mxu0
        %v6056 = vadd.f32 0.0, %v6055
        %v6057 = vpop.f32.mrb[0].mxu0
        %6058 = vmatprep.mubr.bf16.mxu0 0
        %6059 = vmatmul.mubr.bf16.gmra.mrb[0].mxu0 %v388
        %v6060 = vpop.f32.mrb[0].mxu0
        %v6061 = vadd.f32 0.0, %v6060
        %v6062 = vpop.f32.mrb[0].mxu0
        %v6063 = vpop.f32.mrb[0].mxu0
        %v6064 = vadd.f32 0.0, %v6063
        %v6065 = vpop.f32.mrb[0].mxu0
        %6066 = vmatprep.mubr.bf16.mxu0 0
        %6067 = vmatmul.mubr.bf16.gmra.mrb[0].mxu0 %v391
        %v6068 = vpop.f32.mrb[0].mxu0
        %v6069 = vadd.f32 0.0, %v6068
        %v6070 = vpop.f32.mrb[0].mxu0
        %v6071 = vpop.f32.mrb[0].mxu0
        %v6072 = vadd.f32 0.0, %v6071
        %v6073 = vpop.f32.mrb[0].mxu0
        %6074 = vmatprep.mubr.bf16.mxu0 0
        %6075 = vmatmul.mubr.bf16.gmra.mrb[0].mxu0 %v394
        %v6076 = vpop.f32.mrb[0].mxu0
        %v6077 = vadd.f32 0.0, %v6076
        %v6078 = vpop.f32.mrb[0].mxu0
        %v6079 = vpop.f32.mrb[0].mxu0
        %v6080 = vadd.f32 0.0, %v6079
        %v6081 = vpop.f32.mrb[0].mxu0
        %6082 = vmatprep.mubr.bf16.mxu0 0
        %6083 = vmatmul.mubr.bf16.gmra.mrb[0].mxu0 %v4095
        %v6084 = vpop.f32.mrb[0].mxu0
        %v6085 = vadd.f32 0.0, %v6084
        %v6086 = vpop.f32.mrb[0].mxu0
        %v6087 = vpop.f32.mrb[0].mxu0
        %v6088 = vadd.f32 0.0, %v6087
        %v6089 = vpop.f32.mrb[0].mxu0
        %6090 = vmatprep.mubr.bf16.mxu0 0
        %6091 = vmatmul.mubr.bf16.gmra.mrb[0].mxu0 %v5997
        %v6092 = vpop.f32.mrb[0].mxu0
        %v6093 = vadd.f32 0.0, %v6092
        %v6094 = vpop.f32.mrb[0].mxu0
        %v6095 = vpop.f32.mrb[0].mxu0
        %v6096 = vadd.f32 0.0, %v6095
        %v6097 = vpop.f32.mrb[0].mxu0
        %6098 = vdwg.mxu0
        %v6099 = vadd.f32 %v5973, %v6037
        %v6100 = vadd.f32 %v5974, %v6040
        %v6101 = vadd.f32 %v5975, %v6045
        %v6102 = vadd.f32 %v5976, %v6048
        %v6103 = vadd.f32 %v5977, %v6053
        %v6104 = vadd.f32 %v5978, %v6056
        %v6105 = vadd.f32 %v5979, %v6061
        %v6106 = vadd.f32 %v5980, %v6064
        %v6107 = vadd.f32 %v5981, %v6069
        %v6108 = vadd.f32 %v5982, %v6072
        %v6109 = vadd.f32 %v5983, %v6077
        %v6110 = vadd.f32 %v5984, %v6080
        %v6111 = vadd.f32 %v5985, %v6085
        %v6112 = vadd.f32 %v5986, %v6088
        %v6113 = vadd.f32 %v5987, %v6093
        %v6114 = vadd.f32 %v5988, %v6096
        %v6116 = vshrl.u32 %v229, 16
        %v6118 = vrot.slane %v6116, 4
        %v6119 = vshll.u32 %v229, 16
        %v6121 = vrot.slane %v6119, 5
        %v6122 = vor.u32 %v6118, %v6121
        %v6123 = vrot.slane %v6122, 4
        %v6125 = vshll.u32 %v230, 16
        %v6127 = vrot.slane %v6125, 5
        %v6128 = vsel %vm666, %v6123, %v6127
        %v6129 = vshrl.u32 %v230, 16
        %v6131 = vrot.slane %v6129, 4
        %v6132 = vor.u32 %v6131, %v6127
        %v6133 = vrot.slane %v6132, 4
        %v6135 = vshll.u32 %v231, 16
        %v6137 = vrot.slane %v6135, 5
        %v6138 = vsel %vm666, %v6133, %v6137
        %s6139 = scalar_lea.vmem %s1, 60
        %v6140 = vld [vmem:[%s6139] sm:$0x3]
        %v6141 = vunpack.c.l.b16 %v6128
        %v6142 = vunpack.c.l.b16 %v6138
        %v6143 = vpack.c.b16 %v6142, %v6141
        %v6145 = vsel %vm371, %v6143, 0
        %v6148 = vand.u32 %v6140, %v399
        %6150 = vmatprep.subr.bf16.mxu0 0
        %6151 = vmatpush1.bf16.msra.mxu0 %v6148
        %6152 = vmatprep.subr.bf16.mxu0 0
        %6153 = vmatpush1.bf16.msra.mxu0 0
        %6154 = vmatprep.subr.bf16.mxu0 0
        %6155 = vmatpush1.bf16.msra.mxu0 0
        %6156 = vmatprep.subr.bf16.mxu0 0
        %6157 = vmatpush1.bf16.msra.mxu0 0
        %6158 = vmatprep.subr.bf16.mxu0 0
        %6159 = vmatpush1.bf16.msra.mxu0 0
        %6160 = vmatprep.subr.bf16.mxu0 0
        %6161 = vmatpush1.bf16.msra.mxu0 0
        %6162 = vmatprep.subr.bf16.mxu0 0
        %6163 = vmatpush1.bf16.msra.mxu0 0
        %6164 = vmatprep.subr.bf16.mxu0 0
        %6165 = vmatpush1.bf16.msra.mxu0 0
        %6166 = vmatprep.subr.bf16.mxu0 0
        %6167 = vmatpush1.bf16.msra.mxu0 0
        %6168 = vmatprep.subr.bf16.mxu0 0
        %6169 = vmatpush1.bf16.msra.mxu0 0
        %6170 = vmatprep.subr.bf16.mxu0 0
        %6171 = vmatpush1.bf16.msra.mxu0 0
        %6172 = vmatprep.subr.bf16.mxu0 0
        %6173 = vmatpush1.bf16.msra.mxu0 0
        %6174 = vmatprep.subr.bf16.mxu0 0
        %6175 = vmatpush1.bf16.msra.mxu0 0
        %6176 = vmatprep.subr.bf16.mxu0 0
        %6177 = vmatpush1.bf16.msra.mxu0 0
        %6178 = vmatprep.subr.bf16.mxu0 0
        %6179 = vmatpush1.bf16.msra.mxu0 0
        %6180 = vmatprep.subr.bf16.mxu0 0
        %6181 = vmatpush1.bf16.msra.mxu0 0
        %6182 = vmatprep.mubr.bf16.mxu0 0
        %6183 = vmatmul.mubr.bf16.gmra.mrb[0].mxu0 %v892
        %v6184 = vpop.f32.mrb[0].mxu0
        %v6185 = vadd.f32 0.0, %v6184
        %v6186 = vpop.f32.mrb[0].mxu0
        %v6187 = vpop.f32.mrb[0].mxu0
        %v6188 = vadd.f32 0.0, %v6187
        %v6189 = vpop.f32.mrb[0].mxu0
        %6190 = vmatprep.mubr.bf16.mxu0 0
        %6191 = vmatmul.mubr.bf16.gmra.mrb[0].mxu0 %v895
        %v6192 = vpop.f32.mrb[0].mxu0
        %v6193 = vadd.f32 0.0, %v6192
        %v6194 = vpop.f32.mrb[0].mxu0
        %v6195 = vpop.f32.mrb[0].mxu0
        %v6196 = vadd.f32 0.0, %v6195
        %v6197 = vpop.f32.mrb[0].mxu0
        %6198 = vmatprep.mubr.bf16.mxu0 0
        %6199 = vmatmul.mubr.bf16.gmra.mrb[0].mxu0 %v898
        %v6200 = vpop.f32.mrb[0].mxu0
        %v6201 = vadd.f32 0.0, %v6200
        %v6202 = vpop.f32.mrb[0].mxu0
        %v6203 = vpop.f32.mrb[0].mxu0
        %v6204 = vadd.f32 0.0, %v6203
        %v6205 = vpop.f32.mrb[0].mxu0
        %6206 = vmatprep.mubr.bf16.mxu0 0
        %6207 = vmatmul.mubr.bf16.gmra.mrb[0].mxu0 %v901
        %v6208 = vpop.f32.mrb[0].mxu0
        %v6209 = vadd.f32 0.0, %v6208
        %v6210 = vpop.f32.mrb[0].mxu0
        %v6211 = vpop.f32.mrb[0].mxu0
        %v6212 = vadd.f32 0.0, %v6211
        %v6213 = vpop.f32.mrb[0].mxu0
        %6214 = vmatprep.mubr.bf16.mxu0 0
        %6215 = vmatmul.mubr.bf16.gmra.mrb[0].mxu0 %v904
        %v6216 = vpop.f32.mrb[0].mxu0
        %v6217 = vadd.f32 0.0, %v6216
        %v6218 = vpop.f32.mrb[0].mxu0
        %v6219 = vpop.f32.mrb[0].mxu0
        %v6220 = vadd.f32 0.0, %v6219
        %v6221 = vpop.f32.mrb[0].mxu0
        %6222 = vmatprep.mubr.bf16.mxu0 0
        %6223 = vmatmul.mubr.bf16.gmra.mrb[0].mxu0 %v907
        %v6224 = vpop.f32.mrb[0].mxu0
        %v6225 = vadd.f32 0.0, %v6224
        %v6226 = vpop.f32.mrb[0].mxu0
        %v6227 = vpop.f32.mrb[0].mxu0
        %v6228 = vadd.f32 0.0, %v6227
        %v6229 = vpop.f32.mrb[0].mxu0
        %6230 = vmatprep.mubr.bf16.mxu0 0
        %6231 = vmatmul.mubr.bf16.gmra.mrb[0].mxu0 %v4243
        %v6232 = vpop.f32.mrb[0].mxu0
        %v6233 = vadd.f32 0.0, %v6232
        %v6234 = vpop.f32.mrb[0].mxu0
        %v6235 = vpop.f32.mrb[0].mxu0
        %v6236 = vadd.f32 0.0, %v6235
        %v6237 = vpop.f32.mrb[0].mxu0
        %6238 = vmatprep.mubr.bf16.mxu0 0
        %6239 = vmatmul.mubr.bf16.gmra.mrb[0].mxu0 %v6145
        %v6240 = vpop.f32.mrb[0].mxu0
        %v6241 = vadd.f32 0.0, %v6240
        %v6242 = vpop.f32.mrb[0].mxu0
        %v6243 = vpop.f32.mrb[0].mxu0
        %v6244 = vadd.f32 0.0, %v6243
        %v6245 = vpop.f32.mrb[0].mxu0
        %6246 = vdwg.mxu0
        %v6247 = vadd.f32 %v6099, %v6185
        %v6248 = vadd.f32 %v6100, %v6188
        %v6249 = vadd.f32 %v6101, %v6193
        %v6250 = vadd.f32 %v6102, %v6196
        %v6251 = vadd.f32 %v6103, %v6201
        %v6252 = vadd.f32 %v6104, %v6204
        %v6253 = vadd.f32 %v6105, %v6209
        %v6254 = vadd.f32 %v6106, %v6212
        %v6255 = vadd.f32 %v6107, %v6217
        %v6256 = vadd.f32 %v6108, %v6220
        %v6257 = vadd.f32 %v6109, %v6225
        %v6258 = vadd.f32 %v6110, %v6228
        %v6259 = vadd.f32 %v6111, %v6233
        %v6260 = vadd.f32 %v6112, %v6236
        %v6261 = vadd.f32 %v6113, %v6241
        %v6262 = vadd.f32 %v6114, %v6244
        %v6264 = vshrl.u32 %v262, 16
        %v6266 = vrot.slane %v6264, 4
        %v6267 = vshll.u32 %v262, 16
        %v6269 = vrot.slane %v6267, 5
        %v6270 = vor.u32 %v6266, %v6269
        %v6271 = vrot.slane %v6270, 4
        %v6273 = vshll.u32 %v263, 16
        %v6275 = vrot.slane %v6273, 5
        %v6276 = vsel %vm666, %v6271, %v6275
        %v6277 = vshrl.u32 %v263, 16
        %v6279 = vrot.slane %v6277, 4
        %v6280 = vor.u32 %v6279, %v6275
        %v6281 = vrot.slane %v6280, 4
        %v6283 = vshll.u32 %v264, 16
        %v6285 = vrot.slane %v6283, 5
        %v6286 = vsel %vm666, %v6281, %v6285
        %s6287 = scalar_lea.vmem %s1, 62
        %v6288 = vld [vmem:[%s6287] sm:$0x3]
        %v6289 = vunpack.c.l.b16 %v6276
        %v6290 = vunpack.c.l.b16 %v6286
        %v6291 = vpack.c.b16 %v6290, %v6289
        %v6293 = vsel %vm371, %v6291, 0
        %v6296 = vand.u32 %v6288, %v399
        %6298 = vmatprep.subr.bf16.mxu0 0
        %6299 = vmatpush1.bf16.msra.mxu0 %v6296
        %6300 = vmatprep.subr.bf16.mxu0 0
        %6301 = vmatpush1.bf16.msra.mxu0 0
        %6302 = vmatprep.subr.bf16.mxu0 0
        %6303 = vmatpush1.bf16.msra.mxu0 0
        %6304 = vmatprep.subr.bf16.mxu0 0
        %6305 = vmatpush1.bf16.msra.mxu0 0
        %6306 = vmatprep.subr.bf16.mxu0 0
        %6307 = vmatpush1.bf16.msra.mxu0 0
        %6308 = vmatprep.subr.bf16.mxu0 0
        %6309 = vmatpush1.bf16.msra.mxu0 0
        %6310 = vmatprep.subr.bf16.mxu0 0
        %6311 = vmatpush1.bf16.msra.mxu0 0
        %6312 = vmatprep.subr.bf16.mxu0 0
        %6313 = vmatpush1.bf16.msra.mxu0 0
        %6314 = vmatprep.subr.bf16.mxu0 0
        %6315 = vmatpush1.bf16.msra.mxu0 0
        %6316 = vmatprep.subr.bf16.mxu0 0
        %6317 = vmatpush1.bf16.msra.mxu0 0
        %6318 = vmatprep.subr.bf16.mxu0 0
        %6319 = vmatpush1.bf16.msra.mxu0 0
        %6320 = vmatprep.subr.bf16.mxu0 0
        %6321 = vmatpush1.bf16.msra.mxu0 0
        %6322 = vmatprep.subr.bf16.mxu0 0
        %6323 = vmatpush1.bf16.msra.mxu0 0
        %6324 = vmatprep.subr.bf16.mxu0 0
        %6325 = vmatpush1.bf16.msra.mxu0 0
        %6326 = vmatprep.subr.bf16.mxu0 0
        %6327 = vmatpush1.bf16.msra.mxu0 0
        %6328 = vmatprep.subr.bf16.mxu0 0
        %6329 = vmatpush1.bf16.msra.mxu0 0
        %6330 = vmatprep.mubr.bf16.mxu0 0
        %6331 = vmatmul.mubr.bf16.gmra.mrb[0].mxu0 %v1250
        %v6332 = vpop.f32.mrb[0].mxu0
        %v6333 = vadd.f32 0.0, %v6332
        %v6334 = vpop.f32.mrb[0].mxu0
        %v6335 = vpop.f32.mrb[0].mxu0
        %v6336 = vadd.f32 0.0, %v6335
        %v6337 = vpop.f32.mrb[0].mxu0
        %6338 = vmatprep.mubr.bf16.mxu0 0
        %6339 = vmatmul.mubr.bf16.gmra.mrb[0].mxu0 %v1253
        %v6340 = vpop.f32.mrb[0].mxu0
        %v6341 = vadd.f32 0.0, %v6340
        %v6342 = vpop.f32.mrb[0].mxu0
        %v6343 = vpop.f32.mrb[0].mxu0
        %v6344 = vadd.f32 0.0, %v6343
        %v6345 = vpop.f32.mrb[0].mxu0
        %6346 = vmatprep.mubr.bf16.mxu0 0
        %6347 = vmatmul.mubr.bf16.gmra.mrb[0].mxu0 %v1256
        %v6348 = vpop.f32.mrb[0].mxu0
        %v6349 = vadd.f32 0.0, %v6348
        %v6350 = vpop.f32.mrb[0].mxu0
        %v6351 = vpop.f32.mrb[0].mxu0
        %v6352 = vadd.f32 0.0, %v6351
        %v6353 = vpop.f32.mrb[0].mxu0
        %6354 = vmatprep.mubr.bf16.mxu0 0
        %6355 = vmatmul.mubr.bf16.gmra.mrb[0].mxu0 %v1259
        %v6356 = vpop.f32.mrb[0].mxu0
        %v6357 = vadd.f32 0.0, %v6356
        %v6358 = vpop.f32.mrb[0].mxu0
        %v6359 = vpop.f32.mrb[0].mxu0
        %v6360 = vadd.f32 0.0, %v6359
        %v6361 = vpop.f32.mrb[0].mxu0
        %6362 = vmatprep.mubr.bf16.mxu0 0
        %6363 = vmatmul.mubr.bf16.gmra.mrb[0].mxu0 %v1262
        %v6364 = vpop.f32.mrb[0].mxu0
        %v6365 = vadd.f32 0.0, %v6364
        %v6366 = vpop.f32.mrb[0].mxu0
        %v6367 = vpop.f32.mrb[0].mxu0
        %v6368 = vadd.f32 0.0, %v6367
        %v6369 = vpop.f32.mrb[0].mxu0
        %6370 = vmatprep.mubr.bf16.mxu0 0
        %6371 = vmatmul.mubr.bf16.gmra.mrb[0].mxu0 %v1265
        %v6372 = vpop.f32.mrb[0].mxu0
        %v6373 = vadd.f32 0.0, %v6372
        %v6374 = vpop.f32.mrb[0].mxu0
        %v6375 = vpop.f32.mrb[0].mxu0
        %v6376 = vadd.f32 0.0, %v6375
        %v6377 = vpop.f32.mrb[0].mxu0
        %6378 = vmatprep.mubr.bf16.mxu0 0
        %6379 = vmatmul.mubr.bf16.gmra.mrb[0].mxu0 %v4391
        %v6380 = vpop.f32.mrb[0].mxu0
        %v6381 = vadd.f32 0.0, %v6380
        %v6382 = vpop.f32.mrb[0].mxu0
        %v6383 = vpop.f32.mrb[0].mxu0
        %v6384 = vadd.f32 0.0, %v6383
        %v6385 = vpop.f32.mrb[0].mxu0
        %6386 = vmatprep.mubr.bf16.mxu0 0
        %6387 = vmatmul.mubr.bf16.gmra.mrb[0].mxu0 %v6293
        %v6388 = vpop.f32.mrb[0].mxu0
        %v6389 = vadd.f32 0.0, %v6388
        %v6390 = vpop.f32.mrb[0].mxu0
        %v6391 = vpop.f32.mrb[0].mxu0
        %v6392 = vadd.f32 0.0, %v6391
        %v6393 = vpop.f32.mrb[0].mxu0
        %6394 = vdwg.mxu0
        %v6395 = vadd.f32 %v6247, %v6333
        %v6396 = vadd.f32 %v6248, %v6336
        %v6397 = vadd.f32 %v6249, %v6341
        %v6398 = vadd.f32 %v6250, %v6344
        %v6399 = vadd.f32 %v6251, %v6349
        %v6400 = vadd.f32 %v6252, %v6352
        %v6401 = vadd.f32 %v6253, %v6357
        %v6402 = vadd.f32 %v6254, %v6360
        %v6403 = vadd.f32 %v6255, %v6365
        %v6404 = vadd.f32 %v6256, %v6368
        %v6405 = vadd.f32 %v6257, %v6373
        %v6406 = vadd.f32 %v6258, %v6376
        %v6407 = vadd.f32 %v6259, %v6381
        %v6408 = vadd.f32 %v6260, %v6384
        %v6409 = vadd.f32 %v6261, %v6389
        %v6410 = vadd.f32 %v6262, %v6392
        %v6412 = vrot.slane %v229, 5
        %v6413 = vrot.slane %v6412, 4
        %v6414 = vrot.slane %v230, 5
        %v6415 = vsel %vm1393, %v6413, %v6414
        %v6416 = vrot.slane %v6414, 4
        %v6417 = vrot.slane %v231, 5
        %v6418 = vsel %vm1393, %v6416, %v6417
        %s6419 = scalar_lea.vmem %s1, 64
        %v6420 = vld [vmem:[%s6419] sm:$0x3]
        %v6421 = vunpack.c.l.b16 %v6415
        %v6422 = vunpack.c.l.b16 %v6418
        %v6423 = vpack.c.b16 %v6422, %v6421
        %v6425 = vsel %vm371, %v6423, 0
        %v6428 = vand.u32 %v6420, %v399
        %6430 = vmatprep.subr.bf16.mxu0 0
        %6431 = vmatpush1.bf16.msra.mxu0 %v6428
        %6432 = vmatprep.subr.bf16.mxu0 0
        %6433 = vmatpush1.bf16.msra.mxu0 0
        %6434 = vmatprep.subr.bf16.mxu0 0
        %6435 = vmatpush1.bf16.msra.mxu0 0
        %6436 = vmatprep.subr.bf16.mxu0 0
        %6437 = vmatpush1.bf16.msra.mxu0 0
        %6438 = vmatprep.subr.bf16.mxu0 0
        %6439 = vmatpush1.bf16.msra.mxu0 0
        %6440 = vmatprep.subr.bf16.mxu0 0
        %6441 = vmatpush1.bf16.msra.mxu0 0
        %6442 = vmatprep.subr.bf16.mxu0 0
        %6443 = vmatpush1.bf16.msra.mxu0 0
        %6444 = vmatprep.subr.bf16.mxu0 0
        %6445 = vmatpush1.bf16.msra.mxu0 0
        %6446 = vmatprep.subr.bf16.mxu0 0
        %6447 = vmatpush1.bf16.msra.mxu0 0
        %6448 = vmatprep.subr.bf16.mxu0 0
        %6449 = vmatpush1.bf16.msra.mxu0 0
        %6450 = vmatprep.subr.bf16.mxu0 0
        %6451 = vmatpush1.bf16.msra.mxu0 0
        %6452 = vmatprep.subr.bf16.mxu0 0
        %6453 = vmatpush1.bf16.msra.mxu0 0
        %6454 = vmatprep.subr.bf16.mxu0 0
        %6455 = vmatpush1.bf16.msra.mxu0 0
        %6456 = vmatprep.subr.bf16.mxu0 0
        %6457 = vmatpush1.bf16.msra.mxu0 0
        %6458 = vmatprep.subr.bf16.mxu0 0
        %6459 = vmatpush1.bf16.msra.mxu0 0
        %6460 = vmatprep.subr.bf16.mxu0 0
        %6461 = vmatpush1.bf16.msra.mxu0 0
        %6462 = vmatprep.mubr.bf16.mxu0 0
        %6463 = vmatmul.mubr.bf16.gmra.mrb[0].mxu0 %v1483
        %v6464 = vpop.f32.mrb[0].mxu0
        %v6465 = vadd.f32 0.0, %v6464
        %v6466 = vpop.f32.mrb[0].mxu0
        %v6467 = vpop.f32.mrb[0].mxu0
        %v6468 = vadd.f32 0.0, %v6467
        %v6469 = vpop.f32.mrb[0].mxu0
        %6470 = vmatprep.mubr.bf16.mxu0 0
        %6471 = vmatmul.mubr.bf16.gmra.mrb[0].mxu0 %v1486
        %v6472 = vpop.f32.mrb[0].mxu0
        %v6473 = vadd.f32 0.0, %v6472
        %v6474 = vpop.f32.mrb[0].mxu0
        %v6475 = vpop.f32.mrb[0].mxu0
        %v6476 = vadd.f32 0.0, %v6475
        %v6477 = vpop.f32.mrb[0].mxu0
        %6478 = vmatprep.mubr.bf16.mxu0 0
        %6479 = vmatmul.mubr.bf16.gmra.mrb[0].mxu0 %v1489
        %v6480 = vpop.f32.mrb[0].mxu0
        %v6481 = vadd.f32 0.0, %v6480
        %v6482 = vpop.f32.mrb[0].mxu0
        %v6483 = vpop.f32.mrb[0].mxu0
        %v6484 = vadd.f32 0.0, %v6483
        %v6485 = vpop.f32.mrb[0].mxu0
        %6486 = vmatprep.mubr.bf16.mxu0 0
        %6487 = vmatmul.mubr.bf16.gmra.mrb[0].mxu0 %v1492
        %v6488 = vpop.f32.mrb[0].mxu0
        %v6489 = vadd.f32 0.0, %v6488
        %v6490 = vpop.f32.mrb[0].mxu0
        %v6491 = vpop.f32.mrb[0].mxu0
        %v6492 = vadd.f32 0.0, %v6491
        %v6493 = vpop.f32.mrb[0].mxu0
        %6494 = vmatprep.mubr.bf16.mxu0 0
        %6495 = vmatmul.mubr.bf16.gmra.mrb[0].mxu0 %v1495
        %v6496 = vpop.f32.mrb[0].mxu0
        %v6497 = vadd.f32 0.0, %v6496
        %v6498 = vpop.f32.mrb[0].mxu0
        %v6499 = vpop.f32.mrb[0].mxu0
        %v6500 = vadd.f32 0.0, %v6499
        %v6501 = vpop.f32.mrb[0].mxu0
        %6502 = vmatprep.mubr.bf16.mxu0 0
        %6503 = vmatmul.mubr.bf16.gmra.mrb[0].mxu0 %v1498
        %v6504 = vpop.f32.mrb[0].mxu0
        %v6505 = vadd.f32 0.0, %v6504
        %v6506 = vpop.f32.mrb[0].mxu0
        %v6507 = vpop.f32.mrb[0].mxu0
        %v6508 = vadd.f32 0.0, %v6507
        %v6509 = vpop.f32.mrb[0].mxu0
        %6510 = vmatprep.mubr.bf16.mxu0 0
        %6511 = vmatmul.mubr.bf16.gmra.mrb[0].mxu0 %v4523
        %v6512 = vpop.f32.mrb[0].mxu0
        %v6513 = vadd.f32 0.0, %v6512
        %v6514 = vpop.f32.mrb[0].mxu0
        %v6515 = vpop.f32.mrb[0].mxu0
        %v6516 = vadd.f32 0.0, %v6515
        %v6517 = vpop.f32.mrb[0].mxu0
        %6518 = vmatprep.mubr.bf16.mxu0 0
        %6519 = vmatmul.mubr.bf16.gmra.mrb[0].mxu0 %v6425
        %v6520 = vpop.f32.mrb[0].mxu0
        %v6521 = vadd.f32 0.0, %v6520
        %v6522 = vpop.f32.mrb[0].mxu0
        %v6523 = vpop.f32.mrb[0].mxu0
        %v6524 = vadd.f32 0.0, %v6523
        %v6525 = vpop.f32.mrb[0].mxu0
        %6526 = vdwg.mxu0
        %v6527 = vadd.f32 %v6395, %v6465
        %v6528 = vadd.f32 %v6396, %v6468
        %v6529 = vadd.f32 %v6397, %v6473
        %v6530 = vadd.f32 %v6398, %v6476
        %v6531 = vadd.f32 %v6399, %v6481
        %v6532 = vadd.f32 %v6400, %v6484
        %v6533 = vadd.f32 %v6401, %v6489
        %v6534 = vadd.f32 %v6402, %v6492
        %v6535 = vadd.f32 %v6403, %v6497
        %v6536 = vadd.f32 %v6404, %v6500
        %v6537 = vadd.f32 %v6405, %v6505
        %v6538 = vadd.f32 %v6406, %v6508
        %v6539 = vadd.f32 %v6407, %v6513
        %v6540 = vadd.f32 %v6408, %v6516
        %v6541 = vadd.f32 %v6409, %v6521
        %v6542 = vadd.f32 %v6410, %v6524
        %v6544 = vrot.slane %v262, 5
        %v6545 = vrot.slane %v6544, 4
        %v6546 = vrot.slane %v263, 5
        %v6547 = vsel %vm1393, %v6545, %v6546
        %v6548 = vrot.slane %v6546, 4
        %v6549 = vrot.slane %v264, 5
        %v6550 = vsel %vm1393, %v6548, %v6549
        %s6551 = scalar_lea.vmem %s1, 66
        %v6552 = vld [vmem:[%s6551] sm:$0x3]
        %v6553 = vunpack.c.l.b16 %v6547
        %v6554 = vunpack.c.l.b16 %v6550
        %v6555 = vpack.c.b16 %v6554, %v6553
        %v6557 = vsel %vm371, %v6555, 0
        %v6560 = vand.u32 %v6552, %v399
        %6562 = vmatprep.subr.bf16.mxu0 0
        %6563 = vmatpush1.bf16.msra.mxu0 %v6560
        %6564 = vmatprep.subr.bf16.mxu0 0
        %6565 = vmatpush1.bf16.msra.mxu0 0
        %6566 = vmatprep.subr.bf16.mxu0 0
        %6567 = vmatpush1.bf16.msra.mxu0 0
        %6568 = vmatprep.subr.bf16.mxu0 0
        %6569 = vmatpush1.bf16.msra.mxu0 0
        %6570 = vmatprep.subr.bf16.mxu0 0
        %6571 = vmatpush1.bf16.msra.mxu0 0
        %6572 = vmatprep.subr.bf16.mxu0 0
        %6573 = vmatpush1.bf16.msra.mxu0 0
        %6574 = vmatprep.subr.bf16.mxu0 0
        %6575 = vmatpush1.bf16.msra.mxu0 0
        %6576 = vmatprep.subr.bf16.mxu0 0
        %6577 = vmatpush1.bf16.msra.mxu0 0
        %6578 = vmatprep.subr.bf16.mxu0 0
        %6579 = vmatpush1.bf16.msra.mxu0 0
        %6580 = vmatprep.subr.bf16.mxu0 0
        %6581 = vmatpush1.bf16.msra.mxu0 0
        %6582 = vmatprep.subr.bf16.mxu0 0
        %6583 = vmatpush1.bf16.msra.mxu0 0
        %6584 = vmatprep.subr.bf16.mxu0 0
        %6585 = vmatpush1.bf16.msra.mxu0 0
        %6586 = vmatprep.subr.bf16.mxu0 0
        %6587 = vmatpush1.bf16.msra.mxu0 0
        %6588 = vmatprep.subr.bf16.mxu0 0
        %6589 = vmatpush1.bf16.msra.mxu0 0
        %6590 = vmatprep.subr.bf16.mxu0 0
        %6591 = vmatpush1.bf16.msra.mxu0 0
        %6592 = vmatprep.subr.bf16.mxu0 0
        %6593 = vmatpush1.bf16.msra.mxu0 0
        %6594 = vmatprep.mubr.bf16.mxu0 0
        %6595 = vmatmul.mubr.bf16.gmra.mrb[0].mxu0 %v1713
        %v6596 = vpop.f32.mrb[0].mxu0
        %v6597 = vadd.f32 0.0, %v6596
        %v6598 = vpop.f32.mrb[0].mxu0
        %v6599 = vpop.f32.mrb[0].mxu0
        %v6600 = vadd.f32 0.0, %v6599
        %v6601 = vpop.f32.mrb[0].mxu0
        %6602 = vmatprep.mubr.bf16.mxu0 0
        %6603 = vmatmul.mubr.bf16.gmra.mrb[0].mxu0 %v1716
        %v6604 = vpop.f32.mrb[0].mxu0
        %v6605 = vadd.f32 0.0, %v6604
        %v6606 = vpop.f32.mrb[0].mxu0
        %v6607 = vpop.f32.mrb[0].mxu0
        %v6608 = vadd.f32 0.0, %v6607
        %v6609 = vpop.f32.mrb[0].mxu0
        %6610 = vmatprep.mubr.bf16.mxu0 0
        %6611 = vmatmul.mubr.bf16.gmra.mrb[0].mxu0 %v1719
        %v6612 = vpop.f32.mrb[0].mxu0
        %v6613 = vadd.f32 0.0, %v6612
        %v6614 = vpop.f32.mrb[0].mxu0
        %v6615 = vpop.f32.mrb[0].mxu0
        %v6616 = vadd.f32 0.0, %v6615
        %v6617 = vpop.f32.mrb[0].mxu0
        %6618 = vmatprep.mubr.bf16.mxu0 0
        %6619 = vmatmul.mubr.bf16.gmra.mrb[0].mxu0 %v1722
        %v6620 = vpop.f32.mrb[0].mxu0
        %v6621 = vadd.f32 0.0, %v6620
        %v6622 = vpop.f32.mrb[0].mxu0
        %v6623 = vpop.f32.mrb[0].mxu0
        %v6624 = vadd.f32 0.0, %v6623
        %v6625 = vpop.f32.mrb[0].mxu0
        %6626 = vmatprep.mubr.bf16.mxu0 0
        %6627 = vmatmul.mubr.bf16.gmra.mrb[0].mxu0 %v1725
        %v6628 = vpop.f32.mrb[0].mxu0
        %v6629 = vadd.f32 0.0, %v6628
        %v6630 = vpop.f32.mrb[0].mxu0
        %v6631 = vpop.f32.mrb[0].mxu0
        %v6632 = vadd.f32 0.0, %v6631
        %v6633 = vpop.f32.mrb[0].mxu0
        %6634 = vmatprep.mubr.bf16.mxu0 0
        %6635 = vmatmul.mubr.bf16.gmra.mrb[0].mxu0 %v1728
        %v6636 = vpop.f32.mrb[0].mxu0
        %v6637 = vadd.f32 0.0, %v6636
        %v6638 = vpop.f32.mrb[0].mxu0
        %v6639 = vpop.f32.mrb[0].mxu0
        %v6640 = vadd.f32 0.0, %v6639
        %v6641 = vpop.f32.mrb[0].mxu0
        %6642 = vmatprep.mubr.bf16.mxu0 0
        %6643 = vmatmul.mubr.bf16.gmra.mrb[0].mxu0 %v4655
        %v6644 = vpop.f32.mrb[0].mxu0
        %v6645 = vadd.f32 0.0, %v6644
        %v6646 = vpop.f32.mrb[0].mxu0
        %v6647 = vpop.f32.mrb[0].mxu0
        %v6648 = vadd.f32 0.0, %v6647
        %v6649 = vpop.f32.mrb[0].mxu0
        %6650 = vmatprep.mubr.bf16.mxu0 0
        %6651 = vmatmul.mubr.bf16.gmra.mrb[0].mxu0 %v6557
        %v6652 = vpop.f32.mrb[0].mxu0
        %v6653 = vadd.f32 0.0, %v6652
        %v6654 = vpop.f32.mrb[0].mxu0
        %v6655 = vpop.f32.mrb[0].mxu0
        %v6656 = vadd.f32 0.0, %v6655
        %v6657 = vpop.f32.mrb[0].mxu0
        %6658 = vdwg.mxu0
        %v6659 = vadd.f32 %v6527, %v6597
        %v6660 = vadd.f32 %v6528, %v6600
        %v6661 = vadd.f32 %v6529, %v6605
        %v6662 = vadd.f32 %v6530, %v6608
        %v6663 = vadd.f32 %v6531, %v6613
        %v6664 = vadd.f32 %v6532, %v6616
        %v6665 = vadd.f32 %v6533, %v6621
        %v6666 = vadd.f32 %v6534, %v6624
        %v6667 = vadd.f32 %v6535, %v6629
        %v6668 = vadd.f32 %v6536, %v6632
        %v6669 = vadd.f32 %v6537, %v6637
        %v6670 = vadd.f32 %v6538, %v6640
        %v6671 = vadd.f32 %v6539, %v6645
        %v6672 = vadd.f32 %v6540, %v6648
        %v6673 = vadd.f32 %v6541, %v6653
        %v6674 = vadd.f32 %v6542, %v6656
        %v6675 = vrot.slane %v6116, 5
        %v6676 = vrot.slane %v6119, 6
        %v6677 = vor.u32 %v6675, %v6676
        %v6678 = vrot.slane %v6677, 4
        %v6679 = vrot.slane %v6129, 5
        %v6680 = vrot.slane %v6125, 6
        %v6681 = vor.u32 %v6679, %v6680
        %v6682 = vsel %vm1848, %v6678, %v6681
        %v6683 = vrot.slane %v6681, 4
        %v6684 = vshrl.u32 %v231, 16
        %v6686 = vrot.slane %v6684, 5
        %v6687 = vrot.slane %v6135, 6
        %v6688 = vor.u32 %v6686, %v6687
        %v6689 = vsel %vm1848, %v6683, %v6688
        %s6690 = scalar_lea.vmem %s1, 68
        %v6691 = vld [vmem:[%s6690] sm:$0x3]
        %v6692 = vunpack.c.l.b16 %v6682
        %v6693 = vunpack.c.l.b16 %v6689
        %v6694 = vpack.c.b16 %v6693, %v6692
        %v6696 = vsel %vm371, %v6694, 0
        %v6699 = vand.u32 %v6691, %v399
        %6701 = vmatprep.subr.bf16.mxu0 0
        %6702 = vmatpush1.bf16.msra.mxu0 %v6699
        %6703 = vmatprep.subr.bf16.mxu0 0
        %6704 = vmatpush1.bf16.msra.mxu0 0
        %6705 = vmatprep.subr.bf16.mxu0 0
        %6706 = vmatpush1.bf16.msra.mxu0 0
        %6707 = vmatprep.subr.bf16.mxu0 0
        %6708 = vmatpush1.bf16.msra.mxu0 0
        %6709 = vmatprep.subr.bf16.mxu0 0
        %6710 = vmatpush1.bf16.msra.mxu0 0
        %6711 = vmatprep.subr.bf16.mxu0 0
        %6712 = vmatpush1.bf16.msra.mxu0 0
        %6713 = vmatprep.subr.bf16.mxu0 0
        %6714 = vmatpush1.bf16.msra.mxu0 0
        %6715 = vmatprep.subr.bf16.mxu0 0
        %6716 = vmatpush1.bf16.msra.mxu0 0
        %6717 = vmatprep.subr.bf16.mxu0 0
        %6718 = vmatpush1.bf16.msra.mxu0 0
        %6719 = vmatprep.subr.bf16.mxu0 0
        %6720 = vmatpush1.bf16.msra.mxu0 0
        %6721 = vmatprep.subr.bf16.mxu0 0
        %6722 = vmatpush1.bf16.msra.mxu0 0
        %6723 = vmatprep.subr.bf16.mxu0 0
        %6724 = vmatpush1.bf16.msra.mxu0 0
        %6725 = vmatprep.subr.bf16.mxu0 0
        %6726 = vmatpush1.bf16.msra.mxu0 0
        %6727 = vmatprep.subr.bf16.mxu0 0
        %6728 = vmatpush1.bf16.msra.mxu0 0
        %6729 = vmatprep.subr.bf16.mxu0 0
        %6730 = vmatpush1.bf16.msra.mxu0 0
        %6731 = vmatprep.subr.bf16.mxu0 0
        %6732 = vmatpush1.bf16.msra.mxu0 0
        %6733 = vmatprep.mubr.bf16.mxu0 0
        %6734 = vmatmul.mubr.bf16.gmra.mrb[0].mxu0 %v2002
        %v6735 = vpop.f32.mrb[0].mxu0
        %v6736 = vadd.f32 0.0, %v6735
        %v6737 = vpop.f32.mrb[0].mxu0
        %v6738 = vpop.f32.mrb[0].mxu0
        %v6739 = vadd.f32 0.0, %v6738
        %v6740 = vpop.f32.mrb[0].mxu0
        %6741 = vmatprep.mubr.bf16.mxu0 0
        %6742 = vmatmul.mubr.bf16.gmra.mrb[0].mxu0 %v2005
        %v6743 = vpop.f32.mrb[0].mxu0
        %v6744 = vadd.f32 0.0, %v6743
        %v6745 = vpop.f32.mrb[0].mxu0
        %v6746 = vpop.f32.mrb[0].mxu0
        %v6747 = vadd.f32 0.0, %v6746
        %v6748 = vpop.f32.mrb[0].mxu0
        %6749 = vmatprep.mubr.bf16.mxu0 0
        %6750 = vmatmul.mubr.bf16.gmra.mrb[0].mxu0 %v2008
        %v6751 = vpop.f32.mrb[0].mxu0
        %v6752 = vadd.f32 0.0, %v6751
        %v6753 = vpop.f32.mrb[0].mxu0
        %v6754 = vpop.f32.mrb[0].mxu0
        %v6755 = vadd.f32 0.0, %v6754
        %v6756 = vpop.f32.mrb[0].mxu0
        %6757 = vmatprep.mubr.bf16.mxu0 0
        %6758 = vmatmul.mubr.bf16.gmra.mrb[0].mxu0 %v2011
        %v6759 = vpop.f32.mrb[0].mxu0
        %v6760 = vadd.f32 0.0, %v6759
        %v6761 = vpop.f32.mrb[0].mxu0
        %v6762 = vpop.f32.mrb[0].mxu0
        %v6763 = vadd.f32 0.0, %v6762
        %v6764 = vpop.f32.mrb[0].mxu0
        %6765 = vmatprep.mubr.bf16.mxu0 0
        %6766 = vmatmul.mubr.bf16.gmra.mrb[0].mxu0 %v2014
        %v6767 = vpop.f32.mrb[0].mxu0
        %v6768 = vadd.f32 0.0, %v6767
        %v6769 = vpop.f32.mrb[0].mxu0
        %v6770 = vpop.f32.mrb[0].mxu0
        %v6771 = vadd.f32 0.0, %v6770
        %v6772 = vpop.f32.mrb[0].mxu0
        %6773 = vmatprep.mubr.bf16.mxu0 0
        %6774 = vmatmul.mubr.bf16.gmra.mrb[0].mxu0 %v2017
        %v6775 = vpop.f32.mrb[0].mxu0
        %v6776 = vadd.f32 0.0, %v6775
        %v6777 = vpop.f32.mrb[0].mxu0
        %v6778 = vpop.f32.mrb[0].mxu0
        %v6779 = vadd.f32 0.0, %v6778
        %v6780 = vpop.f32.mrb[0].mxu0
        %6781 = vmatprep.mubr.bf16.mxu0 0
        %6782 = vmatmul.mubr.bf16.gmra.mrb[0].mxu0 %v4794
        %v6783 = vpop.f32.mrb[0].mxu0
        %v6784 = vadd.f32 0.0, %v6783
        %v6785 = vpop.f32.mrb[0].mxu0
        %v6786 = vpop.f32.mrb[0].mxu0
        %v6787 = vadd.f32 0.0, %v6786
        %v6788 = vpop.f32.mrb[0].mxu0
        %6789 = vmatprep.mubr.bf16.mxu0 0
        %6790 = vmatmul.mubr.bf16.gmra.mrb[0].mxu0 %v6696
        %v6791 = vpop.f32.mrb[0].mxu0
        %v6792 = vadd.f32 0.0, %v6791
        %v6793 = vpop.f32.mrb[0].mxu0
        %v6794 = vpop.f32.mrb[0].mxu0
        %v6795 = vadd.f32 0.0, %v6794
        %v6796 = vpop.f32.mrb[0].mxu0
        %6797 = vdwg.mxu0
        %v6798 = vadd.f32 %v6659, %v6736
        %v6799 = vadd.f32 %v6660, %v6739
        %v6800 = vadd.f32 %v6661, %v6744
        %v6801 = vadd.f32 %v6662, %v6747
        %v6802 = vadd.f32 %v6663, %v6752
        %v6803 = vadd.f32 %v6664, %v6755
        %v6804 = vadd.f32 %v6665, %v6760
        %v6805 = vadd.f32 %v6666, %v6763
        %v6806 = vadd.f32 %v6667, %v6768
        %v6807 = vadd.f32 %v6668, %v6771
        %v6808 = vadd.f32 %v6669, %v6776
        %v6809 = vadd.f32 %v6670, %v6779
        %v6810 = vadd.f32 %v6671, %v6784
        %v6811 = vadd.f32 %v6672, %v6787
        %v6812 = vadd.f32 %v6673, %v6792
        %v6813 = vadd.f32 %v6674, %v6795
        %s6814 = scalar_lea.vmem %s1, 70
        %v6815 = vld [vmem:[%s6814] sm:$0x3]
        %v6818 = vunpack.c.l.b16 %v295
        %v6819 = vunpack.c.l.b16 %v296
        %v6820 = vpack.c.b16 %v6819, %v6818
        %v6822 = vsel %vm371, %v6820, 0
        %v6825 = vand.u32 %v6815, %v399
        %6827 = vmatprep.subr.bf16.mxu0 0
        %6828 = vmatpush1.bf16.msra.mxu0 %v6825
        %6829 = vmatprep.subr.bf16.mxu0 0
        %6830 = vmatpush1.bf16.msra.mxu0 0
        %6831 = vmatprep.subr.bf16.mxu0 0
        %6832 = vmatpush1.bf16.msra.mxu0 0
        %6833 = vmatprep.subr.bf16.mxu0 0
        %6834 = vmatpush1.bf16.msra.mxu0 0
        %6835 = vmatprep.subr.bf16.mxu0 0
        %6836 = vmatpush1.bf16.msra.mxu0 0
        %6837 = vmatprep.subr.bf16.mxu0 0
        %6838 = vmatpush1.bf16.msra.mxu0 0
        %6839 = vmatprep.subr.bf16.mxu0 0
        %6840 = vmatpush1.bf16.msra.mxu0 0
        %6841 = vmatprep.subr.bf16.mxu0 0
        %6842 = vmatpush1.bf16.msra.mxu0 0
        %6843 = vmatprep.subr.bf16.mxu0 0
        %6844 = vmatpush1.bf16.msra.mxu0 0
        %6845 = vmatprep.subr.bf16.mxu0 0
        %6846 = vmatpush1.bf16.msra.mxu0 0
        %6847 = vmatprep.subr.bf16.mxu0 0
        %6848 = vmatpush1.bf16.msra.mxu0 0
        %6849 = vmatprep.subr.bf16.mxu0 0
        %6850 = vmatpush1.bf16.msra.mxu0 0
        %6851 = vmatprep.subr.bf16.mxu0 0
        %6852 = vmatpush1.bf16.msra.mxu0 0
        %6853 = vmatprep.subr.bf16.mxu0 0
        %6854 = vmatpush1.bf16.msra.mxu0 0
        %6855 = vmatprep.subr.bf16.mxu0 0
        %6856 = vmatpush1.bf16.msra.mxu0 0
        %6857 = vmatprep.subr.bf16.mxu0 0
        %6858 = vmatpush1.bf16.msra.mxu0 0
        %6859 = vmatprep.mubr.bf16.mxu0 0
        %6860 = vmatmul.mubr.bf16.gmra.mrb[0].mxu0 %v2184
        %v6861 = vpop.f32.mrb[0].mxu0
        %v6862 = vadd.f32 0.0, %v6861
        %v6863 = vpop.f32.mrb[0].mxu0
        %v6864 = vpop.f32.mrb[0].mxu0
        %v6865 = vadd.f32 0.0, %v6864
        %v6866 = vpop.f32.mrb[0].mxu0
        %6867 = vmatprep.mubr.bf16.mxu0 0
        %6868 = vmatmul.mubr.bf16.gmra.mrb[0].mxu0 %v2187
        %v6869 = vpop.f32.mrb[0].mxu0
        %v6870 = vadd.f32 0.0, %v6869
        %v6871 = vpop.f32.mrb[0].mxu0
        %v6872 = vpop.f32.mrb[0].mxu0
        %v6873 = vadd.f32 0.0, %v6872
        %v6874 = vpop.f32.mrb[0].mxu0
        %6875 = vmatprep.mubr.bf16.mxu0 0
        %6876 = vmatmul.mubr.bf16.gmra.mrb[0].mxu0 %v2190
        %v6877 = vpop.f32.mrb[0].mxu0
        %v6878 = vadd.f32 0.0, %v6877
        %v6879 = vpop.f32.mrb[0].mxu0
        %v6880 = vpop.f32.mrb[0].mxu0
        %v6881 = vadd.f32 0.0, %v6880
        %v6882 = vpop.f32.mrb[0].mxu0
        %6883 = vmatprep.mubr.bf16.mxu0 0
        %6884 = vmatmul.mubr.bf16.gmra.mrb[0].mxu0 %v2193
        %v6885 = vpop.f32.mrb[0].mxu0
        %v6886 = vadd.f32 0.0, %v6885
        %v6887 = vpop.f32.mrb[0].mxu0
        %v6888 = vpop.f32.mrb[0].mxu0
        %v6889 = vadd.f32 0.0, %v6888
        %v6890 = vpop.f32.mrb[0].mxu0
        %6891 = vmatprep.mubr.bf16.mxu0 0
        %6892 = vmatmul.mubr.bf16.gmra.mrb[0].mxu0 %v2196
        %v6893 = vpop.f32.mrb[0].mxu0
        %v6894 = vadd.f32 0.0, %v6893
        %v6895 = vpop.f32.mrb[0].mxu0
        %v6896 = vpop.f32.mrb[0].mxu0
        %v6897 = vadd.f32 0.0, %v6896
        %v6898 = vpop.f32.mrb[0].mxu0
        %6899 = vmatprep.mubr.bf16.mxu0 0
        %6900 = vmatmul.mubr.bf16.gmra.mrb[0].mxu0 %v2199
        %v6901 = vpop.f32.mrb[0].mxu0
        %v6902 = vadd.f32 0.0, %v6901
        %v6903 = vpop.f32.mrb[0].mxu0
        %v6904 = vpop.f32.mrb[0].mxu0
        %v6905 = vadd.f32 0.0, %v6904
        %v6906 = vpop.f32.mrb[0].mxu0
        %6907 = vmatprep.mubr.bf16.mxu0 0
        %6908 = vmatmul.mubr.bf16.gmra.mrb[0].mxu0 %v4920
        %v6909 = vpop.f32.mrb[0].mxu0
        %v6910 = vadd.f32 0.0, %v6909
        %v6911 = vpop.f32.mrb[0].mxu0
        %v6912 = vpop.f32.mrb[0].mxu0
        %v6913 = vadd.f32 0.0, %v6912
        %v6914 = vpop.f32.mrb[0].mxu0
        %6915 = vmatprep.mubr.bf16.mxu0 0
        %6916 = vmatmul.mubr.bf16.gmra.mrb[0].mxu0 %v6822
        %v6917 = vpop.f32.mrb[0].mxu0
        %v6918 = vadd.f32 0.0, %v6917
        %v6919 = vpop.f32.mrb[0].mxu0
        %v6920 = vpop.f32.mrb[0].mxu0
        %v6921 = vadd.f32 0.0, %v6920
        %v6922 = vpop.f32.mrb[0].mxu0
        %6923 = vdwg.mxu0
        %v6924 = vadd.f32 %v6798, %v6862
        %v6925 = vadd.f32 %v6799, %v6865
        %v6926 = vadd.f32 %v6800, %v6870
        %v6927 = vadd.f32 %v6801, %v6873
        %v6928 = vadd.f32 %v6802, %v6878
        %v6929 = vadd.f32 %v6803, %v6881
        %v6930 = vadd.f32 %v6804, %v6886
        %v6931 = vadd.f32 %v6805, %v6889
        %v6932 = vadd.f32 %v6806, %v6894
        %v6933 = vadd.f32 %v6807, %v6897
        %v6934 = vadd.f32 %v6808, %v6902
        %v6935 = vadd.f32 %v6809, %v6905
        %v6936 = vadd.f32 %v6810, %v6910
        %v6937 = vadd.f32 %v6811, %v6913
        %v6938 = vadd.f32 %v6812, %v6918
        %v6939 = vadd.f32 %v6813, %v6921
        %s6940 = scalar_lea.vmem %s1, 72
        %v6941 = vld [vmem:[%s6940] sm:$0x3]
        %v6944 = vunpack.c.l.b16 %v325
        %v6945 = vunpack.c.l.b16 %v326
        %v6946 = vpack.c.b16 %v6945, %v6944
        %v6948 = vsel %vm371, %v6946, 0
        %v6951 = vand.u32 %v6941, %v399
        %6953 = vmatprep.subr.bf16.mxu0 0
        %6954 = vmatpush1.bf16.msra.mxu0 %v6951
        %6955 = vmatprep.subr.bf16.mxu0 0
        %6956 = vmatpush1.bf16.msra.mxu0 0
        %6957 = vmatprep.subr.bf16.mxu0 0
        %6958 = vmatpush1.bf16.msra.mxu0 0
        %6959 = vmatprep.subr.bf16.mxu0 0
        %6960 = vmatpush1.bf16.msra.mxu0 0
        %6961 = vmatprep.subr.bf16.mxu0 0
        %6962 = vmatpush1.bf16.msra.mxu0 0
        %6963 = vmatprep.subr.bf16.mxu0 0
        %6964 = vmatpush1.bf16.msra.mxu0 0
        %6965 = vmatprep.subr.bf16.mxu0 0
        %6966 = vmatpush1.bf16.msra.mxu0 0
        %6967 = vmatprep.subr.bf16.mxu0 0
        %6968 = vmatpush1.bf16.msra.mxu0 0
        %6969 = vmatprep.subr.bf16.mxu0 0
        %6970 = vmatpush1.bf16.msra.mxu0 0
        %6971 = vmatprep.subr.bf16.mxu0 0
        %6972 = vmatpush1.bf16.msra.mxu0 0
        %6973 = vmatprep.subr.bf16.mxu0 0
        %6974 = vmatpush1.bf16.msra.mxu0 0
        %6975 = vmatprep.subr.bf16.mxu0 0
        %6976 = vmatpush1.bf16.msra.mxu0 0
        %6977 = vmatprep.subr.bf16.mxu0 0
        %6978 = vmatpush1.bf16.msra.mxu0 0
        %6979 = vmatprep.subr.bf16.mxu0 0
        %6980 = vmatpush1.bf16.msra.mxu0 0
        %6981 = vmatprep.subr.bf16.mxu0 0
        %6982 = vmatpush1.bf16.msra.mxu0 0
        %6983 = vmatprep.subr.bf16.mxu0 0
        %6984 = vmatpush1.bf16.msra.mxu0 0
        %6985 = vmatprep.mubr.bf16.mxu0 0
        %6986 = vmatmul.mubr.bf16.gmra.mrb[0].mxu0 %v2366
        %v6987 = vpop.f32.mrb[0].mxu0
        %v6988 = vadd.f32 0.0, %v6987
        %v6989 = vpop.f32.mrb[0].mxu0
        %v6990 = vpop.f32.mrb[0].mxu0
        %v6991 = vadd.f32 0.0, %v6990
        %v6992 = vpop.f32.mrb[0].mxu0
        %6993 = vmatprep.mubr.bf16.mxu0 0
        %6994 = vmatmul.mubr.bf16.gmra.mrb[0].mxu0 %v2369
        %v6995 = vpop.f32.mrb[0].mxu0
        %v6996 = vadd.f32 0.0, %v6995
        %v6997 = vpop.f32.mrb[0].mxu0
        %v6998 = vpop.f32.mrb[0].mxu0
        %v6999 = vadd.f32 0.0, %v6998
        %v7000 = vpop.f32.mrb[0].mxu0
        %7001 = vmatprep.mubr.bf16.mxu0 0
        %7002 = vmatmul.mubr.bf16.gmra.mrb[0].mxu0 %v2372
        %v7003 = vpop.f32.mrb[0].mxu0
        %v7004 = vadd.f32 0.0, %v7003
        %v7005 = vpop.f32.mrb[0].mxu0
        %v7006 = vpop.f32.mrb[0].mxu0
        %v7007 = vadd.f32 0.0, %v7006
        %v7008 = vpop.f32.mrb[0].mxu0
        %7009 = vmatprep.mubr.bf16.mxu0 0
        %7010 = vmatmul.mubr.bf16.gmra.mrb[0].mxu0 %v2375
        %v7011 = vpop.f32.mrb[0].mxu0
        %v7012 = vadd.f32 0.0, %v7011
        %v7013 = vpop.f32.mrb[0].mxu0
        %v7014 = vpop.f32.mrb[0].mxu0
        %v7015 = vadd.f32 0.0, %v7014
        %v7016 = vpop.f32.mrb[0].mxu0
        %7017 = vmatprep.mubr.bf16.mxu0 0
        %7018 = vmatmul.mubr.bf16.gmra.mrb[0].mxu0 %v2378
        %v7019 = vpop.f32.mrb[0].mxu0
        %v7020 = vadd.f32 0.0, %v7019
        %v7021 = vpop.f32.mrb[0].mxu0
        %v7022 = vpop.f32.mrb[0].mxu0
        %v7023 = vadd.f32 0.0, %v7022
        %v7024 = vpop.f32.mrb[0].mxu0
        %7025 = vmatprep.mubr.bf16.mxu0 0
        %7026 = vmatmul.mubr.bf16.gmra.mrb[0].mxu0 %v2381
        %v7027 = vpop.f32.mrb[0].mxu0
        %v7028 = vadd.f32 0.0, %v7027
        %v7029 = vpop.f32.mrb[0].mxu0
        %v7030 = vpop.f32.mrb[0].mxu0
        %v7031 = vadd.f32 0.0, %v7030
        %v7032 = vpop.f32.mrb[0].mxu0
        %7033 = vmatprep.mubr.bf16.mxu0 0
        %7034 = vmatmul.mubr.bf16.gmra.mrb[0].mxu0 %v5046
        %v7035 = vpop.f32.mrb[0].mxu0
        %v7036 = vadd.f32 0.0, %v7035
        %v7037 = vpop.f32.mrb[0].mxu0
        %v7038 = vpop.f32.mrb[0].mxu0
        %v7039 = vadd.f32 0.0, %v7038
        %v7040 = vpop.f32.mrb[0].mxu0
        %7041 = vmatprep.mubr.bf16.mxu0 0
        %7042 = vmatmul.mubr.bf16.gmra.mrb[0].mxu0 %v6948
        %v7043 = vpop.f32.mrb[0].mxu0
        %v7044 = vadd.f32 0.0, %v7043
        %v7045 = vpop.f32.mrb[0].mxu0
        %v7046 = vpop.f32.mrb[0].mxu0
        %v7047 = vadd.f32 0.0, %v7046
        %v7048 = vpop.f32.mrb[0].mxu0
        %7049 = vdwg.mxu0
        %v7050 = vadd.f32 %v6924, %v6988
        %v7051 = vadd.f32 %v6925, %v6991
        %v7052 = vadd.f32 %v6926, %v6996
        %v7053 = vadd.f32 %v6927, %v6999
        %v7054 = vadd.f32 %v6928, %v7004
        %v7055 = vadd.f32 %v6929, %v7007
        %v7056 = vadd.f32 %v6930, %v7012
        %v7057 = vadd.f32 %v6931, %v7015
        %v7058 = vadd.f32 %v6932, %v7020
        %v7059 = vadd.f32 %v6933, %v7023
        %v7060 = vadd.f32 %v6934, %v7028
        %v7061 = vadd.f32 %v6935, %v7031
        %v7062 = vadd.f32 %v6936, %v7036
        %v7063 = vadd.f32 %v6937, %v7039
        %v7064 = vadd.f32 %v6938, %v7044
        %v7065 = vadd.f32 %v6939, %v7047
        %v7067 = vshrl.u32 %v295, 16
        %v7069 = vrot.slane %v7067, 4
        %v7070 = vshll.u32 %v295, 16
        %v7072 = vrot.slane %v7070, 5
        %v7073 = vor.u32 %v7069, %v7072
        %v7074 = vrot.slane %v7073, 4
        %v7076 = vshll.u32 %v296, 16
        %v7078 = vrot.slane %v7076, 5
        %v7079 = vsel %vm666, %v7074, %v7078
        %v7080 = vshrl.u32 %v296, 16
        %v7082 = vrot.slane %v7080, 4
        %v7083 = vor.u32 %v7082, %v7078
        %v7084 = vrot.slane %v7083, 4
        %v7086 = vshll.u32 %v297, 16
        %v7088 = vrot.slane %v7086, 5
        %v7089 = vsel %vm666, %v7084, %v7088
        %s7090 = scalar_lea.vmem %s1, 74
        %v7091 = vld [vmem:[%s7090] sm:$0x3]
        %v7092 = vunpack.c.l.b16 %v7079
        %v7093 = vunpack.c.l.b16 %v7089
        %v7094 = vpack.c.b16 %v7093, %v7092
        %v7096 = vsel %vm371, %v7094, 0
        %v7099 = vand.u32 %v7091, %v399
        %7101 = vmatprep.subr.bf16.mxu0 0
        %7102 = vmatpush1.bf16.msra.mxu0 %v7099
        %7103 = vmatprep.subr.bf16.mxu0 0
        %7104 = vmatpush1.bf16.msra.mxu0 0
        %7105 = vmatprep.subr.bf16.mxu0 0
        %7106 = vmatpush1.bf16.msra.mxu0 0
        %7107 = vmatprep.subr.bf16.mxu0 0
        %7108 = vmatpush1.bf16.msra.mxu0 0
        %7109 = vmatprep.subr.bf16.mxu0 0
        %7110 = vmatpush1.bf16.msra.mxu0 0
        %7111 = vmatprep.subr.bf16.mxu0 0
        %7112 = vmatpush1.bf16.msra.mxu0 0
        %7113 = vmatprep.subr.bf16.mxu0 0
        %7114 = vmatpush1.bf16.msra.mxu0 0
        %7115 = vmatprep.subr.bf16.mxu0 0
        %7116 = vmatpush1.bf16.msra.mxu0 0
        %7117 = vmatprep.subr.bf16.mxu0 0
        %7118 = vmatpush1.bf16.msra.mxu0 0
        %7119 = vmatprep.subr.bf16.mxu0 0
        %7120 = vmatpush1.bf16.msra.mxu0 0
        %7121 = vmatprep.subr.bf16.mxu0 0
        %7122 = vmatpush1.bf16.msra.mxu0 0
        %7123 = vmatprep.subr.bf16.mxu0 0
        %7124 = vmatpush1.bf16.msra.mxu0 0
        %7125 = vmatprep.subr.bf16.mxu0 0
        %7126 = vmatpush1.bf16.msra.mxu0 0
        %7127 = vmatprep.subr.bf16.mxu0 0
        %7128 = vmatpush1.bf16.msra.mxu0 0
        %7129 = vmatprep.subr.bf16.mxu0 0
        %7130 = vmatpush1.bf16.msra.mxu0 0
        %7131 = vmatprep.subr.bf16.mxu0 0
        %7132 = vmatpush1.bf16.msra.mxu0 0
        %7133 = vmatprep.mubr.bf16.mxu0 0
        %7134 = vmatmul.mubr.bf16.gmra.mrb[0].mxu0 %v2724
        %v7135 = vpop.f32.mrb[0].mxu0
        %v7136 = vadd.f32 0.0, %v7135
        %v7137 = vpop.f32.mrb[0].mxu0
        %v7138 = vpop.f32.mrb[0].mxu0
        %v7139 = vadd.f32 0.0, %v7138
        %v7140 = vpop.f32.mrb[0].mxu0
        %7141 = vmatprep.mubr.bf16.mxu0 0
        %7142 = vmatmul.mubr.bf16.gmra.mrb[0].mxu0 %v2727
        %v7143 = vpop.f32.mrb[0].mxu0
        %v7144 = vadd.f32 0.0, %v7143
        %v7145 = vpop.f32.mrb[0].mxu0
        %v7146 = vpop.f32.mrb[0].mxu0
        %v7147 = vadd.f32 0.0, %v7146
        %v7148 = vpop.f32.mrb[0].mxu0
        %7149 = vmatprep.mubr.bf16.mxu0 0
        %7150 = vmatmul.mubr.bf16.gmra.mrb[0].mxu0 %v2730
        %v7151 = vpop.f32.mrb[0].mxu0
        %v7152 = vadd.f32 0.0, %v7151
        %v7153 = vpop.f32.mrb[0].mxu0
        %v7154 = vpop.f32.mrb[0].mxu0
        %v7155 = vadd.f32 0.0, %v7154
        %v7156 = vpop.f32.mrb[0].mxu0
        %7157 = vmatprep.mubr.bf16.mxu0 0
        %7158 = vmatmul.mubr.bf16.gmra.mrb[0].mxu0 %v2733
        %v7159 = vpop.f32.mrb[0].mxu0
        %v7160 = vadd.f32 0.0, %v7159
        %v7161 = vpop.f32.mrb[0].mxu0
        %v7162 = vpop.f32.mrb[0].mxu0
        %v7163 = vadd.f32 0.0, %v7162
        %v7164 = vpop.f32.mrb[0].mxu0
        %7165 = vmatprep.mubr.bf16.mxu0 0
        %7166 = vmatmul.mubr.bf16.gmra.mrb[0].mxu0 %v2736
        %v7167 = vpop.f32.mrb[0].mxu0
        %v7168 = vadd.f32 0.0, %v7167
        %v7169 = vpop.f32.mrb[0].mxu0
        %v7170 = vpop.f32.mrb[0].mxu0
        %v7171 = vadd.f32 0.0, %v7170
        %v7172 = vpop.f32.mrb[0].mxu0
        %7173 = vmatprep.mubr.bf16.mxu0 0
        %7174 = vmatmul.mubr.bf16.gmra.mrb[0].mxu0 %v2739
        %v7175 = vpop.f32.mrb[0].mxu0
        %v7176 = vadd.f32 0.0, %v7175
        %v7177 = vpop.f32.mrb[0].mxu0
        %v7178 = vpop.f32.mrb[0].mxu0
        %v7179 = vadd.f32 0.0, %v7178
        %v7180 = vpop.f32.mrb[0].mxu0
        %7181 = vmatprep.mubr.bf16.mxu0 0
        %7182 = vmatmul.mubr.bf16.gmra.mrb[0].mxu0 %v5194
        %v7183 = vpop.f32.mrb[0].mxu0
        %v7184 = vadd.f32 0.0, %v7183
        %v7185 = vpop.f32.mrb[0].mxu0
        %v7186 = vpop.f32.mrb[0].mxu0
        %v7187 = vadd.f32 0.0, %v7186
        %v7188 = vpop.f32.mrb[0].mxu0
        %7189 = vmatprep.mubr.bf16.mxu0 0
        %7190 = vmatmul.mubr.bf16.gmra.mrb[0].mxu0 %v7096
        %v7191 = vpop.f32.mrb[0].mxu0
        %v7192 = vadd.f32 0.0, %v7191
        %v7193 = vpop.f32.mrb[0].mxu0
        %v7194 = vpop.f32.mrb[0].mxu0
        %v7195 = vadd.f32 0.0, %v7194
        %v7196 = vpop.f32.mrb[0].mxu0
        %7197 = vdwg.mxu0
        %v7198 = vadd.f32 %v7050, %v7136
        %v7199 = vadd.f32 %v7051, %v7139
        %v7200 = vadd.f32 %v7052, %v7144
        %v7201 = vadd.f32 %v7053, %v7147
        %v7202 = vadd.f32 %v7054, %v7152
        %v7203 = vadd.f32 %v7055, %v7155
        %v7204 = vadd.f32 %v7056, %v7160
        %v7205 = vadd.f32 %v7057, %v7163
        %v7206 = vadd.f32 %v7058, %v7168
        %v7207 = vadd.f32 %v7059, %v7171
        %v7208 = vadd.f32 %v7060, %v7176
        %v7209 = vadd.f32 %v7061, %v7179
        %v7210 = vadd.f32 %v7062, %v7184
        %v7211 = vadd.f32 %v7063, %v7187
        %v7212 = vadd.f32 %v7064, %v7192
        %v7213 = vadd.f32 %v7065, %v7195
        %v7215 = vshrl.u32 %v325, 16
        %v7217 = vrot.slane %v7215, 4
        %v7218 = vshll.u32 %v325, 16
        %v7220 = vrot.slane %v7218, 5
        %v7221 = vor.u32 %v7217, %v7220
        %v7222 = vrot.slane %v7221, 4
        %v7224 = vshll.u32 %v326, 16
        %v7226 = vrot.slane %v7224, 5
        %v7227 = vsel %vm666, %v7222, %v7226
        %v7228 = vshrl.u32 %v326, 16
        %v7230 = vrot.slane %v7228, 4
        %v7231 = vor.u32 %v7230, %v7226
        %v7232 = vrot.slane %v7231, 4
        %v7234 = vshll.u32 %v327, 16
        %v7236 = vrot.slane %v7234, 5
        %v7237 = vsel %vm666, %v7232, %v7236
        %s7238 = scalar_lea.vmem %s1, 76
        %v7239 = vld [vmem:[%s7238] sm:$0x3]
        %v7240 = vunpack.c.l.b16 %v7227
        %v7241 = vunpack.c.l.b16 %v7237
        %v7242 = vpack.c.b16 %v7241, %v7240
        %v7244 = vsel %vm371, %v7242, 0
        %v7247 = vand.u32 %v7239, %v399
        %7249 = vmatprep.subr.bf16.mxu0 0
        %7250 = vmatpush1.bf16.msra.mxu0 %v7247
        %7251 = vmatprep.subr.bf16.mxu0 0
        %7252 = vmatpush1.bf16.msra.mxu0 0
        %7253 = vmatprep.subr.bf16.mxu0 0
        %7254 = vmatpush1.bf16.msra.mxu0 0
        %7255 = vmatprep.subr.bf16.mxu0 0
        %7256 = vmatpush1.bf16.msra.mxu0 0
        %7257 = vmatprep.subr.bf16.mxu0 0
        %7258 = vmatpush1.bf16.msra.mxu0 0
        %7259 = vmatprep.subr.bf16.mxu0 0
        %7260 = vmatpush1.bf16.msra.mxu0 0
        %7261 = vmatprep.subr.bf16.mxu0 0
        %7262 = vmatpush1.bf16.msra.mxu0 0
        %7263 = vmatprep.subr.bf16.mxu0 0
        %7264 = vmatpush1.bf16.msra.mxu0 0
        %7265 = vmatprep.subr.bf16.mxu0 0
        %7266 = vmatpush1.bf16.msra.mxu0 0
        %7267 = vmatprep.subr.bf16.mxu0 0
        %7268 = vmatpush1.bf16.msra.mxu0 0
        %7269 = vmatprep.subr.bf16.mxu0 0
        %7270 = vmatpush1.bf16.msra.mxu0 0
        %7271 = vmatprep.subr.bf16.mxu0 0
        %7272 = vmatpush1.bf16.msra.mxu0 0
        %7273 = vmatprep.subr.bf16.mxu0 0
        %7274 = vmatpush1.bf16.msra.mxu0 0
        %7275 = vmatprep.subr.bf16.mxu0 0
        %7276 = vmatpush1.bf16.msra.mxu0 0
        %7277 = vmatprep.subr.bf16.mxu0 0
        %7278 = vmatpush1.bf16.msra.mxu0 0
        %7279 = vmatprep.subr.bf16.mxu0 0
        %7280 = vmatpush1.bf16.msra.mxu0 0
        %7281 = vmatprep.mubr.bf16.mxu0 0
        %7282 = vmatmul.mubr.bf16.gmra.mrb[0].mxu0 %v3082
        %v7283 = vpop.f32.mrb[0].mxu0
        %v7284 = vadd.f32 0.0, %v7283
        %v7285 = vpop.f32.mrb[0].mxu0
        %v7286 = vpop.f32.mrb[0].mxu0
        %v7287 = vadd.f32 0.0, %v7286
        %v7288 = vpop.f32.mrb[0].mxu0
        %7289 = vmatprep.mubr.bf16.mxu0 0
        %7290 = vmatmul.mubr.bf16.gmra.mrb[0].mxu0 %v3085
        %v7291 = vpop.f32.mrb[0].mxu0
        %v7292 = vadd.f32 0.0, %v7291
        %v7293 = vpop.f32.mrb[0].mxu0
        %v7294 = vpop.f32.mrb[0].mxu0
        %v7295 = vadd.f32 0.0, %v7294
        %v7296 = vpop.f32.mrb[0].mxu0
        %7297 = vmatprep.mubr.bf16.mxu0 0
        %7298 = vmatmul.mubr.bf16.gmra.mrb[0].mxu0 %v3088
        %v7299 = vpop.f32.mrb[0].mxu0
        %v7300 = vadd.f32 0.0, %v7299
        %v7301 = vpop.f32.mrb[0].mxu0
        %v7302 = vpop.f32.mrb[0].mxu0
        %v7303 = vadd.f32 0.0, %v7302
        %v7304 = vpop.f32.mrb[0].mxu0
        %7305 = vmatprep.mubr.bf16.mxu0 0
        %7306 = vmatmul.mubr.bf16.gmra.mrb[0].mxu0 %v3091
        %v7307 = vpop.f32.mrb[0].mxu0
        %v7308 = vadd.f32 0.0, %v7307
        %v7309 = vpop.f32.mrb[0].mxu0
        %v7310 = vpop.f32.mrb[0].mxu0
        %v7311 = vadd.f32 0.0, %v7310
        %v7312 = vpop.f32.mrb[0].mxu0
        %7313 = vmatprep.mubr.bf16.mxu0 0
        %7314 = vmatmul.mubr.bf16.gmra.mrb[0].mxu0 %v3094
        %v7315 = vpop.f32.mrb[0].mxu0
        %v7316 = vadd.f32 0.0, %v7315
        %v7317 = vpop.f32.mrb[0].mxu0
        %v7318 = vpop.f32.mrb[0].mxu0
        %v7319 = vadd.f32 0.0, %v7318
        %v7320 = vpop.f32.mrb[0].mxu0
        %7321 = vmatprep.mubr.bf16.mxu0 0
        %7322 = vmatmul.mubr.bf16.gmra.mrb[0].mxu0 %v3097
        %v7323 = vpop.f32.mrb[0].mxu0
        %v7324 = vadd.f32 0.0, %v7323
        %v7325 = vpop.f32.mrb[0].mxu0
        %v7326 = vpop.f32.mrb[0].mxu0
        %v7327 = vadd.f32 0.0, %v7326
        %v7328 = vpop.f32.mrb[0].mxu0
        %7329 = vmatprep.mubr.bf16.mxu0 0
        %7330 = vmatmul.mubr.bf16.gmra.mrb[0].mxu0 %v5342
        %v7331 = vpop.f32.mrb[0].mxu0
        %v7332 = vadd.f32 0.0, %v7331
        %v7333 = vpop.f32.mrb[0].mxu0
        %v7334 = vpop.f32.mrb[0].mxu0
        %v7335 = vadd.f32 0.0, %v7334
        %v7336 = vpop.f32.mrb[0].mxu0
        %7337 = vmatprep.mubr.bf16.mxu0 0
        %7338 = vmatmul.mubr.bf16.gmra.mrb[0].mxu0 %v7244
        %v7339 = vpop.f32.mrb[0].mxu0
        %v7340 = vadd.f32 0.0, %v7339
        %v7341 = vpop.f32.mrb[0].mxu0
        %v7342 = vpop.f32.mrb[0].mxu0
        %v7343 = vadd.f32 0.0, %v7342
        %v7344 = vpop.f32.mrb[0].mxu0
        %7345 = vdwg.mxu0
        %v7346 = vadd.f32 %v7198, %v7284
        %v7347 = vadd.f32 %v7199, %v7287
        %v7348 = vadd.f32 %v7200, %v7292
        %v7349 = vadd.f32 %v7201, %v7295
        %v7350 = vadd.f32 %v7202, %v7300
        %v7351 = vadd.f32 %v7203, %v7303
        %v7352 = vadd.f32 %v7204, %v7308
        %v7353 = vadd.f32 %v7205, %v7311
        %v7354 = vadd.f32 %v7206, %v7316
        %v7355 = vadd.f32 %v7207, %v7319
        %v7356 = vadd.f32 %v7208, %v7324
        %v7357 = vadd.f32 %v7209, %v7327
        %v7358 = vadd.f32 %v7210, %v7332
        %v7359 = vadd.f32 %v7211, %v7335
        %v7360 = vadd.f32 %v7212, %v7340
        %v7361 = vadd.f32 %v7213, %v7343
        %v7363 = vrot.slane %v295, 5
        %v7364 = vrot.slane %v7363, 4
        %v7365 = vrot.slane %v296, 5
        %v7366 = vsel %vm1393, %v7364, %v7365
        %v7367 = vrot.slane %v7365, 4
        %v7368 = vrot.slane %v297, 5
        %v7369 = vsel %vm1393, %v7367, %v7368
        %s7370 = scalar_lea.vmem %s1, 78
        %v7371 = vld [vmem:[%s7370] sm:$0x3]
        %v7372 = vunpack.c.l.b16 %v7366
        %v7373 = vunpack.c.l.b16 %v7369
        %v7374 = vpack.c.b16 %v7373, %v7372
        %v7376 = vsel %vm371, %v7374, 0
        %v7379 = vand.u32 %v7371, %v399
        %7381 = vmatprep.subr.bf16.mxu0 0
        %7382 = vmatpush1.bf16.msra.mxu0 %v7379
        %7383 = vmatprep.subr.bf16.mxu0 0
        %7384 = vmatpush1.bf16.msra.mxu0 0
        %7385 = vmatprep.subr.bf16.mxu0 0
        %7386 = vmatpush1.bf16.msra.mxu0 0
        %7387 = vmatprep.subr.bf16.mxu0 0
        %7388 = vmatpush1.bf16.msra.mxu0 0
        %7389 = vmatprep.subr.bf16.mxu0 0
        %7390 = vmatpush1.bf16.msra.mxu0 0
        %7391 = vmatprep.subr.bf16.mxu0 0
        %7392 = vmatpush1.bf16.msra.mxu0 0
        %7393 = vmatprep.subr.bf16.mxu0 0
        %7394 = vmatpush1.bf16.msra.mxu0 0
        %7395 = vmatprep.subr.bf16.mxu0 0
        %7396 = vmatpush1.bf16.msra.mxu0 0
        %7397 = vmatprep.subr.bf16.mxu0 0
        %7398 = vmatpush1.bf16.msra.mxu0 0
        %7399 = vmatprep.subr.bf16.mxu0 0
        %7400 = vmatpush1.bf16.msra.mxu0 0
        %7401 = vmatprep.subr.bf16.mxu0 0
        %7402 = vmatpush1.bf16.msra.mxu0 0
        %7403 = vmatprep.subr.bf16.mxu0 0
        %7404 = vmatpush1.bf16.msra.mxu0 0
        %7405 = vmatprep.subr.bf16.mxu0 0
        %7406 = vmatpush1.bf16.msra.mxu0 0
        %7407 = vmatprep.subr.bf16.mxu0 0
        %7408 = vmatpush1.bf16.msra.mxu0 0
        %7409 = vmatprep.subr.bf16.mxu0 0
        %7410 = vmatpush1.bf16.msra.mxu0 0
        %7411 = vmatprep.subr.bf16.mxu0 0
        %7412 = vmatpush1.bf16.msra.mxu0 0
        %7413 = vmatprep.mubr.bf16.mxu0 0
        %7414 = vmatmul.mubr.bf16.gmra.mrb[0].mxu0 %v3312
        %v7415 = vpop.f32.mrb[0].mxu0
        %v7416 = vadd.f32 0.0, %v7415
        %v7417 = vpop.f32.mrb[0].mxu0
        %v7418 = vpop.f32.mrb[0].mxu0
        %v7419 = vadd.f32 0.0, %v7418
        %v7420 = vpop.f32.mrb[0].mxu0
        %7421 = vmatprep.mubr.bf16.mxu0 0
        %7422 = vmatmul.mubr.bf16.gmra.mrb[0].mxu0 %v3315
        %v7423 = vpop.f32.mrb[0].mxu0
        %v7424 = vadd.f32 0.0, %v7423
        %v7425 = vpop.f32.mrb[0].mxu0
        %v7426 = vpop.f32.mrb[0].mxu0
        %v7427 = vadd.f32 0.0, %v7426
        %v7428 = vpop.f32.mrb[0].mxu0
        %7429 = vmatprep.mubr.bf16.mxu0 0
        %7430 = vmatmul.mubr.bf16.gmra.mrb[0].mxu0 %v3318
        %v7431 = vpop.f32.mrb[0].mxu0
        %v7432 = vadd.f32 0.0, %v7431
        %v7433 = vpop.f32.mrb[0].mxu0
        %v7434 = vpop.f32.mrb[0].mxu0
        %v7435 = vadd.f32 0.0, %v7434
        %v7436 = vpop.f32.mrb[0].mxu0
        %7437 = vmatprep.mubr.bf16.mxu0 0
        %7438 = vmatmul.mubr.bf16.gmra.mrb[0].mxu0 %v3321
        %v7439 = vpop.f32.mrb[0].mxu0
        %v7440 = vadd.f32 0.0, %v7439
        %v7441 = vpop.f32.mrb[0].mxu0
        %v7442 = vpop.f32.mrb[0].mxu0
        %v7443 = vadd.f32 0.0, %v7442
        %v7444 = vpop.f32.mrb[0].mxu0
        %7445 = vmatprep.mubr.bf16.mxu0 0
        %7446 = vmatmul.mubr.bf16.gmra.mrb[0].mxu0 %v3324
        %v7447 = vpop.f32.mrb[0].mxu0
        %v7448 = vadd.f32 0.0, %v7447
        %v7449 = vpop.f32.mrb[0].mxu0
        %v7450 = vpop.f32.mrb[0].mxu0
        %v7451 = vadd.f32 0.0, %v7450
        %v7452 = vpop.f32.mrb[0].mxu0
        %7453 = vmatprep.mubr.bf16.mxu0 0
        %7454 = vmatmul.mubr.bf16.gmra.mrb[0].mxu0 %v3327
        %v7455 = vpop.f32.mrb[0].mxu0
        %v7456 = vadd.f32 0.0, %v7455
        %v7457 = vpop.f32.mrb[0].mxu0
        %v7458 = vpop.f32.mrb[0].mxu0
        %v7459 = vadd.f32 0.0, %v7458
        %v7460 = vpop.f32.mrb[0].mxu0
        %7461 = vmatprep.mubr.bf16.mxu0 0
        %7462 = vmatmul.mubr.bf16.gmra.mrb[0].mxu0 %v5474
        %v7463 = vpop.f32.mrb[0].mxu0
        %v7464 = vadd.f32 0.0, %v7463
        %v7465 = vpop.f32.mrb[0].mxu0
        %v7466 = vpop.f32.mrb[0].mxu0
        %v7467 = vadd.f32 0.0, %v7466
        %v7468 = vpop.f32.mrb[0].mxu0
        %7469 = vmatprep.mubr.bf16.mxu0 0
        %7470 = vmatmul.mubr.bf16.gmra.mrb[0].mxu0 %v7376
        %v7471 = vpop.f32.mrb[0].mxu0
        %v7472 = vadd.f32 0.0, %v7471
        %v7473 = vpop.f32.mrb[0].mxu0
        %v7474 = vpop.f32.mrb[0].mxu0
        %v7475 = vadd.f32 0.0, %v7474
        %v7476 = vpop.f32.mrb[0].mxu0
        %7477 = vdwg.mxu0
        %v7478 = vadd.f32 %v7346, %v7416
        %v7479 = vadd.f32 %v7347, %v7419
        %v7480 = vadd.f32 %v7348, %v7424
        %v7481 = vadd.f32 %v7349, %v7427
        %v7482 = vadd.f32 %v7350, %v7432
        %v7483 = vadd.f32 %v7351, %v7435
        %v7484 = vadd.f32 %v7352, %v7440
        %v7485 = vadd.f32 %v7353, %v7443
        %v7486 = vadd.f32 %v7354, %v7448
        %v7487 = vadd.f32 %v7355, %v7451
        %v7488 = vadd.f32 %v7356, %v7456
        %v7489 = vadd.f32 %v7357, %v7459
        %v7490 = vadd.f32 %v7358, %v7464
        %v7491 = vadd.f32 %v7359, %v7467
        %v7492 = vadd.f32 %v7360, %v7472
        %v7493 = vadd.f32 %v7361, %v7475
        %v7495 = vrot.slane %v325, 5
        %v7496 = vrot.slane %v7495, 4
        %v7497 = vrot.slane %v326, 5
        %v7498 = vsel %vm1393, %v7496, %v7497
        %v7499 = vrot.slane %v7497, 4
        %v7500 = vrot.slane %v327, 5
        %v7501 = vsel %vm1393, %v7499, %v7500
        %s7502 = scalar_lea.vmem %s1, 80
        %v7503 = vld [vmem:[%s7502] sm:$0x3]
        %v7504 = vunpack.c.l.b16 %v7498
        %v7505 = vunpack.c.l.b16 %v7501
        %v7506 = vpack.c.b16 %v7505, %v7504
        %v7508 = vsel %vm371, %v7506, 0
        %v7511 = vand.u32 %v7503, %v399
        %7513 = vmatprep.subr.bf16.mxu0 0
        %7514 = vmatpush1.bf16.msra.mxu0 %v7511
        %7515 = vmatprep.subr.bf16.mxu0 0
        %7516 = vmatpush1.bf16.msra.mxu0 0
        %7517 = vmatprep.subr.bf16.mxu0 0
        %7518 = vmatpush1.bf16.msra.mxu0 0
        %7519 = vmatprep.subr.bf16.mxu0 0
        %7520 = vmatpush1.bf16.msra.mxu0 0
        %7521 = vmatprep.subr.bf16.mxu0 0
        %7522 = vmatpush1.bf16.msra.mxu0 0
        %7523 = vmatprep.subr.bf16.mxu0 0
        %7524 = vmatpush1.bf16.msra.mxu0 0
        %7525 = vmatprep.subr.bf16.mxu0 0
        %7526 = vmatpush1.bf16.msra.mxu0 0
        %7527 = vmatprep.subr.bf16.mxu0 0
        %7528 = vmatpush1.bf16.msra.mxu0 0
        %7529 = vmatprep.subr.bf16.mxu0 0
        %7530 = vmatpush1.bf16.msra.mxu0 0
        %7531 = vmatprep.subr.bf16.mxu0 0
        %7532 = vmatpush1.bf16.msra.mxu0 0
        %7533 = vmatprep.subr.bf16.mxu0 0
        %7534 = vmatpush1.bf16.msra.mxu0 0
        %7535 = vmatprep.subr.bf16.mxu0 0
        %7536 = vmatpush1.bf16.msra.mxu0 0
        %7537 = vmatprep.subr.bf16.mxu0 0
        %7538 = vmatpush1.bf16.msra.mxu0 0
        %7539 = vmatprep.subr.bf16.mxu0 0
        %7540 = vmatpush1.bf16.msra.mxu0 0
        %7541 = vmatprep.subr.bf16.mxu0 0
        %7542 = vmatpush1.bf16.msra.mxu0 0
        %7543 = vmatprep.subr.bf16.mxu0 0
        %7544 = vmatpush1.bf16.msra.mxu0 0
        %7545 = vmatprep.mubr.bf16.mxu0 0
        %7546 = vmatmul.mubr.bf16.gmra.mrb[0].mxu0 %v3542
        %v7547 = vpop.f32.mrb[0].mxu0
        %v7548 = vadd.f32 0.0, %v7547
        %v7549 = vpop.f32.mrb[0].mxu0
        %v7550 = vpop.f32.mrb[0].mxu0
        %v7551 = vadd.f32 0.0, %v7550
        %v7552 = vpop.f32.mrb[0].mxu0
        %7553 = vmatprep.mubr.bf16.mxu0 0
        %7554 = vmatmul.mubr.bf16.gmra.mrb[0].mxu0 %v3545
        %v7555 = vpop.f32.mrb[0].mxu0
        %v7556 = vadd.f32 0.0, %v7555
        %v7557 = vpop.f32.mrb[0].mxu0
        %v7558 = vpop.f32.mrb[0].mxu0
        %v7559 = vadd.f32 0.0, %v7558
        %v7560 = vpop.f32.mrb[0].mxu0
        %7561 = vmatprep.mubr.bf16.mxu0 0
        %7562 = vmatmul.mubr.bf16.gmra.mrb[0].mxu0 %v3548
        %v7563 = vpop.f32.mrb[0].mxu0
        %v7564 = vadd.f32 0.0, %v7563
        %v7565 = vpop.f32.mrb[0].mxu0
        %v7566 = vpop.f32.mrb[0].mxu0
        %v7567 = vadd.f32 0.0, %v7566
        %v7568 = vpop.f32.mrb[0].mxu0
        %7569 = vmatprep.mubr.bf16.mxu0 0
        %7570 = vmatmul.mubr.bf16.gmra.mrb[0].mxu0 %v3551
        %v7571 = vpop.f32.mrb[0].mxu0
        %v7572 = vadd.f32 0.0, %v7571
        %v7573 = vpop.f32.mrb[0].mxu0
        %v7574 = vpop.f32.mrb[0].mxu0
        %v7575 = vadd.f32 0.0, %v7574
        %v7576 = vpop.f32.mrb[0].mxu0
        %7577 = vmatprep.mubr.bf16.mxu0 0
        %7578 = vmatmul.mubr.bf16.gmra.mrb[0].mxu0 %v3554
        %v7579 = vpop.f32.mrb[0].mxu0
        %v7580 = vadd.f32 0.0, %v7579
        %v7581 = vpop.f32.mrb[0].mxu0
        %v7582 = vpop.f32.mrb[0].mxu0
        %v7583 = vadd.f32 0.0, %v7582
        %v7584 = vpop.f32.mrb[0].mxu0
        %7585 = vmatprep.mubr.bf16.mxu0 0
        %7586 = vmatmul.mubr.bf16.gmra.mrb[0].mxu0 %v3557
        %v7587 = vpop.f32.mrb[0].mxu0
        %v7588 = vadd.f32 0.0, %v7587
        %v7589 = vpop.f32.mrb[0].mxu0
        %v7590 = vpop.f32.mrb[0].mxu0
        %v7591 = vadd.f32 0.0, %v7590
        %v7592 = vpop.f32.mrb[0].mxu0
        %7593 = vmatprep.mubr.bf16.mxu0 0
        %7594 = vmatmul.mubr.bf16.gmra.mrb[0].mxu0 %v5606
        %v7595 = vpop.f32.mrb[0].mxu0
        %v7596 = vadd.f32 0.0, %v7595
        %v7597 = vpop.f32.mrb[0].mxu0
        %v7598 = vpop.f32.mrb[0].mxu0
        %v7599 = vadd.f32 0.0, %v7598
        %v7600 = vpop.f32.mrb[0].mxu0
        %7601 = vmatprep.mubr.bf16.mxu0 0
        %7602 = vmatmul.mubr.bf16.gmra.mrb[0].mxu0 %v7508
        %v7603 = vpop.f32.mrb[0].mxu0
        %v7604 = vadd.f32 0.0, %v7603
        %v7605 = vpop.f32.mrb[0].mxu0
        %v7606 = vpop.f32.mrb[0].mxu0
        %v7607 = vadd.f32 0.0, %v7606
        %v7608 = vpop.f32.mrb[0].mxu0
        %7609 = vdwg.mxu0
        %v7610 = vadd.f32 %v7478, %v7548
        %v7611 = vadd.f32 %v7479, %v7551
        %v7612 = vadd.f32 %v7480, %v7556
        %v7613 = vadd.f32 %v7481, %v7559
        %v7614 = vadd.f32 %v7482, %v7564
        %v7615 = vadd.f32 %v7483, %v7567
        %v7616 = vadd.f32 %v7484, %v7572
        %v7617 = vadd.f32 %v7485, %v7575
        %v7618 = vadd.f32 %v7486, %v7580
        %v7619 = vadd.f32 %v7487, %v7583
        %v7620 = vadd.f32 %v7488, %v7588
        %v7621 = vadd.f32 %v7489, %v7591
        %v7622 = vadd.f32 %v7490, %v7596
        %v7623 = vadd.f32 %v7491, %v7599
        %v7624 = vadd.f32 %v7492, %v7604
        %v7625 = vadd.f32 %v7493, %v7607
        %v7626 = vrot.slane %v7067, 5
        %v7627 = vrot.slane %v7070, 6
        %v7628 = vor.u32 %v7626, %v7627
        %v7629 = vrot.slane %v7628, 4
        %v7630 = vrot.slane %v7080, 5
        %v7631 = vrot.slane %v7076, 6
        %v7632 = vor.u32 %v7630, %v7631
        %v7633 = vsel %vm1848, %v7629, %v7632
        %v7634 = vrot.slane %v7632, 4
        %v7635 = vshrl.u32 %v297, 16
        %v7637 = vrot.slane %v7635, 5
        %v7638 = vrot.slane %v7086, 6
        %v7639 = vor.u32 %v7637, %v7638
        %v7640 = vsel %vm1848, %v7634, %v7639
        %s7641 = scalar_lea.vmem %s1, 82
        %v7642 = vld [vmem:[%s7641] sm:$0x3]
        %v7643 = vunpack.c.l.b16 %v7633
        %v7644 = vunpack.c.l.b16 %v7640
        %v7645 = vpack.c.b16 %v7644, %v7643
        %v7647 = vsel %vm371, %v7645, 0
        %v7650 = vand.u32 %v7642, %v399
        %7652 = vmatprep.subr.bf16.mxu0 0
        %7653 = vmatpush1.bf16.msra.mxu0 %v7650
        %7654 = vmatprep.subr.bf16.mxu0 0
        %7655 = vmatpush1.bf16.msra.mxu0 0
        %7656 = vmatprep.subr.bf16.mxu0 0
        %7657 = vmatpush1.bf16.msra.mxu0 0
        %7658 = vmatprep.subr.bf16.mxu0 0
        %7659 = vmatpush1.bf16.msra.mxu0 0
        %7660 = vmatprep.subr.bf16.mxu0 0
        %7661 = vmatpush1.bf16.msra.mxu0 0
        %7662 = vmatprep.subr.bf16.mxu0 0
        %7663 = vmatpush1.bf16.msra.mxu0 0
        %7664 = vmatprep.subr.bf16.mxu0 0
        %7665 = vmatpush1.bf16.msra.mxu0 0
        %7666 = vmatprep.subr.bf16.mxu0 0
        %7667 = vmatpush1.bf16.msra.mxu0 0
        %7668 = vmatprep.subr.bf16.mxu0 0
        %7669 = vmatpush1.bf16.msra.mxu0 0
        %7670 = vmatprep.subr.bf16.mxu0 0
        %7671 = vmatpush1.bf16.msra.mxu0 0
        %7672 = vmatprep.subr.bf16.mxu0 0
        %7673 = vmatpush1.bf16.msra.mxu0 0
        %7674 = vmatprep.subr.bf16.mxu0 0
        %7675 = vmatpush1.bf16.msra.mxu0 0
        %7676 = vmatprep.subr.bf16.mxu0 0
        %7677 = vmatpush1.bf16.msra.mxu0 0
        %7678 = vmatprep.subr.bf16.mxu0 0
        %7679 = vmatpush1.bf16.msra.mxu0 0
        %7680 = vmatprep.subr.bf16.mxu0 0
        %7681 = vmatpush1.bf16.msra.mxu0 0
        %7682 = vmatprep.subr.bf16.mxu0 0
        %7683 = vmatpush1.bf16.msra.mxu0 0
        %7684 = vmatprep.mubr.bf16.mxu0 0
        %7685 = vmatmul.mubr.bf16.gmra.mrb[0].mxu0 %v3828
        %v7686 = vpop.f32.mrb[0].mxu0
        %v7687 = vadd.f32 0.0, %v7686
        %v7688 = vpop.f32.mrb[0].mxu0
        %v7689 = vpop.f32.mrb[0].mxu0
        %v7690 = vadd.f32 0.0, %v7689
        %v7691 = vpop.f32.mrb[0].mxu0
        %7692 = vmatprep.mubr.bf16.mxu0 0
        %7693 = vmatmul.mubr.bf16.gmra.mrb[0].mxu0 %v3831
        %v7694 = vpop.f32.mrb[0].mxu0
        %v7695 = vadd.f32 0.0, %v7694
        %v7696 = vpop.f32.mrb[0].mxu0
        %v7697 = vpop.f32.mrb[0].mxu0
        %v7698 = vadd.f32 0.0, %v7697
        %v7699 = vpop.f32.mrb[0].mxu0
        %7700 = vmatprep.mubr.bf16.mxu0 0
        %7701 = vmatmul.mubr.bf16.gmra.mrb[0].mxu0 %v3834
        %v7702 = vpop.f32.mrb[0].mxu0
        %v7703 = vadd.f32 0.0, %v7702
        %v7704 = vpop.f32.mrb[0].mxu0
        %v7705 = vpop.f32.mrb[0].mxu0
        %v7706 = vadd.f32 0.0, %v7705
        %v7707 = vpop.f32.mrb[0].mxu0
        %7708 = vmatprep.mubr.bf16.mxu0 0
        %7709 = vmatmul.mubr.bf16.gmra.mrb[0].mxu0 %v3837
        %v7710 = vpop.f32.mrb[0].mxu0
        %v7711 = vadd.f32 0.0, %v7710
        %v7712 = vpop.f32.mrb[0].mxu0
        %v7713 = vpop.f32.mrb[0].mxu0
        %v7714 = vadd.f32 0.0, %v7713
        %v7715 = vpop.f32.mrb[0].mxu0
        %7716 = vmatprep.mubr.bf16.mxu0 0
        %7717 = vmatmul.mubr.bf16.gmra.mrb[0].mxu0 %v3840
        %v7718 = vpop.f32.mrb[0].mxu0
        %v7719 = vadd.f32 0.0, %v7718
        %v7720 = vpop.f32.mrb[0].mxu0
        %v7721 = vpop.f32.mrb[0].mxu0
        %v7722 = vadd.f32 0.0, %v7721
        %v7723 = vpop.f32.mrb[0].mxu0
        %7724 = vmatprep.mubr.bf16.mxu0 0
        %7725 = vmatmul.mubr.bf16.gmra.mrb[0].mxu0 %v3843
        %v7726 = vpop.f32.mrb[0].mxu0
        %v7727 = vadd.f32 0.0, %v7726
        %v7728 = vpop.f32.mrb[0].mxu0
        %v7729 = vpop.f32.mrb[0].mxu0
        %v7730 = vadd.f32 0.0, %v7729
        %v7731 = vpop.f32.mrb[0].mxu0
        %7732 = vmatprep.mubr.bf16.mxu0 0
        %7733 = vmatmul.mubr.bf16.gmra.mrb[0].mxu0 %v5745
        %v7734 = vpop.f32.mrb[0].mxu0
        %v7735 = vadd.f32 0.0, %v7734
        %v7736 = vpop.f32.mrb[0].mxu0
        %v7737 = vpop.f32.mrb[0].mxu0
        %v7738 = vadd.f32 0.0, %v7737
        %v7739 = vpop.f32.mrb[0].mxu0
        %7740 = vmatprep.mubr.bf16.mxu0 0
        %7741 = vmatmul.mubr.bf16.gmra.mrb[0].mxu0 %v7647
        %v7742 = vpop.f32.mrb[0].mxu0
        %v7743 = vadd.f32 0.0, %v7742
        %v7744 = vpop.f32.mrb[0].mxu0
        %v7745 = vpop.f32.mrb[0].mxu0
        %v7746 = vadd.f32 0.0, %v7745
        %v7747 = vpop.f32.mrb[0].mxu0
        %7748 = vdwg.mxu0
        %v7749 = vadd.f32 %v7610, %v7687
        %v7750 = vadd.f32 %v7611, %v7690
        %v7751 = vadd.f32 %v7612, %v7695
        %v7752 = vadd.f32 %v7613, %v7698
        %v7753 = vadd.f32 %v7614, %v7703
        %v7754 = vadd.f32 %v7615, %v7706
        %v7755 = vadd.f32 %v7616, %v7711
        %v7756 = vadd.f32 %v7617, %v7714
        %v7757 = vadd.f32 %v7618, %v7719
        %v7758 = vadd.f32 %v7619, %v7722
        %v7759 = vadd.f32 %v7620, %v7727
        %v7760 = vadd.f32 %v7621, %v7730
        %v7761 = vadd.f32 %v7622, %v7735
        %v7762 = vadd.f32 %v7623, %v7738
        %v7763 = vadd.f32 %v7624, %v7743
        %v7764 = vadd.f32 %v7625, %v7746
        %s7765 = scalar_lea.vmem %s1, 84
        %v7766 = vld [vmem:[%s7765] sm:$0x3]
        %v7769 = vunpack.c.l.b16 %v232
        %v7770 = vunpack.c.l.b16 %v233
        %v7771 = vpack.c.b16 %v7770, %v7769
        %v7773 = vsel %vm371, %v7771, 0
        %v7776 = vand.u32 %v7766, %v399
        %7778 = vmatprep.subr.bf16.mxu0 0
        %7779 = vmatpush1.bf16.msra.mxu0 %v7776
        %7780 = vmatprep.subr.bf16.mxu0 0
        %7781 = vmatpush1.bf16.msra.mxu0 0
        %7782 = vmatprep.subr.bf16.mxu0 0
        %7783 = vmatpush1.bf16.msra.mxu0 0
        %7784 = vmatprep.subr.bf16.mxu0 0
        %7785 = vmatpush1.bf16.msra.mxu0 0
        %7786 = vmatprep.subr.bf16.mxu0 0
        %7787 = vmatpush1.bf16.msra.mxu0 0
        %7788 = vmatprep.subr.bf16.mxu0 0
        %7789 = vmatpush1.bf16.msra.mxu0 0
        %7790 = vmatprep.subr.bf16.mxu0 0
        %7791 = vmatpush1.bf16.msra.mxu0 0
        %7792 = vmatprep.subr.bf16.mxu0 0
        %7793 = vmatpush1.bf16.msra.mxu0 0
        %7794 = vmatprep.subr.bf16.mxu0 0
        %7795 = vmatpush1.bf16.msra.mxu0 0
        %7796 = vmatprep.subr.bf16.mxu0 0
        %7797 = vmatpush1.bf16.msra.mxu0 0
        %7798 = vmatprep.subr.bf16.mxu0 0
        %7799 = vmatpush1.bf16.msra.mxu0 0
        %7800 = vmatprep.subr.bf16.mxu0 0
        %7801 = vmatpush1.bf16.msra.mxu0 0
        %7802 = vmatprep.subr.bf16.mxu0 0
        %7803 = vmatpush1.bf16.msra.mxu0 0
        %7804 = vmatprep.subr.bf16.mxu0 0
        %7805 = vmatpush1.bf16.msra.mxu0 0
        %7806 = vmatprep.subr.bf16.mxu0 0
        %7807 = vmatpush1.bf16.msra.mxu0 0
        %7808 = vmatprep.subr.bf16.mxu0 0
        %7809 = vmatpush1.bf16.msra.mxu0 0
        %7810 = vmatprep.mubr.bf16.mxu0 0
        %7811 = vmatmul.mubr.bf16.gmra.mrb[0].mxu0 %v550
        %v7812 = vpop.f32.mrb[0].mxu0
        %v7813 = vadd.f32 0.0, %v7812
        %v7814 = vpop.f32.mrb[0].mxu0
        %v7815 = vpop.f32.mrb[0].mxu0
        %v7816 = vadd.f32 0.0, %v7815
        %v7817 = vpop.f32.mrb[0].mxu0
        %7818 = vmatprep.mubr.bf16.mxu0 0
        %7819 = vmatmul.mubr.bf16.gmra.mrb[0].mxu0 %v553
        %v7820 = vpop.f32.mrb[0].mxu0
        %v7821 = vadd.f32 0.0, %v7820
        %v7822 = vpop.f32.mrb[0].mxu0
        %v7823 = vpop.f32.mrb[0].mxu0
        %v7824 = vadd.f32 0.0, %v7823
        %v7825 = vpop.f32.mrb[0].mxu0
        %7826 = vmatprep.mubr.bf16.mxu0 0
        %7827 = vmatmul.mubr.bf16.gmra.mrb[0].mxu0 %v556
        %v7828 = vpop.f32.mrb[0].mxu0
        %v7829 = vadd.f32 0.0, %v7828
        %v7830 = vpop.f32.mrb[0].mxu0
        %v7831 = vpop.f32.mrb[0].mxu0
        %v7832 = vadd.f32 0.0, %v7831
        %v7833 = vpop.f32.mrb[0].mxu0
        %7834 = vmatprep.mubr.bf16.mxu0 0
        %7835 = vmatmul.mubr.bf16.gmra.mrb[0].mxu0 %v559
        %v7836 = vpop.f32.mrb[0].mxu0
        %v7837 = vadd.f32 0.0, %v7836
        %v7838 = vpop.f32.mrb[0].mxu0
        %v7839 = vpop.f32.mrb[0].mxu0
        %v7840 = vadd.f32 0.0, %v7839
        %v7841 = vpop.f32.mrb[0].mxu0
        %7842 = vmatprep.mubr.bf16.mxu0 0
        %7843 = vmatmul.mubr.bf16.gmra.mrb[0].mxu0 %v562
        %v7844 = vpop.f32.mrb[0].mxu0
        %v7845 = vadd.f32 0.0, %v7844
        %v7846 = vpop.f32.mrb[0].mxu0
        %v7847 = vpop.f32.mrb[0].mxu0
        %v7848 = vadd.f32 0.0, %v7847
        %v7849 = vpop.f32.mrb[0].mxu0
        %7850 = vmatprep.mubr.bf16.mxu0 0
        %7851 = vmatmul.mubr.bf16.gmra.mrb[0].mxu0 %v3969
        %v7852 = vpop.f32.mrb[0].mxu0
        %v7853 = vadd.f32 0.0, %v7852
        %v7854 = vpop.f32.mrb[0].mxu0
        %v7855 = vpop.f32.mrb[0].mxu0
        %v7856 = vadd.f32 0.0, %v7855
        %v7857 = vpop.f32.mrb[0].mxu0
        %7858 = vmatprep.mubr.bf16.mxu0 0
        %7859 = vmatmul.mubr.bf16.gmra.mrb[0].mxu0 %v5871
        %v7860 = vpop.f32.mrb[0].mxu0
        %v7861 = vadd.f32 0.0, %v7860
        %v7862 = vpop.f32.mrb[0].mxu0
        %v7863 = vpop.f32.mrb[0].mxu0
        %v7864 = vadd.f32 0.0, %v7863
        %v7865 = vpop.f32.mrb[0].mxu0
        %7866 = vmatprep.mubr.bf16.mxu0 0
        %7867 = vmatmul.mubr.bf16.gmra.mrb[0].mxu0 %v7773
        %v7868 = vpop.f32.mrb[0].mxu0
        %v7869 = vadd.f32 0.0, %v7868
        %v7870 = vpop.f32.mrb[0].mxu0
        %v7871 = vpop.f32.mrb[0].mxu0
        %v7872 = vadd.f32 0.0, %v7871
        %v7873 = vpop.f32.mrb[0].mxu0
        %7874 = vdwg.mxu0
        %v7875 = vadd.f32 %v7749, %v7813
        %v7876 = vadd.f32 %v7750, %v7816
        %v7877 = vadd.f32 %v7751, %v7821
        %v7878 = vadd.f32 %v7752, %v7824
        %v7879 = vadd.f32 %v7753, %v7829
        %v7880 = vadd.f32 %v7754, %v7832
        %v7881 = vadd.f32 %v7755, %v7837
        %v7882 = vadd.f32 %v7756, %v7840
        %v7883 = vadd.f32 %v7757, %v7845
        %v7884 = vadd.f32 %v7758, %v7848
        %v7885 = vadd.f32 %v7759, %v7853
        %v7886 = vadd.f32 %v7760, %v7856
        %v7887 = vadd.f32 %v7761, %v7861
        %v7888 = vadd.f32 %v7762, %v7864
        %v7889 = vadd.f32 %v7763, %v7869
        %v7890 = vadd.f32 %v7764, %v7872
        %s7891 = scalar_lea.vmem %s1, 86
        %v7892 = vld [vmem:[%s7891] sm:$0x3]
        %v7895 = vunpack.c.l.b16 %v265
        %v7896 = vunpack.c.l.b16 %v266
        %v7897 = vpack.c.b16 %v7896, %v7895
        %v7899 = vsel %vm371, %v7897, 0
        %v7902 = vand.u32 %v7892, %v399
        %7904 = vmatprep.subr.bf16.mxu0 0
        %7905 = vmatpush1.bf16.msra.mxu0 %v7902
        %7906 = vmatprep.subr.bf16.mxu0 0
        %7907 = vmatpush1.bf16.msra.mxu0 0
        %7908 = vmatprep.subr.bf16.mxu0 0
        %7909 = vmatpush1.bf16.msra.mxu0 0
        %7910 = vmatprep.subr.bf16.mxu0 0
        %7911 = vmatpush1.bf16.msra.mxu0 0
        %7912 = vmatprep.subr.bf16.mxu0 0
        %7913 = vmatpush1.bf16.msra.mxu0 0
        %7914 = vmatprep.subr.bf16.mxu0 0
        %7915 = vmatpush1.bf16.msra.mxu0 0
        %7916 = vmatprep.subr.bf16.mxu0 0
        %7917 = vmatpush1.bf16.msra.mxu0 0
        %7918 = vmatprep.subr.bf16.mxu0 0
        %7919 = vmatpush1.bf16.msra.mxu0 0
        %7920 = vmatprep.subr.bf16.mxu0 0
        %7921 = vmatpush1.bf16.msra.mxu0 0
        %7922 = vmatprep.subr.bf16.mxu0 0
        %7923 = vmatpush1.bf16.msra.mxu0 0
        %7924 = vmatprep.subr.bf16.mxu0 0
        %7925 = vmatpush1.bf16.msra.mxu0 0
        %7926 = vmatprep.subr.bf16.mxu0 0
        %7927 = vmatpush1.bf16.msra.mxu0 0
        %7928 = vmatprep.subr.bf16.mxu0 0
        %7929 = vmatpush1.bf16.msra.mxu0 0
        %7930 = vmatprep.subr.bf16.mxu0 0
        %7931 = vmatpush1.bf16.msra.mxu0 0
        %7932 = vmatprep.subr.bf16.mxu0 0
        %7933 = vmatpush1.bf16.msra.mxu0 0
        %7934 = vmatprep.subr.bf16.mxu0 0
        %7935 = vmatpush1.bf16.msra.mxu0 0
        %7936 = vmatprep.mubr.bf16.mxu0 0
        %7937 = vmatmul.mubr.bf16.gmra.mrb[0].mxu0 %v382
        %v7938 = vpop.f32.mrb[0].mxu0
        %v7939 = vadd.f32 0.0, %v7938
        %v7940 = vpop.f32.mrb[0].mxu0
        %v7941 = vpop.f32.mrb[0].mxu0
        %v7942 = vadd.f32 0.0, %v7941
        %v7943 = vpop.f32.mrb[0].mxu0
        %7944 = vmatprep.mubr.bf16.mxu0 0
        %7945 = vmatmul.mubr.bf16.gmra.mrb[0].mxu0 %v385
        %v7946 = vpop.f32.mrb[0].mxu0
        %v7947 = vadd.f32 0.0, %v7946
        %v7948 = vpop.f32.mrb[0].mxu0
        %v7949 = vpop.f32.mrb[0].mxu0
        %v7950 = vadd.f32 0.0, %v7949
        %v7951 = vpop.f32.mrb[0].mxu0
        %7952 = vmatprep.mubr.bf16.mxu0 0
        %7953 = vmatmul.mubr.bf16.gmra.mrb[0].mxu0 %v388
        %v7954 = vpop.f32.mrb[0].mxu0
        %v7955 = vadd.f32 0.0, %v7954
        %v7956 = vpop.f32.mrb[0].mxu0
        %v7957 = vpop.f32.mrb[0].mxu0
        %v7958 = vadd.f32 0.0, %v7957
        %v7959 = vpop.f32.mrb[0].mxu0
        %7960 = vmatprep.mubr.bf16.mxu0 0
        %7961 = vmatmul.mubr.bf16.gmra.mrb[0].mxu0 %v391
        %v7962 = vpop.f32.mrb[0].mxu0
        %v7963 = vadd.f32 0.0, %v7962
        %v7964 = vpop.f32.mrb[0].mxu0
        %v7965 = vpop.f32.mrb[0].mxu0
        %v7966 = vadd.f32 0.0, %v7965
        %v7967 = vpop.f32.mrb[0].mxu0
        %7968 = vmatprep.mubr.bf16.mxu0 0
        %7969 = vmatmul.mubr.bf16.gmra.mrb[0].mxu0 %v394
        %v7970 = vpop.f32.mrb[0].mxu0
        %v7971 = vadd.f32 0.0, %v7970
        %v7972 = vpop.f32.mrb[0].mxu0
        %v7973 = vpop.f32.mrb[0].mxu0
        %v7974 = vadd.f32 0.0, %v7973
        %v7975 = vpop.f32.mrb[0].mxu0
        %7976 = vmatprep.mubr.bf16.mxu0 0
        %7977 = vmatmul.mubr.bf16.gmra.mrb[0].mxu0 %v4095
        %v7978 = vpop.f32.mrb[0].mxu0
        %v7979 = vadd.f32 0.0, %v7978
        %v7980 = vpop.f32.mrb[0].mxu0
        %v7981 = vpop.f32.mrb[0].mxu0
        %v7982 = vadd.f32 0.0, %v7981
        %v7983 = vpop.f32.mrb[0].mxu0
        %7984 = vmatprep.mubr.bf16.mxu0 0
        %7985 = vmatmul.mubr.bf16.gmra.mrb[0].mxu0 %v5997
        %v7986 = vpop.f32.mrb[0].mxu0
        %v7987 = vadd.f32 0.0, %v7986
        %v7988 = vpop.f32.mrb[0].mxu0
        %v7989 = vpop.f32.mrb[0].mxu0
        %v7990 = vadd.f32 0.0, %v7989
        %v7991 = vpop.f32.mrb[0].mxu0
        %7992 = vmatprep.mubr.bf16.mxu0 0
        %7993 = vmatmul.mubr.bf16.gmra.mrb[0].mxu0 %v7899
        %v7994 = vpop.f32.mrb[0].mxu0
        %v7995 = vadd.f32 0.0, %v7994
        %v7996 = vpop.f32.mrb[0].mxu0
        %v7997 = vpop.f32.mrb[0].mxu0
        %v7998 = vadd.f32 0.0, %v7997
        %v7999 = vpop.f32.mrb[0].mxu0
        %8000 = vdwg.mxu0
        %v8001 = vadd.f32 %v7875, %v7939
        %v8002 = vadd.f32 %v7876, %v7942
        %v8003 = vadd.f32 %v7877, %v7947
        %v8004 = vadd.f32 %v7878, %v7950
        %v8005 = vadd.f32 %v7879, %v7955
        %v8006 = vadd.f32 %v7880, %v7958
        %v8007 = vadd.f32 %v7881, %v7963
        %v8008 = vadd.f32 %v7882, %v7966
        %v8009 = vadd.f32 %v7883, %v7971
        %v8010 = vadd.f32 %v7884, %v7974
        %v8011 = vadd.f32 %v7885, %v7979
        %v8012 = vadd.f32 %v7886, %v7982
        %v8013 = vadd.f32 %v7887, %v7987
        %v8014 = vadd.f32 %v7888, %v7990
        %v8015 = vadd.f32 %v7889, %v7995
        %v8016 = vadd.f32 %v7890, %v7998
        %v8018 = vshrl.u32 %v232, 16
        %v8020 = vrot.slane %v8018, 4
        %v8021 = vshll.u32 %v232, 16
        %v8023 = vrot.slane %v8021, 5
        %v8024 = vor.u32 %v8020, %v8023
        %v8025 = vrot.slane %v8024, 4
        %v8027 = vshll.u32 %v233, 16
        %v8029 = vrot.slane %v8027, 5
        %v8030 = vsel %vm666, %v8025, %v8029
        %v8031 = vshrl.u32 %v233, 16
        %v8033 = vrot.slane %v8031, 4
        %v8034 = vor.u32 %v8033, %v8029
        %v8035 = vrot.slane %v8034, 4
        %v8037 = vshll.u32 %v234, 16
        %v8039 = vrot.slane %v8037, 5
        %v8040 = vsel %vm666, %v8035, %v8039
        %s8041 = scalar_lea.vmem %s1, 88
        %v8042 = vld [vmem:[%s8041] sm:$0x3]
        %v8043 = vunpack.c.l.b16 %v8030
        %v8044 = vunpack.c.l.b16 %v8040
        %v8045 = vpack.c.b16 %v8044, %v8043
        %v8047 = vsel %vm371, %v8045, 0
        %v8050 = vand.u32 %v8042, %v399
        %8052 = vmatprep.subr.bf16.mxu0 0
        %8053 = vmatpush1.bf16.msra.mxu0 %v8050
        %8054 = vmatprep.subr.bf16.mxu0 0
        %8055 = vmatpush1.bf16.msra.mxu0 0
        %8056 = vmatprep.subr.bf16.mxu0 0
        %8057 = vmatpush1.bf16.msra.mxu0 0
        %8058 = vmatprep.subr.bf16.mxu0 0
        %8059 = vmatpush1.bf16.msra.mxu0 0
        %8060 = vmatprep.subr.bf16.mxu0 0
        %8061 = vmatpush1.bf16.msra.mxu0 0
        %8062 = vmatprep.subr.bf16.mxu0 0
        %8063 = vmatpush1.bf16.msra.mxu0 0
        %8064 = vmatprep.subr.bf16.mxu0 0
        %8065 = vmatpush1.bf16.msra.mxu0 0
        %8066 = vmatprep.subr.bf16.mxu0 0
        %8067 = vmatpush1.bf16.msra.mxu0 0
        %8068 = vmatprep.subr.bf16.mxu0 0
        %8069 = vmatpush1.bf16.msra.mxu0 0
        %8070 = vmatprep.subr.bf16.mxu0 0
        %8071 = vmatpush1.bf16.msra.mxu0 0
        %8072 = vmatprep.subr.bf16.mxu0 0
        %8073 = vmatpush1.bf16.msra.mxu0 0
        %8074 = vmatprep.subr.bf16.mxu0 0
        %8075 = vmatpush1.bf16.msra.mxu0 0
        %8076 = vmatprep.subr.bf16.mxu0 0
        %8077 = vmatpush1.bf16.msra.mxu0 0
        %8078 = vmatprep.subr.bf16.mxu0 0
        %8079 = vmatpush1.bf16.msra.mxu0 0
        %8080 = vmatprep.subr.bf16.mxu0 0
        %8081 = vmatpush1.bf16.msra.mxu0 0
        %8082 = vmatprep.subr.bf16.mxu0 0
        %8083 = vmatpush1.bf16.msra.mxu0 0
        %8084 = vmatprep.mubr.bf16.mxu0 0
        %8085 = vmatmul.mubr.bf16.gmra.mrb[0].mxu0 %v895
        %v8086 = vpop.f32.mrb[0].mxu0
        %v8087 = vadd.f32 0.0, %v8086
        %v8088 = vpop.f32.mrb[0].mxu0
        %v8089 = vpop.f32.mrb[0].mxu0
        %v8090 = vadd.f32 0.0, %v8089
        %v8091 = vpop.f32.mrb[0].mxu0
        %8092 = vmatprep.mubr.bf16.mxu0 0
        %8093 = vmatmul.mubr.bf16.gmra.mrb[0].mxu0 %v898
        %v8094 = vpop.f32.mrb[0].mxu0
        %v8095 = vadd.f32 0.0, %v8094
        %v8096 = vpop.f32.mrb[0].mxu0
        %v8097 = vpop.f32.mrb[0].mxu0
        %v8098 = vadd.f32 0.0, %v8097
        %v8099 = vpop.f32.mrb[0].mxu0
        %8100 = vmatprep.mubr.bf16.mxu0 0
        %8101 = vmatmul.mubr.bf16.gmra.mrb[0].mxu0 %v901
        %v8102 = vpop.f32.mrb[0].mxu0
        %v8103 = vadd.f32 0.0, %v8102
        %v8104 = vpop.f32.mrb[0].mxu0
        %v8105 = vpop.f32.mrb[0].mxu0
        %v8106 = vadd.f32 0.0, %v8105
        %v8107 = vpop.f32.mrb[0].mxu0
        %8108 = vmatprep.mubr.bf16.mxu0 0
        %8109 = vmatmul.mubr.bf16.gmra.mrb[0].mxu0 %v904
        %v8110 = vpop.f32.mrb[0].mxu0
        %v8111 = vadd.f32 0.0, %v8110
        %v8112 = vpop.f32.mrb[0].mxu0
        %v8113 = vpop.f32.mrb[0].mxu0
        %v8114 = vadd.f32 0.0, %v8113
        %v8115 = vpop.f32.mrb[0].mxu0
        %8116 = vmatprep.mubr.bf16.mxu0 0
        %8117 = vmatmul.mubr.bf16.gmra.mrb[0].mxu0 %v907
        %v8118 = vpop.f32.mrb[0].mxu0
        %v8119 = vadd.f32 0.0, %v8118
        %v8120 = vpop.f32.mrb[0].mxu0
        %v8121 = vpop.f32.mrb[0].mxu0
        %v8122 = vadd.f32 0.0, %v8121
        %v8123 = vpop.f32.mrb[0].mxu0
        %8124 = vmatprep.mubr.bf16.mxu0 0
        %8125 = vmatmul.mubr.bf16.gmra.mrb[0].mxu0 %v4243
        %v8126 = vpop.f32.mrb[0].mxu0
        %v8127 = vadd.f32 0.0, %v8126
        %v8128 = vpop.f32.mrb[0].mxu0
        %v8129 = vpop.f32.mrb[0].mxu0
        %v8130 = vadd.f32 0.0, %v8129
        %v8131 = vpop.f32.mrb[0].mxu0
        %8132 = vmatprep.mubr.bf16.mxu0 0
        %8133 = vmatmul.mubr.bf16.gmra.mrb[0].mxu0 %v6145
        %v8134 = vpop.f32.mrb[0].mxu0
        %v8135 = vadd.f32 0.0, %v8134
        %v8136 = vpop.f32.mrb[0].mxu0
        %v8137 = vpop.f32.mrb[0].mxu0
        %v8138 = vadd.f32 0.0, %v8137
        %v8139 = vpop.f32.mrb[0].mxu0
        %8140 = vmatprep.mubr.bf16.mxu0 0
        %8141 = vmatmul.mubr.bf16.gmra.mrb[0].mxu0 %v8047
        %v8142 = vpop.f32.mrb[0].mxu0
        %v8143 = vadd.f32 0.0, %v8142
        %v8144 = vpop.f32.mrb[0].mxu0
        %v8145 = vpop.f32.mrb[0].mxu0
        %v8146 = vadd.f32 0.0, %v8145
        %v8147 = vpop.f32.mrb[0].mxu0
        %8148 = vdwg.mxu0
        %v8149 = vadd.f32 %v8001, %v8087
        %v8150 = vadd.f32 %v8002, %v8090
        %v8151 = vadd.f32 %v8003, %v8095
        %v8152 = vadd.f32 %v8004, %v8098
        %v8153 = vadd.f32 %v8005, %v8103
        %v8154 = vadd.f32 %v8006, %v8106
        %v8155 = vadd.f32 %v8007, %v8111
        %v8156 = vadd.f32 %v8008, %v8114
        %v8157 = vadd.f32 %v8009, %v8119
        %v8158 = vadd.f32 %v8010, %v8122
        %v8159 = vadd.f32 %v8011, %v8127
        %v8160 = vadd.f32 %v8012, %v8130
        %v8161 = vadd.f32 %v8013, %v8135
        %v8162 = vadd.f32 %v8014, %v8138
        %v8163 = vadd.f32 %v8015, %v8143
        %v8164 = vadd.f32 %v8016, %v8146
        %v8166 = vshrl.u32 %v265, 16
        %v8168 = vrot.slane %v8166, 4
        %v8169 = vshll.u32 %v265, 16
        %v8171 = vrot.slane %v8169, 5
        %v8172 = vor.u32 %v8168, %v8171
        %v8173 = vrot.slane %v8172, 4
        %v8175 = vshll.u32 %v266, 16
        %v8177 = vrot.slane %v8175, 5
        %v8178 = vsel %vm666, %v8173, %v8177
        %v8179 = vshrl.u32 %v266, 16
        %v8181 = vrot.slane %v8179, 4
        %v8182 = vor.u32 %v8181, %v8177
        %v8183 = vrot.slane %v8182, 4
        %v8185 = vshll.u32 %v267, 16
        %v8187 = vrot.slane %v8185, 5
        %v8188 = vsel %vm666, %v8183, %v8187
        %s8189 = scalar_lea.vmem %s1, 90
        %v8190 = vld [vmem:[%s8189] sm:$0x3]
        %v8191 = vunpack.c.l.b16 %v8178
        %v8192 = vunpack.c.l.b16 %v8188
        %v8193 = vpack.c.b16 %v8192, %v8191
        %v8195 = vsel %vm371, %v8193, 0
        %v8198 = vand.u32 %v8190, %v399
        %8200 = vmatprep.subr.bf16.mxu0 0
        %8201 = vmatpush1.bf16.msra.mxu0 %v8198
        %8202 = vmatprep.subr.bf16.mxu0 0
        %8203 = vmatpush1.bf16.msra.mxu0 0
        %8204 = vmatprep.subr.bf16.mxu0 0
        %8205 = vmatpush1.bf16.msra.mxu0 0
        %8206 = vmatprep.subr.bf16.mxu0 0
        %8207 = vmatpush1.bf16.msra.mxu0 0
        %8208 = vmatprep.subr.bf16.mxu0 0
        %8209 = vmatpush1.bf16.msra.mxu0 0
        %8210 = vmatprep.subr.bf16.mxu0 0
        %8211 = vmatpush1.bf16.msra.mxu0 0
        %8212 = vmatprep.subr.bf16.mxu0 0
        %8213 = vmatpush1.bf16.msra.mxu0 0
        %8214 = vmatprep.subr.bf16.mxu0 0
        %8215 = vmatpush1.bf16.msra.mxu0 0
        %8216 = vmatprep.subr.bf16.mxu0 0
        %8217 = vmatpush1.bf16.msra.mxu0 0
        %8218 = vmatprep.subr.bf16.mxu0 0
        %8219 = vmatpush1.bf16.msra.mxu0 0
        %8220 = vmatprep.subr.bf16.mxu0 0
        %8221 = vmatpush1.bf16.msra.mxu0 0
        %8222 = vmatprep.subr.bf16.mxu0 0
        %8223 = vmatpush1.bf16.msra.mxu0 0
        %8224 = vmatprep.subr.bf16.mxu0 0
        %8225 = vmatpush1.bf16.msra.mxu0 0
        %8226 = vmatprep.subr.bf16.mxu0 0
        %8227 = vmatpush1.bf16.msra.mxu0 0
        %8228 = vmatprep.subr.bf16.mxu0 0
        %8229 = vmatpush1.bf16.msra.mxu0 0
        %8230 = vmatprep.subr.bf16.mxu0 0
        %8231 = vmatpush1.bf16.msra.mxu0 0
        %8232 = vmatprep.mubr.bf16.mxu0 0
        %8233 = vmatmul.mubr.bf16.gmra.mrb[0].mxu0 %v1253
        %v8234 = vpop.f32.mrb[0].mxu0
        %v8235 = vadd.f32 0.0, %v8234
        %v8236 = vpop.f32.mrb[0].mxu0
        %v8237 = vpop.f32.mrb[0].mxu0
        %v8238 = vadd.f32 0.0, %v8237
        %v8239 = vpop.f32.mrb[0].mxu0
        %8240 = vmatprep.mubr.bf16.mxu0 0
        %8241 = vmatmul.mubr.bf16.gmra.mrb[0].mxu0 %v1256
        %v8242 = vpop.f32.mrb[0].mxu0
        %v8243 = vadd.f32 0.0, %v8242
        %v8244 = vpop.f32.mrb[0].mxu0
        %v8245 = vpop.f32.mrb[0].mxu0
        %v8246 = vadd.f32 0.0, %v8245
        %v8247 = vpop.f32.mrb[0].mxu0
        %8248 = vmatprep.mubr.bf16.mxu0 0
        %8249 = vmatmul.mubr.bf16.gmra.mrb[0].mxu0 %v1259
        %v8250 = vpop.f32.mrb[0].mxu0
        %v8251 = vadd.f32 0.0, %v8250
        %v8252 = vpop.f32.mrb[0].mxu0
        %v8253 = vpop.f32.mrb[0].mxu0
        %v8254 = vadd.f32 0.0, %v8253
        %v8255 = vpop.f32.mrb[0].mxu0
        %8256 = vmatprep.mubr.bf16.mxu0 0
        %8257 = vmatmul.mubr.bf16.gmra.mrb[0].mxu0 %v1262
        %v8258 = vpop.f32.mrb[0].mxu0
        %v8259 = vadd.f32 0.0, %v8258
        %v8260 = vpop.f32.mrb[0].mxu0
        %v8261 = vpop.f32.mrb[0].mxu0
        %v8262 = vadd.f32 0.0, %v8261
        %v8263 = vpop.f32.mrb[0].mxu0
        %8264 = vmatprep.mubr.bf16.mxu0 0
        %8265 = vmatmul.mubr.bf16.gmra.mrb[0].mxu0 %v1265
        %v8266 = vpop.f32.mrb[0].mxu0
        %v8267 = vadd.f32 0.0, %v8266
        %v8268 = vpop.f32.mrb[0].mxu0
        %v8269 = vpop.f32.mrb[0].mxu0
        %v8270 = vadd.f32 0.0, %v8269
        %v8271 = vpop.f32.mrb[0].mxu0
        %8272 = vmatprep.mubr.bf16.mxu0 0
        %8273 = vmatmul.mubr.bf16.gmra.mrb[0].mxu0 %v4391
        %v8274 = vpop.f32.mrb[0].mxu0
        %v8275 = vadd.f32 0.0, %v8274
        %v8276 = vpop.f32.mrb[0].mxu0
        %v8277 = vpop.f32.mrb[0].mxu0
        %v8278 = vadd.f32 0.0, %v8277
        %v8279 = vpop.f32.mrb[0].mxu0
        %8280 = vmatprep.mubr.bf16.mxu0 0
        %8281 = vmatmul.mubr.bf16.gmra.mrb[0].mxu0 %v6293
        %v8282 = vpop.f32.mrb[0].mxu0
        %v8283 = vadd.f32 0.0, %v8282
        %v8284 = vpop.f32.mrb[0].mxu0
        %v8285 = vpop.f32.mrb[0].mxu0
        %v8286 = vadd.f32 0.0, %v8285
        %v8287 = vpop.f32.mrb[0].mxu0
        %8288 = vmatprep.mubr.bf16.mxu0 0
        %8289 = vmatmul.mubr.bf16.gmra.mrb[0].mxu0 %v8195
        %v8290 = vpop.f32.mrb[0].mxu0
        %v8291 = vadd.f32 0.0, %v8290
        %v8292 = vpop.f32.mrb[0].mxu0
        %v8293 = vpop.f32.mrb[0].mxu0
        %v8294 = vadd.f32 0.0, %v8293
        %v8295 = vpop.f32.mrb[0].mxu0
        %8296 = vdwg.mxu0
        %v8297 = vadd.f32 %v8149, %v8235
        %v8298 = vadd.f32 %v8150, %v8238
        %v8299 = vadd.f32 %v8151, %v8243
        %v8300 = vadd.f32 %v8152, %v8246
        %v8301 = vadd.f32 %v8153, %v8251
        %v8302 = vadd.f32 %v8154, %v8254
        %v8303 = vadd.f32 %v8155, %v8259
        %v8304 = vadd.f32 %v8156, %v8262
        %v8305 = vadd.f32 %v8157, %v8267
        %v8306 = vadd.f32 %v8158, %v8270
        %v8307 = vadd.f32 %v8159, %v8275
        %v8308 = vadd.f32 %v8160, %v8278
        %v8309 = vadd.f32 %v8161, %v8283
        %v8310 = vadd.f32 %v8162, %v8286
        %v8311 = vadd.f32 %v8163, %v8291
        %v8312 = vadd.f32 %v8164, %v8294
        %v8314 = vrot.slane %v232, 5
        %v8315 = vrot.slane %v8314, 4
        %v8316 = vrot.slane %v233, 5
        %v8317 = vsel %vm1393, %v8315, %v8316
        %v8318 = vrot.slane %v8316, 4
        %v8319 = vrot.slane %v234, 5
        %v8320 = vsel %vm1393, %v8318, %v8319
        %s8321 = scalar_lea.vmem %s1, 92
        %v8322 = vld [vmem:[%s8321] sm:$0x3]
        %v8323 = vunpack.c.l.b16 %v8317
        %v8324 = vunpack.c.l.b16 %v8320
        %v8325 = vpack.c.b16 %v8324, %v8323
        %v8327 = vsel %vm371, %v8325, 0
        %v8330 = vand.u32 %v8322, %v399
        %8332 = vmatprep.subr.bf16.mxu0 0
        %8333 = vmatpush1.bf16.msra.mxu0 %v8330
        %8334 = vmatprep.subr.bf16.mxu0 0
        %8335 = vmatpush1.bf16.msra.mxu0 0
        %8336 = vmatprep.subr.bf16.mxu0 0
        %8337 = vmatpush1.bf16.msra.mxu0 0
        %8338 = vmatprep.subr.bf16.mxu0 0
        %8339 = vmatpush1.bf16.msra.mxu0 0
        %8340 = vmatprep.subr.bf16.mxu0 0
        %8341 = vmatpush1.bf16.msra.mxu0 0
        %8342 = vmatprep.subr.bf16.mxu0 0
        %8343 = vmatpush1.bf16.msra.mxu0 0
        %8344 = vmatprep.subr.bf16.mxu0 0
        %8345 = vmatpush1.bf16.msra.mxu0 0
        %8346 = vmatprep.subr.bf16.mxu0 0
        %8347 = vmatpush1.bf16.msra.mxu0 0
        %8348 = vmatprep.subr.bf16.mxu0 0
        %8349 = vmatpush1.bf16.msra.mxu0 0
        %8350 = vmatprep.subr.bf16.mxu0 0
        %8351 = vmatpush1.bf16.msra.mxu0 0
        %8352 = vmatprep.subr.bf16.mxu0 0
        %8353 = vmatpush1.bf16.msra.mxu0 0
        %8354 = vmatprep.subr.bf16.mxu0 0
        %8355 = vmatpush1.bf16.msra.mxu0 0
        %8356 = vmatprep.subr.bf16.mxu0 0
        %8357 = vmatpush1.bf16.msra.mxu0 0
        %8358 = vmatprep.subr.bf16.mxu0 0
        %8359 = vmatpush1.bf16.msra.mxu0 0
        %8360 = vmatprep.subr.bf16.mxu0 0
        %8361 = vmatpush1.bf16.msra.mxu0 0
        %8362 = vmatprep.subr.bf16.mxu0 0
        %8363 = vmatpush1.bf16.msra.mxu0 0
        %8364 = vmatprep.mubr.bf16.mxu0 0
        %8365 = vmatmul.mubr.bf16.gmra.mrb[0].mxu0 %v1486
        %v8366 = vpop.f32.mrb[0].mxu0
        %v8367 = vadd.f32 0.0, %v8366
        %v8368 = vpop.f32.mrb[0].mxu0
        %v8369 = vpop.f32.mrb[0].mxu0
        %v8370 = vadd.f32 0.0, %v8369
        %v8371 = vpop.f32.mrb[0].mxu0
        %8372 = vmatprep.mubr.bf16.mxu0 0
        %8373 = vmatmul.mubr.bf16.gmra.mrb[0].mxu0 %v1489
        %v8374 = vpop.f32.mrb[0].mxu0
        %v8375 = vadd.f32 0.0, %v8374
        %v8376 = vpop.f32.mrb[0].mxu0
        %v8377 = vpop.f32.mrb[0].mxu0
        %v8378 = vadd.f32 0.0, %v8377
        %v8379 = vpop.f32.mrb[0].mxu0
        %8380 = vmatprep.mubr.bf16.mxu0 0
        %8381 = vmatmul.mubr.bf16.gmra.mrb[0].mxu0 %v1492
        %v8382 = vpop.f32.mrb[0].mxu0
        %v8383 = vadd.f32 0.0, %v8382
        %v8384 = vpop.f32.mrb[0].mxu0
        %v8385 = vpop.f32.mrb[0].mxu0
        %v8386 = vadd.f32 0.0, %v8385
        %v8387 = vpop.f32.mrb[0].mxu0
        %8388 = vmatprep.mubr.bf16.mxu0 0
        %8389 = vmatmul.mubr.bf16.gmra.mrb[0].mxu0 %v1495
        %v8390 = vpop.f32.mrb[0].mxu0
        %v8391 = vadd.f32 0.0, %v8390
        %v8392 = vpop.f32.mrb[0].mxu0
        %v8393 = vpop.f32.mrb[0].mxu0
        %v8394 = vadd.f32 0.0, %v8393
        %v8395 = vpop.f32.mrb[0].mxu0
        %8396 = vmatprep.mubr.bf16.mxu0 0
        %8397 = vmatmul.mubr.bf16.gmra.mrb[0].mxu0 %v1498
        %v8398 = vpop.f32.mrb[0].mxu0
        %v8399 = vadd.f32 0.0, %v8398
        %v8400 = vpop.f32.mrb[0].mxu0
        %v8401 = vpop.f32.mrb[0].mxu0
        %v8402 = vadd.f32 0.0, %v8401
        %v8403 = vpop.f32.mrb[0].mxu0
        %8404 = vmatprep.mubr.bf16.mxu0 0
        %8405 = vmatmul.mubr.bf16.gmra.mrb[0].mxu0 %v4523
        %v8406 = vpop.f32.mrb[0].mxu0
        %v8407 = vadd.f32 0.0, %v8406
        %v8408 = vpop.f32.mrb[0].mxu0
        %v8409 = vpop.f32.mrb[0].mxu0
        %v8410 = vadd.f32 0.0, %v8409
        %v8411 = vpop.f32.mrb[0].mxu0
        %8412 = vmatprep.mubr.bf16.mxu0 0
        %8413 = vmatmul.mubr.bf16.gmra.mrb[0].mxu0 %v6425
        %v8414 = vpop.f32.mrb[0].mxu0
        %v8415 = vadd.f32 0.0, %v8414
        %v8416 = vpop.f32.mrb[0].mxu0
        %v8417 = vpop.f32.mrb[0].mxu0
        %v8418 = vadd.f32 0.0, %v8417
        %v8419 = vpop.f32.mrb[0].mxu0
        %8420 = vmatprep.mubr.bf16.mxu0 0
        %8421 = vmatmul.mubr.bf16.gmra.mrb[0].mxu0 %v8327
        %v8422 = vpop.f32.mrb[0].mxu0
        %v8423 = vadd.f32 0.0, %v8422
        %v8424 = vpop.f32.mrb[0].mxu0
        %v8425 = vpop.f32.mrb[0].mxu0
        %v8426 = vadd.f32 0.0, %v8425
        %v8427 = vpop.f32.mrb[0].mxu0
        %8428 = vdwg.mxu0
        %v8429 = vadd.f32 %v8297, %v8367
        %v8430 = vadd.f32 %v8298, %v8370
        %v8431 = vadd.f32 %v8299, %v8375
        %v8432 = vadd.f32 %v8300, %v8378
        %v8433 = vadd.f32 %v8301, %v8383
        %v8434 = vadd.f32 %v8302, %v8386
        %v8435 = vadd.f32 %v8303, %v8391
        %v8436 = vadd.f32 %v8304, %v8394
        %v8437 = vadd.f32 %v8305, %v8399
        %v8438 = vadd.f32 %v8306, %v8402
        %v8439 = vadd.f32 %v8307, %v8407
        %v8440 = vadd.f32 %v8308, %v8410
        %v8441 = vadd.f32 %v8309, %v8415
        %v8442 = vadd.f32 %v8310, %v8418
        %v8443 = vadd.f32 %v8311, %v8423
        %v8444 = vadd.f32 %v8312, %v8426
        %v8446 = vrot.slane %v265, 5
        %v8447 = vrot.slane %v8446, 4
        %v8448 = vrot.slane %v266, 5
        %v8449 = vsel %vm1393, %v8447, %v8448
        %v8450 = vrot.slane %v8448, 4
        %v8451 = vrot.slane %v267, 5
        %v8452 = vsel %vm1393, %v8450, %v8451
        %s8453 = scalar_lea.vmem %s1, 94
        %v8454 = vld [vmem:[%s8453] sm:$0x3]
        %v8455 = vunpack.c.l.b16 %v8449
        %v8456 = vunpack.c.l.b16 %v8452
        %v8457 = vpack.c.b16 %v8456, %v8455
        %v8459 = vsel %vm371, %v8457, 0
        %v8462 = vand.u32 %v8454, %v399
        %8464 = vmatprep.subr.bf16.mxu0 0
        %8465 = vmatpush1.bf16.msra.mxu0 %v8462
        %8466 = vmatprep.subr.bf16.mxu0 0
        %8467 = vmatpush1.bf16.msra.mxu0 0
        %8468 = vmatprep.subr.bf16.mxu0 0
        %8469 = vmatpush1.bf16.msra.mxu0 0
        %8470 = vmatprep.subr.bf16.mxu0 0
        %8471 = vmatpush1.bf16.msra.mxu0 0
        %8472 = vmatprep.subr.bf16.mxu0 0
        %8473 = vmatpush1.bf16.msra.mxu0 0
        %8474 = vmatprep.subr.bf16.mxu0 0
        %8475 = vmatpush1.bf16.msra.mxu0 0
        %8476 = vmatprep.subr.bf16.mxu0 0
        %8477 = vmatpush1.bf16.msra.mxu0 0
        %8478 = vmatprep.subr.bf16.mxu0 0
        %8479 = vmatpush1.bf16.msra.mxu0 0
        %8480 = vmatprep.subr.bf16.mxu0 0
        %8481 = vmatpush1.bf16.msra.mxu0 0
        %8482 = vmatprep.subr.bf16.mxu0 0
        %8483 = vmatpush1.bf16.msra.mxu0 0
        %8484 = vmatprep.subr.bf16.mxu0 0
        %8485 = vmatpush1.bf16.msra.mxu0 0
        %8486 = vmatprep.subr.bf16.mxu0 0
        %8487 = vmatpush1.bf16.msra.mxu0 0
        %8488 = vmatprep.subr.bf16.mxu0 0
        %8489 = vmatpush1.bf16.msra.mxu0 0
        %8490 = vmatprep.subr.bf16.mxu0 0
        %8491 = vmatpush1.bf16.msra.mxu0 0
        %8492 = vmatprep.subr.bf16.mxu0 0
        %8493 = vmatpush1.bf16.msra.mxu0 0
        %8494 = vmatprep.subr.bf16.mxu0 0
        %8495 = vmatpush1.bf16.msra.mxu0 0
        %8496 = vmatprep.mubr.bf16.mxu0 0
        %8497 = vmatmul.mubr.bf16.gmra.mrb[0].mxu0 %v1716
        %v8498 = vpop.f32.mrb[0].mxu0
        %v8499 = vadd.f32 0.0, %v8498
        %v8500 = vpop.f32.mrb[0].mxu0
        %v8501 = vpop.f32.mrb[0].mxu0
        %v8502 = vadd.f32 0.0, %v8501
        %v8503 = vpop.f32.mrb[0].mxu0
        %8504 = vmatprep.mubr.bf16.mxu0 0
        %8505 = vmatmul.mubr.bf16.gmra.mrb[0].mxu0 %v1719
        %v8506 = vpop.f32.mrb[0].mxu0
        %v8507 = vadd.f32 0.0, %v8506
        %v8508 = vpop.f32.mrb[0].mxu0
        %v8509 = vpop.f32.mrb[0].mxu0
        %v8510 = vadd.f32 0.0, %v8509
        %v8511 = vpop.f32.mrb[0].mxu0
        %8512 = vmatprep.mubr.bf16.mxu0 0
        %8513 = vmatmul.mubr.bf16.gmra.mrb[0].mxu0 %v1722
        %v8514 = vpop.f32.mrb[0].mxu0
        %v8515 = vadd.f32 0.0, %v8514
        %v8516 = vpop.f32.mrb[0].mxu0
        %v8517 = vpop.f32.mrb[0].mxu0
        %v8518 = vadd.f32 0.0, %v8517
        %v8519 = vpop.f32.mrb[0].mxu0
        %8520 = vmatprep.mubr.bf16.mxu0 0
        %8521 = vmatmul.mubr.bf16.gmra.mrb[0].mxu0 %v1725
        %v8522 = vpop.f32.mrb[0].mxu0
        %v8523 = vadd.f32 0.0, %v8522
        %v8524 = vpop.f32.mrb[0].mxu0
        %v8525 = vpop.f32.mrb[0].mxu0
        %v8526 = vadd.f32 0.0, %v8525
        %v8527 = vpop.f32.mrb[0].mxu0
        %8528 = vmatprep.mubr.bf16.mxu0 0
        %8529 = vmatmul.mubr.bf16.gmra.mrb[0].mxu0 %v1728
        %v8530 = vpop.f32.mrb[0].mxu0
        %v8531 = vadd.f32 0.0, %v8530
        %v8532 = vpop.f32.mrb[0].mxu0
        %v8533 = vpop.f32.mrb[0].mxu0
        %v8534 = vadd.f32 0.0, %v8533
        %v8535 = vpop.f32.mrb[0].mxu0
        %8536 = vmatprep.mubr.bf16.mxu0 0
        %8537 = vmatmul.mubr.bf16.gmra.mrb[0].mxu0 %v4655
        %v8538 = vpop.f32.mrb[0].mxu0
        %v8539 = vadd.f32 0.0, %v8538
        %v8540 = vpop.f32.mrb[0].mxu0
        %v8541 = vpop.f32.mrb[0].mxu0
        %v8542 = vadd.f32 0.0, %v8541
        %v8543 = vpop.f32.mrb[0].mxu0
        %8544 = vmatprep.mubr.bf16.mxu0 0
        %8545 = vmatmul.mubr.bf16.gmra.mrb[0].mxu0 %v6557
        %v8546 = vpop.f32.mrb[0].mxu0
        %v8547 = vadd.f32 0.0, %v8546
        %v8548 = vpop.f32.mrb[0].mxu0
        %v8549 = vpop.f32.mrb[0].mxu0
        %v8550 = vadd.f32 0.0, %v8549
        %v8551 = vpop.f32.mrb[0].mxu0
        %8552 = vmatprep.mubr.bf16.mxu0 0
        %8553 = vmatmul.mubr.bf16.gmra.mrb[0].mxu0 %v8459
        %v8554 = vpop.f32.mrb[0].mxu0
        %v8555 = vadd.f32 0.0, %v8554
        %v8556 = vpop.f32.mrb[0].mxu0
        %v8557 = vpop.f32.mrb[0].mxu0
        %v8558 = vadd.f32 0.0, %v8557
        %v8559 = vpop.f32.mrb[0].mxu0
        %8560 = vdwg.mxu0
        %v8561 = vadd.f32 %v8429, %v8499
        %v8562 = vadd.f32 %v8430, %v8502
        %v8563 = vadd.f32 %v8431, %v8507
        %v8564 = vadd.f32 %v8432, %v8510
        %v8565 = vadd.f32 %v8433, %v8515
        %v8566 = vadd.f32 %v8434, %v8518
        %v8567 = vadd.f32 %v8435, %v8523
        %v8568 = vadd.f32 %v8436, %v8526
        %v8569 = vadd.f32 %v8437, %v8531
        %v8570 = vadd.f32 %v8438, %v8534
        %v8571 = vadd.f32 %v8439, %v8539
        %v8572 = vadd.f32 %v8440, %v8542
        %v8573 = vadd.f32 %v8441, %v8547
        %v8574 = vadd.f32 %v8442, %v8550
        %v8575 = vadd.f32 %v8443, %v8555
        %v8576 = vadd.f32 %v8444, %v8558
        %v8577 = vrot.slane %v8018, 5
        %v8578 = vrot.slane %v8021, 6
        %v8579 = vor.u32 %v8577, %v8578
        %v8580 = vrot.slane %v8579, 4
        %v8581 = vrot.slane %v8031, 5
        %v8582 = vrot.slane %v8027, 6
        %v8583 = vor.u32 %v8581, %v8582
        %v8584 = vsel %vm1848, %v8580, %v8583
        %v8585 = vrot.slane %v8583, 4
        %v8586 = vshrl.u32 %v234, 16
        %v8588 = vrot.slane %v8586, 5
        %v8589 = vrot.slane %v8037, 6
        %v8590 = vor.u32 %v8588, %v8589
        %v8591 = vsel %vm1848, %v8585, %v8590
        %s8592 = scalar_lea.vmem %s1, 96
        %v8593 = vld [vmem:[%s8592] sm:$0x3]
        %v8594 = vunpack.c.l.b16 %v8584
        %v8595 = vunpack.c.l.b16 %v8591
        %v8596 = vpack.c.b16 %v8595, %v8594
        %v8598 = vsel %vm371, %v8596, 0
        %v8601 = vand.u32 %v8593, %v399
        %8603 = vmatprep.subr.bf16.mxu0 0
        %8604 = vmatpush1.bf16.msra.mxu0 %v8601
        %8605 = vmatprep.subr.bf16.mxu0 0
        %8606 = vmatpush1.bf16.msra.mxu0 0
        %8607 = vmatprep.subr.bf16.mxu0 0
        %8608 = vmatpush1.bf16.msra.mxu0 0
        %8609 = vmatprep.subr.bf16.mxu0 0
        %8610 = vmatpush1.bf16.msra.mxu0 0
        %8611 = vmatprep.subr.bf16.mxu0 0
        %8612 = vmatpush1.bf16.msra.mxu0 0
        %8613 = vmatprep.subr.bf16.mxu0 0
        %8614 = vmatpush1.bf16.msra.mxu0 0
        %8615 = vmatprep.subr.bf16.mxu0 0
        %8616 = vmatpush1.bf16.msra.mxu0 0
        %8617 = vmatprep.subr.bf16.mxu0 0
        %8618 = vmatpush1.bf16.msra.mxu0 0
        %8619 = vmatprep.subr.bf16.mxu0 0
        %8620 = vmatpush1.bf16.msra.mxu0 0
        %8621 = vmatprep.subr.bf16.mxu0 0
        %8622 = vmatpush1.bf16.msra.mxu0 0
        %8623 = vmatprep.subr.bf16.mxu0 0
        %8624 = vmatpush1.bf16.msra.mxu0 0
        %8625 = vmatprep.subr.bf16.mxu0 0
        %8626 = vmatpush1.bf16.msra.mxu0 0
        %8627 = vmatprep.subr.bf16.mxu0 0
        %8628 = vmatpush1.bf16.msra.mxu0 0
        %8629 = vmatprep.subr.bf16.mxu0 0
        %8630 = vmatpush1.bf16.msra.mxu0 0
        %8631 = vmatprep.subr.bf16.mxu0 0
        %8632 = vmatpush1.bf16.msra.mxu0 0
        %8633 = vmatprep.subr.bf16.mxu0 0
        %8634 = vmatpush1.bf16.msra.mxu0 0
        %8635 = vmatprep.mubr.bf16.mxu0 0
        %8636 = vmatmul.mubr.bf16.gmra.mrb[0].mxu0 %v2005
        %v8637 = vpop.f32.mrb[0].mxu0
        %v8638 = vadd.f32 0.0, %v8637
        %v8639 = vpop.f32.mrb[0].mxu0
        %v8640 = vpop.f32.mrb[0].mxu0
        %v8641 = vadd.f32 0.0, %v8640
        %v8642 = vpop.f32.mrb[0].mxu0
        %8643 = vmatprep.mubr.bf16.mxu0 0
        %8644 = vmatmul.mubr.bf16.gmra.mrb[0].mxu0 %v2008
        %v8645 = vpop.f32.mrb[0].mxu0
        %v8646 = vadd.f32 0.0, %v8645
        %v8647 = vpop.f32.mrb[0].mxu0
        %v8648 = vpop.f32.mrb[0].mxu0
        %v8649 = vadd.f32 0.0, %v8648
        %v8650 = vpop.f32.mrb[0].mxu0
        %8651 = vmatprep.mubr.bf16.mxu0 0
        %8652 = vmatmul.mubr.bf16.gmra.mrb[0].mxu0 %v2011
        %v8653 = vpop.f32.mrb[0].mxu0
        %v8654 = vadd.f32 0.0, %v8653
        %v8655 = vpop.f32.mrb[0].mxu0
        %v8656 = vpop.f32.mrb[0].mxu0
        %v8657 = vadd.f32 0.0, %v8656
        %v8658 = vpop.f32.mrb[0].mxu0
        %8659 = vmatprep.mubr.bf16.mxu0 0
        %8660 = vmatmul.mubr.bf16.gmra.mrb[0].mxu0 %v2014
        %v8661 = vpop.f32.mrb[0].mxu0
        %v8662 = vadd.f32 0.0, %v8661
        %v8663 = vpop.f32.mrb[0].mxu0
        %v8664 = vpop.f32.mrb[0].mxu0
        %v8665 = vadd.f32 0.0, %v8664
        %v8666 = vpop.f32.mrb[0].mxu0
        %8667 = vmatprep.mubr.bf16.mxu0 0
        %8668 = vmatmul.mubr.bf16.gmra.mrb[0].mxu0 %v2017
        %v8669 = vpop.f32.mrb[0].mxu0
        %v8670 = vadd.f32 0.0, %v8669
        %v8671 = vpop.f32.mrb[0].mxu0
        %v8672 = vpop.f32.mrb[0].mxu0
        %v8673 = vadd.f32 0.0, %v8672
        %v8674 = vpop.f32.mrb[0].mxu0
        %8675 = vmatprep.mubr.bf16.mxu0 0
        %8676 = vmatmul.mubr.bf16.gmra.mrb[0].mxu0 %v4794
        %v8677 = vpop.f32.mrb[0].mxu0
        %v8678 = vadd.f32 0.0, %v8677
        %v8679 = vpop.f32.mrb[0].mxu0
        %v8680 = vpop.f32.mrb[0].mxu0
        %v8681 = vadd.f32 0.0, %v8680
        %v8682 = vpop.f32.mrb[0].mxu0
        %8683 = vmatprep.mubr.bf16.mxu0 0
        %8684 = vmatmul.mubr.bf16.gmra.mrb[0].mxu0 %v6696
        %v8685 = vpop.f32.mrb[0].mxu0
        %v8686 = vadd.f32 0.0, %v8685
        %v8687 = vpop.f32.mrb[0].mxu0
        %v8688 = vpop.f32.mrb[0].mxu0
        %v8689 = vadd.f32 0.0, %v8688
        %v8690 = vpop.f32.mrb[0].mxu0
        %8691 = vmatprep.mubr.bf16.mxu0 0
        %8692 = vmatmul.mubr.bf16.gmra.mrb[0].mxu0 %v8598
        %v8693 = vpop.f32.mrb[0].mxu0
        %v8694 = vadd.f32 0.0, %v8693
        %v8695 = vpop.f32.mrb[0].mxu0
        %v8696 = vpop.f32.mrb[0].mxu0
        %v8697 = vadd.f32 0.0, %v8696
        %v8698 = vpop.f32.mrb[0].mxu0
        %8699 = vdwg.mxu0
        %v8700 = vadd.f32 %v8561, %v8638
        %v8701 = vadd.f32 %v8562, %v8641
        %v8702 = vadd.f32 %v8563, %v8646
        %v8703 = vadd.f32 %v8564, %v8649
        %v8704 = vadd.f32 %v8565, %v8654
        %v8705 = vadd.f32 %v8566, %v8657
        %v8706 = vadd.f32 %v8567, %v8662
        %v8707 = vadd.f32 %v8568, %v8665
        %v8708 = vadd.f32 %v8569, %v8670
        %v8709 = vadd.f32 %v8570, %v8673
        %v8710 = vadd.f32 %v8571, %v8678
        %v8711 = vadd.f32 %v8572, %v8681
        %v8712 = vadd.f32 %v8573, %v8686
        %v8713 = vadd.f32 %v8574, %v8689
        %v8714 = vadd.f32 %v8575, %v8694
        %v8715 = vadd.f32 %v8576, %v8697
        %v8716 = vld [vmem:[%s2] sm:$0x1]
        %v8718 = vlaneseq
        %v8719 = vshrl.u32 %v8718, 7
        %v8720 = vsub.s32 0, %v8719
        %v8721 = vrot.slane %v8716, %v8720
        %v8723 = vmul.f32 %v8700, %v8721
        %v8724 = vmul.f32 %v8701, %v8721
        %v8725 = vmul.f32 %v8702, %v8721
        %v8726 = vmul.f32 %v8703, %v8721
        %v8727 = vmul.f32 %v8704, %v8721
        %v8728 = vmul.f32 %v8705, %v8721
        %v8729 = vmul.f32 %v8706, %v8721
        %v8730 = vmul.f32 %v8707, %v8721
        %v8731 = vmul.f32 %v8708, %v8721
        %v8732 = vmul.f32 %v8709, %v8721
        %v8733 = vmul.f32 %v8710, %v8721
        %v8734 = vmul.f32 %v8711, %v8721
        %v8735 = vmul.f32 %v8712, %v8721
        %v8736 = vmul.f32 %v8713, %v8721
        %v8737 = vmul.f32 %v8714, %v8721
        %v8738 = vmul.f32 %v8715, %v8721
        %v8739 = vld [vmem:[%s3] sm:$0x1]
        %v8741 = vlaneseq
        %v8742 = vshrl.u32 %v8741, 7
        %v8743 = vsub.s32 0, %v8742
        %v8744 = vrot.slane %v8739, %v8743
        %v8746 = vadd.f32 %v8723, %v8744
        %v8747 = vadd.f32 %v8724, %v8744
        %v8748 = vadd.f32 %v8725, %v8744
        %v8749 = vadd.f32 %v8726, %v8744
        %v8750 = vadd.f32 %v8727, %v8744
        %v8751 = vadd.f32 %v8728, %v8744
        %v8752 = vadd.f32 %v8729, %v8744
        %v8753 = vadd.f32 %v8730, %v8744
        %v8754 = vadd.f32 %v8731, %v8744
        %v8755 = vadd.f32 %v8732, %v8744
        %v8756 = vadd.f32 %v8733, %v8744
        %v8757 = vadd.f32 %v8734, %v8744
        %v8758 = vadd.f32 %v8735, %v8744
        %v8759 = vadd.f32 %v8736, %v8744
        %v8760 = vadd.f32 %v8737, %v8744
        %v8761 = vadd.f32 %v8738, %v8744
        %v8762 = vmax.f32 %v8746, 0.0
        %v8763 = vmax.f32 %v8747, 0.0
        %v8764 = vmax.f32 %v8748, 0.0
        %v8765 = vmax.f32 %v8749, 0.0
        %v8766 = vmax.f32 %v8750, 0.0
        %v8767 = vmax.f32 %v8751, 0.0
        %v8768 = vmax.f32 %v8752, 0.0
        %v8769 = vmax.f32 %v8753, 0.0
        %v8770 = vmax.f32 %v8754, 0.0
        %v8771 = vmax.f32 %v8755, 0.0
        %v8772 = vmax.f32 %v8756, 0.0
        %v8773 = vmax.f32 %v8757, 0.0
        %v8774 = vmax.f32 %v8758, 0.0
        %v8775 = vmax.f32 %v8759, 0.0
        %v8776 = vmax.f32 %v8760, 0.0
        %v8777 = vmax.f32 %v8761, 0.0
        %v8778 = vpack.c.bf16 %v8763, %v8762
        %v8779 = vpack.c.bf16 %v8765, %v8764
        %v8780 = vpack.c.bf16 %v8767, %v8766
        %v8781 = vpack.c.bf16 %v8769, %v8768
        %v8782 = vpack.c.bf16 %v8771, %v8770
        %v8783 = vpack.c.bf16 %v8773, %v8772
        %v8784 = vpack.c.bf16 %v8775, %v8774
        %v8785 = vpack.c.bf16 %v8777, %v8776
        %v8794 = vunpack.c.l.b16 %v8778
        %v8795 = vunpack.c.h.b16 %v8778
        %v8796 = vunpack.c.l.b16 %v8779
        %v8797 = vunpack.c.h.b16 %v8779
        %v8798 = vunpack.c.l.b16 %v8780
        %v8799 = vunpack.c.h.b16 %v8780
        %v8800 = vunpack.c.l.b16 %v8781
        %v8801 = vunpack.c.h.b16 %v8781
        %v8802 = vunpack.c.l.b16 %v8782
        %v8803 = vunpack.c.h.b16 %v8782
        %v8804 = vunpack.c.l.b16 %v8783
        %v8805 = vunpack.c.h.b16 %v8783
        %v8806 = vunpack.c.l.b16 %v8784
        %v8807 = vunpack.c.h.b16 %v8784
        %v8808 = vunpack.c.l.b16 %v8785
        %v8809 = vunpack.c.h.b16 %v8785
        %v8810 = vpack.c.b16 %v8794, %v8794
        %v8811 = vpack.c.b16 %v8795, %v8795
        %v8812 = vpack.c.b16 %v8796, %v8796
        %v8813 = vpack.c.b16 %v8797, %v8797
        %v8814 = vpack.c.b16 %v8798, %v8798
        %v8815 = vpack.c.b16 %v8799, %v8799
        %v8816 = vpack.c.b16 %v8800, %v8800
        %v8817 = vpack.c.b16 %v8801, %v8801
        %v8818 = vpack.c.b16 %v8802, %v8802
        %v8819 = vpack.c.b16 %v8803, %v8803
        %v8820 = vpack.c.b16 %v8804, %v8804
        %v8821 = vpack.c.b16 %v8805, %v8805
        %v8822 = vpack.c.b16 %v8806, %v8806
        %v8823 = vpack.c.b16 %v8807, %v8807
        %v8824 = vpack.c.b16 %v8808, %v8808
        %v8825 = vpack.c.b16 %v8809, %v8809
        %8842 = vst [vmem:[%s193] sm:$0xf] %v8810
        %8843 = vst [vmem:[%s193 + $0x4] sm:$0xf] %v8811
        %8844 = vst [vmem:[%s193 + $0x8] sm:$0xf] %v8812
        %8845 = vst [vmem:[%s193 + $0xc] sm:$0xf] %v8813
        %8846 = vst [vmem:[%s193 + $0x10] sm:$0xf] %v8814
        %8847 = vst [vmem:[%s193 + $0x14] sm:$0xf] %v8815
        %8848 = vst [vmem:[%s193 + $0x18] sm:$0xf] %v8816
        %8849 = vst [vmem:[%s193 + $0x1c] sm:$0xf] %v8817
        %8850 = vst [vmem:[%s193 + $0x20] sm:$0xf] %v8818
        %8851 = vst [vmem:[%s193 + $0x24] sm:$0xf] %v8819
        %8852 = vst [vmem:[%s193 + $0x28] sm:$0xf] %v8820
        %8853 = vst [vmem:[%s193 + $0x2c] sm:$0xf] %v8821
        %8854 = vst [vmem:[%s193 + $0x30] sm:$0xf] %v8822
        %8855 = vst [vmem:[%s193 + $0x34] sm:$0xf] %v8823
        %8856 = vst [vmem:[%s193 + $0x38] sm:$0xf] %v8824
        %8857 = vst [vmem:[%s193 + $0x3c] sm:$0xf] %v8825
        %s8858 = sand.u32 %s115, 1
        %s8859 = scalar_lea.sflag [#allocation3], %s8858
        %s8860 = sand.u32 %s115, 1
        %s8861 = smul.addr %s8860, 64
        %s8862 = scalar_lea.vmem [#allocation2], %s8861
        // Predicated region
        $region37: #{tpu_custom_call.1} parent=35 // pred_check
          %p8863 = pneg %p125
        $region38: #{tpu_custom_call.1} parent=35 // pred_check_branch
          %8865 = sbr.rel (%p8863) target = $region40
        $region39: #{tpu_custom_call.1} parent=35 // pred_region
          %s8867 = ssub.s32 1024, 1024
          %8868 = vsyncadd %s8859, %s8867
          %s8869 = smul.addr %s18, 16
          %s8870 = smul.addr %s8869, 64
          %s8871 = scalar_lea.hbm %s4, %s8870
          %s8872 = sshll.u32 %s8862, 4
          %s8873 = int_to_ptr.vmem [resolvable:$true] %s8872
          %8878 = dma.vmem_to_hbm [thread:$0]  %s8873, 1024, %s8871, %s8859, 64, 64, 4
        $region40: #{tpu_custom_call.1} parent=35 // pred_fallthru
          _
      $region36: #{tpu_custom_call.1} parent=5 // pred_fallthru
        _
      %p8879 = scmp.le.s32.totalorder 2, %s13
      // Predicated region
      $region41: #{tpu_custom_call.1} parent=5 // pred_check
        %p8880 = pneg %p8879
      $region42: #{tpu_custom_call.1} parent=5 // pred_check_branch
        %8882 = sbr.rel (%p8880) target = $region44
      $region43: #{tpu_custom_call.1} parent=5 // pred_region
        %s8883 = ssub.s32 %s13, 2
        // Predicated region
        $region45: #{tpu_custom_call.1} parent=43 // pred_check
          %p8884 = pneg %p131
        $region46: #{tpu_custom_call.1} parent=43 // pred_check_branch
          %8886 = sbr.rel (%p8884) target = $region48
        $region47: #{tpu_custom_call.1} parent=43 // pred_region
          %s8887 = sand.u32 %s116, 1
          %s8888 = scalar_lea.sflag [#allocation3], %s8887
          %s8889 = sand.u32 %s116, 1
          %s8890 = smul.addr %s8889, 64
          %s8891 = scalar_lea.vmem [#allocation2], %s8890
          %8892 = dma.done %s8888, 1024
        $region48: #{tpu_custom_call.1} parent=43 // pred_fallthru
          _
      $region44: #{tpu_custom_call.1} parent=5 // pred_fallthru
        _
    $region6: #{tpu_custom_call.1} parent=1 // loop_footer
      %s17 = sadd.s32 1, %s13
    $region7: #{tpu_custom_call.1} parent=1 // loop_footer_branch
      %12 = sbr.rel target = $region3
    $region8: #{tpu_custom_call.1} parent=1 // loop_exit
      _
    %8893 = vsyncpa [#allocation3], 1
    %s8894 = scalar_lea.sflag [#allocation3], 1
    %8895 = vsyncpa %s8894, 1

</llo_original>
